<compile_context>
chip_gen: v6e
topology: v6e:2x2x1
jax: 0.10.0
libtpu: 0.0.40
codegen_flags: <defaults>
</compile_context>

<pallas_src>
import numpy as np

import jax
import jax.numpy as jnp
from jax import lax
from jax.experimental import pallas as pl
from jax.experimental.pallas import tpu as pltpu


# ---------------------------------------------------------------------------
# Pallas kernels
# ---------------------------------------------------------------------------
def _conv_relu_pool_kernel(x_ref, w_ref, b_ref, o_ref):
    """Fused 3x3 conv (stride 1, pad 1) + bias + ReLU + 2x2/2 max-pool, 1 image.

    x_ref: (1, 2, Hp//2, Wp*Cin)    zero-padded NHWC input, rows split by
                                    parity, each row flattened over (w, cin).
    w_ref: (2, 3, Wp*Cin, Wo*Cout)  banded weights, one matrix per
                                    (pool column offset dx, kernel row ky).
    b_ref: (1, Wo*Cout)             bias tiled across the pooled width.
    o_ref: (1, Ho, Wo*Cout)         pooled NHWC output, (w, c) in lanes.
    """
    ho = o_ref.shape[1]
    accs = []
    for dy in (0, 1):                       # pool row offset
        for dx in (0, 1):                   # pool col offset (folded into RHS)
            acc = None
            for ky in range(3):             # kernel row
                a = dy + ky                 # padded-input row offset
                lhs = x_ref[0, a & 1, (a >> 1):(a >> 1) + ho, :]
                part = jnp.dot(lhs, w_ref[dx, ky],
                               preferred_element_type=jnp.float32)
                acc = part if acc is None else acc + part
            accs.append(acc)                # acc[i, j*Cout+c] = conv[2i+dy, 2j+dx, c]
    pooled = jnp.maximum(jnp.maximum(accs[0], accs[1]),
                         jnp.maximum(accs[2], accs[3]))
    o_ref[0, :, :] = jnp.maximum(pooled + b_ref[...], 0.0).astype(o_ref.dtype)


def _fc_head_kernel(x_ref, w1_ref, b1_ref, w2_ref, b2_ref, o_ref):
    """Fused fc1 + ReLU + fc2 on one tile of batch rows."""
    h = jnp.dot(x_ref[...], w1_ref[...], preferred_element_type=jnp.float32)
    h = jnp.maximum(h + b1_ref[...], 0.0)
    o = jnp.dot(h, w2_ref[...], preferred_element_type=jnp.float32) + b2_ref[...]
    o_ref[...] = o.astype(o_ref.dtype)


# ---------------------------------------------------------------------------
# Pallas wrappers
# ---------------------------------------------------------------------------
def conv_relu_pool(x_rows, wb, b_tiled, *, ho, wocout):
    """x_rows: (N, 2, Hp//2, Wp*Cin) -> (N, Ho, Wo*Cout)."""
    n = x_rows.shape[0]
    blk_x = (1,) + tuple(x_rows.shape[1:])
    return pl.pallas_call(
        _conv_relu_pool_kernel,
        out_shape=jax.ShapeDtypeStruct((n, ho, wocout), jnp.float32),
        grid_spec=pltpu.PrefetchScalarGridSpec(
            num_scalar_prefetch=0,
            grid=(n,),
            in_specs=[
                pl.BlockSpec(blk_x, lambda i: (i, 0, 0, 0)),
                pl.BlockSpec(tuple(wb.shape), lambda i: (0, 0, 0, 0)),
                pl.BlockSpec(tuple(b_tiled.shape), lambda i: (0, 0)),
            ],
            out_specs=pl.BlockSpec((1, ho, wocout), lambda i: (i, 0, 0)),
        ),
        compiler_params=pltpu.CompilerParams(
            dimension_semantics=("parallel",)),
    )(x_rows, wb, b_tiled)


def fc_head(flat, w1, b1, w2, b2):
    """(N, K) -> fc1(K,128)+ReLU -> fc2(128,10), fused, tiled over batch rows."""
    n, k = flat.shape
    n1 = w1.shape[1]
    n2 = w2.shape[1]
    tm = 128 if n >= 128 else n          # cdiv grid; partial last block is OK
    grid = (pl.cdiv(n, tm),)
    return pl.pallas_call(
        _fc_head_kernel,
        out_shape=jax.ShapeDtypeStruct((n, n2), jnp.float32),
        grid_spec=pltpu.PrefetchScalarGridSpec(
            num_scalar_prefetch=0,
            grid=grid,
            in_specs=[
                pl.BlockSpec((tm, k), lambda i: (i, 0)),
                pl.BlockSpec((k, n1), lambda i: (0, 0)),
                pl.BlockSpec((1, n1), lambda i: (0, 0)),
                pl.BlockSpec((n1, n2), lambda i: (0, 0)),
                pl.BlockSpec((1, n2), lambda i: (0, 0)),
            ],
            out_specs=pl.BlockSpec((tm, n2), lambda i: (i, 0)),
        ),
        compiler_params=pltpu.CompilerParams(
            dimension_semantics=("parallel",)),
    )(flat, w1, b1.reshape(1, n1), w2, b2.reshape(1, n2))


# ---------------------------------------------------------------------------
# Trace-time weight / layout glue (tiny tensors; folded into constants by XLA)
# ---------------------------------------------------------------------------
def _banded_conv_weights(w_oihw, *, wo, wp):
    """Fold 3x3 im2col + the pool's column phase into a banded weight matrix.

    Returns (2, 3, wp*Cin, wo*Cout) f32 with
      out[dx, ky, x*Cin + ci, j*Cout + co] = w[co, ci, ky, x - 2j - dx]
    when 0 <= x - 2j - dx <= 2, else 0.
    """
    cout, cin = w_oihw.shape[0], w_oihw.shape[1]
    w_t = jnp.transpose(w_oihw, (2, 3, 1, 0)).astype(jnp.float32)   # (ky,kx,ci,co)
    xs = np.arange(wp)[None, :, None, None]
    ds = np.arange(2)[:, None, None, None]
    js = np.arange(wo)[None, None, :, None]
    ks = np.arange(3)[None, None, None, :]
    sel = (xs == 2 * js + ds + ks).astype(np.float32)               # (2,wp,wo,3)
    wb = jnp.einsum('dxjk,ykic->dyxijc', jnp.asarray(sel), w_t)     # (2,3,wp,ci,wo,co)
    return wb.reshape(2, 3, wp * cin, wo * cout)


def _row_parity_split(x_nhwc_padded):
    """(N, Hp, Wp, C) -> (N, 2, Hp//2, Wp*C): rows split by parity, flattened."""
    n, hp, wp, c = x_nhwc_padded.shape
    y = x_nhwc_padded.reshape(n, hp // 2, 2, wp * c)
    return jnp.transpose(y, (0, 2, 1, 3))


# ---------------------------------------------------------------------------
# Full forward (matches torch CNN.forward)
# ---------------------------------------------------------------------------
def cnn_forward(x_nchw, params):
    w1, b1, w2, b2, fw1, fb1, fw2, fb2 = params
    n = x_nchw.shape[0]
    assert x_nchw.shape[1:] == (1, 28, 28)

    # conv1 + ReLU + pool: 28x28x1 -> 14x14x32, one fused kernel.
    xp1 = jnp.pad(x_nchw[:, 0], ((0, 0), (1, 1), (1, 1)))[..., None]  # (N,30,30,1)
    xr1 = _row_parity_split(xp1)                                      # (N,2,15,30)
    wb1 = _banded_conv_weights(w1, wo=14, wp=30)                      # (2,3,30,448)
    b1t = jnp.tile(b1, 14)[None, :]                                   # (1,448)
    y1 = conv_relu_pool(xr1, wb1, b1t, ho=14, wocout=14 * 32)         # (N,14,448)

    # conv2 + ReLU + pool: 14x14x32 -> 7x7x64.  Activation stays NHWC; the
    # only glue is a cheap pad + row-parity repack (no NCHW transposes).
    y1p = jnp.pad(y1.reshape(n, 14, 14, 32),
                  ((0, 0), (1, 1), (1, 1), (0, 0)))                   # (N,16,16,32)
    xr2 = _row_parity_split(y1p)                                      # (N,2,8,512)
    wb2 = _banded_conv_weights(w2, wo=7, wp=16)                       # (2,3,512,448)
    b2t = jnp.tile(b2, 7)[None, :]                                    # (1,448)
    y2 = conv_relu_pool(xr2, wb2, b2t, ho=7, wocout=7 * 64)           # (N,7,448)

    # FC head: torch.flatten(x,1) of NCHW == our (h,w,c)-ordered flatten once
    # fc1's weight columns are permuted at trace time, so this is a free
    # reshape.  fc1 + ReLU + fc2 run as a single fused kernel.
    flat = y2.reshape(n, 7 * 7 * 64)
    fw1_hwc = jnp.transpose(fw1.reshape(128, 64, 7, 7),
                            (2, 3, 1, 0)).reshape(7 * 7 * 64, 128)
    return fc_head(flat, fw1_hwc, fb1, fw2.T, fb2)


# ---------------------------------------------------------------------------
# Pure-JAX reference (PyTorch semantics) and deterministic params
# ---------------------------------------------------------------------------
def ref_forward(x, params):
    w1, b1, w2, b2, fw1, fb1, fw2, fb2 = params
    dn = ("NCHW", "OIHW", "NCHW")

    def conv(x, w, b):
        y = lax.conv_general_dilated(x, w, (1, 1), ((1, 1), (1, 1)),
                                     dimension_numbers=dn,
                                     precision=lax.Precision.HIGHEST)
        return y + b[None, :, None, None]

    def pool(x):
        return lax.reduce_window(x, -jnp.inf, lax.max,
                                 (1, 1, 2, 2), (1, 1, 2, 2), "VALID")

    y = pool(jnp.maximum(conv(x, w1, b1), 0.0))
    y = pool(jnp.maximum(conv(y, w2, b2), 0.0))
    y = y.reshape(x.shape[0], -1)
    y = jnp.maximum(
        jnp.dot(y, fw1.T, precision=lax.Precision.HIGHEST) + fb1, 0.0)
    return jnp.dot(y, fw2.T, precision=lax.Precision.HIGHEST) + fb2


def init_params(key):
    ks = jax.random.split(key, 8)
    s = 0.05
    w1 = s * jax.random.normal(ks[0], (32, 1, 3, 3), jnp.float32)
    b1 = s * jax.random.normal(ks[1], (32,), jnp.float32)
    w2 = s * jax.random.normal(ks[2], (64, 32, 3, 3), jnp.float32)
    b2 = s * jax.random.normal(ks[3], (64,), jnp.float32)
    fw1 = s * jax.random.normal(ks[4], (128, 64 * 7 * 7), jnp.float32)
    fb1 = s * jax.random.normal(ks[5], (128,), jnp.float32)
    fw2 = s * jax.random.normal(ks[6], (10, 128), jnp.float32)
    fb2 = s * jax.random.normal(ks[7], (10,), jnp.float32)
    return (w1, b1, w2, b2, fw1, fb1, fw2, fb2)


if __name__ == "__main__":
    key = jax.random.PRNGKey(0)
    pkey, xkey = jax.random.split(key)
    params = init_params(pkey)
    # MNIST-like input: fc1's 64*7*7 pins spatial size to 28x28.
    x = jax.random.normal(xkey, (2, 1, 28, 28), jnp.float32)

    out = jax.jit(cnn_forward)(x, params)
    out = jax.block_until_ready(out)
    assert out.shape == (2, 10), out.shape

    ref = ref_forward(x, params)
    max_diff = jnp.max(jnp.abs(out - ref))
    assert jnp.allclose(out, ref, atol=2e-2, rtol=2e-2), f"max diff {max_diff}"

    print("KERNEL_OK")
</pallas_src>

<mosaic_0001>
module attributes {stable_mosaic.version = 11 : i64} {
  func.func @_conv_relu_pool_kernel(%arg0: i32, %arg1: memref<1x2x15x30xf32, #tpu.memory_space<vmem>>, %arg2: memref<2x3x30x448xf32, #tpu.memory_space<vmem>>, %arg3: memref<1x448xf32, #tpu.memory_space<vmem>>, %arg4: memref<1x14x448xf32, #tpu.memory_space<vmem>>) attributes {dimension_semantics = [#tpu.dimension_semantics<parallel>], iteration_bounds = array<i64: 2>, scalar_prefetch = 0 : i64, scratch_operands = 0 : i64, tpu.core_type = #tpu.core_type<tc>, window_params = [{transform_indices = @transform_0, window_bounds = array<i64: 1, 2, 15, 30>}, {pipeline_mode = #tpu.pipeline_mode<synchronous>, transform_indices = @transform_1, window_bounds = array<i64: 2, 3, 30, 448>}, {pipeline_mode = #tpu.pipeline_mode<synchronous>, transform_indices = @transform_2, window_bounds = array<i64: 1, 448>}, {transform_indices = @transform_3, window_bounds = array<i64: 1, 14, 448>}]} {
    %c0 = arith.constant 0 : index
    %c0_0 = arith.constant 0 : index
    %c0_1 = arith.constant 0 : index
    %c0_2 = arith.constant 0 : index
    %0 = vector.load %arg1[%c0, %c0_0, %c0_1, %c0_2] : memref<1x2x15x30xf32, #tpu.memory_space<vmem>>, vector<1x1x14x30xf32>
    %1 = vector.shape_cast %0 : vector<1x1x14x30xf32> to vector<14x30xf32>
    %c0_3 = arith.constant 0 : index
    %c0_4 = arith.constant 0 : index
    %c0_5 = arith.constant 0 : index
    %c0_6 = arith.constant 0 : index
    %2 = vector.load %arg2[%c0_3, %c0_4, %c0_5, %c0_6] : memref<2x3x30x448xf32, #tpu.memory_space<vmem>>, vector<1x1x30x448xf32>
    %3 = vector.shape_cast %2 : vector<1x1x30x448xf32> to vector<30x448xf32>
    %cst = arith.constant dense<0.000000e+00> : vector<14x448xf32>
    %4 = tpu.matmul %1, %3, %cst {dimension_numbers = #tpu.dot_dimension_numbers<[1], [0], [0], [1], [0, 0, 1, 1], [], []>} : vector<14x30xf32>, vector<30x448xf32>, vector<14x448xf32> -> vector<14x448xf32>
    %c0_7 = arith.constant 0 : index
    %c1 = arith.constant 1 : index
    %c0_8 = arith.constant 0 : index
    %c0_9 = arith.constant 0 : index
    %5 = vector.load %arg1[%c0_7, %c1, %c0_8, %c0_9] : memref<1x2x15x30xf32, #tpu.memory_space<vmem>>, vector<1x1x14x30xf32>
    %6 = vector.shape_cast %5 : vector<1x1x14x30xf32> to vector<14x30xf32>
    %c0_10 = arith.constant 0 : index
    %c1_11 = arith.constant 1 : index
    %c0_12 = arith.constant 0 : index
    %c0_13 = arith.constant 0 : index
    %7 = vector.load %arg2[%c0_10, %c1_11, %c0_12, %c0_13] : memref<2x3x30x448xf32, #tpu.memory_space<vmem>>, vector<1x1x30x448xf32>
    %8 = vector.shape_cast %7 : vector<1x1x30x448xf32> to vector<30x448xf32>
    %cst_14 = arith.constant dense<0.000000e+00> : vector<14x448xf32>
    %9 = tpu.matmul %6, %8, %cst_14 {dimension_numbers = #tpu.dot_dimension_numbers<[1], [0], [0], [1], [0, 0, 1, 1], [], []>} : vector<14x30xf32>, vector<30x448xf32>, vector<14x448xf32> -> vector<14x448xf32>
    %10 = arith.addf %4, %9 : vector<14x448xf32>
    %c0_15 = arith.constant 0 : index
    %c0_16 = arith.constant 0 : index
    %c1_17 = arith.constant 1 : index
    %c0_18 = arith.constant 0 : index
    %11 = vector.load %arg1[%c0_15, %c0_16, %c1_17, %c0_18] : memref<1x2x15x30xf32, #tpu.memory_space<vmem>>, vector<1x1x14x30xf32>
    %12 = vector.shape_cast %11 : vector<1x1x14x30xf32> to vector<14x30xf32>
    %c0_19 = arith.constant 0 : index
    %c2 = arith.constant 2 : index
    %c0_20 = arith.constant 0 : index
    %c0_21 = arith.constant 0 : index
    %13 = vector.load %arg2[%c0_19, %c2, %c0_20, %c0_21] : memref<2x3x30x448xf32, #tpu.memory_space<vmem>>, vector<1x1x30x448xf32>
    %14 = vector.shape_cast %13 : vector<1x1x30x448xf32> to vector<30x448xf32>
    %cst_22 = arith.constant dense<0.000000e+00> : vector<14x448xf32>
    %15 = tpu.matmul %12, %14, %cst_22 {dimension_numbers = #tpu.dot_dimension_numbers<[1], [0], [0], [1], [0, 0, 1, 1], [], []>} : vector<14x30xf32>, vector<30x448xf32>, vector<14x448xf32> -> vector<14x448xf32>
    %16 = arith.addf %10, %15 : vector<14x448xf32>
    %c0_23 = arith.constant 0 : index
    %c0_24 = arith.constant 0 : index
    %c0_25 = arith.constant 0 : index
    %c0_26 = arith.constant 0 : index
    %17 = vector.load %arg1[%c0_23, %c0_24, %c0_25, %c0_26] : memref<1x2x15x30xf32, #tpu.memory_space<vmem>>, vector<1x1x14x30xf32>
    %18 = vector.shape_cast %17 : vector<1x1x14x30xf32> to vector<14x30xf32>
    %c1_27 = arith.constant 1 : index
    %c0_28 = arith.constant 0 : index
    %c0_29 = arith.constant 0 : index
    %c0_30 = arith.constant 0 : index
    %19 = vector.load %arg2[%c1_27, %c0_28, %c0_29, %c0_30] : memref<2x3x30x448xf32, #tpu.memory_space<vmem>>, vector<1x1x30x448xf32>
    %20 = vector.shape_cast %19 : vector<1x1x30x448xf32> to vector<30x448xf32>
    %cst_31 = arith.constant dense<0.000000e+00> : vector<14x448xf32>
    %21 = tpu.matmul %18, %20, %cst_31 {dimension_numbers = #tpu.dot_dimension_numbers<[1], [0], [0], [1], [0, 0, 1, 1], [], []>} : vector<14x30xf32>, vector<30x448xf32>, vector<14x448xf32> -> vector<14x448xf32>
    %c0_32 = arith.constant 0 : index
    %c1_33 = arith.constant 1 : index
    %c0_34 = arith.constant 0 : index
    %c0_35 = arith.constant 0 : index
    %22 = vector.load %arg1[%c0_32, %c1_33, %c0_34, %c0_35] : memref<1x2x15x30xf32, #tpu.memory_space<vmem>>, vector<1x1x14x30xf32>
    %23 = vector.shape_cast %22 : vector<1x1x14x30xf32> to vector<14x30xf32>
    %c1_36 = arith.constant 1 : index
    %c1_37 = arith.constant 1 : index
    %c0_38 = arith.constant 0 : index
    %c0_39 = arith.constant 0 : index
    %24 = vector.load %arg2[%c1_36, %c1_37, %c0_38, %c0_39] : memref<2x3x30x448xf32, #tpu.memory_space<vmem>>, vector<1x1x30x448xf32>
    %25 = vector.shape_cast %24 : vector<1x1x30x448xf32> to vector<30x448xf32>
    %cst_40 = arith.constant dense<0.000000e+00> : vector<14x448xf32>
    %26 = tpu.matmul %23, %25, %cst_40 {dimension_numbers = #tpu.dot_dimension_numbers<[1], [0], [0], [1], [0, 0, 1, 1], [], []>} : vector<14x30xf32>, vector<30x448xf32>, vector<14x448xf32> -> vector<14x448xf32>
    %27 = arith.addf %21, %26 : vector<14x448xf32>
    %c0_41 = arith.constant 0 : index
    %c0_42 = arith.constant 0 : index
    %c1_43 = arith.constant 1 : index
    %c0_44 = arith.constant 0 : index
    %28 = vector.load %arg1[%c0_41, %c0_42, %c1_43, %c0_44] : memref<1x2x15x30xf32, #tpu.memory_space<vmem>>, vector<1x1x14x30xf32>
    %29 = vector.shape_cast %28 : vector<1x1x14x30xf32> to vector<14x30xf32>
    %c1_45 = arith.constant 1 : index
    %c2_46 = arith.constant 2 : index
    %c0_47 = arith.constant 0 : index
    %c0_48 = arith.constant 0 : index
    %30 = vector.load %arg2[%c1_45, %c2_46, %c0_47, %c0_48] : memref<2x3x30x448xf32, #tpu.memory_space<vmem>>, vector<1x1x30x448xf32>
    %31 = vector.shape_cast %30 : vector<1x1x30x448xf32> to vector<30x448xf32>
    %cst_49 = arith.constant dense<0.000000e+00> : vector<14x448xf32>
    %32 = tpu.matmul %29, %31, %cst_49 {dimension_numbers = #tpu.dot_dimension_numbers<[1], [0], [0], [1], [0, 0, 1, 1], [], []>} : vector<14x30xf32>, vector<30x448xf32>, vector<14x448xf32> -> vector<14x448xf32>
    %33 = arith.addf %27, %32 : vector<14x448xf32>
    %c0_50 = arith.constant 0 : index
    %c1_51 = arith.constant 1 : index
    %c0_52 = arith.constant 0 : index
    %c0_53 = arith.constant 0 : index
    %34 = vector.load %arg1[%c0_50, %c1_51, %c0_52, %c0_53] : memref<1x2x15x30xf32, #tpu.memory_space<vmem>>, vector<1x1x14x30xf32>
    %35 = vector.shape_cast %34 : vector<1x1x14x30xf32> to vector<14x30xf32>
    %c0_54 = arith.constant 0 : index
    %c0_55 = arith.constant 0 : index
    %c0_56 = arith.constant 0 : index
    %c0_57 = arith.constant 0 : index
    %36 = vector.load %arg2[%c0_54, %c0_55, %c0_56, %c0_57] : memref<2x3x30x448xf32, #tpu.memory_space<vmem>>, vector<1x1x30x448xf32>
    %37 = vector.shape_cast %36 : vector<1x1x30x448xf32> to vector<30x448xf32>
    %cst_58 = arith.constant dense<0.000000e+00> : vector<14x448xf32>
    %38 = tpu.matmul %35, %37, %cst_58 {dimension_numbers = #tpu.dot_dimension_numbers<[1], [0], [0], [1], [0, 0, 1, 1], [], []>} : vector<14x30xf32>, vector<30x448xf32>, vector<14x448xf32> -> vector<14x448xf32>
    %c0_59 = arith.constant 0 : index
    %c0_60 = arith.constant 0 : index
    %c1_61 = arith.constant 1 : index
    %c0_62 = arith.constant 0 : index
    %39 = vector.load %arg1[%c0_59, %c0_60, %c1_61, %c0_62] : memref<1x2x15x30xf32, #tpu.memory_space<vmem>>, vector<1x1x14x30xf32>
    %40 = vector.shape_cast %39 : vector<1x1x14x30xf32> to vector<14x30xf32>
    %c0_63 = arith.constant 0 : index
    %c1_64 = arith.constant 1 : index
    %c0_65 = arith.constant 0 : index
    %c0_66 = arith.constant 0 : index
    %41 = vector.load %arg2[%c0_63, %c1_64, %c0_65, %c0_66] : memref<2x3x30x448xf32, #tpu.memory_space<vmem>>, vector<1x1x30x448xf32>
    %42 = vector.shape_cast %41 : vector<1x1x30x448xf32> to vector<30x448xf32>
    %cst_67 = arith.constant dense<0.000000e+00> : vector<14x448xf32>
    %43 = tpu.matmul %40, %42, %cst_67 {dimension_numbers = #tpu.dot_dimension_numbers<[1], [0], [0], [1], [0, 0, 1, 1], [], []>} : vector<14x30xf32>, vector<30x448xf32>, vector<14x448xf32> -> vector<14x448xf32>
    %44 = arith.addf %38, %43 : vector<14x448xf32>
    %c0_68 = arith.constant 0 : index
    %c1_69 = arith.constant 1 : index
    %c1_70 = arith.constant 1 : index
    %c0_71 = arith.constant 0 : index
    %45 = vector.load %arg1[%c0_68, %c1_69, %c1_70, %c0_71] : memref<1x2x15x30xf32, #tpu.memory_space<vmem>>, vector<1x1x14x30xf32>
    %46 = vector.shape_cast %45 : vector<1x1x14x30xf32> to vector<14x30xf32>
    %c0_72 = arith.constant 0 : index
    %c2_73 = arith.constant 2 : index
    %c0_74 = arith.constant 0 : index
    %c0_75 = arith.constant 0 : index
    %47 = vector.load %arg2[%c0_72, %c2_73, %c0_74, %c0_75] : memref<2x3x30x448xf32, #tpu.memory_space<vmem>>, vector<1x1x30x448xf32>
    %48 = vector.shape_cast %47 : vector<1x1x30x448xf32> to vector<30x448xf32>
    %cst_76 = arith.constant dense<0.000000e+00> : vector<14x448xf32>
    %49 = tpu.matmul %46, %48, %cst_76 {dimension_numbers = #tpu.dot_dimension_numbers<[1], [0], [0], [1], [0, 0, 1, 1], [], []>} : vector<14x30xf32>, vector<30x448xf32>, vector<14x448xf32> -> vector<14x448xf32>
    %50 = arith.addf %44, %49 : vector<14x448xf32>
    %c0_77 = arith.constant 0 : index
    %c1_78 = arith.constant 1 : index
    %c0_79 = arith.constant 0 : index
    %c0_80 = arith.constant 0 : index
    %51 = vector.load %arg1[%c0_77, %c1_78, %c0_79, %c0_80] : memref<1x2x15x30xf32, #tpu.memory_space<vmem>>, vector<1x1x14x30xf32>
    %52 = vector.shape_cast %51 : vector<1x1x14x30xf32> to vector<14x30xf32>
    %c1_81 = arith.constant 1 : index
    %c0_82 = arith.constant 0 : index
    %c0_83 = arith.constant 0 : index
    %c0_84 = arith.constant 0 : index
    %53 = vector.load %arg2[%c1_81, %c0_82, %c0_83, %c0_84] : memref<2x3x30x448xf32, #tpu.memory_space<vmem>>, vector<1x1x30x448xf32>
    %54 = vector.shape_cast %53 : vector<1x1x30x448xf32> to vector<30x448xf32>
    %cst_85 = arith.constant dense<0.000000e+00> : vector<14x448xf32>
    %55 = tpu.matmul %52, %54, %cst_85 {dimension_numbers = #tpu.dot_dimension_numbers<[1], [0], [0], [1], [0, 0, 1, 1], [], []>} : vector<14x30xf32>, vector<30x448xf32>, vector<14x448xf32> -> vector<14x448xf32>
    %c0_86 = arith.constant 0 : index
    %c0_87 = arith.constant 0 : index
    %c1_88 = arith.constant 1 : index
    %c0_89 = arith.constant 0 : index
    %56 = vector.load %arg1[%c0_86, %c0_87, %c1_88, %c0_89] : memref<1x2x15x30xf32, #tpu.memory_space<vmem>>, vector<1x1x14x30xf32>
    %57 = vector.shape_cast %56 : vector<1x1x14x30xf32> to vector<14x30xf32>
    %c1_90 = arith.constant 1 : index
    %c1_91 = arith.constant 1 : index
    %c0_92 = arith.constant 0 : index
    %c0_93 = arith.constant 0 : index
    %58 = vector.load %arg2[%c1_90, %c1_91, %c0_92, %c0_93] : memref<2x3x30x448xf32, #tpu.memory_space<vmem>>, vector<1x1x30x448xf32>
    %59 = vector.shape_cast %58 : vector<1x1x30x448xf32> to vector<30x448xf32>
    %cst_94 = arith.constant dense<0.000000e+00> : vector<14x448xf32>
    %60 = tpu.matmul %57, %59, %cst_94 {dimension_numbers = #tpu.dot_dimension_numbers<[1], [0], [0], [1], [0, 0, 1, 1], [], []>} : vector<14x30xf32>, vector<30x448xf32>, vector<14x448xf32> -> vector<14x448xf32>
    %61 = arith.addf %55, %60 : vector<14x448xf32>
    %c0_95 = arith.constant 0 : index
    %c1_96 = arith.constant 1 : index
    %c1_97 = arith.constant 1 : index
    %c0_98 = arith.constant 0 : index
    %62 = vector.load %arg1[%c0_95, %c1_96, %c1_97, %c0_98] : memref<1x2x15x30xf32, #tpu.memory_space<vmem>>, vector<1x1x14x30xf32>
    %63 = vector.shape_cast %62 : vector<1x1x14x30xf32> to vector<14x30xf32>
    %c1_99 = arith.constant 1 : index
    %c2_100 = arith.constant 2 : index
    %c0_101 = arith.constant 0 : index
    %c0_102 = arith.constant 0 : index
    %64 = vector.load %arg2[%c1_99, %c2_100, %c0_101, %c0_102] : memref<2x3x30x448xf32, #tpu.memory_space<vmem>>, vector<1x1x30x448xf32>
    %65 = vector.shape_cast %64 : vector<1x1x30x448xf32> to vector<30x448xf32>
    %cst_103 = arith.constant dense<0.000000e+00> : vector<14x448xf32>
    %66 = tpu.matmul %63, %65, %cst_103 {dimension_numbers = #tpu.dot_dimension_numbers<[1], [0], [0], [1], [0, 0, 1, 1], [], []>} : vector<14x30xf32>, vector<30x448xf32>, vector<14x448xf32> -> vector<14x448xf32>
    %67 = arith.addf %61, %66 : vector<14x448xf32>
    %68 = arith.maximumf %16, %33 : vector<14x448xf32>
    %69 = arith.maximumf %50, %67 : vector<14x448xf32>
    %70 = arith.maximumf %68, %69 : vector<14x448xf32>
    %c0_104 = arith.constant 0 : index
    %c0_105 = arith.constant 0 : index
    %71 = vector.load %arg3[%c0_104, %c0_105] : memref<1x448xf32, #tpu.memory_space<vmem>>, vector<1x448xf32>
    %72 = vector.broadcast %71 : vector<1x448xf32> to vector<14x448xf32>
    %73 = arith.addf %70, %72 : vector<14x448xf32>
    %cst_106 = arith.constant 0.000000e+00 : f32
    %74 = vector.broadcast %cst_106 : f32 to vector<14x448xf32>
    %75 = arith.maximumf %73, %74 : vector<14x448xf32>
    %c0_107 = arith.constant 0 : index
    %c0_108 = arith.constant 0 : index
    %c0_109 = arith.constant 0 : index
    %76 = vector.load %arg4[%c0_107, %c0_108, %c0_109] : memref<1x14x448xf32, #tpu.memory_space<vmem>>, vector<1x14x448xf32>
    %77 = vector.shape_cast %76 : vector<1x14x448xf32> to vector<14x448xf32>
    %78 = vector.shape_cast %75 : vector<14x448xf32> to vector<1x14x448xf32>
    tpu.vector_store %arg4[%c0_107, %c0_108, %c0_109], %78 {strides = array<i32>} : memref<1x14x448xf32, #tpu.memory_space<vmem>>, vector<1x14x448xf32>,
    return
  }
  func.func @transform_0(%arg0: i32) -> (i32, i32, i32, i32) {
    %c0_i32 = arith.constant 0 : i32
    %c0_i32_0 = arith.constant 0 : i32
    %c0_i32_1 = arith.constant 0 : i32
    %c0_i32_2 = arith.constant 0 : i32
    return %arg0, %c0_i32, %c0_i32_0, %c0_i32_1 : i32, i32, i32, i32
  }
  func.func @transform_1(%arg0: i32) -> (i32, i32, i32, i32) {
    %c0_i32 = arith.constant 0 : i32
    %c0_i32_0 = arith.constant 0 : i32
    %c0_i32_1 = arith.constant 0 : i32
    %c0_i32_2 = arith.constant 0 : i32
    %c0_i32_3 = arith.constant 0 : i32
    return %c0_i32, %c0_i32_0, %c0_i32_1, %c0_i32_2 : i32, i32, i32, i32
  }
  func.func @transform_2(%arg0: i32) -> (i32, i32) {
    %c0_i32 = arith.constant 0 : i32
    %c0_i32_0 = arith.constant 0 : i32
    %c0_i32_1 = arith.constant 0 : i32
    return %c0_i32, %c0_i32_0 : i32, i32
  }
  func.func @transform_3(%arg0: i32) -> (i32, i32, i32) {
    %c0_i32 = arith.constant 0 : i32
    %c0_i32_0 = arith.constant 0 : i32
    %c0_i32_1 = arith.constant 0 : i32
    return %arg0, %c0_i32, %c0_i32_0 : i32, i32, i32
  }
}

module attributes {stable_mosaic.version = 11 : i64} {
  func.func @_conv_relu_pool_kernel(%arg0: i32, %arg1: memref<1x2x8x512xf32, #tpu.memory_space<vmem>>, %arg2: memref<2x3x512x448xf32, #tpu.memory_space<vmem>>, %arg3: memref<1x448xf32, #tpu.memory_space<vmem>>, %arg4: memref<1x7x448xf32, #tpu.memory_space<vmem>>) attributes {dimension_semantics = [#tpu.dimension_semantics<parallel>], iteration_bounds = array<i64: 2>, scalar_prefetch = 0 : i64, scratch_operands = 0 : i64, tpu.core_type = #tpu.core_type<tc>, window_params = [{transform_indices = @transform_0, window_bounds = array<i64: 1, 2, 8, 512>}, {pipeline_mode = #tpu.pipeline_mode<synchronous>, transform_indices = @transform_1, window_bounds = array<i64: 2, 3, 512, 448>}, {pipeline_mode = #tpu.pipeline_mode<synchronous>, transform_indices = @transform_2, window_bounds = array<i64: 1, 448>}, {transform_indices = @transform_3, window_bounds = array<i64: 1, 7, 448>}]} {
    %c0 = arith.constant 0 : index
    %c0_0 = arith.constant 0 : index
    %c0_1 = arith.constant 0 : index
    %c0_2 = arith.constant 0 : index
    %0 = vector.load %arg1[%c0, %c0_0, %c0_1, %c0_2] : memref<1x2x8x512xf32, #tpu.memory_space<vmem>>, vector<1x1x7x512xf32>
    %1 = vector.shape_cast %0 : vector<1x1x7x512xf32> to vector<7x512xf32>
    %c0_3 = arith.constant 0 : index
    %c0_4 = arith.constant 0 : index
    %c0_5 = arith.constant 0 : index
    %c0_6 = arith.constant 0 : index
    %2 = vector.load %arg2[%c0_3, %c0_4, %c0_5, %c0_6] : memref<2x3x512x448xf32, #tpu.memory_space<vmem>>, vector<1x1x512x448xf32>
    %3 = vector.shape_cast %2 : vector<1x1x512x448xf32> to vector<512x448xf32>
    %cst = arith.constant dense<0.000000e+00> : vector<7x448xf32>
    %4 = tpu.matmul %1, %3, %cst {dimension_numbers = #tpu.dot_dimension_numbers<[1], [0], [0], [1], [0, 0, 1, 1], [], []>} : vector<7x512xf32>, vector<512x448xf32>, vector<7x448xf32> -> vector<7x448xf32>
    %c0_7 = arith.constant 0 : index
    %c1 = arith.constant 1 : index
    %c0_8 = arith.constant 0 : index
    %c0_9 = arith.constant 0 : index
    %5 = vector.load %arg1[%c0_7, %c1, %c0_8, %c0_9] : memref<1x2x8x512xf32, #tpu.memory_space<vmem>>, vector<1x1x7x512xf32>
    %6 = vector.shape_cast %5 : vector<1x1x7x512xf32> to vector<7x512xf32>
    %c0_10 = arith.constant 0 : index
    %c1_11 = arith.constant 1 : index
    %c0_12 = arith.constant 0 : index
    %c0_13 = arith.constant 0 : index
    %7 = vector.load %arg2[%c0_10, %c1_11, %c0_12, %c0_13] : memref<2x3x512x448xf32, #tpu.memory_space<vmem>>, vector<1x1x512x448xf32>
    %8 = vector.shape_cast %7 : vector<1x1x512x448xf32> to vector<512x448xf32>
    %cst_14 = arith.constant dense<0.000000e+00> : vector<7x448xf32>
    %9 = tpu.matmul %6, %8, %cst_14 {dimension_numbers = #tpu.dot_dimension_numbers<[1], [0], [0], [1], [0, 0, 1, 1], [], []>} : vector<7x512xf32>, vector<512x448xf32>, vector<7x448xf32> -> vector<7x448xf32>
    %10 = arith.addf %4, %9 : vector<7x448xf32>
    %c0_15 = arith.constant 0 : index
    %c0_16 = arith.constant 0 : index
    %c1_17 = arith.constant 1 : index
    %c0_18 = arith.constant 0 : index
    %11 = vector.load %arg1[%c0_15, %c0_16, %c1_17, %c0_18] : memref<1x2x8x512xf32, #tpu.memory_space<vmem>>, vector<1x1x7x512xf32>
    %12 = vector.shape_cast %11 : vector<1x1x7x512xf32> to vector<7x512xf32>
    %c0_19 = arith.constant 0 : index
    %c2 = arith.constant 2 : index
    %c0_20 = arith.constant 0 : index
    %c0_21 = arith.constant 0 : index
    %13 = vector.load %arg2[%c0_19, %c2, %c0_20, %c0_21] : memref<2x3x512x448xf32, #tpu.memory_space<vmem>>, vector<1x1x512x448xf32>
    %14 = vector.shape_cast %13 : vector<1x1x512x448xf32> to vector<512x448xf32>
    %cst_22 = arith.constant dense<0.000000e+00> : vector<7x448xf32>
    %15 = tpu.matmul %12, %14, %cst_22 {dimension_numbers = #tpu.dot_dimension_numbers<[1], [0], [0], [1], [0, 0, 1, 1], [], []>} : vector<7x512xf32>, vector<512x448xf32>, vector<7x448xf32> -> vector<7x448xf32>
    %16 = arith.addf %10, %15 : vector<7x448xf32>
    %c0_23 = arith.constant 0 : index
    %c0_24 = arith.constant 0 : index
    %c0_25 = arith.constant 0 : index
    %c0_26 = arith.constant 0 : index
    %17 = vector.load %arg1[%c0_23, %c0_24, %c0_25, %c0_26] : memref<1x2x8x512xf32, #tpu.memory_space<vmem>>, vector<1x1x7x512xf32>
    %18 = vector.shape_cast %17 : vector<1x1x7x512xf32> to vector<7x512xf32>
    %c1_27 = arith.constant 1 : index
    %c0_28 = arith.constant 0 : index
    %c0_29 = arith.constant 0 : index
    %c0_30 = arith.constant 0 : index
    %19 = vector.load %arg2[%c1_27, %c0_28, %c0_29, %c0_30] : memref<2x3x512x448xf32, #tpu.memory_space<vmem>>, vector<1x1x512x448xf32>
    %20 = vector.shape_cast %19 : vector<1x1x512x448xf32> to vector<512x448xf32>
    %cst_31 = arith.constant dense<0.000000e+00> : vector<7x448xf32>
    %21 = tpu.matmul %18, %20, %cst_31 {dimension_numbers = #tpu.dot_dimension_numbers<[1], [0], [0], [1], [0, 0, 1, 1], [], []>} : vector<7x512xf32>, vector<512x448xf32>, vector<7x448xf32> -> vector<7x448xf32>
    %c0_32 = arith.constant 0 : index
    %c1_33 = arith.constant 1 : index
    %c0_34 = arith.constant 0 : index
    %c0_35 = arith.constant 0 : index
    %22 = vector.load %arg1[%c0_32, %c1_33, %c0_34, %c0_35] : memref<1x2x8x512xf32, #tpu.memory_space<vmem>>, vector<1x1x7x512xf32>
    %23 = vector.shape_cast %22 : vector<1x1x7x512xf32> to vector<7x512xf32>
    %c1_36 = arith.constant 1 : index
    %c1_37 = arith.constant 1 : index
    %c0_38 = arith.constant 0 : index
    %c0_39 = arith.constant 0 : index
    %24 = vector.load %arg2[%c1_36, %c1_37, %c0_38, %c0_39] : memref<2x3x512x448xf32, #tpu.memory_space<vmem>>, vector<1x1x512x448xf32>
    %25 = vector.shape_cast %24 : vector<1x1x512x448xf32> to vector<512x448xf32>
    %cst_40 = arith.constant dense<0.000000e+00> : vector<7x448xf32>
    %26 = tpu.matmul %23, %25, %cst_40 {dimension_numbers = #tpu.dot_dimension_numbers<[1], [0], [0], [1], [0, 0, 1, 1], [], []>} : vector<7x512xf32>, vector<512x448xf32>, vector<7x448xf32> -> vector<7x448xf32>
    %27 = arith.addf %21, %26 : vector<7x448xf32>
    %c0_41 = arith.constant 0 : index
    %c0_42 = arith.constant 0 : index
    %c1_43 = arith.constant 1 : index
    %c0_44 = arith.constant 0 : index
    %28 = vector.load %arg1[%c0_41, %c0_42, %c1_43, %c0_44] : memref<1x2x8x512xf32, #tpu.memory_space<vmem>>, vector<1x1x7x512xf32>
    %29 = vector.shape_cast %28 : vector<1x1x7x512xf32> to vector<7x512xf32>
    %c1_45 = arith.constant 1 : index
    %c2_46 = arith.constant 2 : index
    %c0_47 = arith.constant 0 : index
    %c0_48 = arith.constant 0 : index
    %30 = vector.load %arg2[%c1_45, %c2_46, %c0_47, %c0_48] : memref<2x3x512x448xf32, #tpu.memory_space<vmem>>, vector<1x1x512x448xf32>
    %31 = vector.shape_cast %30 : vector<1x1x512x448xf32> to vector<512x448xf32>
    %cst_49 = arith.constant dense<0.000000e+00> : vector<7x448xf32>
    %32 = tpu.matmul %29, %31, %cst_49 {dimension_numbers = #tpu.dot_dimension_numbers<[1], [0], [0], [1], [0, 0, 1, 1], [], []>} : vector<7x512xf32>, vector<512x448xf32>, vector<7x448xf32> -> vector<7x448xf32>
    %33 = arith.addf %27, %32 : vector<7x448xf32>
    %c0_50 = arith.constant 0 : index
    %c1_51 = arith.constant 1 : index
    %c0_52 = arith.constant 0 : index
    %c0_53 = arith.constant 0 : index
    %34 = vector.load %arg1[%c0_50, %c1_51, %c0_52, %c0_53] : memref<1x2x8x512xf32, #tpu.memory_space<vmem>>, vector<1x1x7x512xf32>
    %35 = vector.shape_cast %34 : vector<1x1x7x512xf32> to vector<7x512xf32>
    %c0_54 = arith.constant 0 : index
    %c0_55 = arith.constant 0 : index
    %c0_56 = arith.constant 0 : index
    %c0_57 = arith.constant 0 : index
    %36 = vector.load %arg2[%c0_54, %c0_55, %c0_56, %c0_57] : memref<2x3x512x448xf32, #tpu.memory_space<vmem>>, vector<1x1x512x448xf32>
    %37 = vector.shape_cast %36 : vector<1x1x512x448xf32> to vector<512x448xf32>
    %cst_58 = arith.constant dense<0.000000e+00> : vector<7x448xf32>
    %38 = tpu.matmul %35, %37, %cst_58 {dimension_numbers = #tpu.dot_dimension_numbers<[1], [0], [0], [1], [0, 0, 1, 1], [], []>} : vector<7x512xf32>, vector<512x448xf32>, vector<7x448xf32> -> vector<7x448xf32>
    %c0_59 = arith.constant 0 : index
    %c0_60 = arith.constant 0 : index
    %c1_61 = arith.constant 1 : index
    %c0_62 = arith.constant 0 : index
    %39 = vector.load %arg1[%c0_59, %c0_60, %c1_61, %c0_62] : memref<1x2x8x512xf32, #tpu.memory_space<vmem>>, vector<1x1x7x512xf32>
    %40 = vector.shape_cast %39 : vector<1x1x7x512xf32> to vector<7x512xf32>
    %c0_63 = arith.constant 0 : index
    %c1_64 = arith.constant 1 : index
    %c0_65 = arith.constant 0 : index
    %c0_66 = arith.constant 0 : index
    %41 = vector.load %arg2[%c0_63, %c1_64, %c0_65, %c0_66] : memref<2x3x512x448xf32, #tpu.memory_space<vmem>>, vector<1x1x512x448xf32>
    %42 = vector.shape_cast %41 : vector<1x1x512x448xf32> to vector<512x448xf32>
    %cst_67 = arith.constant dense<0.000000e+00> : vector<7x448xf32>
    %43 = tpu.matmul %40, %42, %cst_67 {dimension_numbers = #tpu.dot_dimension_numbers<[1], [0], [0], [1], [0, 0, 1, 1], [], []>} : vector<7x512xf32>, vector<512x448xf32>, vector<7x448xf32> -> vector<7x448xf32>
    %44 = arith.addf %38, %43 : vector<7x448xf32>
    %c0_68 = arith.constant 0 : index
    %c1_69 = arith.constant 1 : index
    %c1_70 = arith.constant 1 : index
    %c0_71 = arith.constant 0 : index
    %45 = vector.load %arg1[%c0_68, %c1_69, %c1_70, %c0_71] : memref<1x2x8x512xf32, #tpu.memory_space<vmem>>, vector<1x1x7x512xf32>
    %46 = vector.shape_cast %45 : vector<1x1x7x512xf32> to vector<7x512xf32>
    %c0_72 = arith.constant 0 : index
    %c2_73 = arith.constant 2 : index
    %c0_74 = arith.constant 0 : index
    %c0_75 = arith.constant 0 : index
    %47 = vector.load %arg2[%c0_72, %c2_73, %c0_74, %c0_75] : memref<2x3x512x448xf32, #tpu.memory_space<vmem>>, vector<1x1x512x448xf32>
    %48 = vector.shape_cast %47 : vector<1x1x512x448xf32> to vector<512x448xf32>
    %cst_76 = arith.constant dense<0.000000e+00> : vector<7x448xf32>
    %49 = tpu.matmul %46, %48, %cst_76 {dimension_numbers = #tpu.dot_dimension_numbers<[1], [0], [0], [1], [0, 0, 1, 1], [], []>} : vector<7x512xf32>, vector<512x448xf32>, vector<7x448xf32> -> vector<7x448xf32>
    %50 = arith.addf %44, %49 : vector<7x448xf32>
    %c0_77 = arith.constant 0 : index
    %c1_78 = arith.constant 1 : index
    %c0_79 = arith.constant 0 : index
    %c0_80 = arith.constant 0 : index
    %51 = vector.load %arg1[%c0_77, %c1_78, %c0_79, %c0_80] : memref<1x2x8x512xf32, #tpu.memory_space<vmem>>, vector<1x1x7x512xf32>
    %52 = vector.shape_cast %51 : vector<1x1x7x512xf32> to vector<7x512xf32>
    %c1_81 = arith.constant 1 : index
    %c0_82 = arith.constant 0 : index
    %c0_83 = arith.constant 0 : index
    %c0_84 = arith.constant 0 : index
    %53 = vector.load %arg2[%c1_81, %c0_82, %c0_83, %c0_84] : memref<2x3x512x448xf32, #tpu.memory_space<vmem>>, vector<1x1x512x448xf32>
    %54 = vector.shape_cast %53 : vector<1x1x512x448xf32> to vector<512x448xf32>
    %cst_85 = arith.constant dense<0.000000e+00> : vector<7x448xf32>
    %55 = tpu.matmul %52, %54, %cst_85 {dimension_numbers = #tpu.dot_dimension_numbers<[1], [0], [0], [1], [0, 0, 1, 1], [], []>} : vector<7x512xf32>, vector<512x448xf32>, vector<7x448xf32> -> vector<7x448xf32>
    %c0_86 = arith.constant 0 : index
    %c0_87 = arith.constant 0 : index
    %c1_88 = arith.constant 1 : index
    %c0_89 = arith.constant 0 : index
    %56 = vector.load %arg1[%c0_86, %c0_87, %c1_88, %c0_89] : memref<1x2x8x512xf32, #tpu.memory_space<vmem>>, vector<1x1x7x512xf32>
    %57 = vector.shape_cast %56 : vector<1x1x7x512xf32> to vector<7x512xf32>
    %c1_90 = arith.constant 1 : index
    %c1_91 = arith.constant 1 : index
    %c0_92 = arith.constant 0 : index
    %c0_93 = arith.constant 0 : index
    %58 = vector.load %arg2[%c1_90, %c1_91, %c0_92, %c0_93] : memref<2x3x512x448xf32, #tpu.memory_space<vmem>>, vector<1x1x512x448xf32>
    %59 = vector.shape_cast %58 : vector<1x1x512x448xf32> to vector<512x448xf32>
    %cst_94 = arith.constant dense<0.000000e+00> : vector<7x448xf32>
    %60 = tpu.matmul %57, %59, %cst_94 {dimension_numbers = #tpu.dot_dimension_numbers<[1], [0], [0], [1], [0, 0, 1, 1], [], []>} : vector<7x512xf32>, vector<512x448xf32>, vector<7x448xf32> -> vector<7x448xf32>
    %61 = arith.addf %55, %60 : vector<7x448xf32>
    %c0_95 = arith.constant 0 : index
    %c1_96 = arith.constant 1 : index
    %c1_97 = arith.constant 1 : index
    %c0_98 = arith.constant 0 : index
    %62 = vector.load %arg1[%c0_95, %c1_96, %c1_97, %c0_98] : memref<1x2x8x512xf32, #tpu.memory_space<vmem>>, vector<1x1x7x512xf32>
    %63 = vector.shape_cast %62 : vector<1x1x7x512xf32> to vector<7x512xf32>
    %c1_99 = arith.constant 1 : index
    %c2_100 = arith.constant 2 : index
    %c0_101 = arith.constant 0 : index
    %c0_102 = arith.constant 0 : index
    %64 = vector.load %arg2[%c1_99, %c2_100, %c0_101, %c0_102] : memref<2x3x512x448xf32, #tpu.memory_space<vmem>>, vector<1x1x512x448xf32>
    %65 = vector.shape_cast %64 : vector<1x1x512x448xf32> to vector<512x448xf32>
    %cst_103 = arith.constant dense<0.000000e+00> : vector<7x448xf32>
    %66 = tpu.matmul %63, %65, %cst_103 {dimension_numbers = #tpu.dot_dimension_numbers<[1], [0], [0], [1], [0, 0, 1, 1], [], []>} : vector<7x512xf32>, vector<512x448xf32>, vector<7x448xf32> -> vector<7x448xf32>
    %67 = arith.addf %61, %66 : vector<7x448xf32>
    %68 = arith.maximumf %16, %33 : vector<7x448xf32>
    %69 = arith.maximumf %50, %67 : vector<7x448xf32>
    %70 = arith.maximumf %68, %69 : vector<7x448xf32>
    %c0_104 = arith.constant 0 : index
    %c0_105 = arith.constant 0 : index
    %71 = vector.load %arg3[%c0_104, %c0_105] : memref<1x448xf32, #tpu.memory_space<vmem>>, vector<1x448xf32>
    %72 = vector.broadcast %71 : vector<1x448xf32> to vector<7x448xf32>
    %73 = arith.addf %70, %72 : vector<7x448xf32>
    %cst_106 = arith.constant 0.000000e+00 : f32
    %74 = vector.broadcast %cst_106 : f32 to vector<7x448xf32>
    %75 = arith.maximumf %73, %74 : vector<7x448xf32>
    %c0_107 = arith.constant 0 : index
    %c0_108 = arith.constant 0 : index
    %c0_109 = arith.constant 0 : index
    %76 = vector.load %arg4[%c0_107, %c0_108, %c0_109] : memref<1x7x448xf32, #tpu.memory_space<vmem>>, vector<1x7x448xf32>
    %77 = vector.shape_cast %76 : vector<1x7x448xf32> to vector<7x448xf32>
    %78 = vector.shape_cast %75 : vector<7x448xf32> to vector<1x7x448xf32>
    tpu.vector_store %arg4[%c0_107, %c0_108, %c0_109], %78 {strides = array<i32>} : memref<1x7x448xf32, #tpu.memory_space<vmem>>, vector<1x7x448xf32>,
    return
  }
  func.func @transform_0(%arg0: i32) -> (i32, i32, i32, i32) {
    %c0_i32 = arith.constant 0 : i32
    %c0_i32_0 = arith.constant 0 : i32
    %c0_i32_1 = arith.constant 0 : i32
    %c0_i32_2 = arith.constant 0 : i32
    return %arg0, %c0_i32, %c0_i32_0, %c0_i32_1 : i32, i32, i32, i32
  }
  func.func @transform_1(%arg0: i32) -> (i32, i32, i32, i32) {
    %c0_i32 = arith.constant 0 : i32
    %c0_i32_0 = arith.constant 0 : i32
    %c0_i32_1 = arith.constant 0 : i32
    %c0_i32_2 = arith.constant 0 : i32
    %c0_i32_3 = arith.constant 0 : i32
    return %c0_i32, %c0_i32_0, %c0_i32_1, %c0_i32_2 : i32, i32, i32, i32
  }
  func.func @transform_2(%arg0: i32) -> (i32, i32) {
    %c0_i32 = arith.constant 0 : i32
    %c0_i32_0 = arith.constant 0 : i32
    %c0_i32_1 = arith.constant 0 : i32
    return %c0_i32, %c0_i32_0 : i32, i32
  }
  func.func @transform_3(%arg0: i32) -> (i32, i32, i32) {
    %c0_i32 = arith.constant 0 : i32
    %c0_i32_0 = arith.constant 0 : i32
    %c0_i32_1 = arith.constant 0 : i32
    return %arg0, %c0_i32, %c0_i32_0 : i32, i32, i32
  }
}

module attributes {stable_mosaic.version = 11 : i64} {
  func.func @_fc_head_kernel(%arg0: i32, %arg1: memref<2x3136xf32, #tpu.memory_space<vmem>>, %arg2: memref<3136x128xf32, #tpu.memory_space<vmem>>, %arg3: memref<1x128xf32, #tpu.memory_space<vmem>>, %arg4: memref<128x10xf32, #tpu.memory_space<vmem>>, %arg5: memref<1x10xf32, #tpu.memory_space<vmem>>, %arg6: memref<2x10xf32, #tpu.memory_space<vmem>>) attributes {dimension_semantics = [#tpu.dimension_semantics<parallel>], iteration_bounds = array<i64: 1>, scalar_prefetch = 0 : i64, scratch_operands = 0 : i64, tpu.core_type = #tpu.core_type<tc>, window_params = [{transform_indices = @transform_0, window_bounds = array<i64: 2, 3136>}, {pipeline_mode = #tpu.pipeline_mode<synchronous>, transform_indices = @transform_1, window_bounds = array<i64: 3136, 128>}, {pipeline_mode = #tpu.pipeline_mode<synchronous>, transform_indices = @transform_2, window_bounds = array<i64: 1, 128>}, {pipeline_mode = #tpu.pipeline_mode<synchronous>, transform_indices = @transform_3, window_bounds = array<i64: 128, 10>}, {pipeline_mode = #tpu.pipeline_mode<synchronous>, transform_indices = @transform_4, window_bounds = array<i64: 1, 10>}, {transform_indices = @transform_5, window_bounds = array<i64: 2, 10>}]} {
    %c0 = arith.constant 0 : index
    %c0_0 = arith.constant 0 : index
    %0 = vector.load %arg1[%c0, %c0_0] : memref<2x3136xf32, #tpu.memory_space<vmem>>, vector<2x3136xf32>
    %c0_1 = arith.constant 0 : index
    %c0_2 = arith.constant 0 : index
    %1 = vector.load %arg2[%c0_1, %c0_2] : memref<3136x128xf32, #tpu.memory_space<vmem>>, vector<3136x128xf32>
    %cst = arith.constant dense<0.000000e+00> : vector<2x128xf32>
    %2 = tpu.matmul %0, %1, %cst {dimension_numbers = #tpu.dot_dimension_numbers<[1], [0], [0], [1], [0, 0, 1, 1], [], []>} : vector<2x3136xf32>, vector<3136x128xf32>, vector<2x128xf32> -> vector<2x128xf32>
    %c0_3 = arith.constant 0 : index
    %c0_4 = arith.constant 0 : index
    %3 = vector.load %arg3[%c0_3, %c0_4] : memref<1x128xf32, #tpu.memory_space<vmem>>, vector<1x128xf32>
    %4 = vector.broadcast %3 : vector<1x128xf32> to vector<2x128xf32>
    %5 = arith.addf %2, %4 : vector<2x128xf32>
    %cst_5 = arith.constant 0.000000e+00 : f32
    %6 = vector.broadcast %cst_5 : f32 to vector<2x128xf32>
    %7 = arith.maximumf %5, %6 : vector<2x128xf32>
    %c0_6 = arith.constant 0 : index
    %c0_7 = arith.constant 0 : index
    %8 = vector.load %arg4[%c0_6, %c0_7] : memref<128x10xf32, #tpu.memory_space<vmem>>, vector<128x10xf32>
    %cst_8 = arith.constant dense<0.000000e+00> : vector<2x10xf32>
    %9 = tpu.matmul %7, %8, %cst_8 {dimension_numbers = #tpu.dot_dimension_numbers<[1], [0], [0], [1], [0, 0, 1, 1], [], []>} : vector<2x128xf32>, vector<128x10xf32>, vector<2x10xf32> -> vector<2x10xf32>
    %c0_9 = arith.constant 0 : index
    %c0_10 = arith.constant 0 : index
    %10 = vector.load %arg5[%c0_9, %c0_10] : memref<1x10xf32, #tpu.memory_space<vmem>>, vector<1x10xf32>
    %11 = vector.broadcast %10 : vector<1x10xf32> to vector<2x10xf32>
    %12 = arith.addf %9, %11 : vector<2x10xf32>
    %c0_11 = arith.constant 0 : index
    %c0_12 = arith.constant 0 : index
    %13 = vector.load %arg6[%c0_11, %c0_12] : memref<2x10xf32, #tpu.memory_space<vmem>>, vector<2x10xf32>
    tpu.vector_store %arg6[%c0_11, %c0_12], %12 {strides = array<i32>} : memref<2x10xf32, #tpu.memory_space<vmem>>, vector<2x10xf32>,
    return
  }
  func.func @transform_0(%arg0: i32) -> (i32, i32) {
    %c0_i32 = arith.constant 0 : i32
    %c0_i32_0 = arith.constant 0 : i32
    return %arg0, %c0_i32 : i32, i32
  }
  func.func @transform_1(%arg0: i32) -> (i32, i32) {
    %c0_i32 = arith.constant 0 : i32
    %c0_i32_0 = arith.constant 0 : i32
    %c0_i32_1 = arith.constant 0 : i32
    return %c0_i32, %c0_i32_0 : i32, i32
  }
  func.func @transform_2(%arg0: i32) -> (i32, i32) {
    %c0_i32 = arith.constant 0 : i32
    %c0_i32_0 = arith.constant 0 : i32
    %c0_i32_1 = arith.constant 0 : i32
    return %c0_i32, %c0_i32_0 : i32, i32
  }
  func.func @transform_3(%arg0: i32) -> (i32, i32) {
    %c0_i32 = arith.constant 0 : i32
    %c0_i32_0 = arith.constant 0 : i32
    %c0_i32_1 = arith.constant 0 : i32
    return %c0_i32, %c0_i32_0 : i32, i32
  }
  func.func @transform_4(%arg0: i32) -> (i32, i32) {
    %c0_i32 = arith.constant 0 : i32
    %c0_i32_0 = arith.constant 0 : i32
    %c0_i32_1 = arith.constant 0 : i32
    return %c0_i32, %c0_i32_0 : i32, i32
  }
  func.func @transform_5(%arg0: i32) -> (i32, i32) {
    %c0_i32 = arith.constant 0 : i32
    %c0_i32_0 = arith.constant 0 : i32
    return %arg0, %c0_i32 : i32, i32
  }
}

</mosaic_0001>

<llo_original>
// kernel: tile.13
$region0: #{tile.13}
  #allocation0 [shape = 's32[1]{0}', space=sflag, size = 0x4, scoped, tag = 'scoped memory for tile.13']
  %s0 = inlined_call_operand.vmem [shape: f32[32], index: 0, kind: input, shape index: {}]
  %s1 = inlined_call_operand.vmem [shape: f32[14,32], index: 1, kind: output, shape index: {}]
  // Predicated region
  $region2: #{tile.13} parent=0 // pred_check
    _
  $region3: #{tile.13} parent=0 // pred_check_branch
    %3 = sbr.rel (0) target = $region5
  $region4: #{tile.13} parent=0 // pred_region
    _
  $region5: #{tile.13} parent=0 // pred_fallthru
    _
  %v4 = vld [vmem:[%s0] ss:$0 sm:$0xff]
  %5 = vst [vmem:[%s1] sm:$0xff] %v4
  %s6 = scalar_lea.vmem %s1, 8
  %7 = vst [vmem:[%s6] sm:$0xff] %v4

// kernel: tile.14
$region0: #{tile.14}
  %s0 = inlined_call_operand.vmem [shape: f32[14,32], index: 0, kind: input, shape index: {}]
  %s1 = inlined_call_operand.vmem [shape: f32[1,448], index: 1, kind: output, shape index: {}]
  $region1: #{tile.14} parent=0
    #allocation0 [shape = 'u8[16384]{0}', space=vmem, size = 0x4000, scoped, tag = 'scoped mem for output reshape']
    %v2 = vld [vmem:[%s0] ss:$4 sm:$0xf]
    %vm3 = vcmask 261120
    %4 = vst.msk [vmem:[#allocation0] ss:$8 sm:$0xf] %vm3, %v2
    %s5 = scalar_lea.vmem %s0, 3
    %v6 = vld [vmem:[%s5] ss:$4 sm:$0x7]
    %7 = vrot.lane.b32.xlu0 %v6, 96
    %v8 = vpop.permute.xlu0 %7
    %vm9 = vcmask 1048320
    %10 = vst.msk [vmem:[#allocation0] ss:$8 sm:$0x7] %vm9, %v8
    %s11 = scalar_lea.vmem %s0, 2
    %v12 = vld [vmem:[%s11] ss:$4 sm:$0x7]
    %13 = vrot.lane.b32.xlu0 %v12, 64
    %v14 = vpop.permute.xlu0 %13
    %vm15 = vcmask 785920
    %16 = vst.msk [vmem:[#allocation0] ss:$8 sm:$0x7] %vm15, %v14
    %s17 = scalar_lea.vmem %s0, 1
    %v18 = vld [vmem:[%s17] ss:$4 sm:$0xf]
    %19 = vrot.lane.b32.xlu0 %v18, 32
    %v20 = vpop.permute.xlu0 %19
    %vm21 = vcmask 523520
    %22 = vst.msk [vmem:[#allocation0] ss:$8 sm:$0xf] %vm21, %v20
    %s24 = sshll.u32 1, 1
    %s25 = ssub.s32 %s24, 1
    %v27 = vld [vmem:[#allocation0] sm:%s25]
    %s28 = sshll.u32 1, 1
    %s29 = ssub.s32 %s28, 1
    %30 = vst [vmem:[%s1] sm:%s29] %v27
    %s31 = scalar_lea.vmem [#allocation0], 8
    %v32 = vld [vmem:[%s31] sm:%s25]
    %s33 = sshll.u32 1, 1
    %s34 = ssub.s32 %s33, 1
    %s35 = scalar_lea.vmem %s1, 1
    %36 = vst [vmem:[%s35] sm:%s34] %v32
    %s37 = scalar_lea.vmem [#allocation0], 16
    %v38 = vld [vmem:[%s37] sm:%s25]
    %s39 = sshll.u32 1, 1
    %s40 = ssub.s32 %s39, 1
    %s41 = smul.addr 1, 2
    %s42 = scalar_lea.vmem %s1, %s41
    %43 = vst [vmem:[%s42] sm:%s40] %v38
    %s44 = scalar_lea.vmem [#allocation0], 24
    %v45 = vld [vmem:[%s44] sm:%s25]
    %s46 = sshll.u32 1, 1
    %s47 = ssub.s32 %s46, 1
    %s48 = smul.addr 1, 3
    %s49 = scalar_lea.vmem %s1, %s48
    %50 = vst [vmem:[%s49] sm:%s47] %v45

// kernel: cnn_forward.3
$region0: #{cnn_forward.3}
  #allocation0 [shape = 'u32[]', space=smem, size = 0x4, offset = 0x4, fixed_abs, tag = 'smem constant byte address 0x4 - core index']
  #allocation1 [shape = 'u32[144,128]{1,0:T(1,128)}', space=vmem, size = 0x12000, scoped, tag = 'internal scratch']
  %s0 = inlined_call_operand.vmem [shape: f32[2,2,15,30], index: 0, kind: input, shape index: {}]
  %s1 = inlined_call_operand.vmem [shape: f32[2,3,30,448], index: 1, kind: input, shape index: {}]
  %s2 = inlined_call_operand.vmem [shape: f32[1,448], index: 2, kind: input, shape index: {}]
  %s3 = inlined_call_operand.vmem [shape: f32[2,14,448], index: 3, kind: output, shape index: {}]
  %s4 = sld [smem:[#allocation0]]
  $region45: #{cnn_forward.3} parent=0
    _
  %s6 = ssub.s32 1, %s4
  %s7 = scalar_select 0, %s6, %s4
  loop: start=0, step=1, limit=4
  $region2: #{cnn_forward.3} parent=0 // loop_pre_header
    _
  $region3: #{cnn_forward.3} parent=0 // loop_header
    %s9 = sphi 0, %s13
    %p10 = scmp.ge.s32.totalorder %s9, 4
    %s19 = sphi 0, %s21
    %s22 = sphi 0, %s19
    %s23 = sphi 0, %s22
    %s39 = sphi 0, %s23
    %s43 = sphi 0, %s43
    %s45 = sphi 0, %s43
    %s46 = sphi 0, %s45
    %s60 = sphi 0, %s46
    %s64 = sphi 0, %s64
    %s66 = sphi 0, %s64
    %s67 = sphi 0, %s66
    %s81 = sphi 0, %s67
    %s87 = sphi 0, %s89
    %s90 = sphi 0, %s87
    %s91 = sphi 0, %s90
    %s107 = sphi 0, %s91
  $region4: #{cnn_forward.3} parent=0 // loop_header_branch
    %12 = sbr.rel (%p10) target = $region8
  $region5: #{cnn_forward.3} parent=0 // loop_body
    %s14 = ssub.s32 %s9, 1
    %s15 = ssub.s32 %s9, 2
    %s16 = sadd.s32 %s9, 1
    %s17 = ssub.s32 %s9, %s16
    %p18 = scmp.eq.s32.totalorder %s17, 0
    %s20 = sadd.s32 %s19, 1
    %s21 = scalar_select %p18, %s19, %s20
    %p24 = pneg %p18
    %p25 = scmp.eq.s32.totalorder %s9, 1
    %p26 = por %p24, %p25
    %p27 = scmp.ne.s32.totalorder %s19, %s22
    %p28 = scmp.eq.s32.totalorder %s9, 0
    %p29 = por %p27, %p28
    %p30 = scmp.ne.s32.totalorder %s19, %s22
    %p31 = scmp.eq.s32.totalorder %s14, 1
    %p32 = por %p30, %p31
    %p33 = scmp.ne.s32.totalorder %s22, %s23
    %p34 = scmp.eq.s32.totalorder %s14, 0
    %p35 = por %p33, %p34
    %p36 = scmp.ne.s32.totalorder %s22, %s23
    %p37 = scmp.eq.s32.totalorder %s15, 1
    %p38 = por %p36, %p37
    %p40 = scmp.ne.s32.totalorder %s23, %s39
    %p41 = scmp.eq.s32.totalorder %s15, 0
    %p42 = por %p40, %p41
    %s44 = sadd.s32 %s43, 1
    %p47 = scmp.eq.s32.totalorder %s9, 1
    %p48 = scmp.ne.s32.totalorder %s43, %s45
    %p49 = scmp.eq.s32.totalorder %s9, 0
    %p50 = por %p48, %p49
    %p51 = scmp.ne.s32.totalorder %s43, %s45
    %p52 = scmp.eq.s32.totalorder %s14, 1
    %p53 = por %p51, %p52
    %p54 = scmp.ne.s32.totalorder %s45, %s46
    %p55 = scmp.eq.s32.totalorder %s14, 0
    %p56 = por %p54, %p55
    %p57 = scmp.ne.s32.totalorder %s45, %s46
    %p58 = scmp.eq.s32.totalorder %s15, 1
    %p59 = por %p57, %p58
    %p61 = scmp.ne.s32.totalorder %s46, %s60
    %p62 = scmp.eq.s32.totalorder %s15, 0
    %p63 = por %p61, %p62
    %s65 = sadd.s32 %s64, 1
    %p68 = scmp.eq.s32.totalorder %s9, 1
    %p69 = scmp.ne.s32.totalorder %s64, %s66
    %p70 = scmp.eq.s32.totalorder %s9, 0
    %p71 = por %p69, %p70
    %p72 = scmp.ne.s32.totalorder %s64, %s66
    %p73 = scmp.eq.s32.totalorder %s14, 1
    %p74 = por %p72, %p73
    %p75 = scmp.ne.s32.totalorder %s66, %s67
    %p76 = scmp.eq.s32.totalorder %s14, 0
    %p77 = por %p75, %p76
    %p78 = scmp.ne.s32.totalorder %s66, %s67
    %p79 = scmp.eq.s32.totalorder %s15, 1
    %p80 = por %p78, %p79
    %p82 = scmp.ne.s32.totalorder %s67, %s81
    %p83 = scmp.eq.s32.totalorder %s15, 0
    %p84 = por %p82, %p83
    %s85 = ssub.s32 %s9, %s16
    %p86 = scmp.eq.s32.totalorder %s85, 0
    %s88 = sadd.s32 %s87, 1
    %s89 = scalar_select %p86, %s87, %s88
    %p92 = pneg %p86
    %p93 = scmp.eq.s32.totalorder %s9, 1
    %p94 = por %p92, %p93
    %p95 = scmp.ne.s32.totalorder %s87, %s90
    %p96 = scmp.eq.s32.totalorder %s9, 0
    %p97 = por %p95, %p96
    %p98 = scmp.ne.s32.totalorder %s87, %s90
    %p99 = scmp.eq.s32.totalorder %s14, 1
    %p100 = por %p98, %p99
    %p101 = scmp.ne.s32.totalorder %s90, %s91
    %p102 = scmp.eq.s32.totalorder %s14, 0
    %p103 = por %p101, %p102
    %p104 = scmp.ne.s32.totalorder %s90, %s91
    %p105 = scmp.eq.s32.totalorder %s15, 1
    %p106 = por %p104, %p105
    %p108 = scmp.ne.s32.totalorder %s91, %s107
    %p109 = scmp.eq.s32.totalorder %s15, 0
    %p110 = por %p108, %p109
    %p111 = scmp.le.s32.totalorder 1, %s9
    %p112 = scmp.lt.s32.totalorder %s9, 3
    %p113 = pnand %p111, %p112
    %p114 = pneg %p113
    // Predicated region
    $region9: #{cnn_forward.3} parent=5 // pred_check
      _
    $region10: #{cnn_forward.3} parent=5 // pred_check_branch
      %116 = sbr.rel (%p113) target = $region12
    $region11: #{cnn_forward.3} parent=5 // pred_region
      %s117 = ssub.s32 %s9, 1
      // Predicated region
      $region13: #{cnn_forward.3} parent=11 // pred_check
        %p118 = pneg %p56
      $region14: #{cnn_forward.3} parent=11 // pred_check_branch
        %120 = sbr.rel (%p118) target = $region16
      $region15: #{cnn_forward.3} parent=11 // pred_region
        _
      $region16: #{cnn_forward.3} parent=11 // pred_fallthru
        _
      // Predicated region
      $region17: #{cnn_forward.3} parent=11 // pred_check
        %p121 = pneg %p77
      $region18: #{cnn_forward.3} parent=11 // pred_check_branch
        %123 = sbr.rel (%p121) target = $region20
      $region19: #{cnn_forward.3} parent=11 // pred_region
        _
      $region20: #{cnn_forward.3} parent=11 // pred_fallthru
        _
    $region12: #{cnn_forward.3} parent=5 // pred_fallthru
      _
    %p124 = scmp.lt.s32.totalorder %s9, 2
    // Predicated region
    $region21: #{cnn_forward.3} parent=5 // pred_check
      %p125 = pneg %p124
    $region22: #{cnn_forward.3} parent=5 // pred_check_branch
      %127 = sbr.rel (%p125) target = $region24
    $region23: #{cnn_forward.3} parent=5 // pred_region
      // Predicated region
      $region25: #{cnn_forward.3} parent=23 // pred_check
        %p128 = pneg %p29
      $region26: #{cnn_forward.3} parent=23 // pred_check_branch
        %130 = sbr.rel (%p128) target = $region28
      $region27: #{cnn_forward.3} parent=23 // pred_region
        %p131 = scmp.lt.s32.totalorder %s9, 1
        %s132 = scalar_select %p131, %s9, 1
        %s133 = smul.addr %s132, 4
        %s134 = smul.addr %s133, 8
        %s135 = scalar_lea.vmem %s0, %s134
      $region28: #{cnn_forward.3} parent=23 // pred_fallthru
        _
    $region24: #{cnn_forward.3} parent=5 // pred_fallthru
      _
    %p136 = scmp.le.s32.totalorder 1, %s9
    %p137 = scmp.lt.s32.totalorder %s9, 3
    %p138 = pnand %p136, %p137
    %p139 = pneg %p138
    // Predicated region
    $region29: #{cnn_forward.3} parent=5 // pred_check
      _
    $region30: #{cnn_forward.3} parent=5 // pred_check_branch
      %141 = sbr.rel (%p138) target = $region32
    $region31: #{cnn_forward.3} parent=5 // pred_region
      %s142 = ssub.s32 %s9, 1
      %p143 = scmp.lt.s32.totalorder %s14, 1
      %s144 = scalar_select %p143, %s14, 1
      %s145 = smul.addr %s144, 4
      %s146 = smul.addr %s145, 8
      %s147 = scalar_lea.vmem %s0, %s146
      %p148 = pneg %p35
      %p149 = pneg %p32
      %p150 = pneg %p56
      %p151 = pneg %p53
      %p152 = pneg %p77
      %p153 = pneg %p74
      %p154 = pneg %p103
      %p155 = pneg %p100
      %p156 = scmp.lt.s32.totalorder %s14, 1
      %s157 = scalar_select %p156, %s14, 1
      %s158 = smul.addr %s157, 8
      %s159 = smul.addr %s158, 8
      %s160 = scalar_lea.vmem %s3, %s159
      %p161 = scmp.lt.s32.totalorder %s14, 1
      %s162 = scalar_select %p161, %s14, 1
      %s163 = smul.addr %s162, 4
      %s164 = smul.addr %s163, 8
      %s165 = scalar_lea.vmem %s0, %s164
      %p166 = scmp.lt.s32.totalorder %s14, 1
      %s167 = scalar_select %p166, %s14, 1
      %s168 = smul.addr %s167, 8
      %s169 = smul.addr %s168, 8
      %s170 = scalar_lea.vmem %s3, %s169
      %v171 = vld [vmem:[%s165] sm:$0xff]
      %v172 = vld [vmem:[%s165 + $0x8] sm:$0x3f]
      %v173 = vld [vmem:[%s1] sm:$0xff]
      %v174 = vld [vmem:[%s1 + $0x8] sm:$0xff]
      %v175 = vld [vmem:[%s1 + $0x10] sm:$0xff]
      %v176 = vld [vmem:[%s1 + $0x18] sm:$0xff]
      %v177 = vld [vmem:[%s1 + $0x20] sm:$0xff]
      %v178 = vld [vmem:[%s1 + $0x28] sm:$0xff]
      %v179 = vld [vmem:[%s1 + $0x30] sm:$0xff]
      %v180 = vld [vmem:[%s1 + $0x38] sm:$0xff]
      %v181 = vld [vmem:[%s1 + $0x40] sm:$0xff]
      %v182 = vld [vmem:[%s1 + $0x48] sm:$0xff]
      %v183 = vld [vmem:[%s1 + $0x50] sm:$0xff]
      %v184 = vld [vmem:[%s1 + $0x58] sm:$0xff]
      %v185 = vld [vmem:[%s1 + $0x60] sm:$0x3f]
      %v186 = vld [vmem:[%s1 + $0x68] sm:$0x3f]
      %v187 = vld [vmem:[%s1 + $0x70] sm:$0x3f]
      %v188 = vld [vmem:[%s1 + $0x78] sm:$0x3f]
      %s189 = scalar_lea.vmem %s165, 16
      %v190 = vld [vmem:[%s189] sm:$0xff]
      %v191 = vld [vmem:[%s189 + $0x8] sm:$0x3f]
      %s192 = scalar_lea.vmem %s1, 128
      %v193 = vld [vmem:[%s192] sm:$0xff]
      %v194 = vld [vmem:[%s192 + $0x8] sm:$0xff]
      %v195 = vld [vmem:[%s192 + $0x10] sm:$0xff]
      %v196 = vld [vmem:[%s192 + $0x18] sm:$0xff]
      %v197 = vld [vmem:[%s192 + $0x20] sm:$0xff]
      %v198 = vld [vmem:[%s192 + $0x28] sm:$0xff]
      %v199 = vld [vmem:[%s192 + $0x30] sm:$0xff]
      %v200 = vld [vmem:[%s192 + $0x38] sm:$0xff]
      %v201 = vld [vmem:[%s192 + $0x40] sm:$0xff]
      %v202 = vld [vmem:[%s192 + $0x48] sm:$0xff]
      %v203 = vld [vmem:[%s192 + $0x50] sm:$0xff]
      %v204 = vld [vmem:[%s192 + $0x58] sm:$0xff]
      %v205 = vld [vmem:[%s192 + $0x60] sm:$0x3f]
      %v206 = vld [vmem:[%s192 + $0x68] sm:$0x3f]
      %v207 = vld [vmem:[%s192 + $0x70] sm:$0x3f]
      %v208 = vld [vmem:[%s192 + $0x78] sm:$0x3f]
      %vm209 = vcmask 244736
      %v211 = vsel %vm209, %v190, 0
      %v214 = vsel %vm209, %v191, 0
      %vm216 = vcmask 1045504
      %v218 = vsel %vm216, %v205, 0
      %v221 = vsel %vm216, %v206, 0
      %v224 = vsel %vm216, %v207, 0
      %v227 = vsel %vm216, %v208, 0
      %229 = vmatprep.subr.mxu0 0.0
      %230 = vmatpush1.msra.mxu0 0.0
      %231 = vmatprep.subr.mxu0 0.0
      %232 = vmatpush1.msra.mxu0 0.0
      %233 = vmatprep.subr.mxu0 0.0
      %234 = vmatpush1.msra.mxu0 0.0
      %235 = vmatprep.subr.mxu0 0.0
      %236 = vmatpush1.msra.mxu0 0.0
      %237 = vmatprep.subr.mxu0 0.0
      %238 = vmatpush1.msra.mxu0 0.0
      %239 = vmatprep.subr.mxu0 0.0
      %240 = vmatpush1.msra.mxu0 0.0
      %241 = vmatprep.subr.mxu0 0.0
      %242 = vmatpush1.msra.mxu0 0.0
      %243 = vmatprep.subr.mxu0 0.0
      %244 = vmatpush1.msra.mxu0 0.0
      %245 = vmatprep.subr.mxu0 0.0
      %246 = vmatpush1.msra.mxu0 0.0
      %247 = vmatprep.subr.mxu0 0.0
      %248 = vmatpush1.msra.mxu0 0.0
      %249 = vmatprep.subr.mxu0 0.0
      %250 = vmatpush1.msra.mxu0 0.0
      %251 = vmatprep.subr.mxu0 0.0
      %252 = vmatpush1.msra.mxu0 0.0
      %253 = vmatprep.subr.mxu0 %v221
      %254 = vmatpush1.msra.mxu0 %v218
      %255 = vmatprep.subr.mxu0 %v202
      %256 = vmatpush1.msra.mxu0 %v201
      %257 = vmatprep.subr.mxu0 %v198
      %258 = vmatpush1.msra.mxu0 %v197
      %259 = vmatprep.subr.mxu0 %v194
      %260 = vmatpush1.msra.mxu0 %v193
      %261 = vmatprep.subr.mxu0 0.0
      %262 = vmatpush2.msra.mxu0 0.0
      %263 = vmatprep.subr.mxu0 0.0
      %264 = vmatpush2.msra.mxu0 0.0
      %265 = vmatprep.subr.mxu0 0.0
      %266 = vmatpush2.msra.mxu0 0.0
      %267 = vmatprep.subr.mxu0 0.0
      %268 = vmatpush2.msra.mxu0 0.0
      %269 = vmatprep.subr.mxu0 0.0
      %270 = vmatpush2.msra.mxu0 0.0
      %271 = vmatprep.subr.mxu0 0.0
      %272 = vmatpush2.msra.mxu0 0.0
      %273 = vmatprep.subr.mxu0 0.0
      %274 = vmatpush2.msra.mxu0 0.0
      %275 = vmatprep.subr.mxu0 0.0
      %276 = vmatpush2.msra.mxu0 0.0
      %277 = vmatprep.subr.mxu0 0.0
      %278 = vmatpush2.msra.mxu0 0.0
      %279 = vmatprep.subr.mxu0 0.0
      %280 = vmatpush2.msra.mxu0 0.0
      %281 = vmatprep.subr.mxu0 0.0
      %282 = vmatpush2.msra.mxu0 0.0
      %283 = vmatprep.subr.mxu0 0.0
      %284 = vmatpush2.msra.mxu0 0.0
      %285 = vmatprep.subr.mxu0 0.0
      %286 = vmatpush2.msra.mxu0 0.0
      %287 = vmatprep.subr.mxu0 0.0
      %288 = vmatpush2.msra.mxu0 0.0
      %289 = vmatprep.subr.mxu0 0.0
      %290 = vmatpush2.msra.mxu0 0.0
      %291 = vmatprep.subr.mxu0 0.0
      %292 = vmatpush2.msra.mxu0 0.0
      %293 = vmatprep.mubr.f32.mxu0 0.0
      %294 = vmatmul.mubr.f32.gmra.mxu0 %v211
      %v295 = vpop.f32.mrf.mxu0
      %v296 = vadd.f32 0.0, %v295
      %v297 = vpop.f32.mrf.mxu0
      %v298 = vadd.f32 0.0, %v297
      %299 = vmatprep.mubr.f32.mxu0 0.0
      %300 = vmatmul.mubr.f32.gmra.mxu0 %v214
      %v301 = vpop.f32.mrf.mxu0
      %v302 = vadd.f32 0.0, %v301
      %v303 = vpop.f32.mrf.mxu0
      %v304 = vadd.f32 0.0, %v303
      %305 = vdwg.mxu0
      %306 = vmatprep.subr.mxu0 0.0
      %307 = vmatpush1.msra.mxu0 0.0
      %308 = vmatprep.subr.mxu0 0.0
      %309 = vmatpush1.msra.mxu0 0.0
      %310 = vmatprep.subr.mxu0 0.0
      %311 = vmatpush1.msra.mxu0 0.0
      %312 = vmatprep.subr.mxu0 0.0
      %313 = vmatpush1.msra.mxu0 0.0
      %314 = vmatprep.subr.mxu0 0.0
      %315 = vmatpush1.msra.mxu0 0.0
      %316 = vmatprep.subr.mxu0 0.0
      %317 = vmatpush1.msra.mxu0 0.0
      %318 = vmatprep.subr.mxu0 0.0
      %319 = vmatpush1.msra.mxu0 0.0
      %320 = vmatprep.subr.mxu0 0.0
      %321 = vmatpush1.msra.mxu0 0.0
      %322 = vmatprep.subr.mxu0 0.0
      %323 = vmatpush1.msra.mxu0 0.0
      %324 = vmatprep.subr.mxu0 0.0
      %325 = vmatpush1.msra.mxu0 0.0
      %326 = vmatprep.subr.mxu0 0.0
      %327 = vmatpush1.msra.mxu0 0.0
      %328 = vmatprep.subr.mxu0 0.0
      %329 = vmatpush1.msra.mxu0 0.0
      %330 = vmatprep.subr.mxu0 %v227
      %331 = vmatpush1.msra.mxu0 %v224
      %332 = vmatprep.subr.mxu0 %v204
      %333 = vmatpush1.msra.mxu0 %v203
      %334 = vmatprep.subr.mxu0 %v200
      %335 = vmatpush1.msra.mxu0 %v199
      %336 = vmatprep.subr.mxu0 %v196
      %337 = vmatpush1.msra.mxu0 %v195
      %338 = vmatprep.subr.mxu0 0.0
      %339 = vmatpush2.msra.mxu0 0.0
      %340 = vmatprep.subr.mxu0 0.0
      %341 = vmatpush2.msra.mxu0 0.0
      %342 = vmatprep.subr.mxu0 0.0
      %343 = vmatpush2.msra.mxu0 0.0
      %344 = vmatprep.subr.mxu0 0.0
      %345 = vmatpush2.msra.mxu0 0.0
      %346 = vmatprep.subr.mxu0 0.0
      %347 = vmatpush2.msra.mxu0 0.0
      %348 = vmatprep.subr.mxu0 0.0
      %349 = vmatpush2.msra.mxu0 0.0
      %350 = vmatprep.subr.mxu0 0.0
      %351 = vmatpush2.msra.mxu0 0.0
      %352 = vmatprep.subr.mxu0 0.0
      %353 = vmatpush2.msra.mxu0 0.0
      %354 = vmatprep.subr.mxu0 0.0
      %355 = vmatpush2.msra.mxu0 0.0
      %356 = vmatprep.subr.mxu0 0.0
      %357 = vmatpush2.msra.mxu0 0.0
      %358 = vmatprep.subr.mxu0 0.0
      %359 = vmatpush2.msra.mxu0 0.0
      %360 = vmatprep.subr.mxu0 0.0
      %361 = vmatpush2.msra.mxu0 0.0
      %362 = vmatprep.subr.mxu0 0.0
      %363 = vmatpush2.msra.mxu0 0.0
      %364 = vmatprep.subr.mxu0 0.0
      %365 = vmatpush2.msra.mxu0 0.0
      %366 = vmatprep.subr.mxu0 0.0
      %367 = vmatpush2.msra.mxu0 0.0
      %368 = vmatprep.subr.mxu0 0.0
      %369 = vmatpush2.msra.mxu0 0.0
      %370 = vmatprep.mubr.f32.mxu0 0.0
      %371 = vmatmul.mubr.f32.gmra.mxu0 %v211
      %v372 = vpop.f32.mrf.mxu0
      %v373 = vadd.f32 0.0, %v372
      %v374 = vpop.f32.mrf.mxu0
      %v375 = vadd.f32 0.0, %v374
      %376 = vmatprep.mubr.f32.mxu0 0.0
      %377 = vmatmul.mubr.f32.gmra.mxu0 %v214
      %v378 = vpop.f32.mrf.mxu0
      %v379 = vadd.f32 0.0, %v378
      %v380 = vpop.f32.mrf.mxu0
      %v381 = vadd.f32 0.0, %v380
      %382 = vdwg.mxu0
      %v384 = vsel %vm209, %v171, 0
      %v387 = vsel %vm209, %v172, 0
      %v390 = vsel %vm216, %v185, 0
      %v393 = vsel %vm216, %v186, 0
      %v396 = vsel %vm216, %v187, 0
      %v399 = vsel %vm216, %v188, 0
      %401 = vmatprep.subr.mxu0 0.0
      %402 = vmatpush1.msra.mxu0 0.0
      %403 = vmatprep.subr.mxu0 0.0
      %404 = vmatpush1.msra.mxu0 0.0
      %405 = vmatprep.subr.mxu0 0.0
      %406 = vmatpush1.msra.mxu0 0.0
      %407 = vmatprep.subr.mxu0 0.0
      %408 = vmatpush1.msra.mxu0 0.0
      %409 = vmatprep.subr.mxu0 0.0
      %410 = vmatpush1.msra.mxu0 0.0
      %411 = vmatprep.subr.mxu0 0.0
      %412 = vmatpush1.msra.mxu0 0.0
      %413 = vmatprep.subr.mxu0 0.0
      %414 = vmatpush1.msra.mxu0 0.0
      %415 = vmatprep.subr.mxu0 0.0
      %416 = vmatpush1.msra.mxu0 0.0
      %417 = vmatprep.subr.mxu0 0.0
      %418 = vmatpush1.msra.mxu0 0.0
      %419 = vmatprep.subr.mxu0 0.0
      %420 = vmatpush1.msra.mxu0 0.0
      %421 = vmatprep.subr.mxu0 0.0
      %422 = vmatpush1.msra.mxu0 0.0
      %423 = vmatprep.subr.mxu0 0.0
      %424 = vmatpush1.msra.mxu0 0.0
      %425 = vmatprep.subr.mxu0 %v393
      %426 = vmatpush1.msra.mxu0 %v390
      %427 = vmatprep.subr.mxu0 %v182
      %428 = vmatpush1.msra.mxu0 %v181
      %429 = vmatprep.subr.mxu0 %v178
      %430 = vmatpush1.msra.mxu0 %v177
      %431 = vmatprep.subr.mxu0 %v174
      %432 = vmatpush1.msra.mxu0 %v173
      %433 = vmatprep.subr.mxu0 0.0
      %434 = vmatpush2.msra.mxu0 0.0
      %435 = vmatprep.subr.mxu0 0.0
      %436 = vmatpush2.msra.mxu0 0.0
      %437 = vmatprep.subr.mxu0 0.0
      %438 = vmatpush2.msra.mxu0 0.0
      %439 = vmatprep.subr.mxu0 0.0
      %440 = vmatpush2.msra.mxu0 0.0
      %441 = vmatprep.subr.mxu0 0.0
      %442 = vmatpush2.msra.mxu0 0.0
      %443 = vmatprep.subr.mxu0 0.0
      %444 = vmatpush2.msra.mxu0 0.0
      %445 = vmatprep.subr.mxu0 0.0
      %446 = vmatpush2.msra.mxu0 0.0
      %447 = vmatprep.subr.mxu0 0.0
      %448 = vmatpush2.msra.mxu0 0.0
      %449 = vmatprep.subr.mxu0 0.0
      %450 = vmatpush2.msra.mxu0 0.0
      %451 = vmatprep.subr.mxu0 0.0
      %452 = vmatpush2.msra.mxu0 0.0
      %453 = vmatprep.subr.mxu0 0.0
      %454 = vmatpush2.msra.mxu0 0.0
      %455 = vmatprep.subr.mxu0 0.0
      %456 = vmatpush2.msra.mxu0 0.0
      %457 = vmatprep.subr.mxu0 0.0
      %458 = vmatpush2.msra.mxu0 0.0
      %459 = vmatprep.subr.mxu0 0.0
      %460 = vmatpush2.msra.mxu0 0.0
      %461 = vmatprep.subr.mxu0 0.0
      %462 = vmatpush2.msra.mxu0 0.0
      %463 = vmatprep.subr.mxu0 0.0
      %464 = vmatpush2.msra.mxu0 0.0
      %465 = vmatprep.mubr.f32.mxu0 0.0
      %466 = vmatmul.mubr.f32.gmra.mxu0 %v384
      %v467 = vpop.f32.mrf.mxu0
      %v468 = vadd.f32 %v296, %v467
      %v469 = vpop.f32.mrf.mxu0
      %v470 = vadd.f32 %v298, %v469
      %471 = vmatprep.mubr.f32.mxu0 0.0
      %472 = vmatmul.mubr.f32.gmra.mxu0 %v387
      %v473 = vpop.f32.mrf.mxu0
      %v474 = vadd.f32 %v302, %v473
      %v475 = vpop.f32.mrf.mxu0
      %v476 = vadd.f32 %v304, %v475
      %477 = vdwg.mxu0
      %478 = vmatprep.subr.mxu0 0.0
      %479 = vmatpush1.msra.mxu0 0.0
      %480 = vmatprep.subr.mxu0 0.0
      %481 = vmatpush1.msra.mxu0 0.0
      %482 = vmatprep.subr.mxu0 0.0
      %483 = vmatpush1.msra.mxu0 0.0
      %484 = vmatprep.subr.mxu0 0.0
      %485 = vmatpush1.msra.mxu0 0.0
      %486 = vmatprep.subr.mxu0 0.0
      %487 = vmatpush1.msra.mxu0 0.0
      %488 = vmatprep.subr.mxu0 0.0
      %489 = vmatpush1.msra.mxu0 0.0
      %490 = vmatprep.subr.mxu0 0.0
      %491 = vmatpush1.msra.mxu0 0.0
      %492 = vmatprep.subr.mxu0 0.0
      %493 = vmatpush1.msra.mxu0 0.0
      %494 = vmatprep.subr.mxu0 0.0
      %495 = vmatpush1.msra.mxu0 0.0
      %496 = vmatprep.subr.mxu0 0.0
      %497 = vmatpush1.msra.mxu0 0.0
      %498 = vmatprep.subr.mxu0 0.0
      %499 = vmatpush1.msra.mxu0 0.0
      %500 = vmatprep.subr.mxu0 0.0
      %501 = vmatpush1.msra.mxu0 0.0
      %502 = vmatprep.subr.mxu0 %v399
      %503 = vmatpush1.msra.mxu0 %v396
      %504 = vmatprep.subr.mxu0 %v184
      %505 = vmatpush1.msra.mxu0 %v183
      %506 = vmatprep.subr.mxu0 %v180
      %507 = vmatpush1.msra.mxu0 %v179
      %508 = vmatprep.subr.mxu0 %v176
      %509 = vmatpush1.msra.mxu0 %v175
      %510 = vmatprep.subr.mxu0 0.0
      %511 = vmatpush2.msra.mxu0 0.0
      %512 = vmatprep.subr.mxu0 0.0
      %513 = vmatpush2.msra.mxu0 0.0
      %514 = vmatprep.subr.mxu0 0.0
      %515 = vmatpush2.msra.mxu0 0.0
      %516 = vmatprep.subr.mxu0 0.0
      %517 = vmatpush2.msra.mxu0 0.0
      %518 = vmatprep.subr.mxu0 0.0
      %519 = vmatpush2.msra.mxu0 0.0
      %520 = vmatprep.subr.mxu0 0.0
      %521 = vmatpush2.msra.mxu0 0.0
      %522 = vmatprep.subr.mxu0 0.0
      %523 = vmatpush2.msra.mxu0 0.0
      %524 = vmatprep.subr.mxu0 0.0
      %525 = vmatpush2.msra.mxu0 0.0
      %526 = vmatprep.subr.mxu0 0.0
      %527 = vmatpush2.msra.mxu0 0.0
      %528 = vmatprep.subr.mxu0 0.0
      %529 = vmatpush2.msra.mxu0 0.0
      %530 = vmatprep.subr.mxu0 0.0
      %531 = vmatpush2.msra.mxu0 0.0
      %532 = vmatprep.subr.mxu0 0.0
      %533 = vmatpush2.msra.mxu0 0.0
      %534 = vmatprep.subr.mxu0 0.0
      %535 = vmatpush2.msra.mxu0 0.0
      %536 = vmatprep.subr.mxu0 0.0
      %537 = vmatpush2.msra.mxu0 0.0
      %538 = vmatprep.subr.mxu0 0.0
      %539 = vmatpush2.msra.mxu0 0.0
      %540 = vmatprep.subr.mxu0 0.0
      %541 = vmatpush2.msra.mxu0 0.0
      %542 = vmatprep.mubr.f32.mxu0 0.0
      %543 = vmatmul.mubr.f32.gmra.mxu0 %v384
      %v544 = vpop.f32.mrf.mxu0
      %v545 = vadd.f32 %v373, %v544
      %v546 = vpop.f32.mrf.mxu0
      %v547 = vadd.f32 %v375, %v546
      %548 = vmatprep.mubr.f32.mxu0 0.0
      %549 = vmatmul.mubr.f32.gmra.mxu0 %v387
      %v550 = vpop.f32.mrf.mxu0
      %v551 = vadd.f32 %v379, %v550
      %v552 = vpop.f32.mrf.mxu0
      %v553 = vadd.f32 %v381, %v552
      %554 = vdwg.mxu0
      %v555 = vld [vmem:[%s165 + $0x1] sm:$0xff]
      %v556 = vld [vmem:[%s165 + $0x9] sm:$0x3f]
      %s557 = scalar_lea.vmem %s1, 256
      %v558 = vld [vmem:[%s557] sm:$0xff]
      %v559 = vld [vmem:[%s557 + $0x8] sm:$0xff]
      %v560 = vld [vmem:[%s557 + $0x10] sm:$0xff]
      %v561 = vld [vmem:[%s557 + $0x18] sm:$0xff]
      %v562 = vld [vmem:[%s557 + $0x20] sm:$0xff]
      %v563 = vld [vmem:[%s557 + $0x28] sm:$0xff]
      %v564 = vld [vmem:[%s557 + $0x30] sm:$0xff]
      %v565 = vld [vmem:[%s557 + $0x38] sm:$0xff]
      %v566 = vld [vmem:[%s557 + $0x40] sm:$0xff]
      %v567 = vld [vmem:[%s557 + $0x48] sm:$0xff]
      %v568 = vld [vmem:[%s557 + $0x50] sm:$0xff]
      %v569 = vld [vmem:[%s557 + $0x58] sm:$0xff]
      %v570 = vld [vmem:[%s557 + $0x60] sm:$0x3f]
      %v571 = vld [vmem:[%s557 + $0x68] sm:$0x3f]
      %v572 = vld [vmem:[%s557 + $0x70] sm:$0x3f]
      %v573 = vld [vmem:[%s557 + $0x78] sm:$0x3f]
      %v575 = vsel %vm209, %v555, 0
      %v578 = vsel %vm209, %v556, 0
      %v581 = vsel %vm216, %v570, 0
      %v584 = vsel %vm216, %v571, 0
      %v587 = vsel %vm216, %v572, 0
      %v590 = vsel %vm216, %v573, 0
      %592 = vmatprep.subr.mxu0 0.0
      %593 = vmatpush1.msra.mxu0 0.0
      %594 = vmatprep.subr.mxu0 0.0
      %595 = vmatpush1.msra.mxu0 0.0
      %596 = vmatprep.subr.mxu0 0.0
      %597 = vmatpush1.msra.mxu0 0.0
      %598 = vmatprep.subr.mxu0 0.0
      %599 = vmatpush1.msra.mxu0 0.0
      %600 = vmatprep.subr.mxu0 0.0
      %601 = vmatpush1.msra.mxu0 0.0
      %602 = vmatprep.subr.mxu0 0.0
      %603 = vmatpush1.msra.mxu0 0.0
      %604 = vmatprep.subr.mxu0 0.0
      %605 = vmatpush1.msra.mxu0 0.0
      %606 = vmatprep.subr.mxu0 0.0
      %607 = vmatpush1.msra.mxu0 0.0
      %608 = vmatprep.subr.mxu0 0.0
      %609 = vmatpush1.msra.mxu0 0.0
      %610 = vmatprep.subr.mxu0 0.0
      %611 = vmatpush1.msra.mxu0 0.0
      %612 = vmatprep.subr.mxu0 0.0
      %613 = vmatpush1.msra.mxu0 0.0
      %614 = vmatprep.subr.mxu0 0.0
      %615 = vmatpush1.msra.mxu0 0.0
      %616 = vmatprep.subr.mxu0 %v584
      %617 = vmatpush1.msra.mxu0 %v581
      %618 = vmatprep.subr.mxu0 %v567
      %619 = vmatpush1.msra.mxu0 %v566
      %620 = vmatprep.subr.mxu0 %v563
      %621 = vmatpush1.msra.mxu0 %v562
      %622 = vmatprep.subr.mxu0 %v559
      %623 = vmatpush1.msra.mxu0 %v558
      %624 = vmatprep.subr.mxu0 0.0
      %625 = vmatpush2.msra.mxu0 0.0
      %626 = vmatprep.subr.mxu0 0.0
      %627 = vmatpush2.msra.mxu0 0.0
      %628 = vmatprep.subr.mxu0 0.0
      %629 = vmatpush2.msra.mxu0 0.0
      %630 = vmatprep.subr.mxu0 0.0
      %631 = vmatpush2.msra.mxu0 0.0
      %632 = vmatprep.subr.mxu0 0.0
      %633 = vmatpush2.msra.mxu0 0.0
      %634 = vmatprep.subr.mxu0 0.0
      %635 = vmatpush2.msra.mxu0 0.0
      %636 = vmatprep.subr.mxu0 0.0
      %637 = vmatpush2.msra.mxu0 0.0
      %638 = vmatprep.subr.mxu0 0.0
      %639 = vmatpush2.msra.mxu0 0.0
      %640 = vmatprep.subr.mxu0 0.0
      %641 = vmatpush2.msra.mxu0 0.0
      %642 = vmatprep.subr.mxu0 0.0
      %643 = vmatpush2.msra.mxu0 0.0
      %644 = vmatprep.subr.mxu0 0.0
      %645 = vmatpush2.msra.mxu0 0.0
      %646 = vmatprep.subr.mxu0 0.0
      %647 = vmatpush2.msra.mxu0 0.0
      %648 = vmatprep.subr.mxu0 0.0
      %649 = vmatpush2.msra.mxu0 0.0
      %650 = vmatprep.subr.mxu0 0.0
      %651 = vmatpush2.msra.mxu0 0.0
      %652 = vmatprep.subr.mxu0 0.0
      %653 = vmatpush2.msra.mxu0 0.0
      %654 = vmatprep.subr.mxu0 0.0
      %655 = vmatpush2.msra.mxu0 0.0
      %656 = vmatprep.mubr.f32.mxu0 0.0
      %657 = vmatmul.mubr.f32.gmra.mxu0 %v575
      %v658 = vpop.f32.mrf.mxu0
      %v659 = vadd.f32 0.0, %v658
      %v660 = vpop.f32.mrf.mxu0
      %v661 = vadd.f32 0.0, %v660
      %662 = vmatprep.mubr.f32.mxu0 0.0
      %663 = vmatmul.mubr.f32.gmra.mxu0 %v578
      %v664 = vpop.f32.mrf.mxu0
      %v665 = vadd.f32 0.0, %v664
      %v666 = vpop.f32.mrf.mxu0
      %v667 = vadd.f32 0.0, %v666
      %668 = vdwg.mxu0
      %669 = vmatprep.subr.mxu0 0.0
      %670 = vmatpush1.msra.mxu0 0.0
      %671 = vmatprep.subr.mxu0 0.0
      %672 = vmatpush1.msra.mxu0 0.0
      %673 = vmatprep.subr.mxu0 0.0
      %674 = vmatpush1.msra.mxu0 0.0
      %675 = vmatprep.subr.mxu0 0.0
      %676 = vmatpush1.msra.mxu0 0.0
      %677 = vmatprep.subr.mxu0 0.0
      %678 = vmatpush1.msra.mxu0 0.0
      %679 = vmatprep.subr.mxu0 0.0
      %680 = vmatpush1.msra.mxu0 0.0
      %681 = vmatprep.subr.mxu0 0.0
      %682 = vmatpush1.msra.mxu0 0.0
      %683 = vmatprep.subr.mxu0 0.0
      %684 = vmatpush1.msra.mxu0 0.0
      %685 = vmatprep.subr.mxu0 0.0
      %686 = vmatpush1.msra.mxu0 0.0
      %687 = vmatprep.subr.mxu0 0.0
      %688 = vmatpush1.msra.mxu0 0.0
      %689 = vmatprep.subr.mxu0 0.0
      %690 = vmatpush1.msra.mxu0 0.0
      %691 = vmatprep.subr.mxu0 0.0
      %692 = vmatpush1.msra.mxu0 0.0
      %693 = vmatprep.subr.mxu0 %v590
      %694 = vmatpush1.msra.mxu0 %v587
      %695 = vmatprep.subr.mxu0 %v569
      %696 = vmatpush1.msra.mxu0 %v568
      %697 = vmatprep.subr.mxu0 %v565
      %698 = vmatpush1.msra.mxu0 %v564
      %699 = vmatprep.subr.mxu0 %v561
      %700 = vmatpush1.msra.mxu0 %v560
      %701 = vmatprep.subr.mxu0 0.0
      %702 = vmatpush2.msra.mxu0 0.0
      %703 = vmatprep.subr.mxu0 0.0
      %704 = vmatpush2.msra.mxu0 0.0
      %705 = vmatprep.subr.mxu0 0.0
      %706 = vmatpush2.msra.mxu0 0.0
      %707 = vmatprep.subr.mxu0 0.0
      %708 = vmatpush2.msra.mxu0 0.0
      %709 = vmatprep.subr.mxu0 0.0
      %710 = vmatpush2.msra.mxu0 0.0
      %711 = vmatprep.subr.mxu0 0.0
      %712 = vmatpush2.msra.mxu0 0.0
      %713 = vmatprep.subr.mxu0 0.0
      %714 = vmatpush2.msra.mxu0 0.0
      %715 = vmatprep.subr.mxu0 0.0
      %716 = vmatpush2.msra.mxu0 0.0
      %717 = vmatprep.subr.mxu0 0.0
      %718 = vmatpush2.msra.mxu0 0.0
      %719 = vmatprep.subr.mxu0 0.0
      %720 = vmatpush2.msra.mxu0 0.0
      %721 = vmatprep.subr.mxu0 0.0
      %722 = vmatpush2.msra.mxu0 0.0
      %723 = vmatprep.subr.mxu0 0.0
      %724 = vmatpush2.msra.mxu0 0.0
      %725 = vmatprep.subr.mxu0 0.0
      %726 = vmatpush2.msra.mxu0 0.0
      %727 = vmatprep.subr.mxu0 0.0
      %728 = vmatpush2.msra.mxu0 0.0
      %729 = vmatprep.subr.mxu0 0.0
      %730 = vmatpush2.msra.mxu0 0.0
      %731 = vmatprep.subr.mxu0 0.0
      %732 = vmatpush2.msra.mxu0 0.0
      %733 = vmatprep.mubr.f32.mxu0 0.0
      %734 = vmatmul.mubr.f32.gmra.mxu0 %v575
      %v735 = vpop.f32.mrf.mxu0
      %v736 = vadd.f32 0.0, %v735
      %v737 = vpop.f32.mrf.mxu0
      %v738 = vadd.f32 0.0, %v737
      %739 = vmatprep.mubr.f32.mxu0 0.0
      %740 = vmatmul.mubr.f32.gmra.mxu0 %v578
      %v741 = vpop.f32.mrf.mxu0
      %v742 = vadd.f32 0.0, %v741
      %v743 = vpop.f32.mrf.mxu0
      %v744 = vadd.f32 0.0, %v743
      %745 = vdwg.mxu0
      %v746 = vadd.f32 %v468, %v659
      %v747 = vadd.f32 %v470, %v661
      %v748 = vadd.f32 %v545, %v736
      %v749 = vadd.f32 %v547, %v738
      %v750 = vadd.f32 %v474, %v665
      %v751 = vadd.f32 %v476, %v667
      %v752 = vadd.f32 %v551, %v742
      %v753 = vadd.f32 %v553, %v744
      %s754 = scalar_lea.vmem %s1, 384
      %v755 = vld [vmem:[%s754] sm:$0xff]
      %v756 = vld [vmem:[%s754 + $0x8] sm:$0xff]
      %v757 = vld [vmem:[%s754 + $0x10] sm:$0xff]
      %v758 = vld [vmem:[%s754 + $0x18] sm:$0xff]
      %v759 = vld [vmem:[%s754 + $0x20] sm:$0xff]
      %v760 = vld [vmem:[%s754 + $0x28] sm:$0xff]
      %v761 = vld [vmem:[%s754 + $0x30] sm:$0xff]
      %v762 = vld [vmem:[%s754 + $0x38] sm:$0xff]
      %v763 = vld [vmem:[%s754 + $0x40] sm:$0xff]
      %v764 = vld [vmem:[%s754 + $0x48] sm:$0xff]
      %v765 = vld [vmem:[%s754 + $0x50] sm:$0xff]
      %v766 = vld [vmem:[%s754 + $0x58] sm:$0xff]
      %v767 = vld [vmem:[%s754 + $0x60] sm:$0x3f]
      %v768 = vld [vmem:[%s754 + $0x68] sm:$0x3f]
      %v769 = vld [vmem:[%s754 + $0x70] sm:$0x3f]
      %v770 = vld [vmem:[%s754 + $0x78] sm:$0x3f]
      %s771 = scalar_lea.vmem %s1, 512
      %v772 = vld [vmem:[%s771] sm:$0xff]
      %v773 = vld [vmem:[%s771 + $0x8] sm:$0xff]
      %v774 = vld [vmem:[%s771 + $0x10] sm:$0xff]
      %v775 = vld [vmem:[%s771 + $0x18] sm:$0xff]
      %v776 = vld [vmem:[%s771 + $0x20] sm:$0xff]
      %v777 = vld [vmem:[%s771 + $0x28] sm:$0xff]
      %v778 = vld [vmem:[%s771 + $0x30] sm:$0xff]
      %v779 = vld [vmem:[%s771 + $0x38] sm:$0xff]
      %v780 = vld [vmem:[%s771 + $0x40] sm:$0xff]
      %v781 = vld [vmem:[%s771 + $0x48] sm:$0xff]
      %v782 = vld [vmem:[%s771 + $0x50] sm:$0xff]
      %v783 = vld [vmem:[%s771 + $0x58] sm:$0xff]
      %v784 = vld [vmem:[%s771 + $0x60] sm:$0x3f]
      %v785 = vld [vmem:[%s771 + $0x68] sm:$0x3f]
      %v786 = vld [vmem:[%s771 + $0x70] sm:$0x3f]
      %v787 = vld [vmem:[%s771 + $0x78] sm:$0x3f]
      %v789 = vsel %vm216, %v784, 0
      %v792 = vsel %vm216, %v785, 0
      %v795 = vsel %vm216, %v786, 0
      %v798 = vsel %vm216, %v787, 0
      %800 = vmatprep.subr.mxu0 0.0
      %801 = vmatpush1.msra.mxu0 0.0
      %802 = vmatprep.subr.mxu0 0.0
      %803 = vmatpush1.msra.mxu0 0.0
      %804 = vmatprep.subr.mxu0 0.0
      %805 = vmatpush1.msra.mxu0 0.0
      %806 = vmatprep.subr.mxu0 0.0
      %807 = vmatpush1.msra.mxu0 0.0
      %808 = vmatprep.subr.mxu0 0.0
      %809 = vmatpush1.msra.mxu0 0.0
      %810 = vmatprep.subr.mxu0 0.0
      %811 = vmatpush1.msra.mxu0 0.0
      %812 = vmatprep.subr.mxu0 0.0
      %813 = vmatpush1.msra.mxu0 0.0
      %814 = vmatprep.subr.mxu0 0.0
      %815 = vmatpush1.msra.mxu0 0.0
      %816 = vmatprep.subr.mxu0 0.0
      %817 = vmatpush1.msra.mxu0 0.0
      %818 = vmatprep.subr.mxu0 0.0
      %819 = vmatpush1.msra.mxu0 0.0
      %820 = vmatprep.subr.mxu0 0.0
      %821 = vmatpush1.msra.mxu0 0.0
      %822 = vmatprep.subr.mxu0 0.0
      %823 = vmatpush1.msra.mxu0 0.0
      %824 = vmatprep.subr.mxu0 %v792
      %825 = vmatpush1.msra.mxu0 %v789
      %826 = vmatprep.subr.mxu0 %v781
      %827 = vmatpush1.msra.mxu0 %v780
      %828 = vmatprep.subr.mxu0 %v777
      %829 = vmatpush1.msra.mxu0 %v776
      %830 = vmatprep.subr.mxu0 %v773
      %831 = vmatpush1.msra.mxu0 %v772
      %832 = vmatprep.subr.mxu0 0.0
      %833 = vmatpush2.msra.mxu0 0.0
      %834 = vmatprep.subr.mxu0 0.0
      %835 = vmatpush2.msra.mxu0 0.0
      %836 = vmatprep.subr.mxu0 0.0
      %837 = vmatpush2.msra.mxu0 0.0
      %838 = vmatprep.subr.mxu0 0.0
      %839 = vmatpush2.msra.mxu0 0.0
      %840 = vmatprep.subr.mxu0 0.0
      %841 = vmatpush2.msra.mxu0 0.0
      %842 = vmatprep.subr.mxu0 0.0
      %843 = vmatpush2.msra.mxu0 0.0
      %844 = vmatprep.subr.mxu0 0.0
      %845 = vmatpush2.msra.mxu0 0.0
      %846 = vmatprep.subr.mxu0 0.0
      %847 = vmatpush2.msra.mxu0 0.0
      %848 = vmatprep.subr.mxu0 0.0
      %849 = vmatpush2.msra.mxu0 0.0
      %850 = vmatprep.subr.mxu0 0.0
      %851 = vmatpush2.msra.mxu0 0.0
      %852 = vmatprep.subr.mxu0 0.0
      %853 = vmatpush2.msra.mxu0 0.0
      %854 = vmatprep.subr.mxu0 0.0
      %855 = vmatpush2.msra.mxu0 0.0
      %856 = vmatprep.subr.mxu0 0.0
      %857 = vmatpush2.msra.mxu0 0.0
      %858 = vmatprep.subr.mxu0 0.0
      %859 = vmatpush2.msra.mxu0 0.0
      %860 = vmatprep.subr.mxu0 0.0
      %861 = vmatpush2.msra.mxu0 0.0
      %862 = vmatprep.subr.mxu0 0.0
      %863 = vmatpush2.msra.mxu0 0.0
      %864 = vmatprep.mubr.f32.mxu0 0.0
      %865 = vmatmul.mubr.f32.gmra.mxu0 %v211
      %v866 = vpop.f32.mrf.mxu0
      %v867 = vadd.f32 0.0, %v866
      %v868 = vpop.f32.mrf.mxu0
      %v869 = vadd.f32 0.0, %v868
      %870 = vmatprep.mubr.f32.mxu0 0.0
      %871 = vmatmul.mubr.f32.gmra.mxu0 %v214
      %v872 = vpop.f32.mrf.mxu0
      %v873 = vadd.f32 0.0, %v872
      %v874 = vpop.f32.mrf.mxu0
      %v875 = vadd.f32 0.0, %v874
      %876 = vdwg.mxu0
      %877 = vmatprep.subr.mxu0 0.0
      %878 = vmatpush1.msra.mxu0 0.0
      %879 = vmatprep.subr.mxu0 0.0
      %880 = vmatpush1.msra.mxu0 0.0
      %881 = vmatprep.subr.mxu0 0.0
      %882 = vmatpush1.msra.mxu0 0.0
      %883 = vmatprep.subr.mxu0 0.0
      %884 = vmatpush1.msra.mxu0 0.0
      %885 = vmatprep.subr.mxu0 0.0
      %886 = vmatpush1.msra.mxu0 0.0
      %887 = vmatprep.subr.mxu0 0.0
      %888 = vmatpush1.msra.mxu0 0.0
      %889 = vmatprep.subr.mxu0 0.0
      %890 = vmatpush1.msra.mxu0 0.0
      %891 = vmatprep.subr.mxu0 0.0
      %892 = vmatpush1.msra.mxu0 0.0
      %893 = vmatprep.subr.mxu0 0.0
      %894 = vmatpush1.msra.mxu0 0.0
      %895 = vmatprep.subr.mxu0 0.0
      %896 = vmatpush1.msra.mxu0 0.0
      %897 = vmatprep.subr.mxu0 0.0
      %898 = vmatpush1.msra.mxu0 0.0
      %899 = vmatprep.subr.mxu0 0.0
      %900 = vmatpush1.msra.mxu0 0.0
      %901 = vmatprep.subr.mxu0 %v798
      %902 = vmatpush1.msra.mxu0 %v795
      %903 = vmatprep.subr.mxu0 %v783
      %904 = vmatpush1.msra.mxu0 %v782
      %905 = vmatprep.subr.mxu0 %v779
      %906 = vmatpush1.msra.mxu0 %v778
      %907 = vmatprep.subr.mxu0 %v775
      %908 = vmatpush1.msra.mxu0 %v774
      %909 = vmatprep.subr.mxu0 0.0
      %910 = vmatpush2.msra.mxu0 0.0
      %911 = vmatprep.subr.mxu0 0.0
      %912 = vmatpush2.msra.mxu0 0.0
      %913 = vmatprep.subr.mxu0 0.0
      %914 = vmatpush2.msra.mxu0 0.0
      %915 = vmatprep.subr.mxu0 0.0
      %916 = vmatpush2.msra.mxu0 0.0
      %917 = vmatprep.subr.mxu0 0.0
      %918 = vmatpush2.msra.mxu0 0.0
      %919 = vmatprep.subr.mxu0 0.0
      %920 = vmatpush2.msra.mxu0 0.0
      %921 = vmatprep.subr.mxu0 0.0
      %922 = vmatpush2.msra.mxu0 0.0
      %923 = vmatprep.subr.mxu0 0.0
      %924 = vmatpush2.msra.mxu0 0.0
      %925 = vmatprep.subr.mxu0 0.0
      %926 = vmatpush2.msra.mxu0 0.0
      %927 = vmatprep.subr.mxu0 0.0
      %928 = vmatpush2.msra.mxu0 0.0
      %929 = vmatprep.subr.mxu0 0.0
      %930 = vmatpush2.msra.mxu0 0.0
      %931 = vmatprep.subr.mxu0 0.0
      %932 = vmatpush2.msra.mxu0 0.0
      %933 = vmatprep.subr.mxu0 0.0
      %934 = vmatpush2.msra.mxu0 0.0
      %935 = vmatprep.subr.mxu0 0.0
      %936 = vmatpush2.msra.mxu0 0.0
      %937 = vmatprep.subr.mxu0 0.0
      %938 = vmatpush2.msra.mxu0 0.0
      %939 = vmatprep.subr.mxu0 0.0
      %940 = vmatpush2.msra.mxu0 0.0
      %941 = vmatprep.mubr.f32.mxu0 0.0
      %942 = vmatmul.mubr.f32.gmra.mxu0 %v211
      %v943 = vpop.f32.mrf.mxu0
      %v944 = vadd.f32 0.0, %v943
      %v945 = vpop.f32.mrf.mxu0
      %v946 = vadd.f32 0.0, %v945
      %947 = vmatprep.mubr.f32.mxu0 0.0
      %948 = vmatmul.mubr.f32.gmra.mxu0 %v214
      %v949 = vpop.f32.mrf.mxu0
      %v950 = vadd.f32 0.0, %v949
      %v951 = vpop.f32.mrf.mxu0
      %v952 = vadd.f32 0.0, %v951
      %953 = vdwg.mxu0
      %v955 = vsel %vm216, %v767, 0
      %v958 = vsel %vm216, %v768, 0
      %v961 = vsel %vm216, %v769, 0
      %v964 = vsel %vm216, %v770, 0
      %966 = vmatprep.subr.mxu0 0.0
      %967 = vmatpush1.msra.mxu0 0.0
      %968 = vmatprep.subr.mxu0 0.0
      %969 = vmatpush1.msra.mxu0 0.0
      %970 = vmatprep.subr.mxu0 0.0
      %971 = vmatpush1.msra.mxu0 0.0
      %972 = vmatprep.subr.mxu0 0.0
      %973 = vmatpush1.msra.mxu0 0.0
      %974 = vmatprep.subr.mxu0 0.0
      %975 = vmatpush1.msra.mxu0 0.0
      %976 = vmatprep.subr.mxu0 0.0
      %977 = vmatpush1.msra.mxu0 0.0
      %978 = vmatprep.subr.mxu0 0.0
      %979 = vmatpush1.msra.mxu0 0.0
      %980 = vmatprep.subr.mxu0 0.0
      %981 = vmatpush1.msra.mxu0 0.0
      %982 = vmatprep.subr.mxu0 0.0
      %983 = vmatpush1.msra.mxu0 0.0
      %984 = vmatprep.subr.mxu0 0.0
      %985 = vmatpush1.msra.mxu0 0.0
      %986 = vmatprep.subr.mxu0 0.0
      %987 = vmatpush1.msra.mxu0 0.0
      %988 = vmatprep.subr.mxu0 0.0
      %989 = vmatpush1.msra.mxu0 0.0
      %990 = vmatprep.subr.mxu0 %v958
      %991 = vmatpush1.msra.mxu0 %v955
      %992 = vmatprep.subr.mxu0 %v764
      %993 = vmatpush1.msra.mxu0 %v763
      %994 = vmatprep.subr.mxu0 %v760
      %995 = vmatpush1.msra.mxu0 %v759
      %996 = vmatprep.subr.mxu0 %v756
      %997 = vmatpush1.msra.mxu0 %v755
      %998 = vmatprep.subr.mxu0 0.0
      %999 = vmatpush2.msra.mxu0 0.0
      %1000 = vmatprep.subr.mxu0 0.0
      %1001 = vmatpush2.msra.mxu0 0.0
      %1002 = vmatprep.subr.mxu0 0.0
      %1003 = vmatpush2.msra.mxu0 0.0
      %1004 = vmatprep.subr.mxu0 0.0
      %1005 = vmatpush2.msra.mxu0 0.0
      %1006 = vmatprep.subr.mxu0 0.0
      %1007 = vmatpush2.msra.mxu0 0.0
      %1008 = vmatprep.subr.mxu0 0.0
      %1009 = vmatpush2.msra.mxu0 0.0
      %1010 = vmatprep.subr.mxu0 0.0
      %1011 = vmatpush2.msra.mxu0 0.0
      %1012 = vmatprep.subr.mxu0 0.0
      %1013 = vmatpush2.msra.mxu0 0.0
      %1014 = vmatprep.subr.mxu0 0.0
      %1015 = vmatpush2.msra.mxu0 0.0
      %1016 = vmatprep.subr.mxu0 0.0
      %1017 = vmatpush2.msra.mxu0 0.0
      %1018 = vmatprep.subr.mxu0 0.0
      %1019 = vmatpush2.msra.mxu0 0.0
      %1020 = vmatprep.subr.mxu0 0.0
      %1021 = vmatpush2.msra.mxu0 0.0
      %1022 = vmatprep.subr.mxu0 0.0
      %1023 = vmatpush2.msra.mxu0 0.0
      %1024 = vmatprep.subr.mxu0 0.0
      %1025 = vmatpush2.msra.mxu0 0.0
      %1026 = vmatprep.subr.mxu0 0.0
      %1027 = vmatpush2.msra.mxu0 0.0
      %1028 = vmatprep.subr.mxu0 0.0
      %1029 = vmatpush2.msra.mxu0 0.0
      %1030 = vmatprep.mubr.f32.mxu0 0.0
      %1031 = vmatmul.mubr.f32.gmra.mxu0 %v384
      %v1032 = vpop.f32.mrf.mxu0
      %v1033 = vadd.f32 %v867, %v1032
      %v1034 = vpop.f32.mrf.mxu0
      %v1035 = vadd.f32 %v869, %v1034
      %1036 = vmatprep.mubr.f32.mxu0 0.0
      %1037 = vmatmul.mubr.f32.gmra.mxu0 %v387
      %v1038 = vpop.f32.mrf.mxu0
      %v1039 = vadd.f32 %v873, %v1038
      %v1040 = vpop.f32.mrf.mxu0
      %v1041 = vadd.f32 %v875, %v1040
      %1042 = vdwg.mxu0
      %1043 = vmatprep.subr.mxu0 0.0
      %1044 = vmatpush1.msra.mxu0 0.0
      %1045 = vmatprep.subr.mxu0 0.0
      %1046 = vmatpush1.msra.mxu0 0.0
      %1047 = vmatprep.subr.mxu0 0.0
      %1048 = vmatpush1.msra.mxu0 0.0
      %1049 = vmatprep.subr.mxu0 0.0
      %1050 = vmatpush1.msra.mxu0 0.0
      %1051 = vmatprep.subr.mxu0 0.0
      %1052 = vmatpush1.msra.mxu0 0.0
      %1053 = vmatprep.subr.mxu0 0.0
      %1054 = vmatpush1.msra.mxu0 0.0
      %1055 = vmatprep.subr.mxu0 0.0
      %1056 = vmatpush1.msra.mxu0 0.0
      %1057 = vmatprep.subr.mxu0 0.0
      %1058 = vmatpush1.msra.mxu0 0.0
      %1059 = vmatprep.subr.mxu0 0.0
      %1060 = vmatpush1.msra.mxu0 0.0
      %1061 = vmatprep.subr.mxu0 0.0
      %1062 = vmatpush1.msra.mxu0 0.0
      %1063 = vmatprep.subr.mxu0 0.0
      %1064 = vmatpush1.msra.mxu0 0.0
      %1065 = vmatprep.subr.mxu0 0.0
      %1066 = vmatpush1.msra.mxu0 0.0
      %1067 = vmatprep.subr.mxu0 %v964
      %1068 = vmatpush1.msra.mxu0 %v961
      %1069 = vmatprep.subr.mxu0 %v766
      %1070 = vmatpush1.msra.mxu0 %v765
      %1071 = vmatprep.subr.mxu0 %v762
      %1072 = vmatpush1.msra.mxu0 %v761
      %1073 = vmatprep.subr.mxu0 %v758
      %1074 = vmatpush1.msra.mxu0 %v757
      %1075 = vmatprep.subr.mxu0 0.0
      %1076 = vmatpush2.msra.mxu0 0.0
      %1077 = vmatprep.subr.mxu0 0.0
      %1078 = vmatpush2.msra.mxu0 0.0
      %1079 = vmatprep.subr.mxu0 0.0
      %1080 = vmatpush2.msra.mxu0 0.0
      %1081 = vmatprep.subr.mxu0 0.0
      %1082 = vmatpush2.msra.mxu0 0.0
      %1083 = vmatprep.subr.mxu0 0.0
      %1084 = vmatpush2.msra.mxu0 0.0
      %1085 = vmatprep.subr.mxu0 0.0
      %1086 = vmatpush2.msra.mxu0 0.0
      %1087 = vmatprep.subr.mxu0 0.0
      %1088 = vmatpush2.msra.mxu0 0.0
      %1089 = vmatprep.subr.mxu0 0.0
      %1090 = vmatpush2.msra.mxu0 0.0
      %1091 = vmatprep.subr.mxu0 0.0
      %1092 = vmatpush2.msra.mxu0 0.0
      %1093 = vmatprep.subr.mxu0 0.0
      %1094 = vmatpush2.msra.mxu0 0.0
      %1095 = vmatprep.subr.mxu0 0.0
      %1096 = vmatpush2.msra.mxu0 0.0
      %1097 = vmatprep.subr.mxu0 0.0
      %1098 = vmatpush2.msra.mxu0 0.0
      %1099 = vmatprep.subr.mxu0 0.0
      %1100 = vmatpush2.msra.mxu0 0.0
      %1101 = vmatprep.subr.mxu0 0.0
      %1102 = vmatpush2.msra.mxu0 0.0
      %1103 = vmatprep.subr.mxu0 0.0
      %1104 = vmatpush2.msra.mxu0 0.0
      %1105 = vmatprep.subr.mxu0 0.0
      %1106 = vmatpush2.msra.mxu0 0.0
      %1107 = vmatprep.mubr.f32.mxu0 0.0
      %1108 = vmatmul.mubr.f32.gmra.mxu0 %v384
      %v1109 = vpop.f32.mrf.mxu0
      %v1110 = vadd.f32 %v944, %v1109
      %v1111 = vpop.f32.mrf.mxu0
      %v1112 = vadd.f32 %v946, %v1111
      %1113 = vmatprep.mubr.f32.mxu0 0.0
      %1114 = vmatmul.mubr.f32.gmra.mxu0 %v387
      %v1115 = vpop.f32.mrf.mxu0
      %v1116 = vadd.f32 %v950, %v1115
      %v1117 = vpop.f32.mrf.mxu0
      %v1118 = vadd.f32 %v952, %v1117
      %1119 = vdwg.mxu0
      %s1120 = scalar_lea.vmem %s1, 640
      %v1121 = vld [vmem:[%s1120] sm:$0xff]
      %v1122 = vld [vmem:[%s1120 + $0x8] sm:$0xff]
      %v1123 = vld [vmem:[%s1120 + $0x10] sm:$0xff]
      %v1124 = vld [vmem:[%s1120 + $0x18] sm:$0xff]
      %v1125 = vld [vmem:[%s1120 + $0x20] sm:$0xff]
      %v1126 = vld [vmem:[%s1120 + $0x28] sm:$0xff]
      %v1127 = vld [vmem:[%s1120 + $0x30] sm:$0xff]
      %v1128 = vld [vmem:[%s1120 + $0x38] sm:$0xff]
      %v1129 = vld [vmem:[%s1120 + $0x40] sm:$0xff]
      %v1130 = vld [vmem:[%s1120 + $0x48] sm:$0xff]
      %v1131 = vld [vmem:[%s1120 + $0x50] sm:$0xff]
      %v1132 = vld [vmem:[%s1120 + $0x58] sm:$0xff]
      %v1133 = vld [vmem:[%s1120 + $0x60] sm:$0x3f]
      %v1134 = vld [vmem:[%s1120 + $0x68] sm:$0x3f]
      %v1135 = vld [vmem:[%s1120 + $0x70] sm:$0x3f]
      %v1136 = vld [vmem:[%s1120 + $0x78] sm:$0x3f]
      %v1138 = vsel %vm216, %v1133, 0
      %v1141 = vsel %vm216, %v1134, 0
      %v1144 = vsel %vm216, %v1135, 0
      %v1147 = vsel %vm216, %v1136, 0
      %1149 = vmatprep.subr.mxu0 0.0
      %1150 = vmatpush1.msra.mxu0 0.0
      %1151 = vmatprep.subr.mxu0 0.0
      %1152 = vmatpush1.msra.mxu0 0.0
      %1153 = vmatprep.subr.mxu0 0.0
      %1154 = vmatpush1.msra.mxu0 0.0
      %1155 = vmatprep.subr.mxu0 0.0
      %1156 = vmatpush1.msra.mxu0 0.0
      %1157 = vmatprep.subr.mxu0 0.0
      %1158 = vmatpush1.msra.mxu0 0.0
      %1159 = vmatprep.subr.mxu0 0.0
      %1160 = vmatpush1.msra.mxu0 0.0
      %1161 = vmatprep.subr.mxu0 0.0
      %1162 = vmatpush1.msra.mxu0 0.0
      %1163 = vmatprep.subr.mxu0 0.0
      %1164 = vmatpush1.msra.mxu0 0.0
      %1165 = vmatprep.subr.mxu0 0.0
      %1166 = vmatpush1.msra.mxu0 0.0
      %1167 = vmatprep.subr.mxu0 0.0
      %1168 = vmatpush1.msra.mxu0 0.0
      %1169 = vmatprep.subr.mxu0 0.0
      %1170 = vmatpush1.msra.mxu0 0.0
      %1171 = vmatprep.subr.mxu0 0.0
      %1172 = vmatpush1.msra.mxu0 0.0
      %1173 = vmatprep.subr.mxu0 %v1141
      %1174 = vmatpush1.msra.mxu0 %v1138
      %1175 = vmatprep.subr.mxu0 %v1130
      %1176 = vmatpush1.msra.mxu0 %v1129
      %1177 = vmatprep.subr.mxu0 %v1126
      %1178 = vmatpush1.msra.mxu0 %v1125
      %1179 = vmatprep.subr.mxu0 %v1122
      %1180 = vmatpush1.msra.mxu0 %v1121
      %1181 = vmatprep.subr.mxu0 0.0
      %1182 = vmatpush2.msra.mxu0 0.0
      %1183 = vmatprep.subr.mxu0 0.0
      %1184 = vmatpush2.msra.mxu0 0.0
      %1185 = vmatprep.subr.mxu0 0.0
      %1186 = vmatpush2.msra.mxu0 0.0
      %1187 = vmatprep.subr.mxu0 0.0
      %1188 = vmatpush2.msra.mxu0 0.0
      %1189 = vmatprep.subr.mxu0 0.0
      %1190 = vmatpush2.msra.mxu0 0.0
      %1191 = vmatprep.subr.mxu0 0.0
      %1192 = vmatpush2.msra.mxu0 0.0
      %1193 = vmatprep.subr.mxu0 0.0
      %1194 = vmatpush2.msra.mxu0 0.0
      %1195 = vmatprep.subr.mxu0 0.0
      %1196 = vmatpush2.msra.mxu0 0.0
      %1197 = vmatprep.subr.mxu0 0.0
      %1198 = vmatpush2.msra.mxu0 0.0
      %1199 = vmatprep.subr.mxu0 0.0
      %1200 = vmatpush2.msra.mxu0 0.0
      %1201 = vmatprep.subr.mxu0 0.0
      %1202 = vmatpush2.msra.mxu0 0.0
      %1203 = vmatprep.subr.mxu0 0.0
      %1204 = vmatpush2.msra.mxu0 0.0
      %1205 = vmatprep.subr.mxu0 0.0
      %1206 = vmatpush2.msra.mxu0 0.0
      %1207 = vmatprep.subr.mxu0 0.0
      %1208 = vmatpush2.msra.mxu0 0.0
      %1209 = vmatprep.subr.mxu0 0.0
      %1210 = vmatpush2.msra.mxu0 0.0
      %1211 = vmatprep.subr.mxu0 0.0
      %1212 = vmatpush2.msra.mxu0 0.0
      %1213 = vmatprep.mubr.f32.mxu0 0.0
      %1214 = vmatmul.mubr.f32.gmra.mxu0 %v575
      %v1215 = vpop.f32.mrf.mxu0
      %v1216 = vadd.f32 0.0, %v1215
      %v1217 = vpop.f32.mrf.mxu0
      %v1218 = vadd.f32 0.0, %v1217
      %1219 = vmatprep.mubr.f32.mxu0 0.0
      %1220 = vmatmul.mubr.f32.gmra.mxu0 %v578
      %v1221 = vpop.f32.mrf.mxu0
      %v1222 = vadd.f32 0.0, %v1221
      %v1223 = vpop.f32.mrf.mxu0
      %v1224 = vadd.f32 0.0, %v1223
      %1225 = vdwg.mxu0
      %1226 = vmatprep.subr.mxu0 0.0
      %1227 = vmatpush1.msra.mxu0 0.0
      %1228 = vmatprep.subr.mxu0 0.0
      %1229 = vmatpush1.msra.mxu0 0.0
      %1230 = vmatprep.subr.mxu0 0.0
      %1231 = vmatpush1.msra.mxu0 0.0
      %1232 = vmatprep.subr.mxu0 0.0
      %1233 = vmatpush1.msra.mxu0 0.0
      %1234 = vmatprep.subr.mxu0 0.0
      %1235 = vmatpush1.msra.mxu0 0.0
      %1236 = vmatprep.subr.mxu0 0.0
      %1237 = vmatpush1.msra.mxu0 0.0
      %1238 = vmatprep.subr.mxu0 0.0
      %1239 = vmatpush1.msra.mxu0 0.0
      %1240 = vmatprep.subr.mxu0 0.0
      %1241 = vmatpush1.msra.mxu0 0.0
      %1242 = vmatprep.subr.mxu0 0.0
      %1243 = vmatpush1.msra.mxu0 0.0
      %1244 = vmatprep.subr.mxu0 0.0
      %1245 = vmatpush1.msra.mxu0 0.0
      %1246 = vmatprep.subr.mxu0 0.0
      %1247 = vmatpush1.msra.mxu0 0.0
      %1248 = vmatprep.subr.mxu0 0.0
      %1249 = vmatpush1.msra.mxu0 0.0
      %1250 = vmatprep.subr.mxu0 %v1147
      %1251 = vmatpush1.msra.mxu0 %v1144
      %1252 = vmatprep.subr.mxu0 %v1132
      %1253 = vmatpush1.msra.mxu0 %v1131
      %1254 = vmatprep.subr.mxu0 %v1128
      %1255 = vmatpush1.msra.mxu0 %v1127
      %1256 = vmatprep.subr.mxu0 %v1124
      %1257 = vmatpush1.msra.mxu0 %v1123
      %1258 = vmatprep.subr.mxu0 0.0
      %1259 = vmatpush2.msra.mxu0 0.0
      %1260 = vmatprep.subr.mxu0 0.0
      %1261 = vmatpush2.msra.mxu0 0.0
      %1262 = vmatprep.subr.mxu0 0.0
      %1263 = vmatpush2.msra.mxu0 0.0
      %1264 = vmatprep.subr.mxu0 0.0
      %1265 = vmatpush2.msra.mxu0 0.0
      %1266 = vmatprep.subr.mxu0 0.0
      %1267 = vmatpush2.msra.mxu0 0.0
      %1268 = vmatprep.subr.mxu0 0.0
      %1269 = vmatpush2.msra.mxu0 0.0
      %1270 = vmatprep.subr.mxu0 0.0
      %1271 = vmatpush2.msra.mxu0 0.0
      %1272 = vmatprep.subr.mxu0 0.0
      %1273 = vmatpush2.msra.mxu0 0.0
      %1274 = vmatprep.subr.mxu0 0.0
      %1275 = vmatpush2.msra.mxu0 0.0
      %1276 = vmatprep.subr.mxu0 0.0
      %1277 = vmatpush2.msra.mxu0 0.0
      %1278 = vmatprep.subr.mxu0 0.0
      %1279 = vmatpush2.msra.mxu0 0.0
      %1280 = vmatprep.subr.mxu0 0.0
      %1281 = vmatpush2.msra.mxu0 0.0
      %1282 = vmatprep.subr.mxu0 0.0
      %1283 = vmatpush2.msra.mxu0 0.0
      %1284 = vmatprep.subr.mxu0 0.0
      %1285 = vmatpush2.msra.mxu0 0.0
      %1286 = vmatprep.subr.mxu0 0.0
      %1287 = vmatpush2.msra.mxu0 0.0
      %1288 = vmatprep.subr.mxu0 0.0
      %1289 = vmatpush2.msra.mxu0 0.0
      %1290 = vmatprep.mubr.f32.mxu0 0.0
      %1291 = vmatmul.mubr.f32.gmra.mxu0 %v575
      %v1292 = vpop.f32.mrf.mxu0
      %v1293 = vadd.f32 0.0, %v1292
      %v1294 = vpop.f32.mrf.mxu0
      %v1295 = vadd.f32 0.0, %v1294
      %1296 = vmatprep.mubr.f32.mxu0 0.0
      %1297 = vmatmul.mubr.f32.gmra.mxu0 %v578
      %v1298 = vpop.f32.mrf.mxu0
      %v1299 = vadd.f32 0.0, %v1298
      %v1300 = vpop.f32.mrf.mxu0
      %v1301 = vadd.f32 0.0, %v1300
      %1302 = vdwg.mxu0
      %v1303 = vadd.f32 %v1033, %v1216
      %v1304 = vadd.f32 %v1035, %v1218
      %v1305 = vadd.f32 %v1110, %v1293
      %v1306 = vadd.f32 %v1112, %v1295
      %v1307 = vadd.f32 %v1039, %v1222
      %v1308 = vadd.f32 %v1041, %v1224
      %v1309 = vadd.f32 %v1116, %v1299
      %v1310 = vadd.f32 %v1118, %v1301
      %1311 = vmatprep.subr.mxu0 0.0
      %1312 = vmatpush1.msra.mxu0 0.0
      %1313 = vmatprep.subr.mxu0 0.0
      %1314 = vmatpush1.msra.mxu0 0.0
      %1315 = vmatprep.subr.mxu0 0.0
      %1316 = vmatpush1.msra.mxu0 0.0
      %1317 = vmatprep.subr.mxu0 0.0
      %1318 = vmatpush1.msra.mxu0 0.0
      %1319 = vmatprep.subr.mxu0 0.0
      %1320 = vmatpush1.msra.mxu0 0.0
      %1321 = vmatprep.subr.mxu0 0.0
      %1322 = vmatpush1.msra.mxu0 0.0
      %1323 = vmatprep.subr.mxu0 0.0
      %1324 = vmatpush1.msra.mxu0 0.0
      %1325 = vmatprep.subr.mxu0 0.0
      %1326 = vmatpush1.msra.mxu0 0.0
      %1327 = vmatprep.subr.mxu0 0.0
      %1328 = vmatpush1.msra.mxu0 0.0
      %1329 = vmatprep.subr.mxu0 0.0
      %1330 = vmatpush1.msra.mxu0 0.0
      %1331 = vmatprep.subr.mxu0 0.0
      %1332 = vmatpush1.msra.mxu0 0.0
      %1333 = vmatprep.subr.mxu0 0.0
      %1334 = vmatpush1.msra.mxu0 0.0
      %1335 = vmatprep.subr.mxu0 %v221
      %1336 = vmatpush1.msra.mxu0 %v218
      %1337 = vmatprep.subr.mxu0 %v202
      %1338 = vmatpush1.msra.mxu0 %v201
      %1339 = vmatprep.subr.mxu0 %v198
      %1340 = vmatpush1.msra.mxu0 %v197
      %1341 = vmatprep.subr.mxu0 %v194
      %1342 = vmatpush1.msra.mxu0 %v193
      %1343 = vmatprep.subr.mxu0 0.0
      %1344 = vmatpush2.msra.mxu0 0.0
      %1345 = vmatprep.subr.mxu0 0.0
      %1346 = vmatpush2.msra.mxu0 0.0
      %1347 = vmatprep.subr.mxu0 0.0
      %1348 = vmatpush2.msra.mxu0 0.0
      %1349 = vmatprep.subr.mxu0 0.0
      %1350 = vmatpush2.msra.mxu0 0.0
      %1351 = vmatprep.subr.mxu0 0.0
      %1352 = vmatpush2.msra.mxu0 0.0
      %1353 = vmatprep.subr.mxu0 0.0
      %1354 = vmatpush2.msra.mxu0 0.0
      %1355 = vmatprep.subr.mxu0 0.0
      %1356 = vmatpush2.msra.mxu0 0.0
      %1357 = vmatprep.subr.mxu0 0.0
      %1358 = vmatpush2.msra.mxu0 0.0
      %1359 = vmatprep.subr.mxu0 0.0
      %1360 = vmatpush2.msra.mxu0 0.0
      %1361 = vmatprep.subr.mxu0 0.0
      %1362 = vmatpush2.msra.mxu0 0.0
      %1363 = vmatprep.subr.mxu0 0.0
      %1364 = vmatpush2.msra.mxu0 0.0
      %1365 = vmatprep.subr.mxu0 0.0
      %1366 = vmatpush2.msra.mxu0 0.0
      %1367 = vmatprep.subr.mxu0 0.0
      %1368 = vmatpush2.msra.mxu0 0.0
      %1369 = vmatprep.subr.mxu0 0.0
      %1370 = vmatpush2.msra.mxu0 0.0
      %1371 = vmatprep.subr.mxu0 0.0
      %1372 = vmatpush2.msra.mxu0 0.0
      %1373 = vmatprep.subr.mxu0 0.0
      %1374 = vmatpush2.msra.mxu0 0.0
      %1375 = vmatprep.mubr.f32.mxu0 0.0
      %1376 = vmatmul.mubr.f32.gmra.mxu0 %v575
      %v1377 = vpop.f32.mrf.mxu0
      %v1378 = vadd.f32 0.0, %v1377
      %v1379 = vpop.f32.mrf.mxu0
      %v1380 = vadd.f32 0.0, %v1379
      %1381 = vmatprep.mubr.f32.mxu0 0.0
      %1382 = vmatmul.mubr.f32.gmra.mxu0 %v578
      %v1383 = vpop.f32.mrf.mxu0
      %v1384 = vadd.f32 0.0, %v1383
      %v1385 = vpop.f32.mrf.mxu0
      %v1386 = vadd.f32 0.0, %v1385
      %1387 = vdwg.mxu0
      %1388 = vmatprep.subr.mxu0 0.0
      %1389 = vmatpush1.msra.mxu0 0.0
      %1390 = vmatprep.subr.mxu0 0.0
      %1391 = vmatpush1.msra.mxu0 0.0
      %1392 = vmatprep.subr.mxu0 0.0
      %1393 = vmatpush1.msra.mxu0 0.0
      %1394 = vmatprep.subr.mxu0 0.0
      %1395 = vmatpush1.msra.mxu0 0.0
      %1396 = vmatprep.subr.mxu0 0.0
      %1397 = vmatpush1.msra.mxu0 0.0
      %1398 = vmatprep.subr.mxu0 0.0
      %1399 = vmatpush1.msra.mxu0 0.0
      %1400 = vmatprep.subr.mxu0 0.0
      %1401 = vmatpush1.msra.mxu0 0.0
      %1402 = vmatprep.subr.mxu0 0.0
      %1403 = vmatpush1.msra.mxu0 0.0
      %1404 = vmatprep.subr.mxu0 0.0
      %1405 = vmatpush1.msra.mxu0 0.0
      %1406 = vmatprep.subr.mxu0 0.0
      %1407 = vmatpush1.msra.mxu0 0.0
      %1408 = vmatprep.subr.mxu0 0.0
      %1409 = vmatpush1.msra.mxu0 0.0
      %1410 = vmatprep.subr.mxu0 0.0
      %1411 = vmatpush1.msra.mxu0 0.0
      %1412 = vmatprep.subr.mxu0 %v227
      %1413 = vmatpush1.msra.mxu0 %v224
      %1414 = vmatprep.subr.mxu0 %v204
      %1415 = vmatpush1.msra.mxu0 %v203
      %1416 = vmatprep.subr.mxu0 %v200
      %1417 = vmatpush1.msra.mxu0 %v199
      %1418 = vmatprep.subr.mxu0 %v196
      %1419 = vmatpush1.msra.mxu0 %v195
      %1420 = vmatprep.subr.mxu0 0.0
      %1421 = vmatpush2.msra.mxu0 0.0
      %1422 = vmatprep.subr.mxu0 0.0
      %1423 = vmatpush2.msra.mxu0 0.0
      %1424 = vmatprep.subr.mxu0 0.0
      %1425 = vmatpush2.msra.mxu0 0.0
      %1426 = vmatprep.subr.mxu0 0.0
      %1427 = vmatpush2.msra.mxu0 0.0
      %1428 = vmatprep.subr.mxu0 0.0
      %1429 = vmatpush2.msra.mxu0 0.0
      %1430 = vmatprep.subr.mxu0 0.0
      %1431 = vmatpush2.msra.mxu0 0.0
      %1432 = vmatprep.subr.mxu0 0.0
      %1433 = vmatpush2.msra.mxu0 0.0
      %1434 = vmatprep.subr.mxu0 0.0
      %1435 = vmatpush2.msra.mxu0 0.0
      %1436 = vmatprep.subr.mxu0 0.0
      %1437 = vmatpush2.msra.mxu0 0.0
      %1438 = vmatprep.subr.mxu0 0.0
      %1439 = vmatpush2.msra.mxu0 0.0
      %1440 = vmatprep.subr.mxu0 0.0
      %1441 = vmatpush2.msra.mxu0 0.0
      %1442 = vmatprep.subr.mxu0 0.0
      %1443 = vmatpush2.msra.mxu0 0.0
      %1444 = vmatprep.subr.mxu0 0.0
      %1445 = vmatpush2.msra.mxu0 0.0
      %1446 = vmatprep.subr.mxu0 0.0
      %1447 = vmatpush2.msra.mxu0 0.0
      %1448 = vmatprep.subr.mxu0 0.0
      %1449 = vmatpush2.msra.mxu0 0.0
      %1450 = vmatprep.subr.mxu0 0.0
      %1451 = vmatpush2.msra.mxu0 0.0
      %1452 = vmatprep.mubr.f32.mxu0 0.0
      %1453 = vmatmul.mubr.f32.gmra.mxu0 %v575
      %v1454 = vpop.f32.mrf.mxu0
      %v1455 = vadd.f32 0.0, %v1454
      %v1456 = vpop.f32.mrf.mxu0
      %v1457 = vadd.f32 0.0, %v1456
      %1458 = vmatprep.mubr.f32.mxu0 0.0
      %1459 = vmatmul.mubr.f32.gmra.mxu0 %v578
      %v1460 = vpop.f32.mrf.mxu0
      %v1461 = vadd.f32 0.0, %v1460
      %v1462 = vpop.f32.mrf.mxu0
      %v1463 = vadd.f32 0.0, %v1462
      %1464 = vdwg.mxu0
      %1465 = vmatprep.subr.mxu0 0.0
      %1466 = vmatpush1.msra.mxu0 0.0
      %1467 = vmatprep.subr.mxu0 0.0
      %1468 = vmatpush1.msra.mxu0 0.0
      %1469 = vmatprep.subr.mxu0 0.0
      %1470 = vmatpush1.msra.mxu0 0.0
      %1471 = vmatprep.subr.mxu0 0.0
      %1472 = vmatpush1.msra.mxu0 0.0
      %1473 = vmatprep.subr.mxu0 0.0
      %1474 = vmatpush1.msra.mxu0 0.0
      %1475 = vmatprep.subr.mxu0 0.0
      %1476 = vmatpush1.msra.mxu0 0.0
      %1477 = vmatprep.subr.mxu0 0.0
      %1478 = vmatpush1.msra.mxu0 0.0
      %1479 = vmatprep.subr.mxu0 0.0
      %1480 = vmatpush1.msra.mxu0 0.0
      %1481 = vmatprep.subr.mxu0 0.0
      %1482 = vmatpush1.msra.mxu0 0.0
      %1483 = vmatprep.subr.mxu0 0.0
      %1484 = vmatpush1.msra.mxu0 0.0
      %1485 = vmatprep.subr.mxu0 0.0
      %1486 = vmatpush1.msra.mxu0 0.0
      %1487 = vmatprep.subr.mxu0 0.0
      %1488 = vmatpush1.msra.mxu0 0.0
      %1489 = vmatprep.subr.mxu0 %v393
      %1490 = vmatpush1.msra.mxu0 %v390
      %1491 = vmatprep.subr.mxu0 %v182
      %1492 = vmatpush1.msra.mxu0 %v181
      %1493 = vmatprep.subr.mxu0 %v178
      %1494 = vmatpush1.msra.mxu0 %v177
      %1495 = vmatprep.subr.mxu0 %v174
      %1496 = vmatpush1.msra.mxu0 %v173
      %1497 = vmatprep.subr.mxu0 0.0
      %1498 = vmatpush2.msra.mxu0 0.0
      %1499 = vmatprep.subr.mxu0 0.0
      %1500 = vmatpush2.msra.mxu0 0.0
      %1501 = vmatprep.subr.mxu0 0.0
      %1502 = vmatpush2.msra.mxu0 0.0
      %1503 = vmatprep.subr.mxu0 0.0
      %1504 = vmatpush2.msra.mxu0 0.0
      %1505 = vmatprep.subr.mxu0 0.0
      %1506 = vmatpush2.msra.mxu0 0.0
      %1507 = vmatprep.subr.mxu0 0.0
      %1508 = vmatpush2.msra.mxu0 0.0
      %1509 = vmatprep.subr.mxu0 0.0
      %1510 = vmatpush2.msra.mxu0 0.0
      %1511 = vmatprep.subr.mxu0 0.0
      %1512 = vmatpush2.msra.mxu0 0.0
      %1513 = vmatprep.subr.mxu0 0.0
      %1514 = vmatpush2.msra.mxu0 0.0
      %1515 = vmatprep.subr.mxu0 0.0
      %1516 = vmatpush2.msra.mxu0 0.0
      %1517 = vmatprep.subr.mxu0 0.0
      %1518 = vmatpush2.msra.mxu0 0.0
      %1519 = vmatprep.subr.mxu0 0.0
      %1520 = vmatpush2.msra.mxu0 0.0
      %1521 = vmatprep.subr.mxu0 0.0
      %1522 = vmatpush2.msra.mxu0 0.0
      %1523 = vmatprep.subr.mxu0 0.0
      %1524 = vmatpush2.msra.mxu0 0.0
      %1525 = vmatprep.subr.mxu0 0.0
      %1526 = vmatpush2.msra.mxu0 0.0
      %1527 = vmatprep.subr.mxu0 0.0
      %1528 = vmatpush2.msra.mxu0 0.0
      %1529 = vmatprep.mubr.f32.mxu0 0.0
      %1530 = vmatmul.mubr.f32.gmra.mxu0 %v211
      %v1531 = vpop.f32.mrf.mxu0
      %v1532 = vadd.f32 %v1378, %v1531
      %v1533 = vpop.f32.mrf.mxu0
      %v1534 = vadd.f32 %v1380, %v1533
      %1535 = vmatprep.mubr.f32.mxu0 0.0
      %1536 = vmatmul.mubr.f32.gmra.mxu0 %v214
      %v1537 = vpop.f32.mrf.mxu0
      %v1538 = vadd.f32 %v1384, %v1537
      %v1539 = vpop.f32.mrf.mxu0
      %v1540 = vadd.f32 %v1386, %v1539
      %1541 = vdwg.mxu0
      %1542 = vmatprep.subr.mxu0 0.0
      %1543 = vmatpush1.msra.mxu0 0.0
      %1544 = vmatprep.subr.mxu0 0.0
      %1545 = vmatpush1.msra.mxu0 0.0
      %1546 = vmatprep.subr.mxu0 0.0
      %1547 = vmatpush1.msra.mxu0 0.0
      %1548 = vmatprep.subr.mxu0 0.0
      %1549 = vmatpush1.msra.mxu0 0.0
      %1550 = vmatprep.subr.mxu0 0.0
      %1551 = vmatpush1.msra.mxu0 0.0
      %1552 = vmatprep.subr.mxu0 0.0
      %1553 = vmatpush1.msra.mxu0 0.0
      %1554 = vmatprep.subr.mxu0 0.0
      %1555 = vmatpush1.msra.mxu0 0.0
      %1556 = vmatprep.subr.mxu0 0.0
      %1557 = vmatpush1.msra.mxu0 0.0
      %1558 = vmatprep.subr.mxu0 0.0
      %1559 = vmatpush1.msra.mxu0 0.0
      %1560 = vmatprep.subr.mxu0 0.0
      %1561 = vmatpush1.msra.mxu0 0.0
      %1562 = vmatprep.subr.mxu0 0.0
      %1563 = vmatpush1.msra.mxu0 0.0
      %1564 = vmatprep.subr.mxu0 0.0
      %1565 = vmatpush1.msra.mxu0 0.0
      %1566 = vmatprep.subr.mxu0 %v399
      %1567 = vmatpush1.msra.mxu0 %v396
      %1568 = vmatprep.subr.mxu0 %v184
      %1569 = vmatpush1.msra.mxu0 %v183
      %1570 = vmatprep.subr.mxu0 %v180
      %1571 = vmatpush1.msra.mxu0 %v179
      %1572 = vmatprep.subr.mxu0 %v176
      %1573 = vmatpush1.msra.mxu0 %v175
      %1574 = vmatprep.subr.mxu0 0.0
      %1575 = vmatpush2.msra.mxu0 0.0
      %1576 = vmatprep.subr.mxu0 0.0
      %1577 = vmatpush2.msra.mxu0 0.0
      %1578 = vmatprep.subr.mxu0 0.0
      %1579 = vmatpush2.msra.mxu0 0.0
      %1580 = vmatprep.subr.mxu0 0.0
      %1581 = vmatpush2.msra.mxu0 0.0
      %1582 = vmatprep.subr.mxu0 0.0
      %1583 = vmatpush2.msra.mxu0 0.0
      %1584 = vmatprep.subr.mxu0 0.0
      %1585 = vmatpush2.msra.mxu0 0.0
      %1586 = vmatprep.subr.mxu0 0.0
      %1587 = vmatpush2.msra.mxu0 0.0
      %1588 = vmatprep.subr.mxu0 0.0
      %1589 = vmatpush2.msra.mxu0 0.0
      %1590 = vmatprep.subr.mxu0 0.0
      %1591 = vmatpush2.msra.mxu0 0.0
      %1592 = vmatprep.subr.mxu0 0.0
      %1593 = vmatpush2.msra.mxu0 0.0
      %1594 = vmatprep.subr.mxu0 0.0
      %1595 = vmatpush2.msra.mxu0 0.0
      %1596 = vmatprep.subr.mxu0 0.0
      %1597 = vmatpush2.msra.mxu0 0.0
      %1598 = vmatprep.subr.mxu0 0.0
      %1599 = vmatpush2.msra.mxu0 0.0
      %1600 = vmatprep.subr.mxu0 0.0
      %1601 = vmatpush2.msra.mxu0 0.0
      %1602 = vmatprep.subr.mxu0 0.0
      %1603 = vmatpush2.msra.mxu0 0.0
      %1604 = vmatprep.subr.mxu0 0.0
      %1605 = vmatpush2.msra.mxu0 0.0
      %1606 = vmatprep.mubr.f32.mxu0 0.0
      %1607 = vmatmul.mubr.f32.gmra.mxu0 %v211
      %v1608 = vpop.f32.mrf.mxu0
      %v1609 = vadd.f32 %v1455, %v1608
      %v1610 = vpop.f32.mrf.mxu0
      %v1611 = vadd.f32 %v1457, %v1610
      %1612 = vmatprep.mubr.f32.mxu0 0.0
      %1613 = vmatmul.mubr.f32.gmra.mxu0 %v214
      %v1614 = vpop.f32.mrf.mxu0
      %v1615 = vadd.f32 %v1461, %v1614
      %v1616 = vpop.f32.mrf.mxu0
      %v1617 = vadd.f32 %v1463, %v1616
      %1618 = vdwg.mxu0
      %v1619 = vld [vmem:[%s189 + $0x1] sm:$0xff]
      %v1620 = vld [vmem:[%s189 + $0x9] sm:$0x3f]
      %v1622 = vsel %vm209, %v1619, 0
      %v1625 = vsel %vm209, %v1620, 0
      %1627 = vmatprep.subr.mxu0 0.0
      %1628 = vmatpush1.msra.mxu0 0.0
      %1629 = vmatprep.subr.mxu0 0.0
      %1630 = vmatpush1.msra.mxu0 0.0
      %1631 = vmatprep.subr.mxu0 0.0
      %1632 = vmatpush1.msra.mxu0 0.0
      %1633 = vmatprep.subr.mxu0 0.0
      %1634 = vmatpush1.msra.mxu0 0.0
      %1635 = vmatprep.subr.mxu0 0.0
      %1636 = vmatpush1.msra.mxu0 0.0
      %1637 = vmatprep.subr.mxu0 0.0
      %1638 = vmatpush1.msra.mxu0 0.0
      %1639 = vmatprep.subr.mxu0 0.0
      %1640 = vmatpush1.msra.mxu0 0.0
      %1641 = vmatprep.subr.mxu0 0.0
      %1642 = vmatpush1.msra.mxu0 0.0
      %1643 = vmatprep.subr.mxu0 0.0
      %1644 = vmatpush1.msra.mxu0 0.0
      %1645 = vmatprep.subr.mxu0 0.0
      %1646 = vmatpush1.msra.mxu0 0.0
      %1647 = vmatprep.subr.mxu0 0.0
      %1648 = vmatpush1.msra.mxu0 0.0
      %1649 = vmatprep.subr.mxu0 0.0
      %1650 = vmatpush1.msra.mxu0 0.0
      %1651 = vmatprep.subr.mxu0 %v584
      %1652 = vmatpush1.msra.mxu0 %v581
      %1653 = vmatprep.subr.mxu0 %v567
      %1654 = vmatpush1.msra.mxu0 %v566
      %1655 = vmatprep.subr.mxu0 %v563
      %1656 = vmatpush1.msra.mxu0 %v562
      %1657 = vmatprep.subr.mxu0 %v559
      %1658 = vmatpush1.msra.mxu0 %v558
      %1659 = vmatprep.subr.mxu0 0.0
      %1660 = vmatpush2.msra.mxu0 0.0
      %1661 = vmatprep.subr.mxu0 0.0
      %1662 = vmatpush2.msra.mxu0 0.0
      %1663 = vmatprep.subr.mxu0 0.0
      %1664 = vmatpush2.msra.mxu0 0.0
      %1665 = vmatprep.subr.mxu0 0.0
      %1666 = vmatpush2.msra.mxu0 0.0
      %1667 = vmatprep.subr.mxu0 0.0
      %1668 = vmatpush2.msra.mxu0 0.0
      %1669 = vmatprep.subr.mxu0 0.0
      %1670 = vmatpush2.msra.mxu0 0.0
      %1671 = vmatprep.subr.mxu0 0.0
      %1672 = vmatpush2.msra.mxu0 0.0
      %1673 = vmatprep.subr.mxu0 0.0
      %1674 = vmatpush2.msra.mxu0 0.0
      %1675 = vmatprep.subr.mxu0 0.0
      %1676 = vmatpush2.msra.mxu0 0.0
      %1677 = vmatprep.subr.mxu0 0.0
      %1678 = vmatpush2.msra.mxu0 0.0
      %1679 = vmatprep.subr.mxu0 0.0
      %1680 = vmatpush2.msra.mxu0 0.0
      %1681 = vmatprep.subr.mxu0 0.0
      %1682 = vmatpush2.msra.mxu0 0.0
      %1683 = vmatprep.subr.mxu0 0.0
      %1684 = vmatpush2.msra.mxu0 0.0
      %1685 = vmatprep.subr.mxu0 0.0
      %1686 = vmatpush2.msra.mxu0 0.0
      %1687 = vmatprep.subr.mxu0 0.0
      %1688 = vmatpush2.msra.mxu0 0.0
      %1689 = vmatprep.subr.mxu0 0.0
      %1690 = vmatpush2.msra.mxu0 0.0
      %1691 = vmatprep.mubr.f32.mxu0 0.0
      %1692 = vmatmul.mubr.f32.gmra.mxu0 %v1622
      %v1693 = vpop.f32.mrf.mxu0
      %v1694 = vadd.f32 0.0, %v1693
      %v1695 = vpop.f32.mrf.mxu0
      %v1696 = vadd.f32 0.0, %v1695
      %1697 = vmatprep.mubr.f32.mxu0 0.0
      %1698 = vmatmul.mubr.f32.gmra.mxu0 %v1625
      %v1699 = vpop.f32.mrf.mxu0
      %v1700 = vadd.f32 0.0, %v1699
      %v1701 = vpop.f32.mrf.mxu0
      %v1702 = vadd.f32 0.0, %v1701
      %1703 = vdwg.mxu0
      %1704 = vmatprep.subr.mxu0 0.0
      %1705 = vmatpush1.msra.mxu0 0.0
      %1706 = vmatprep.subr.mxu0 0.0
      %1707 = vmatpush1.msra.mxu0 0.0
      %1708 = vmatprep.subr.mxu0 0.0
      %1709 = vmatpush1.msra.mxu0 0.0
      %1710 = vmatprep.subr.mxu0 0.0
      %1711 = vmatpush1.msra.mxu0 0.0
      %1712 = vmatprep.subr.mxu0 0.0
      %1713 = vmatpush1.msra.mxu0 0.0
      %1714 = vmatprep.subr.mxu0 0.0
      %1715 = vmatpush1.msra.mxu0 0.0
      %1716 = vmatprep.subr.mxu0 0.0
      %1717 = vmatpush1.msra.mxu0 0.0
      %1718 = vmatprep.subr.mxu0 0.0
      %1719 = vmatpush1.msra.mxu0 0.0
      %1720 = vmatprep.subr.mxu0 0.0
      %1721 = vmatpush1.msra.mxu0 0.0
      %1722 = vmatprep.subr.mxu0 0.0
      %1723 = vmatpush1.msra.mxu0 0.0
      %1724 = vmatprep.subr.mxu0 0.0
      %1725 = vmatpush1.msra.mxu0 0.0
      %1726 = vmatprep.subr.mxu0 0.0
      %1727 = vmatpush1.msra.mxu0 0.0
      %1728 = vmatprep.subr.mxu0 %v590
      %1729 = vmatpush1.msra.mxu0 %v587
      %1730 = vmatprep.subr.mxu0 %v569
      %1731 = vmatpush1.msra.mxu0 %v568
      %1732 = vmatprep.subr.mxu0 %v565
      %1733 = vmatpush1.msra.mxu0 %v564
      %1734 = vmatprep.subr.mxu0 %v561
      %1735 = vmatpush1.msra.mxu0 %v560
      %1736 = vmatprep.subr.mxu0 0.0
      %1737 = vmatpush2.msra.mxu0 0.0
      %1738 = vmatprep.subr.mxu0 0.0
      %1739 = vmatpush2.msra.mxu0 0.0
      %1740 = vmatprep.subr.mxu0 0.0
      %1741 = vmatpush2.msra.mxu0 0.0
      %1742 = vmatprep.subr.mxu0 0.0
      %1743 = vmatpush2.msra.mxu0 0.0
      %1744 = vmatprep.subr.mxu0 0.0
      %1745 = vmatpush2.msra.mxu0 0.0
      %1746 = vmatprep.subr.mxu0 0.0
      %1747 = vmatpush2.msra.mxu0 0.0
      %1748 = vmatprep.subr.mxu0 0.0
      %1749 = vmatpush2.msra.mxu0 0.0
      %1750 = vmatprep.subr.mxu0 0.0
      %1751 = vmatpush2.msra.mxu0 0.0
      %1752 = vmatprep.subr.mxu0 0.0
      %1753 = vmatpush2.msra.mxu0 0.0
      %1754 = vmatprep.subr.mxu0 0.0
      %1755 = vmatpush2.msra.mxu0 0.0
      %1756 = vmatprep.subr.mxu0 0.0
      %1757 = vmatpush2.msra.mxu0 0.0
      %1758 = vmatprep.subr.mxu0 0.0
      %1759 = vmatpush2.msra.mxu0 0.0
      %1760 = vmatprep.subr.mxu0 0.0
      %1761 = vmatpush2.msra.mxu0 0.0
      %1762 = vmatprep.subr.mxu0 0.0
      %1763 = vmatpush2.msra.mxu0 0.0
      %1764 = vmatprep.subr.mxu0 0.0
      %1765 = vmatpush2.msra.mxu0 0.0
      %1766 = vmatprep.subr.mxu0 0.0
      %1767 = vmatpush2.msra.mxu0 0.0
      %1768 = vmatprep.mubr.f32.mxu0 0.0
      %1769 = vmatmul.mubr.f32.gmra.mxu0 %v1622
      %v1770 = vpop.f32.mrf.mxu0
      %v1771 = vadd.f32 0.0, %v1770
      %v1772 = vpop.f32.mrf.mxu0
      %v1773 = vadd.f32 0.0, %v1772
      %1774 = vmatprep.mubr.f32.mxu0 0.0
      %1775 = vmatmul.mubr.f32.gmra.mxu0 %v1625
      %v1776 = vpop.f32.mrf.mxu0
      %v1777 = vadd.f32 0.0, %v1776
      %v1778 = vpop.f32.mrf.mxu0
      %v1779 = vadd.f32 0.0, %v1778
      %1780 = vdwg.mxu0
      %v1781 = vadd.f32 %v1532, %v1694
      %v1782 = vadd.f32 %v1534, %v1696
      %v1783 = vadd.f32 %v1609, %v1771
      %v1784 = vadd.f32 %v1611, %v1773
      %v1785 = vadd.f32 %v1538, %v1700
      %v1786 = vadd.f32 %v1540, %v1702
      %v1787 = vadd.f32 %v1615, %v1777
      %v1788 = vadd.f32 %v1617, %v1779
      %1789 = vmatprep.subr.mxu0 0.0
      %1790 = vmatpush1.msra.mxu0 0.0
      %1791 = vmatprep.subr.mxu0 0.0
      %1792 = vmatpush1.msra.mxu0 0.0
      %1793 = vmatprep.subr.mxu0 0.0
      %1794 = vmatpush1.msra.mxu0 0.0
      %1795 = vmatprep.subr.mxu0 0.0
      %1796 = vmatpush1.msra.mxu0 0.0
      %1797 = vmatprep.subr.mxu0 0.0
      %1798 = vmatpush1.msra.mxu0 0.0
      %1799 = vmatprep.subr.mxu0 0.0
      %1800 = vmatpush1.msra.mxu0 0.0
      %1801 = vmatprep.subr.mxu0 0.0
      %1802 = vmatpush1.msra.mxu0 0.0
      %1803 = vmatprep.subr.mxu0 0.0
      %1804 = vmatpush1.msra.mxu0 0.0
      %1805 = vmatprep.subr.mxu0 0.0
      %1806 = vmatpush1.msra.mxu0 0.0
      %1807 = vmatprep.subr.mxu0 0.0
      %1808 = vmatpush1.msra.mxu0 0.0
      %1809 = vmatprep.subr.mxu0 0.0
      %1810 = vmatpush1.msra.mxu0 0.0
      %1811 = vmatprep.subr.mxu0 0.0
      %1812 = vmatpush1.msra.mxu0 0.0
      %1813 = vmatprep.subr.mxu0 %v792
      %1814 = vmatpush1.msra.mxu0 %v789
      %1815 = vmatprep.subr.mxu0 %v781
      %1816 = vmatpush1.msra.mxu0 %v780
      %1817 = vmatprep.subr.mxu0 %v777
      %1818 = vmatpush1.msra.mxu0 %v776
      %1819 = vmatprep.subr.mxu0 %v773
      %1820 = vmatpush1.msra.mxu0 %v772
      %1821 = vmatprep.subr.mxu0 0.0
      %1822 = vmatpush2.msra.mxu0 0.0
      %1823 = vmatprep.subr.mxu0 0.0
      %1824 = vmatpush2.msra.mxu0 0.0
      %1825 = vmatprep.subr.mxu0 0.0
      %1826 = vmatpush2.msra.mxu0 0.0
      %1827 = vmatprep.subr.mxu0 0.0
      %1828 = vmatpush2.msra.mxu0 0.0
      %1829 = vmatprep.subr.mxu0 0.0
      %1830 = vmatpush2.msra.mxu0 0.0
      %1831 = vmatprep.subr.mxu0 0.0
      %1832 = vmatpush2.msra.mxu0 0.0
      %1833 = vmatprep.subr.mxu0 0.0
      %1834 = vmatpush2.msra.mxu0 0.0
      %1835 = vmatprep.subr.mxu0 0.0
      %1836 = vmatpush2.msra.mxu0 0.0
      %1837 = vmatprep.subr.mxu0 0.0
      %1838 = vmatpush2.msra.mxu0 0.0
      %1839 = vmatprep.subr.mxu0 0.0
      %1840 = vmatpush2.msra.mxu0 0.0
      %1841 = vmatprep.subr.mxu0 0.0
      %1842 = vmatpush2.msra.mxu0 0.0
      %1843 = vmatprep.subr.mxu0 0.0
      %1844 = vmatpush2.msra.mxu0 0.0
      %1845 = vmatprep.subr.mxu0 0.0
      %1846 = vmatpush2.msra.mxu0 0.0
      %1847 = vmatprep.subr.mxu0 0.0
      %1848 = vmatpush2.msra.mxu0 0.0
      %1849 = vmatprep.subr.mxu0 0.0
      %1850 = vmatpush2.msra.mxu0 0.0
      %1851 = vmatprep.subr.mxu0 0.0
      %1852 = vmatpush2.msra.mxu0 0.0
      %1853 = vmatprep.mubr.f32.mxu0 0.0
      %1854 = vmatmul.mubr.f32.gmra.mxu0 %v575
      %v1855 = vpop.f32.mrf.mxu0
      %v1856 = vadd.f32 0.0, %v1855
      %v1857 = vpop.f32.mrf.mxu0
      %v1858 = vadd.f32 0.0, %v1857
      %1859 = vmatprep.mubr.f32.mxu0 0.0
      %1860 = vmatmul.mubr.f32.gmra.mxu0 %v578
      %v1861 = vpop.f32.mrf.mxu0
      %v1862 = vadd.f32 0.0, %v1861
      %v1863 = vpop.f32.mrf.mxu0
      %v1864 = vadd.f32 0.0, %v1863
      %1865 = vdwg.mxu0
      %1866 = vmatprep.subr.mxu0 0.0
      %1867 = vmatpush1.msra.mxu0 0.0
      %1868 = vmatprep.subr.mxu0 0.0
      %1869 = vmatpush1.msra.mxu0 0.0
      %1870 = vmatprep.subr.mxu0 0.0
      %1871 = vmatpush1.msra.mxu0 0.0
      %1872 = vmatprep.subr.mxu0 0.0
      %1873 = vmatpush1.msra.mxu0 0.0
      %1874 = vmatprep.subr.mxu0 0.0
      %1875 = vmatpush1.msra.mxu0 0.0
      %1876 = vmatprep.subr.mxu0 0.0
      %1877 = vmatpush1.msra.mxu0 0.0
      %1878 = vmatprep.subr.mxu0 0.0
      %1879 = vmatpush1.msra.mxu0 0.0
      %1880 = vmatprep.subr.mxu0 0.0
      %1881 = vmatpush1.msra.mxu0 0.0
      %1882 = vmatprep.subr.mxu0 0.0
      %1883 = vmatpush1.msra.mxu0 0.0
      %1884 = vmatprep.subr.mxu0 0.0
      %1885 = vmatpush1.msra.mxu0 0.0
      %1886 = vmatprep.subr.mxu0 0.0
      %1887 = vmatpush1.msra.mxu0 0.0
      %1888 = vmatprep.subr.mxu0 0.0
      %1889 = vmatpush1.msra.mxu0 0.0
      %1890 = vmatprep.subr.mxu0 %v798
      %1891 = vmatpush1.msra.mxu0 %v795
      %1892 = vmatprep.subr.mxu0 %v783
      %1893 = vmatpush1.msra.mxu0 %v782
      %1894 = vmatprep.subr.mxu0 %v779
      %1895 = vmatpush1.msra.mxu0 %v778
      %1896 = vmatprep.subr.mxu0 %v775
      %1897 = vmatpush1.msra.mxu0 %v774
      %1898 = vmatprep.subr.mxu0 0.0
      %1899 = vmatpush2.msra.mxu0 0.0
      %1900 = vmatprep.subr.mxu0 0.0
      %1901 = vmatpush2.msra.mxu0 0.0
      %1902 = vmatprep.subr.mxu0 0.0
      %1903 = vmatpush2.msra.mxu0 0.0
      %1904 = vmatprep.subr.mxu0 0.0
      %1905 = vmatpush2.msra.mxu0 0.0
      %1906 = vmatprep.subr.mxu0 0.0
      %1907 = vmatpush2.msra.mxu0 0.0
      %1908 = vmatprep.subr.mxu0 0.0
      %1909 = vmatpush2.msra.mxu0 0.0
      %1910 = vmatprep.subr.mxu0 0.0
      %1911 = vmatpush2.msra.mxu0 0.0
      %1912 = vmatprep.subr.mxu0 0.0
      %1913 = vmatpush2.msra.mxu0 0.0
      %1914 = vmatprep.subr.mxu0 0.0
      %1915 = vmatpush2.msra.mxu0 0.0
      %1916 = vmatprep.subr.mxu0 0.0
      %1917 = vmatpush2.msra.mxu0 0.0
      %1918 = vmatprep.subr.mxu0 0.0
      %1919 = vmatpush2.msra.mxu0 0.0
      %1920 = vmatprep.subr.mxu0 0.0
      %1921 = vmatpush2.msra.mxu0 0.0
      %1922 = vmatprep.subr.mxu0 0.0
      %1923 = vmatpush2.msra.mxu0 0.0
      %1924 = vmatprep.subr.mxu0 0.0
      %1925 = vmatpush2.msra.mxu0 0.0
      %1926 = vmatprep.subr.mxu0 0.0
      %1927 = vmatpush2.msra.mxu0 0.0
      %1928 = vmatprep.subr.mxu0 0.0
      %1929 = vmatpush2.msra.mxu0 0.0
      %1930 = vmatprep.mubr.f32.mxu0 0.0
      %1931 = vmatmul.mubr.f32.gmra.mxu0 %v575
      %v1932 = vpop.f32.mrf.mxu0
      %v1933 = vadd.f32 0.0, %v1932
      %v1934 = vpop.f32.mrf.mxu0
      %v1935 = vadd.f32 0.0, %v1934
      %1936 = vmatprep.mubr.f32.mxu0 0.0
      %1937 = vmatmul.mubr.f32.gmra.mxu0 %v578
      %v1938 = vpop.f32.mrf.mxu0
      %v1939 = vadd.f32 0.0, %v1938
      %v1940 = vpop.f32.mrf.mxu0
      %v1941 = vadd.f32 0.0, %v1940
      %1942 = vdwg.mxu0
      %1943 = vmatprep.subr.mxu0 0.0
      %1944 = vmatpush1.msra.mxu0 0.0
      %1945 = vmatprep.subr.mxu0 0.0
      %1946 = vmatpush1.msra.mxu0 0.0
      %1947 = vmatprep.subr.mxu0 0.0
      %1948 = vmatpush1.msra.mxu0 0.0
      %1949 = vmatprep.subr.mxu0 0.0
      %1950 = vmatpush1.msra.mxu0 0.0
      %1951 = vmatprep.subr.mxu0 0.0
      %1952 = vmatpush1.msra.mxu0 0.0
      %1953 = vmatprep.subr.mxu0 0.0
      %1954 = vmatpush1.msra.mxu0 0.0
      %1955 = vmatprep.subr.mxu0 0.0
      %1956 = vmatpush1.msra.mxu0 0.0
      %1957 = vmatprep.subr.mxu0 0.0
      %1958 = vmatpush1.msra.mxu0 0.0
      %1959 = vmatprep.subr.mxu0 0.0
      %1960 = vmatpush1.msra.mxu0 0.0
      %1961 = vmatprep.subr.mxu0 0.0
      %1962 = vmatpush1.msra.mxu0 0.0
      %1963 = vmatprep.subr.mxu0 0.0
      %1964 = vmatpush1.msra.mxu0 0.0
      %1965 = vmatprep.subr.mxu0 0.0
      %1966 = vmatpush1.msra.mxu0 0.0
      %1967 = vmatprep.subr.mxu0 %v958
      %1968 = vmatpush1.msra.mxu0 %v955
      %1969 = vmatprep.subr.mxu0 %v764
      %1970 = vmatpush1.msra.mxu0 %v763
      %1971 = vmatprep.subr.mxu0 %v760
      %1972 = vmatpush1.msra.mxu0 %v759
      %1973 = vmatprep.subr.mxu0 %v756
      %1974 = vmatpush1.msra.mxu0 %v755
      %1975 = vmatprep.subr.mxu0 0.0
      %1976 = vmatpush2.msra.mxu0 0.0
      %1977 = vmatprep.subr.mxu0 0.0
      %1978 = vmatpush2.msra.mxu0 0.0
      %1979 = vmatprep.subr.mxu0 0.0
      %1980 = vmatpush2.msra.mxu0 0.0
      %1981 = vmatprep.subr.mxu0 0.0
      %1982 = vmatpush2.msra.mxu0 0.0
      %1983 = vmatprep.subr.mxu0 0.0
      %1984 = vmatpush2.msra.mxu0 0.0
      %1985 = vmatprep.subr.mxu0 0.0
      %1986 = vmatpush2.msra.mxu0 0.0
      %1987 = vmatprep.subr.mxu0 0.0
      %1988 = vmatpush2.msra.mxu0 0.0
      %1989 = vmatprep.subr.mxu0 0.0
      %1990 = vmatpush2.msra.mxu0 0.0
      %1991 = vmatprep.subr.mxu0 0.0
      %1992 = vmatpush2.msra.mxu0 0.0
      %1993 = vmatprep.subr.mxu0 0.0
      %1994 = vmatpush2.msra.mxu0 0.0
      %1995 = vmatprep.subr.mxu0 0.0
      %1996 = vmatpush2.msra.mxu0 0.0
      %1997 = vmatprep.subr.mxu0 0.0
      %1998 = vmatpush2.msra.mxu0 0.0
      %1999 = vmatprep.subr.mxu0 0.0
      %2000 = vmatpush2.msra.mxu0 0.0
      %2001 = vmatprep.subr.mxu0 0.0
      %2002 = vmatpush2.msra.mxu0 0.0
      %2003 = vmatprep.subr.mxu0 0.0
      %2004 = vmatpush2.msra.mxu0 0.0
      %2005 = vmatprep.subr.mxu0 0.0
      %2006 = vmatpush2.msra.mxu0 0.0
      %2007 = vmatprep.mubr.f32.mxu0 0.0
      %2008 = vmatmul.mubr.f32.gmra.mxu0 %v211
      %v2009 = vpop.f32.mrf.mxu0
      %v2010 = vadd.f32 %v1856, %v2009
      %v2011 = vpop.f32.mrf.mxu0
      %v2012 = vadd.f32 %v1858, %v2011
      %2013 = vmatprep.mubr.f32.mxu0 0.0
      %2014 = vmatmul.mubr.f32.gmra.mxu0 %v214
      %v2015 = vpop.f32.mrf.mxu0
      %v2016 = vadd.f32 %v1862, %v2015
      %v2017 = vpop.f32.mrf.mxu0
      %v2018 = vadd.f32 %v1864, %v2017
      %2019 = vdwg.mxu0
      %2020 = vmatprep.subr.mxu0 0.0
      %2021 = vmatpush1.msra.mxu0 0.0
      %2022 = vmatprep.subr.mxu0 0.0
      %2023 = vmatpush1.msra.mxu0 0.0
      %2024 = vmatprep.subr.mxu0 0.0
      %2025 = vmatpush1.msra.mxu0 0.0
      %2026 = vmatprep.subr.mxu0 0.0
      %2027 = vmatpush1.msra.mxu0 0.0
      %2028 = vmatprep.subr.mxu0 0.0
      %2029 = vmatpush1.msra.mxu0 0.0
      %2030 = vmatprep.subr.mxu0 0.0
      %2031 = vmatpush1.msra.mxu0 0.0
      %2032 = vmatprep.subr.mxu0 0.0
      %2033 = vmatpush1.msra.mxu0 0.0
      %2034 = vmatprep.subr.mxu0 0.0
      %2035 = vmatpush1.msra.mxu0 0.0
      %2036 = vmatprep.subr.mxu0 0.0
      %2037 = vmatpush1.msra.mxu0 0.0
      %2038 = vmatprep.subr.mxu0 0.0
      %2039 = vmatpush1.msra.mxu0 0.0
      %2040 = vmatprep.subr.mxu0 0.0
      %2041 = vmatpush1.msra.mxu0 0.0
      %2042 = vmatprep.subr.mxu0 0.0
      %2043 = vmatpush1.msra.mxu0 0.0
      %2044 = vmatprep.subr.mxu0 %v964
      %2045 = vmatpush1.msra.mxu0 %v961
      %2046 = vmatprep.subr.mxu0 %v766
      %2047 = vmatpush1.msra.mxu0 %v765
      %2048 = vmatprep.subr.mxu0 %v762
      %2049 = vmatpush1.msra.mxu0 %v761
      %2050 = vmatprep.subr.mxu0 %v758
      %2051 = vmatpush1.msra.mxu0 %v757
      %2052 = vmatprep.subr.mxu0 0.0
      %2053 = vmatpush2.msra.mxu0 0.0
      %2054 = vmatprep.subr.mxu0 0.0
      %2055 = vmatpush2.msra.mxu0 0.0
      %2056 = vmatprep.subr.mxu0 0.0
      %2057 = vmatpush2.msra.mxu0 0.0
      %2058 = vmatprep.subr.mxu0 0.0
      %2059 = vmatpush2.msra.mxu0 0.0
      %2060 = vmatprep.subr.mxu0 0.0
      %2061 = vmatpush2.msra.mxu0 0.0
      %2062 = vmatprep.subr.mxu0 0.0
      %2063 = vmatpush2.msra.mxu0 0.0
      %2064 = vmatprep.subr.mxu0 0.0
      %2065 = vmatpush2.msra.mxu0 0.0
      %2066 = vmatprep.subr.mxu0 0.0
      %2067 = vmatpush2.msra.mxu0 0.0
      %2068 = vmatprep.subr.mxu0 0.0
      %2069 = vmatpush2.msra.mxu0 0.0
      %2070 = vmatprep.subr.mxu0 0.0
      %2071 = vmatpush2.msra.mxu0 0.0
      %2072 = vmatprep.subr.mxu0 0.0
      %2073 = vmatpush2.msra.mxu0 0.0
      %2074 = vmatprep.subr.mxu0 0.0
      %2075 = vmatpush2.msra.mxu0 0.0
      %2076 = vmatprep.subr.mxu0 0.0
      %2077 = vmatpush2.msra.mxu0 0.0
      %2078 = vmatprep.subr.mxu0 0.0
      %2079 = vmatpush2.msra.mxu0 0.0
      %2080 = vmatprep.subr.mxu0 0.0
      %2081 = vmatpush2.msra.mxu0 0.0
      %2082 = vmatprep.subr.mxu0 0.0
      %2083 = vmatpush2.msra.mxu0 0.0
      %2084 = vmatprep.mubr.f32.mxu0 0.0
      %2085 = vmatmul.mubr.f32.gmra.mxu0 %v211
      %v2086 = vpop.f32.mrf.mxu0
      %v2087 = vadd.f32 %v1933, %v2086
      %v2088 = vpop.f32.mrf.mxu0
      %v2089 = vadd.f32 %v1935, %v2088
      %2090 = vmatprep.mubr.f32.mxu0 0.0
      %2091 = vmatmul.mubr.f32.gmra.mxu0 %v214
      %v2092 = vpop.f32.mrf.mxu0
      %v2093 = vadd.f32 %v1939, %v2092
      %v2094 = vpop.f32.mrf.mxu0
      %v2095 = vadd.f32 %v1941, %v2094
      %2096 = vdwg.mxu0
      %2097 = vmatprep.subr.mxu0 0.0
      %2098 = vmatpush1.msra.mxu0 0.0
      %2099 = vmatprep.subr.mxu0 0.0
      %2100 = vmatpush1.msra.mxu0 0.0
      %2101 = vmatprep.subr.mxu0 0.0
      %2102 = vmatpush1.msra.mxu0 0.0
      %2103 = vmatprep.subr.mxu0 0.0
      %2104 = vmatpush1.msra.mxu0 0.0
      %2105 = vmatprep.subr.mxu0 0.0
      %2106 = vmatpush1.msra.mxu0 0.0
      %2107 = vmatprep.subr.mxu0 0.0
      %2108 = vmatpush1.msra.mxu0 0.0
      %2109 = vmatprep.subr.mxu0 0.0
      %2110 = vmatpush1.msra.mxu0 0.0
      %2111 = vmatprep.subr.mxu0 0.0
      %2112 = vmatpush1.msra.mxu0 0.0
      %2113 = vmatprep.subr.mxu0 0.0
      %2114 = vmatpush1.msra.mxu0 0.0
      %2115 = vmatprep.subr.mxu0 0.0
      %2116 = vmatpush1.msra.mxu0 0.0
      %2117 = vmatprep.subr.mxu0 0.0
      %2118 = vmatpush1.msra.mxu0 0.0
      %2119 = vmatprep.subr.mxu0 0.0
      %2120 = vmatpush1.msra.mxu0 0.0
      %2121 = vmatprep.subr.mxu0 %v1141
      %2122 = vmatpush1.msra.mxu0 %v1138
      %2123 = vmatprep.subr.mxu0 %v1130
      %2124 = vmatpush1.msra.mxu0 %v1129
      %2125 = vmatprep.subr.mxu0 %v1126
      %2126 = vmatpush1.msra.mxu0 %v1125
      %2127 = vmatprep.subr.mxu0 %v1122
      %2128 = vmatpush1.msra.mxu0 %v1121
      %2129 = vmatprep.subr.mxu0 0.0
      %2130 = vmatpush2.msra.mxu0 0.0
      %2131 = vmatprep.subr.mxu0 0.0
      %2132 = vmatpush2.msra.mxu0 0.0
      %2133 = vmatprep.subr.mxu0 0.0
      %2134 = vmatpush2.msra.mxu0 0.0
      %2135 = vmatprep.subr.mxu0 0.0
      %2136 = vmatpush2.msra.mxu0 0.0
      %2137 = vmatprep.subr.mxu0 0.0
      %2138 = vmatpush2.msra.mxu0 0.0
      %2139 = vmatprep.subr.mxu0 0.0
      %2140 = vmatpush2.msra.mxu0 0.0
      %2141 = vmatprep.subr.mxu0 0.0
      %2142 = vmatpush2.msra.mxu0 0.0
      %2143 = vmatprep.subr.mxu0 0.0
      %2144 = vmatpush2.msra.mxu0 0.0
      %2145 = vmatprep.subr.mxu0 0.0
      %2146 = vmatpush2.msra.mxu0 0.0
      %2147 = vmatprep.subr.mxu0 0.0
      %2148 = vmatpush2.msra.mxu0 0.0
      %2149 = vmatprep.subr.mxu0 0.0
      %2150 = vmatpush2.msra.mxu0 0.0
      %2151 = vmatprep.subr.mxu0 0.0
      %2152 = vmatpush2.msra.mxu0 0.0
      %2153 = vmatprep.subr.mxu0 0.0
      %2154 = vmatpush2.msra.mxu0 0.0
      %2155 = vmatprep.subr.mxu0 0.0
      %2156 = vmatpush2.msra.mxu0 0.0
      %2157 = vmatprep.subr.mxu0 0.0
      %2158 = vmatpush2.msra.mxu0 0.0
      %2159 = vmatprep.subr.mxu0 0.0
      %2160 = vmatpush2.msra.mxu0 0.0
      %2161 = vmatprep.mubr.f32.mxu0 0.0
      %2162 = vmatmul.mubr.f32.gmra.mxu0 %v1622
      %v2163 = vpop.f32.mrf.mxu0
      %v2164 = vadd.f32 0.0, %v2163
      %v2165 = vpop.f32.mrf.mxu0
      %v2166 = vadd.f32 0.0, %v2165
      %2167 = vmatprep.mubr.f32.mxu0 0.0
      %2168 = vmatmul.mubr.f32.gmra.mxu0 %v1625
      %v2169 = vpop.f32.mrf.mxu0
      %v2170 = vadd.f32 0.0, %v2169
      %v2171 = vpop.f32.mrf.mxu0
      %v2172 = vadd.f32 0.0, %v2171
      %2173 = vdwg.mxu0
      %2174 = vmatprep.subr.mxu0 0.0
      %2175 = vmatpush1.msra.mxu0 0.0
      %2176 = vmatprep.subr.mxu0 0.0
      %2177 = vmatpush1.msra.mxu0 0.0
      %2178 = vmatprep.subr.mxu0 0.0
      %2179 = vmatpush1.msra.mxu0 0.0
      %2180 = vmatprep.subr.mxu0 0.0
      %2181 = vmatpush1.msra.mxu0 0.0
      %2182 = vmatprep.subr.mxu0 0.0
      %2183 = vmatpush1.msra.mxu0 0.0
      %2184 = vmatprep.subr.mxu0 0.0
      %2185 = vmatpush1.msra.mxu0 0.0
      %2186 = vmatprep.subr.mxu0 0.0
      %2187 = vmatpush1.msra.mxu0 0.0
      %2188 = vmatprep.subr.mxu0 0.0
      %2189 = vmatpush1.msra.mxu0 0.0
      %2190 = vmatprep.subr.mxu0 0.0
      %2191 = vmatpush1.msra.mxu0 0.0
      %2192 = vmatprep.subr.mxu0 0.0
      %2193 = vmatpush1.msra.mxu0 0.0
      %2194 = vmatprep.subr.mxu0 0.0
      %2195 = vmatpush1.msra.mxu0 0.0
      %2196 = vmatprep.subr.mxu0 0.0
      %2197 = vmatpush1.msra.mxu0 0.0
      %2198 = vmatprep.subr.mxu0 %v1147
      %2199 = vmatpush1.msra.mxu0 %v1144
      %2200 = vmatprep.subr.mxu0 %v1132
      %2201 = vmatpush1.msra.mxu0 %v1131
      %2202 = vmatprep.subr.mxu0 %v1128
      %2203 = vmatpush1.msra.mxu0 %v1127
      %2204 = vmatprep.subr.mxu0 %v1124
      %2205 = vmatpush1.msra.mxu0 %v1123
      %2206 = vmatprep.subr.mxu0 0.0
      %2207 = vmatpush2.msra.mxu0 0.0
      %2208 = vmatprep.subr.mxu0 0.0
      %2209 = vmatpush2.msra.mxu0 0.0
      %2210 = vmatprep.subr.mxu0 0.0
      %2211 = vmatpush2.msra.mxu0 0.0
      %2212 = vmatprep.subr.mxu0 0.0
      %2213 = vmatpush2.msra.mxu0 0.0
      %2214 = vmatprep.subr.mxu0 0.0
      %2215 = vmatpush2.msra.mxu0 0.0
      %2216 = vmatprep.subr.mxu0 0.0
      %2217 = vmatpush2.msra.mxu0 0.0
      %2218 = vmatprep.subr.mxu0 0.0
      %2219 = vmatpush2.msra.mxu0 0.0
      %2220 = vmatprep.subr.mxu0 0.0
      %2221 = vmatpush2.msra.mxu0 0.0
      %2222 = vmatprep.subr.mxu0 0.0
      %2223 = vmatpush2.msra.mxu0 0.0
      %2224 = vmatprep.subr.mxu0 0.0
      %2225 = vmatpush2.msra.mxu0 0.0
      %2226 = vmatprep.subr.mxu0 0.0
      %2227 = vmatpush2.msra.mxu0 0.0
      %2228 = vmatprep.subr.mxu0 0.0
      %2229 = vmatpush2.msra.mxu0 0.0
      %2230 = vmatprep.subr.mxu0 0.0
      %2231 = vmatpush2.msra.mxu0 0.0
      %2232 = vmatprep.subr.mxu0 0.0
      %2233 = vmatpush2.msra.mxu0 0.0
      %2234 = vmatprep.subr.mxu0 0.0
      %2235 = vmatpush2.msra.mxu0 0.0
      %2236 = vmatprep.subr.mxu0 0.0
      %2237 = vmatpush2.msra.mxu0 0.0
      %2238 = vmatprep.mubr.f32.mxu0 0.0
      %2239 = vmatmul.mubr.f32.gmra.mxu0 %v1622
      %v2240 = vpop.f32.mrf.mxu0
      %v2241 = vadd.f32 0.0, %v2240
      %v2242 = vpop.f32.mrf.mxu0
      %v2243 = vadd.f32 0.0, %v2242
      %2244 = vmatprep.mubr.f32.mxu0 0.0
      %2245 = vmatmul.mubr.f32.gmra.mxu0 %v1625
      %v2246 = vpop.f32.mrf.mxu0
      %v2247 = vadd.f32 0.0, %v2246
      %v2248 = vpop.f32.mrf.mxu0
      %v2249 = vadd.f32 0.0, %v2248
      %2250 = vdwg.mxu0
      %v2251 = vadd.f32 %v2010, %v2164
      %v2252 = vadd.f32 %v2012, %v2166
      %v2253 = vadd.f32 %v2087, %v2241
      %v2254 = vadd.f32 %v2089, %v2243
      %v2255 = vadd.f32 %v2016, %v2170
      %v2256 = vadd.f32 %v2018, %v2172
      %v2257 = vadd.f32 %v2093, %v2247
      %v2258 = vadd.f32 %v2095, %v2249
      %v2259 = vmax.f32 %v746, %v1303
      %v2260 = vmax.f32 %v747, %v1304
      %v2261 = vmax.f32 %v748, %v1305
      %v2262 = vmax.f32 %v749, %v1306
      %v2263 = vmax.f32 %v750, %v1307
      %v2264 = vmax.f32 %v751, %v1308
      %v2265 = vmax.f32 %v752, %v1309
      %v2266 = vmax.f32 %v753, %v1310
      %v2267 = vmax.f32 %v1781, %v2251
      %v2268 = vmax.f32 %v1782, %v2252
      %v2269 = vmax.f32 %v1783, %v2253
      %v2270 = vmax.f32 %v1784, %v2254
      %v2271 = vmax.f32 %v1785, %v2255
      %v2272 = vmax.f32 %v1786, %v2256
      %v2273 = vmax.f32 %v1787, %v2257
      %v2274 = vmax.f32 %v1788, %v2258
      %v2275 = vmax.f32 %v2259, %v2267
      %v2276 = vmax.f32 %v2260, %v2268
      %v2277 = vmax.f32 %v2261, %v2269
      %v2278 = vmax.f32 %v2262, %v2270
      %v2279 = vmax.f32 %v2263, %v2271
      %v2280 = vmax.f32 %v2264, %v2272
      %v2281 = vmax.f32 %v2265, %v2273
      %v2282 = vmax.f32 %v2266, %v2274
      %v2283 = vld [vmem:[%s2] sm:$0xf]
      %v2285 = vlaneseq
      %v2286 = vshrl.u32 %v2285, 7
      %v2287 = vsub.s32 0, %v2286
      %v2288 = vrot.slane %v2283, %v2287
      %v2289 = vlaneseq
      %v2290 = vshrl.u32 %v2289, 7
      %v2291 = vsub.s32 1, %v2290
      %v2292 = vrot.slane %v2283, %v2291
      %v2293 = vlaneseq
      %v2294 = vshrl.u32 %v2293, 7
      %v2295 = vsub.s32 2, %v2294
      %v2296 = vrot.slane %v2283, %v2295
      %v2297 = vlaneseq
      %v2298 = vshrl.u32 %v2297, 7
      %v2299 = vsub.s32 3, %v2298
      %v2300 = vrot.slane %v2283, %v2299
      %v2305 = vadd.f32 %v2275, %v2288
      %v2306 = vadd.f32 %v2276, %v2292
      %v2307 = vadd.f32 %v2277, %v2296
      %v2308 = vadd.f32 %v2278, %v2300
      %v2309 = vadd.f32 %v2279, %v2288
      %v2310 = vadd.f32 %v2280, %v2292
      %v2311 = vadd.f32 %v2281, %v2296
      %v2312 = vadd.f32 %v2282, %v2300
      %v2313 = vmax.f32 %v2305, 0.0
      %v2314 = vmax.f32 %v2306, 0.0
      %v2315 = vmax.f32 %v2307, 0.0
      %v2316 = vmax.f32 %v2308, 0.0
      %v2317 = vmax.f32 %v2309, 0.0
      %v2318 = vmax.f32 %v2310, 0.0
      %v2319 = vmax.f32 %v2311, 0.0
      %v2320 = vmax.f32 %v2312, 0.0
      %2321 = vst [vmem:[%s170] sm:$0xff] %v2313
      %2322 = vst [vmem:[%s170 + $0x8] sm:$0xff] %v2314
      %2323 = vst [vmem:[%s170 + $0x10] sm:$0xff] %v2315
      %vm2324 = vcmask 523264
      %2325 = vst.msk [vmem:[%s170 + $0x18] sm:$0xff] %vm2324, %v2316
      %2326 = vst [vmem:[%s170 + $0x20] sm:$0x3f] %v2317
      %2327 = vst [vmem:[%s170 + $0x28] sm:$0x3f] %v2318
      %2328 = vst [vmem:[%s170 + $0x30] sm:$0x3f] %v2319
      %vm2329 = vcmask 521216
      %2330 = vst.msk [vmem:[%s170 + $0x38] sm:$0x3f] %vm2329, %v2320
      %p2331 = scmp.lt.s32.totalorder %s14, 1
      %s2332 = scalar_select %p2331, %s14, 1
      %s2333 = smul.addr %s2332, 8
      %s2334 = smul.addr %s2333, 8
      %s2335 = scalar_lea.vmem %s3, %s2334
      // Predicated region
      $region33: #{cnn_forward.3} parent=31 // pred_check
        %p2336 = pneg %p100
      $region34: #{cnn_forward.3} parent=31 // pred_check_branch
        %2338 = sbr.rel (%p2336) target = $region36
      $region35: #{cnn_forward.3} parent=31 // pred_region
        _
      $region36: #{cnn_forward.3} parent=31 // pred_fallthru
        _
    $region32: #{cnn_forward.3} parent=5 // pred_fallthru
      _
    %p2339 = scmp.le.s32.totalorder 2, %s9
    // Predicated region
    $region37: #{cnn_forward.3} parent=5 // pred_check
      %p2340 = pneg %p2339
    $region38: #{cnn_forward.3} parent=5 // pred_check_branch
      %2342 = sbr.rel (%p2340) target = $region40
    $region39: #{cnn_forward.3} parent=5 // pred_region
      %s2343 = ssub.s32 %s9, 2
      // Predicated region
      $region41: #{cnn_forward.3} parent=39 // pred_check
        %p2344 = pneg %p106
      $region42: #{cnn_forward.3} parent=39 // pred_check_branch
        %2346 = sbr.rel (%p2344) target = $region44
      $region43: #{cnn_forward.3} parent=39 // pred_region
        %p2347 = scmp.lt.s32.totalorder %s15, 1
        %s2348 = scalar_select %p2347, %s15, 1
        %s2349 = smul.addr %s2348, 8
        %s2350 = smul.addr %s2349, 8
        %s2351 = scalar_lea.vmem %s3, %s2350
      $region44: #{cnn_forward.3} parent=39 // pred_fallthru
        _
    $region40: #{cnn_forward.3} parent=5 // pred_fallthru
      _
  $region6: #{cnn_forward.3} parent=0 // loop_footer
    %s13 = sadd.s32 1, %s9
  $region7: #{cnn_forward.3} parent=0 // loop_footer_branch
    %8 = sbr.rel target = $region3
  $region8: #{cnn_forward.3} parent=0 // loop_exit
    _

// kernel: tile.18
$region0: #{tile.18}
  #allocation0 [shape = 's32[1]{0}', space=sflag, size = 0x4, scoped, tag = 'scoped memory for tile.18']
  %s0 = inlined_call_operand.vmem [shape: f32[64], index: 0, kind: input, shape index: {}]
  %s1 = inlined_call_operand.vmem [shape: f32[7,64], index: 1, kind: output, shape index: {}]
  // Predicated region
  $region2: #{tile.18} parent=0 // pred_check
    _
  $region3: #{tile.18} parent=0 // pred_check_branch
    %3 = sbr.rel (0) target = $region5
  $region4: #{tile.18} parent=0 // pred_region
    _
  $region5: #{tile.18} parent=0 // pred_fallthru
    _
  %v4 = vld [vmem:[%s0] ss:$0 sm:$0xff]
  %5 = vst [vmem:[%s1] sm:$0xff] %v4

// kernel: tile.19
$region0: #{tile.19}
  %s0 = inlined_call_operand.vmem [shape: f32[7,64], index: 0, kind: input, shape index: {}]
  %s1 = inlined_call_operand.vmem [shape: f32[1,448], index: 1, kind: output, shape index: {}]
  $region1: #{tile.19} parent=0
    #allocation0 [shape = 'u8[16384]{0}', space=vmem, size = 0x4000, scoped, tag = 'scoped mem for output reshape']
    %v2 = vld [vmem:[%s0] ss:$2 sm:$0xf]
    %vm3 = vcmask 523264
    %4 = vst.msk [vmem:[#allocation0] ss:$8 sm:$0xf] %vm3, %v2
    %s5 = scalar_lea.vmem %s0, 1
    %v6 = vld [vmem:[%s5] ss:$2 sm:$0x7]
    %7 = vrot.lane.b32.xlu0 %v6, 64
    %v8 = vpop.permute.xlu0 %7
    %vm9 = vcmask 1048064
    %10 = vst.msk [vmem:[#allocation0] ss:$8 sm:$0x7] %vm9, %v8
    %s12 = sshll.u32 1, 1
    %s13 = ssub.s32 %s12, 1
    %v15 = vld [vmem:[#allocation0] sm:%s13]
    %s16 = sshll.u32 1, 1
    %s17 = ssub.s32 %s16, 1
    %18 = vst [vmem:[%s1] sm:%s17] %v15
    %s19 = scalar_lea.vmem [#allocation0], 8
    %v20 = vld [vmem:[%s19] sm:%s13]
    %s21 = sshll.u32 1, 1
    %s22 = ssub.s32 %s21, 1
    %s23 = scalar_lea.vmem %s1, 1
    %24 = vst [vmem:[%s23] sm:%s22] %v20
    %s25 = scalar_lea.vmem [#allocation0], 16
    %v26 = vld [vmem:[%s25] sm:%s13]
    %s27 = sshll.u32 1, 1
    %s28 = ssub.s32 %s27, 1
    %s29 = smul.addr 1, 2
    %s30 = scalar_lea.vmem %s1, %s29
    %31 = vst [vmem:[%s30] sm:%s28] %v26
    %s32 = scalar_lea.vmem [#allocation0], 24
    %v33 = vld [vmem:[%s32] sm:%s13]
    %s34 = sshll.u32 1, 1
    %s35 = ssub.s32 %s34, 1
    %s36 = smul.addr 1, 3
    %s37 = scalar_lea.vmem %s1, %s36
    %38 = vst [vmem:[%s37] sm:%s35] %v33

// kernel: cnn_forward.5
$region0: #{cnn_forward.5}
  #allocation0 [shape = 'u32[]', space=smem, size = 0x4, offset = 0x4, fixed_abs, tag = 'smem constant byte address 0x4 - core index']
  #allocation1 [shape = 'u32[144,128]{1,0:T(1,128)}', space=vmem, size = 0x12000, scoped, tag = 'internal scratch']
  %s0 = inlined_call_operand.vmem [shape: f32[2,3136], index: 0, kind: input, shape index: {}]
  %s1 = inlined_call_operand.vmem [shape: f32[3136,128], index: 1, kind: input, shape index: {}]
  %s2 = inlined_call_operand.vmem [shape: f32[1,128], index: 2, kind: input, shape index: {}]
  %s3 = inlined_call_operand.vmem [shape: f32[128,10], index: 3, kind: input, shape index: {}]
  %s4 = inlined_call_operand.vmem [shape: f32[1,10], index: 4, kind: input, shape index: {}]
  %s5 = inlined_call_operand.hbm [shape: f32[2,10], index: 5, kind: output, shape index: {}]
  %s6 = sld [smem:[#allocation0]]
  $region30: #{cnn_forward.5} parent=0
    _
  %s8 = ssub.s32 1, %s6
  %s9 = scalar_select 0, %s8, %s6
  $region1: #{cnn_forward.5} parent=0
    #allocation2 [shape = 'u8[1024]{0}', space=vmem, size = 0x400, scoped, tag = 'output window, operand 0, single buffered']
    #allocation3 [shape = 's32[1]{0}', space=sflag, size = 0x4, scoped, tag = 'scoped memory for cnn_forward.5']
    %10 = vsyncpa [#allocation3], 0
    // Predicated region
    $region2: #{cnn_forward.5} parent=1 // pred_check
      _
    $region3: #{cnn_forward.5} parent=1 // pred_check_branch
      %12 = sbr.rel (0) target = $region5
    $region4: #{cnn_forward.5} parent=1 // pred_region
      _
    $region5: #{cnn_forward.5} parent=1 // pred_fallthru
      _
    // Predicated region
    $region6: #{cnn_forward.5} parent=1 // pred_check
      _
    $region7: #{cnn_forward.5} parent=1 // pred_check_branch
      %14 = sbr.rel (0) target = $region9
    $region8: #{cnn_forward.5} parent=1 // pred_region
      _
    $region9: #{cnn_forward.5} parent=1 // pred_fallthru
      _
    // Predicated region
    $region10: #{cnn_forward.5} parent=1 // pred_check
      _
    $region11: #{cnn_forward.5} parent=1 // pred_check_branch
      %16 = sbr.rel (0) target = $region13
    $region12: #{cnn_forward.5} parent=1 // pred_region
      _
    $region13: #{cnn_forward.5} parent=1 // pred_fallthru
      _
    // Predicated region
    $region14: #{cnn_forward.5} parent=1 // pred_check
      _
    $region15: #{cnn_forward.5} parent=1 // pred_check_branch
      %18 = sbr.rel (0) target = $region17
    $region16: #{cnn_forward.5} parent=1 // pred_region
      _
    $region17: #{cnn_forward.5} parent=1 // pred_fallthru
      _
    // Predicated region
    $region18: #{cnn_forward.5} parent=1 // pred_check
      _
    $region19: #{cnn_forward.5} parent=1 // pred_check_branch
      %20 = sbr.rel (0) target = $region21
    $region20: #{cnn_forward.5} parent=1 // pred_region
      _
    $region21: #{cnn_forward.5} parent=1 // pred_fallthru
      _
    %v21 = vld [vmem:[%s0] sm:$0xff]
    %v22 = vld [vmem:[%s0 + $0x8] sm:$0xff]
    %v23 = vld [vmem:[%s0 + $0x10] sm:$0xff]
    %v24 = vld [vmem:[%s0 + $0x18] sm:$0xff]
    %v25 = vld [vmem:[%s0 + $0x20] sm:$0xff]
    %v26 = vld [vmem:[%s0 + $0x28] sm:$0xff]
    %v27 = vld [vmem:[%s0 + $0x30] sm:$0x3]
    %v28 = vld [vmem:[%s1] sm:$0xff]
    %v29 = vld [vmem:[%s1 + $0x8] sm:$0xff]
    %v30 = vld [vmem:[%s1 + $0x10] sm:$0xff]
    %v31 = vld [vmem:[%s1 + $0x18] sm:$0xff]
    %v32 = vld [vmem:[%s1 + $0x20] sm:$0xff]
    %v33 = vld [vmem:[%s1 + $0x28] sm:$0xff]
    %v34 = vld [vmem:[%s1 + $0x30] sm:$0xff]
    %v35 = vld [vmem:[%s1 + $0x38] sm:$0xff]
    %v36 = vld [vmem:[%s1 + $0x40] sm:$0xff]
    %v37 = vld [vmem:[%s1 + $0x48] sm:$0xff]
    %v38 = vld [vmem:[%s1 + $0x50] sm:$0xff]
    %v39 = vld [vmem:[%s1 + $0x58] sm:$0xff]
    %v40 = vld [vmem:[%s1 + $0x60] sm:$0xff]
    %v41 = vld [vmem:[%s1 + $0x68] sm:$0xff]
    %v42 = vld [vmem:[%s1 + $0x70] sm:$0xff]
    %v43 = vld [vmem:[%s1 + $0x78] sm:$0xff]
    %v44 = vld [vmem:[%s1 + $0x80] sm:$0xff]
    %v45 = vld [vmem:[%s1 + $0x88] sm:$0xff]
    %v46 = vld [vmem:[%s1 + $0x90] sm:$0xff]
    %v47 = vld [vmem:[%s1 + $0x98] sm:$0xff]
    %v48 = vld [vmem:[%s1 + $0xa0] sm:$0xff]
    %v49 = vld [vmem:[%s1 + $0xa8] sm:$0xff]
    %v50 = vld [vmem:[%s1 + $0xb0] sm:$0xff]
    %v51 = vld [vmem:[%s1 + $0xb8] sm:$0xff]
    %v52 = vld [vmem:[%s1 + $0xc0] sm:$0xff]
    %v53 = vld [vmem:[%s1 + $0xc8] sm:$0xff]
    %v54 = vld [vmem:[%s1 + $0xd0] sm:$0xff]
    %v55 = vld [vmem:[%s1 + $0xd8] sm:$0xff]
    %v56 = vld [vmem:[%s1 + $0xe0] sm:$0xff]
    %v57 = vld [vmem:[%s1 + $0xe8] sm:$0xff]
    %v58 = vld [vmem:[%s1 + $0xf0] sm:$0xff]
    %v59 = vld [vmem:[%s1 + $0xf8] sm:$0xff]
    %v60 = vld [vmem:[%s1 + $0x100] sm:$0xff]
    %v61 = vld [vmem:[%s1 + $0x108] sm:$0xff]
    %v62 = vld [vmem:[%s1 + $0x110] sm:$0xff]
    %v63 = vld [vmem:[%s1 + $0x118] sm:$0xff]
    %v64 = vld [vmem:[%s1 + $0x120] sm:$0xff]
    %v65 = vld [vmem:[%s1 + $0x128] sm:$0xff]
    %v66 = vld [vmem:[%s1 + $0x130] sm:$0xff]
    %v67 = vld [vmem:[%s1 + $0x138] sm:$0xff]
    %v68 = vld [vmem:[%s1 + $0x140] sm:$0xff]
    %v69 = vld [vmem:[%s1 + $0x148] sm:$0xff]
    %v70 = vld [vmem:[%s1 + $0x150] sm:$0xff]
    %v71 = vld [vmem:[%s1 + $0x158] sm:$0xff]
    %v72 = vld [vmem:[%s1 + $0x160] sm:$0xff]
    %v73 = vld [vmem:[%s1 + $0x168] sm:$0xff]
    %v74 = vld [vmem:[%s1 + $0x170] sm:$0xff]
    %v75 = vld [vmem:[%s1 + $0x178] sm:$0xff]
    %v76 = vld [vmem:[%s1 + $0x180] sm:$0xff]
    %v77 = vld [vmem:[%s1 + $0x188] sm:$0xff]
    %v78 = vld [vmem:[%s1 + $0x190] sm:$0xff]
    %v79 = vld [vmem:[%s1 + $0x198] sm:$0xff]
    %v80 = vld [vmem:[%s1 + $0x1a0] sm:$0xff]
    %v81 = vld [vmem:[%s1 + $0x1a8] sm:$0xff]
    %v82 = vld [vmem:[%s1 + $0x1b0] sm:$0xff]
    %v83 = vld [vmem:[%s1 + $0x1b8] sm:$0xff]
    %v84 = vld [vmem:[%s1 + $0x1c0] sm:$0xff]
    %v85 = vld [vmem:[%s1 + $0x1c8] sm:$0xff]
    %v86 = vld [vmem:[%s1 + $0x1d0] sm:$0xff]
    %v87 = vld [vmem:[%s1 + $0x1d8] sm:$0xff]
    %v88 = vld [vmem:[%s1 + $0x1e0] sm:$0xff]
    %v89 = vld [vmem:[%s1 + $0x1e8] sm:$0xff]
    %v90 = vld [vmem:[%s1 + $0x1f0] sm:$0xff]
    %v91 = vld [vmem:[%s1 + $0x1f8] sm:$0xff]
    %v92 = vld [vmem:[%s1 + $0x200] sm:$0xff]
    %v93 = vld [vmem:[%s1 + $0x208] sm:$0xff]
    %v94 = vld [vmem:[%s1 + $0x210] sm:$0xff]
    %v95 = vld [vmem:[%s1 + $0x218] sm:$0xff]
    %v96 = vld [vmem:[%s1 + $0x220] sm:$0xff]
    %v97 = vld [vmem:[%s1 + $0x228] sm:$0xff]
    %v98 = vld [vmem:[%s1 + $0x230] sm:$0xff]
    %v99 = vld [vmem:[%s1 + $0x238] sm:$0xff]
    %v100 = vld [vmem:[%s1 + $0x240] sm:$0xff]
    %v101 = vld [vmem:[%s1 + $0x248] sm:$0xff]
    %v102 = vld [vmem:[%s1 + $0x250] sm:$0xff]
    %v103 = vld [vmem:[%s1 + $0x258] sm:$0xff]
    %v104 = vld [vmem:[%s1 + $0x260] sm:$0xff]
    %v105 = vld [vmem:[%s1 + $0x268] sm:$0xff]
    %v106 = vld [vmem:[%s1 + $0x270] sm:$0xff]
    %v107 = vld [vmem:[%s1 + $0x278] sm:$0xff]
    %v108 = vld [vmem:[%s1 + $0x280] sm:$0xff]
    %v109 = vld [vmem:[%s1 + $0x288] sm:$0xff]
    %v110 = vld [vmem:[%s1 + $0x290] sm:$0xff]
    %v111 = vld [vmem:[%s1 + $0x298] sm:$0xff]
    %v112 = vld [vmem:[%s1 + $0x2a0] sm:$0xff]
    %v113 = vld [vmem:[%s1 + $0x2a8] sm:$0xff]
    %v114 = vld [vmem:[%s1 + $0x2b0] sm:$0xff]
    %v115 = vld [vmem:[%s1 + $0x2b8] sm:$0xff]
    %v116 = vld [vmem:[%s1 + $0x2c0] sm:$0xff]
    %v117 = vld [vmem:[%s1 + $0x2c8] sm:$0xff]
    %v118 = vld [vmem:[%s1 + $0x2d0] sm:$0xff]
    %v119 = vld [vmem:[%s1 + $0x2d8] sm:$0xff]
    %v120 = vld [vmem:[%s1 + $0x2e0] sm:$0xff]
    %v121 = vld [vmem:[%s1 + $0x2e8] sm:$0xff]
    %v122 = vld [vmem:[%s1 + $0x2f0] sm:$0xff]
    %v123 = vld [vmem:[%s1 + $0x2f8] sm:$0xff]
    %v124 = vld [vmem:[%s1 + $0x300] sm:$0xff]
    %v125 = vld [vmem:[%s1 + $0x308] sm:$0xff]
    %v126 = vld [vmem:[%s1 + $0x310] sm:$0xff]
    %v127 = vld [vmem:[%s1 + $0x318] sm:$0xff]
    %v128 = vld [vmem:[%s1 + $0x320] sm:$0xff]
    %v129 = vld [vmem:[%s1 + $0x328] sm:$0xff]
    %v130 = vld [vmem:[%s1 + $0x330] sm:$0xff]
    %v131 = vld [vmem:[%s1 + $0x338] sm:$0xff]
    %v132 = vld [vmem:[%s1 + $0x340] sm:$0xff]
    %v133 = vld [vmem:[%s1 + $0x348] sm:$0xff]
    %v134 = vld [vmem:[%s1 + $0x350] sm:$0xff]
    %v135 = vld [vmem:[%s1 + $0x358] sm:$0xff]
    %v136 = vld [vmem:[%s1 + $0x360] sm:$0xff]
    %v137 = vld [vmem:[%s1 + $0x368] sm:$0xff]
    %v138 = vld [vmem:[%s1 + $0x370] sm:$0xff]
    %v139 = vld [vmem:[%s1 + $0x378] sm:$0xff]
    %v140 = vld [vmem:[%s1 + $0x380] sm:$0xff]
    %v141 = vld [vmem:[%s1 + $0x388] sm:$0xff]
    %v142 = vld [vmem:[%s1 + $0x390] sm:$0xff]
    %v143 = vld [vmem:[%s1 + $0x398] sm:$0xff]
    %v144 = vld [vmem:[%s1 + $0x3a0] sm:$0xff]
    %v145 = vld [vmem:[%s1 + $0x3a8] sm:$0xff]
    %v146 = vld [vmem:[%s1 + $0x3b0] sm:$0xff]
    %v147 = vld [vmem:[%s1 + $0x3b8] sm:$0xff]
    %v148 = vld [vmem:[%s1 + $0x3c0] sm:$0xff]
    %v149 = vld [vmem:[%s1 + $0x3c8] sm:$0xff]
    %v150 = vld [vmem:[%s1 + $0x3d0] sm:$0xff]
    %v151 = vld [vmem:[%s1 + $0x3d8] sm:$0xff]
    %v152 = vld [vmem:[%s1 + $0x3e0] sm:$0xff]
    %v153 = vld [vmem:[%s1 + $0x3e8] sm:$0xff]
    %v154 = vld [vmem:[%s1 + $0x3f0] sm:$0xff]
    %v155 = vld [vmem:[%s1 + $0x3f8] sm:$0xff]
    %v156 = vld [vmem:[%s1 + $0x400] sm:$0xff]
    %v157 = vld [vmem:[%s1 + $0x408] sm:$0xff]
    %v158 = vld [vmem:[%s1 + $0x410] sm:$0xff]
    %v159 = vld [vmem:[%s1 + $0x418] sm:$0xff]
    %v160 = vld [vmem:[%s1 + $0x420] sm:$0xff]
    %v161 = vld [vmem:[%s1 + $0x428] sm:$0xff]
    %v162 = vld [vmem:[%s1 + $0x430] sm:$0xff]
    %v163 = vld [vmem:[%s1 + $0x438] sm:$0xff]
    %v164 = vld [vmem:[%s1 + $0x440] sm:$0xff]
    %v165 = vld [vmem:[%s1 + $0x448] sm:$0xff]
    %v166 = vld [vmem:[%s1 + $0x450] sm:$0xff]
    %v167 = vld [vmem:[%s1 + $0x458] sm:$0xff]
    %v168 = vld [vmem:[%s1 + $0x460] sm:$0xff]
    %v169 = vld [vmem:[%s1 + $0x468] sm:$0xff]
    %v170 = vld [vmem:[%s1 + $0x470] sm:$0xff]
    %v171 = vld [vmem:[%s1 + $0x478] sm:$0xff]
    %v172 = vld [vmem:[%s1 + $0x480] sm:$0xff]
    %v173 = vld [vmem:[%s1 + $0x488] sm:$0xff]
    %v174 = vld [vmem:[%s1 + $0x490] sm:$0xff]
    %v175 = vld [vmem:[%s1 + $0x498] sm:$0xff]
    %v176 = vld [vmem:[%s1 + $0x4a0] sm:$0xff]
    %v177 = vld [vmem:[%s1 + $0x4a8] sm:$0xff]
    %v178 = vld [vmem:[%s1 + $0x4b0] sm:$0xff]
    %v179 = vld [vmem:[%s1 + $0x4b8] sm:$0xff]
    %v180 = vld [vmem:[%s1 + $0x4c0] sm:$0xff]
    %v181 = vld [vmem:[%s1 + $0x4c8] sm:$0xff]
    %v182 = vld [vmem:[%s1 + $0x4d0] sm:$0xff]
    %v183 = vld [vmem:[%s1 + $0x4d8] sm:$0xff]
    %v184 = vld [vmem:[%s1 + $0x4e0] sm:$0xff]
    %v185 = vld [vmem:[%s1 + $0x4e8] sm:$0xff]
    %v186 = vld [vmem:[%s1 + $0x4f0] sm:$0xff]
    %v187 = vld [vmem:[%s1 + $0x4f8] sm:$0xff]
    %v188 = vld [vmem:[%s1 + $0x500] sm:$0xff]
    %v189 = vld [vmem:[%s1 + $0x508] sm:$0xff]
    %v190 = vld [vmem:[%s1 + $0x510] sm:$0xff]
    %v191 = vld [vmem:[%s1 + $0x518] sm:$0xff]
    %v192 = vld [vmem:[%s1 + $0x520] sm:$0xff]
    %v193 = vld [vmem:[%s1 + $0x528] sm:$0xff]
    %v194 = vld [vmem:[%s1 + $0x530] sm:$0xff]
    %v195 = vld [vmem:[%s1 + $0x538] sm:$0xff]
    %v196 = vld [vmem:[%s1 + $0x540] sm:$0xff]
    %v197 = vld [vmem:[%s1 + $0x548] sm:$0xff]
    %v198 = vld [vmem:[%s1 + $0x550] sm:$0xff]
    %v199 = vld [vmem:[%s1 + $0x558] sm:$0xff]
    %v200 = vld [vmem:[%s1 + $0x560] sm:$0xff]
    %v201 = vld [vmem:[%s1 + $0x568] sm:$0xff]
    %v202 = vld [vmem:[%s1 + $0x570] sm:$0xff]
    %v203 = vld [vmem:[%s1 + $0x578] sm:$0xff]
    %v204 = vld [vmem:[%s1 + $0x580] sm:$0xff]
    %v205 = vld [vmem:[%s1 + $0x588] sm:$0xff]
    %v206 = vld [vmem:[%s1 + $0x590] sm:$0xff]
    %v207 = vld [vmem:[%s1 + $0x598] sm:$0xff]
    %v208 = vld [vmem:[%s1 + $0x5a0] sm:$0xff]
    %v209 = vld [vmem:[%s1 + $0x5a8] sm:$0xff]
    %v210 = vld [vmem:[%s1 + $0x5b0] sm:$0xff]
    %v211 = vld [vmem:[%s1 + $0x5b8] sm:$0xff]
    %v212 = vld [vmem:[%s1 + $0x5c0] sm:$0xff]
    %v213 = vld [vmem:[%s1 + $0x5c8] sm:$0xff]
    %v214 = vld [vmem:[%s1 + $0x5d0] sm:$0xff]
    %v215 = vld [vmem:[%s1 + $0x5d8] sm:$0xff]
    %v216 = vld [vmem:[%s1 + $0x5e0] sm:$0xff]
    %v217 = vld [vmem:[%s1 + $0x5e8] sm:$0xff]
    %v218 = vld [vmem:[%s1 + $0x5f0] sm:$0xff]
    %v219 = vld [vmem:[%s1 + $0x5f8] sm:$0xff]
    %v220 = vld [vmem:[%s1 + $0x600] sm:$0xff]
    %v221 = vld [vmem:[%s1 + $0x608] sm:$0xff]
    %v222 = vld [vmem:[%s1 + $0x610] sm:$0xff]
    %v223 = vld [vmem:[%s1 + $0x618] sm:$0xff]
    %v224 = vld [vmem:[%s1 + $0x620] sm:$0xff]
    %v225 = vld [vmem:[%s1 + $0x628] sm:$0xff]
    %v226 = vld [vmem:[%s1 + $0x630] sm:$0xff]
    %v227 = vld [vmem:[%s1 + $0x638] sm:$0xff]
    %v228 = vld [vmem:[%s1 + $0x640] sm:$0xff]
    %v229 = vld [vmem:[%s1 + $0x648] sm:$0xff]
    %v230 = vld [vmem:[%s1 + $0x650] sm:$0xff]
    %v231 = vld [vmem:[%s1 + $0x658] sm:$0xff]
    %v232 = vld [vmem:[%s1 + $0x660] sm:$0xff]
    %v233 = vld [vmem:[%s1 + $0x668] sm:$0xff]
    %v234 = vld [vmem:[%s1 + $0x670] sm:$0xff]
    %v235 = vld [vmem:[%s1 + $0x678] sm:$0xff]
    %v236 = vld [vmem:[%s1 + $0x680] sm:$0xff]
    %v237 = vld [vmem:[%s1 + $0x688] sm:$0xff]
    %v238 = vld [vmem:[%s1 + $0x690] sm:$0xff]
    %v239 = vld [vmem:[%s1 + $0x698] sm:$0xff]
    %v240 = vld [vmem:[%s1 + $0x6a0] sm:$0xff]
    %v241 = vld [vmem:[%s1 + $0x6a8] sm:$0xff]
    %v242 = vld [vmem:[%s1 + $0x6b0] sm:$0xff]
    %v243 = vld [vmem:[%s1 + $0x6b8] sm:$0xff]
    %v244 = vld [vmem:[%s1 + $0x6c0] sm:$0xff]
    %v245 = vld [vmem:[%s1 + $0x6c8] sm:$0xff]
    %v246 = vld [vmem:[%s1 + $0x6d0] sm:$0xff]
    %v247 = vld [vmem:[%s1 + $0x6d8] sm:$0xff]
    %v248 = vld [vmem:[%s1 + $0x6e0] sm:$0xff]
    %v249 = vld [vmem:[%s1 + $0x6e8] sm:$0xff]
    %v250 = vld [vmem:[%s1 + $0x6f0] sm:$0xff]
    %v251 = vld [vmem:[%s1 + $0x6f8] sm:$0xff]
    %v252 = vld [vmem:[%s1 + $0x700] sm:$0xff]
    %v253 = vld [vmem:[%s1 + $0x708] sm:$0xff]
    %v254 = vld [vmem:[%s1 + $0x710] sm:$0xff]
    %v255 = vld [vmem:[%s1 + $0x718] sm:$0xff]
    %v256 = vld [vmem:[%s1 + $0x720] sm:$0xff]
    %v257 = vld [vmem:[%s1 + $0x728] sm:$0xff]
    %v258 = vld [vmem:[%s1 + $0x730] sm:$0xff]
    %v259 = vld [vmem:[%s1 + $0x738] sm:$0xff]
    %v260 = vld [vmem:[%s1 + $0x740] sm:$0xff]
    %v261 = vld [vmem:[%s1 + $0x748] sm:$0xff]
    %v262 = vld [vmem:[%s1 + $0x750] sm:$0xff]
    %v263 = vld [vmem:[%s1 + $0x758] sm:$0xff]
    %v264 = vld [vmem:[%s1 + $0x760] sm:$0xff]
    %v265 = vld [vmem:[%s1 + $0x768] sm:$0xff]
    %v266 = vld [vmem:[%s1 + $0x770] sm:$0xff]
    %v267 = vld [vmem:[%s1 + $0x778] sm:$0xff]
    %v268 = vld [vmem:[%s1 + $0x780] sm:$0xff]
    %v269 = vld [vmem:[%s1 + $0x788] sm:$0xff]
    %v270 = vld [vmem:[%s1 + $0x790] sm:$0xff]
    %v271 = vld [vmem:[%s1 + $0x798] sm:$0xff]
    %v272 = vld [vmem:[%s1 + $0x7a0] sm:$0xff]
    %v273 = vld [vmem:[%s1 + $0x7a8] sm:$0xff]
    %v274 = vld [vmem:[%s1 + $0x7b0] sm:$0xff]
    %v275 = vld [vmem:[%s1 + $0x7b8] sm:$0xff]
    %v276 = vld [vmem:[%s1 + $0x7c0] sm:$0xff]
    %v277 = vld [vmem:[%s1 + $0x7c8] sm:$0xff]
    %v278 = vld [vmem:[%s1 + $0x7d0] sm:$0xff]
    %v279 = vld [vmem:[%s1 + $0x7d8] sm:$0xff]
    %v280 = vld [vmem:[%s1 + $0x7e0] sm:$0xff]
    %v281 = vld [vmem:[%s1 + $0x7e8] sm:$0xff]
    %v282 = vld [vmem:[%s1 + $0x7f0] sm:$0xff]
    %v283 = vld [vmem:[%s1 + $0x7f8] sm:$0xff]
    %v284 = vld [vmem:[%s1 + $0x800] sm:$0xff]
    %v285 = vld [vmem:[%s1 + $0x808] sm:$0xff]
    %v286 = vld [vmem:[%s1 + $0x810] sm:$0xff]
    %v287 = vld [vmem:[%s1 + $0x818] sm:$0xff]
    %v288 = vld [vmem:[%s1 + $0x820] sm:$0xff]
    %v289 = vld [vmem:[%s1 + $0x828] sm:$0xff]
    %v290 = vld [vmem:[%s1 + $0x830] sm:$0xff]
    %v291 = vld [vmem:[%s1 + $0x838] sm:$0xff]
    %v292 = vld [vmem:[%s1 + $0x840] sm:$0xff]
    %v293 = vld [vmem:[%s1 + $0x848] sm:$0xff]
    %v294 = vld [vmem:[%s1 + $0x850] sm:$0xff]
    %v295 = vld [vmem:[%s1 + $0x858] sm:$0xff]
    %v296 = vld [vmem:[%s1 + $0x860] sm:$0xff]
    %v297 = vld [vmem:[%s1 + $0x868] sm:$0xff]
    %v298 = vld [vmem:[%s1 + $0x870] sm:$0xff]
    %v299 = vld [vmem:[%s1 + $0x878] sm:$0xff]
    %v300 = vld [vmem:[%s1 + $0x880] sm:$0xff]
    %v301 = vld [vmem:[%s1 + $0x888] sm:$0xff]
    %v302 = vld [vmem:[%s1 + $0x890] sm:$0xff]
    %v303 = vld [vmem:[%s1 + $0x898] sm:$0xff]
    %v304 = vld [vmem:[%s1 + $0x8a0] sm:$0xff]
    %v305 = vld [vmem:[%s1 + $0x8a8] sm:$0xff]
    %v306 = vld [vmem:[%s1 + $0x8b0] sm:$0xff]
    %v307 = vld [vmem:[%s1 + $0x8b8] sm:$0xff]
    %v308 = vld [vmem:[%s1 + $0x8c0] sm:$0xff]
    %v309 = vld [vmem:[%s1 + $0x8c8] sm:$0xff]
    %v310 = vld [vmem:[%s1 + $0x8d0] sm:$0xff]
    %v311 = vld [vmem:[%s1 + $0x8d8] sm:$0xff]
    %v312 = vld [vmem:[%s1 + $0x8e0] sm:$0xff]
    %v313 = vld [vmem:[%s1 + $0x8e8] sm:$0xff]
    %v314 = vld [vmem:[%s1 + $0x8f0] sm:$0xff]
    %v315 = vld [vmem:[%s1 + $0x8f8] sm:$0xff]
    %v316 = vld [vmem:[%s1 + $0x900] sm:$0xff]
    %v317 = vld [vmem:[%s1 + $0x908] sm:$0xff]
    %v318 = vld [vmem:[%s1 + $0x910] sm:$0xff]
    %v319 = vld [vmem:[%s1 + $0x918] sm:$0xff]
    %v320 = vld [vmem:[%s1 + $0x920] sm:$0xff]
    %v321 = vld [vmem:[%s1 + $0x928] sm:$0xff]
    %v322 = vld [vmem:[%s1 + $0x930] sm:$0xff]
    %v323 = vld [vmem:[%s1 + $0x938] sm:$0xff]
    %v324 = vld [vmem:[%s1 + $0x940] sm:$0xff]
    %v325 = vld [vmem:[%s1 + $0x948] sm:$0xff]
    %v326 = vld [vmem:[%s1 + $0x950] sm:$0xff]
    %v327 = vld [vmem:[%s1 + $0x958] sm:$0xff]
    %v328 = vld [vmem:[%s1 + $0x960] sm:$0xff]
    %v329 = vld [vmem:[%s1 + $0x968] sm:$0xff]
    %v330 = vld [vmem:[%s1 + $0x970] sm:$0xff]
    %v331 = vld [vmem:[%s1 + $0x978] sm:$0xff]
    %v332 = vld [vmem:[%s1 + $0x980] sm:$0xff]
    %v333 = vld [vmem:[%s1 + $0x988] sm:$0xff]
    %v334 = vld [vmem:[%s1 + $0x990] sm:$0xff]
    %v335 = vld [vmem:[%s1 + $0x998] sm:$0xff]
    %v336 = vld [vmem:[%s1 + $0x9a0] sm:$0xff]
    %v337 = vld [vmem:[%s1 + $0x9a8] sm:$0xff]
    %v338 = vld [vmem:[%s1 + $0x9b0] sm:$0xff]
    %v339 = vld [vmem:[%s1 + $0x9b8] sm:$0xff]
    %v340 = vld [vmem:[%s1 + $0x9c0] sm:$0xff]
    %v341 = vld [vmem:[%s1 + $0x9c8] sm:$0xff]
    %v342 = vld [vmem:[%s1 + $0x9d0] sm:$0xff]
    %v343 = vld [vmem:[%s1 + $0x9d8] sm:$0xff]
    %v344 = vld [vmem:[%s1 + $0x9e0] sm:$0xff]
    %v345 = vld [vmem:[%s1 + $0x9e8] sm:$0xff]
    %v346 = vld [vmem:[%s1 + $0x9f0] sm:$0xff]
    %v347 = vld [vmem:[%s1 + $0x9f8] sm:$0xff]
    %v348 = vld [vmem:[%s1 + $0xa00] sm:$0xff]
    %v349 = vld [vmem:[%s1 + $0xa08] sm:$0xff]
    %v350 = vld [vmem:[%s1 + $0xa10] sm:$0xff]
    %v351 = vld [vmem:[%s1 + $0xa18] sm:$0xff]
    %v352 = vld [vmem:[%s1 + $0xa20] sm:$0xff]
    %v353 = vld [vmem:[%s1 + $0xa28] sm:$0xff]
    %v354 = vld [vmem:[%s1 + $0xa30] sm:$0xff]
    %v355 = vld [vmem:[%s1 + $0xa38] sm:$0xff]
    %v356 = vld [vmem:[%s1 + $0xa40] sm:$0xff]
    %v357 = vld [vmem:[%s1 + $0xa48] sm:$0xff]
    %v358 = vld [vmem:[%s1 + $0xa50] sm:$0xff]
    %v359 = vld [vmem:[%s1 + $0xa58] sm:$0xff]
    %v360 = vld [vmem:[%s1 + $0xa60] sm:$0xff]
    %v361 = vld [vmem:[%s1 + $0xa68] sm:$0xff]
    %v362 = vld [vmem:[%s1 + $0xa70] sm:$0xff]
    %v363 = vld [vmem:[%s1 + $0xa78] sm:$0xff]
    %v364 = vld [vmem:[%s1 + $0xa80] sm:$0xff]
    %v365 = vld [vmem:[%s1 + $0xa88] sm:$0xff]
    %v366 = vld [vmem:[%s1 + $0xa90] sm:$0xff]
    %v367 = vld [vmem:[%s1 + $0xa98] sm:$0xff]
    %v368 = vld [vmem:[%s1 + $0xaa0] sm:$0xff]
    %v369 = vld [vmem:[%s1 + $0xaa8] sm:$0xff]
    %v370 = vld [vmem:[%s1 + $0xab0] sm:$0xff]
    %v371 = vld [vmem:[%s1 + $0xab8] sm:$0xff]
    %v372 = vld [vmem:[%s1 + $0xac0] sm:$0xff]
    %v373 = vld [vmem:[%s1 + $0xac8] sm:$0xff]
    %v374 = vld [vmem:[%s1 + $0xad0] sm:$0xff]
    %v375 = vld [vmem:[%s1 + $0xad8] sm:$0xff]
    %v376 = vld [vmem:[%s1 + $0xae0] sm:$0xff]
    %v377 = vld [vmem:[%s1 + $0xae8] sm:$0xff]
    %v378 = vld [vmem:[%s1 + $0xaf0] sm:$0xff]
    %v379 = vld [vmem:[%s1 + $0xaf8] sm:$0xff]
    %v380 = vld [vmem:[%s1 + $0xb00] sm:$0xff]
    %v381 = vld [vmem:[%s1 + $0xb08] sm:$0xff]
    %v382 = vld [vmem:[%s1 + $0xb10] sm:$0xff]
    %v383 = vld [vmem:[%s1 + $0xb18] sm:$0xff]
    %v384 = vld [vmem:[%s1 + $0xb20] sm:$0xff]
    %v385 = vld [vmem:[%s1 + $0xb28] sm:$0xff]
    %v386 = vld [vmem:[%s1 + $0xb30] sm:$0xff]
    %v387 = vld [vmem:[%s1 + $0xb38] sm:$0xff]
    %v388 = vld [vmem:[%s1 + $0xb40] sm:$0xff]
    %v389 = vld [vmem:[%s1 + $0xb48] sm:$0xff]
    %v390 = vld [vmem:[%s1 + $0xb50] sm:$0xff]
    %v391 = vld [vmem:[%s1 + $0xb58] sm:$0xff]
    %v392 = vld [vmem:[%s1 + $0xb60] sm:$0xff]
    %v393 = vld [vmem:[%s1 + $0xb68] sm:$0xff]
    %v394 = vld [vmem:[%s1 + $0xb70] sm:$0xff]
    %v395 = vld [vmem:[%s1 + $0xb78] sm:$0xff]
    %v396 = vld [vmem:[%s1 + $0xb80] sm:$0xff]
    %v397 = vld [vmem:[%s1 + $0xb88] sm:$0xff]
    %v398 = vld [vmem:[%s1 + $0xb90] sm:$0xff]
    %v399 = vld [vmem:[%s1 + $0xb98] sm:$0xff]
    %v400 = vld [vmem:[%s1 + $0xba0] sm:$0xff]
    %v401 = vld [vmem:[%s1 + $0xba8] sm:$0xff]
    %v402 = vld [vmem:[%s1 + $0xbb0] sm:$0xff]
    %v403 = vld [vmem:[%s1 + $0xbb8] sm:$0xff]
    %v404 = vld [vmem:[%s1 + $0xbc0] sm:$0xff]
    %v405 = vld [vmem:[%s1 + $0xbc8] sm:$0xff]
    %v406 = vld [vmem:[%s1 + $0xbd0] sm:$0xff]
    %v407 = vld [vmem:[%s1 + $0xbd8] sm:$0xff]
    %v408 = vld [vmem:[%s1 + $0xbe0] sm:$0xff]
    %v409 = vld [vmem:[%s1 + $0xbe8] sm:$0xff]
    %v410 = vld [vmem:[%s1 + $0xbf0] sm:$0xff]
    %v411 = vld [vmem:[%s1 + $0xbf8] sm:$0xff]
    %v412 = vld [vmem:[%s1 + $0xc00] sm:$0xff]
    %v413 = vld [vmem:[%s1 + $0xc08] sm:$0xff]
    %v414 = vld [vmem:[%s1 + $0xc10] sm:$0xff]
    %v415 = vld [vmem:[%s1 + $0xc18] sm:$0xff]
    %v416 = vld [vmem:[%s1 + $0xc20] sm:$0xff]
    %v417 = vld [vmem:[%s1 + $0xc28] sm:$0xff]
    %v418 = vld [vmem:[%s1 + $0xc30] sm:$0xff]
    %v419 = vld [vmem:[%s1 + $0xc38] sm:$0xff]
    %v420 = vld [vmem:[%s2] sm:$0x1]
    %v422 = vlaneseq
    %v423 = vshrl.u32 %v422, 7
    %v424 = vsub.s32 0, %v423
    %v425 = vrot.slane %v420, %v424
    %v434 = vcombine.high %v21, %v21
    %v436 = vunpack.c.l.s4 1983009808
    %v437 = vunpack.c.0.s8 %v436
    %v438 = vlaneseq
    %v439 = vshrl.u32 %v438, 7
    %v440 = vsub.s32 %v437, %v439
    %v441 = vrot.slane %v21, %v440
    %v443 = vunpack.c.l.s4 1983009808
    %v444 = vunpack.c.0.s8 %v443
    %v445 = vlaneseq
    %v446 = vshrl.u32 %v445, 7
    %v447 = vsub.s32 %v444, %v446
    %v448 = vrot.slane %v434, %v447
    %v449 = vcombine.high %v441, %v441
    %v450 = vcombine.high %v448, %v448
    %v451 = vcombine.high %v22, %v22
    %v453 = vunpack.c.l.s4 1983009808
    %v454 = vunpack.c.0.s8 %v453
    %v455 = vlaneseq
    %v456 = vshrl.u32 %v455, 7
    %v457 = vsub.s32 %v454, %v456
    %v458 = vrot.slane %v22, %v457
    %v460 = vunpack.c.l.s4 1983009808
    %v461 = vunpack.c.0.s8 %v460
    %v462 = vlaneseq
    %v463 = vshrl.u32 %v462, 7
    %v464 = vsub.s32 %v461, %v463
    %v465 = vrot.slane %v451, %v464
    %v466 = vcombine.high %v458, %v458
    %v467 = vcombine.high %v465, %v465
    %v468 = vcombine.high %v23, %v23
    %v470 = vunpack.c.l.s4 1983009808
    %v471 = vunpack.c.0.s8 %v470
    %v472 = vlaneseq
    %v473 = vshrl.u32 %v472, 7
    %v474 = vsub.s32 %v471, %v473
    %v475 = vrot.slane %v23, %v474
    %v477 = vunpack.c.l.s4 1983009808
    %v478 = vunpack.c.0.s8 %v477
    %v479 = vlaneseq
    %v480 = vshrl.u32 %v479, 7
    %v481 = vsub.s32 %v478, %v480
    %v482 = vrot.slane %v468, %v481
    %v483 = vcombine.high %v475, %v475
    %v484 = vcombine.high %v482, %v482
    %v485 = vcombine.high %v24, %v24
    %v487 = vunpack.c.l.s4 1983009808
    %v488 = vunpack.c.0.s8 %v487
    %v489 = vlaneseq
    %v490 = vshrl.u32 %v489, 7
    %v491 = vsub.s32 %v488, %v490
    %v492 = vrot.slane %v24, %v491
    %v494 = vunpack.c.l.s4 1983009808
    %v495 = vunpack.c.0.s8 %v494
    %v496 = vlaneseq
    %v497 = vshrl.u32 %v496, 7
    %v498 = vsub.s32 %v495, %v497
    %v499 = vrot.slane %v485, %v498
    %v500 = vcombine.high %v492, %v492
    %v501 = vcombine.high %v499, %v499
    %v502 = vcombine.high %v25, %v25
    %v504 = vunpack.c.l.s4 1983009808
    %v505 = vunpack.c.0.s8 %v504
    %v506 = vlaneseq
    %v507 = vshrl.u32 %v506, 7
    %v508 = vsub.s32 %v505, %v507
    %v509 = vrot.slane %v25, %v508
    %v511 = vunpack.c.l.s4 1983009808
    %v512 = vunpack.c.0.s8 %v511
    %v513 = vlaneseq
    %v514 = vshrl.u32 %v513, 7
    %v515 = vsub.s32 %v512, %v514
    %v516 = vrot.slane %v502, %v515
    %v517 = vcombine.high %v509, %v509
    %v518 = vcombine.high %v516, %v516
    %v519 = vcombine.high %v26, %v26
    %v521 = vunpack.c.l.s4 1983009808
    %v522 = vunpack.c.0.s8 %v521
    %v523 = vlaneseq
    %v524 = vshrl.u32 %v523, 7
    %v525 = vsub.s32 %v522, %v524
    %v526 = vrot.slane %v26, %v525
    %v528 = vunpack.c.l.s4 1983009808
    %v529 = vunpack.c.0.s8 %v528
    %v530 = vlaneseq
    %v531 = vshrl.u32 %v530, 7
    %v532 = vsub.s32 %v529, %v531
    %v533 = vrot.slane %v519, %v532
    %v534 = vcombine.high %v526, %v526
    %v535 = vcombine.high %v533, %v533
    %v537 = vunpack.c.l.s4 1983009808
    %v538 = vunpack.c.0.s8 %v537
    %v539 = vlaneseq
    %v540 = vshrl.u32 %v539, 7
    %v541 = vsub.s32 %v538, %v540
    %v542 = vrot.slane %v27, %v541
    %vm567 = vcmask 523264
    %v568 = vsel %vm567, %v542, 0
    %570 = vmatprep.subr.mxu0 0.0
    %571 = vmatpush1.msra.mxu0 %v43
    %572 = vmatprep.subr.mxu0 0.0
    %573 = vmatpush1.msra.mxu0 %v42
    %574 = vmatprep.subr.mxu0 0.0
    %575 = vmatpush1.msra.mxu0 %v41
    %576 = vmatprep.subr.mxu0 0.0
    %577 = vmatpush1.msra.mxu0 %v40
    %578 = vmatprep.subr.mxu0 0.0
    %579 = vmatpush1.msra.mxu0 %v39
    %580 = vmatprep.subr.mxu0 0.0
    %581 = vmatpush1.msra.mxu0 %v38
    %582 = vmatprep.subr.mxu0 0.0
    %583 = vmatpush1.msra.mxu0 %v37
    %584 = vmatprep.subr.mxu0 0.0
    %585 = vmatpush1.msra.mxu0 %v36
    %586 = vmatprep.subr.mxu0 0.0
    %587 = vmatpush1.msra.mxu0 %v35
    %588 = vmatprep.subr.mxu0 0.0
    %589 = vmatpush1.msra.mxu0 %v34
    %590 = vmatprep.subr.mxu0 0.0
    %591 = vmatpush1.msra.mxu0 %v33
    %592 = vmatprep.subr.mxu0 0.0
    %593 = vmatpush1.msra.mxu0 %v32
    %594 = vmatprep.subr.mxu0 0.0
    %595 = vmatpush1.msra.mxu0 %v31
    %596 = vmatprep.subr.mxu0 0.0
    %597 = vmatpush1.msra.mxu0 %v30
    %598 = vmatprep.subr.mxu0 0.0
    %599 = vmatpush1.msra.mxu0 %v29
    %600 = vmatprep.subr.mxu0 0.0
    %601 = vmatpush1.msra.mxu0 %v28
    %602 = vmatprep.subr.mxu0 0.0
    %603 = vmatpush2.msra.mxu0 %v59
    %604 = vmatprep.subr.mxu0 0.0
    %605 = vmatpush2.msra.mxu0 %v58
    %606 = vmatprep.subr.mxu0 0.0
    %607 = vmatpush2.msra.mxu0 %v57
    %608 = vmatprep.subr.mxu0 0.0
    %609 = vmatpush2.msra.mxu0 %v56
    %610 = vmatprep.subr.mxu0 0.0
    %611 = vmatpush2.msra.mxu0 %v55
    %612 = vmatprep.subr.mxu0 0.0
    %613 = vmatpush2.msra.mxu0 %v54
    %614 = vmatprep.subr.mxu0 0.0
    %615 = vmatpush2.msra.mxu0 %v53
    %616 = vmatprep.subr.mxu0 0.0
    %617 = vmatpush2.msra.mxu0 %v52
    %618 = vmatprep.subr.mxu0 0.0
    %619 = vmatpush2.msra.mxu0 %v51
    %620 = vmatprep.subr.mxu0 0.0
    %621 = vmatpush2.msra.mxu0 %v50
    %622 = vmatprep.subr.mxu0 0.0
    %623 = vmatpush2.msra.mxu0 %v49
    %624 = vmatprep.subr.mxu0 0.0
    %625 = vmatpush2.msra.mxu0 %v48
    %626 = vmatprep.subr.mxu0 0.0
    %627 = vmatpush2.msra.mxu0 %v47
    %628 = vmatprep.subr.mxu0 0.0
    %629 = vmatpush2.msra.mxu0 %v46
    %630 = vmatprep.subr.mxu0 0.0
    %631 = vmatpush2.msra.mxu0 %v45
    %632 = vmatprep.subr.mxu0 0.0
    %633 = vmatpush2.msra.mxu0 %v44
    %634 = vmatprep.mubr.f32.mxu0 %v449
    %635 = vmatmul.mubr.f32.gmra.mxu0 %v441
    %v636 = vpop.f32.mrf.mxu0
    %v637 = vadd.f32 %v425, %v636
    %v638 = vpop.f32.mrf.mxu0
    %639 = vdwg.mxu0
    %640 = vmatprep.subr.mxu0 0.0
    %641 = vmatpush1.msra.mxu0 %v75
    %642 = vmatprep.subr.mxu0 0.0
    %643 = vmatpush1.msra.mxu0 %v74
    %644 = vmatprep.subr.mxu0 0.0
    %645 = vmatpush1.msra.mxu0 %v73
    %646 = vmatprep.subr.mxu0 0.0
    %647 = vmatpush1.msra.mxu0 %v72
    %648 = vmatprep.subr.mxu0 0.0
    %649 = vmatpush1.msra.mxu0 %v71
    %650 = vmatprep.subr.mxu0 0.0
    %651 = vmatpush1.msra.mxu0 %v70
    %652 = vmatprep.subr.mxu0 0.0
    %653 = vmatpush1.msra.mxu0 %v69
    %654 = vmatprep.subr.mxu0 0.0
    %655 = vmatpush1.msra.mxu0 %v68
    %656 = vmatprep.subr.mxu0 0.0
    %657 = vmatpush1.msra.mxu0 %v67
    %658 = vmatprep.subr.mxu0 0.0
    %659 = vmatpush1.msra.mxu0 %v66
    %660 = vmatprep.subr.mxu0 0.0
    %661 = vmatpush1.msra.mxu0 %v65
    %662 = vmatprep.subr.mxu0 0.0
    %663 = vmatpush1.msra.mxu0 %v64
    %664 = vmatprep.subr.mxu0 0.0
    %665 = vmatpush1.msra.mxu0 %v63
    %666 = vmatprep.subr.mxu0 0.0
    %667 = vmatpush1.msra.mxu0 %v62
    %668 = vmatprep.subr.mxu0 0.0
    %669 = vmatpush1.msra.mxu0 %v61
    %670 = vmatprep.subr.mxu0 0.0
    %671 = vmatpush1.msra.mxu0 %v60
    %672 = vmatprep.subr.mxu0 0.0
    %673 = vmatpush2.msra.mxu0 %v91
    %674 = vmatprep.subr.mxu0 0.0
    %675 = vmatpush2.msra.mxu0 %v90
    %676 = vmatprep.subr.mxu0 0.0
    %677 = vmatpush2.msra.mxu0 %v89
    %678 = vmatprep.subr.mxu0 0.0
    %679 = vmatpush2.msra.mxu0 %v88
    %680 = vmatprep.subr.mxu0 0.0
    %681 = vmatpush2.msra.mxu0 %v87
    %682 = vmatprep.subr.mxu0 0.0
    %683 = vmatpush2.msra.mxu0 %v86
    %684 = vmatprep.subr.mxu0 0.0
    %685 = vmatpush2.msra.mxu0 %v85
    %686 = vmatprep.subr.mxu0 0.0
    %687 = vmatpush2.msra.mxu0 %v84
    %688 = vmatprep.subr.mxu0 0.0
    %689 = vmatpush2.msra.mxu0 %v83
    %690 = vmatprep.subr.mxu0 0.0
    %691 = vmatpush2.msra.mxu0 %v82
    %692 = vmatprep.subr.mxu0 0.0
    %693 = vmatpush2.msra.mxu0 %v81
    %694 = vmatprep.subr.mxu0 0.0
    %695 = vmatpush2.msra.mxu0 %v80
    %696 = vmatprep.subr.mxu0 0.0
    %697 = vmatpush2.msra.mxu0 %v79
    %698 = vmatprep.subr.mxu0 0.0
    %699 = vmatpush2.msra.mxu0 %v78
    %700 = vmatprep.subr.mxu0 0.0
    %701 = vmatpush2.msra.mxu0 %v77
    %702 = vmatprep.subr.mxu0 0.0
    %703 = vmatpush2.msra.mxu0 %v76
    %704 = vmatprep.mubr.f32.mxu0 %v450
    %705 = vmatmul.mubr.f32.gmra.mxu0 %v448
    %v706 = vpop.f32.mrf.mxu0
    %v707 = vadd.f32 %v637, %v706
    %v708 = vpop.f32.mrf.mxu0
    %709 = vdwg.mxu0
    %710 = vmatprep.subr.mxu0 0.0
    %711 = vmatpush1.msra.mxu0 %v107
    %712 = vmatprep.subr.mxu0 0.0
    %713 = vmatpush1.msra.mxu0 %v106
    %714 = vmatprep.subr.mxu0 0.0
    %715 = vmatpush1.msra.mxu0 %v105
    %716 = vmatprep.subr.mxu0 0.0
    %717 = vmatpush1.msra.mxu0 %v104
    %718 = vmatprep.subr.mxu0 0.0
    %719 = vmatpush1.msra.mxu0 %v103
    %720 = vmatprep.subr.mxu0 0.0
    %721 = vmatpush1.msra.mxu0 %v102
    %722 = vmatprep.subr.mxu0 0.0
    %723 = vmatpush1.msra.mxu0 %v101
    %724 = vmatprep.subr.mxu0 0.0
    %725 = vmatpush1.msra.mxu0 %v100
    %726 = vmatprep.subr.mxu0 0.0
    %727 = vmatpush1.msra.mxu0 %v99
    %728 = vmatprep.subr.mxu0 0.0
    %729 = vmatpush1.msra.mxu0 %v98
    %730 = vmatprep.subr.mxu0 0.0
    %731 = vmatpush1.msra.mxu0 %v97
    %732 = vmatprep.subr.mxu0 0.0
    %733 = vmatpush1.msra.mxu0 %v96
    %734 = vmatprep.subr.mxu0 0.0
    %735 = vmatpush1.msra.mxu0 %v95
    %736 = vmatprep.subr.mxu0 0.0
    %737 = vmatpush1.msra.mxu0 %v94
    %738 = vmatprep.subr.mxu0 0.0
    %739 = vmatpush1.msra.mxu0 %v93
    %740 = vmatprep.subr.mxu0 0.0
    %741 = vmatpush1.msra.mxu0 %v92
    %742 = vmatprep.subr.mxu0 0.0
    %743 = vmatpush2.msra.mxu0 %v123
    %744 = vmatprep.subr.mxu0 0.0
    %745 = vmatpush2.msra.mxu0 %v122
    %746 = vmatprep.subr.mxu0 0.0
    %747 = vmatpush2.msra.mxu0 %v121
    %748 = vmatprep.subr.mxu0 0.0
    %749 = vmatpush2.msra.mxu0 %v120
    %750 = vmatprep.subr.mxu0 0.0
    %751 = vmatpush2.msra.mxu0 %v119
    %752 = vmatprep.subr.mxu0 0.0
    %753 = vmatpush2.msra.mxu0 %v118
    %754 = vmatprep.subr.mxu0 0.0
    %755 = vmatpush2.msra.mxu0 %v117
    %756 = vmatprep.subr.mxu0 0.0
    %757 = vmatpush2.msra.mxu0 %v116
    %758 = vmatprep.subr.mxu0 0.0
    %759 = vmatpush2.msra.mxu0 %v115
    %760 = vmatprep.subr.mxu0 0.0
    %761 = vmatpush2.msra.mxu0 %v114
    %762 = vmatprep.subr.mxu0 0.0
    %763 = vmatpush2.msra.mxu0 %v113
    %764 = vmatprep.subr.mxu0 0.0
    %765 = vmatpush2.msra.mxu0 %v112
    %766 = vmatprep.subr.mxu0 0.0
    %767 = vmatpush2.msra.mxu0 %v111
    %768 = vmatprep.subr.mxu0 0.0
    %769 = vmatpush2.msra.mxu0 %v110
    %770 = vmatprep.subr.mxu0 0.0
    %771 = vmatpush2.msra.mxu0 %v109
    %772 = vmatprep.subr.mxu0 0.0
    %773 = vmatpush2.msra.mxu0 %v108
    %774 = vmatprep.mubr.f32.mxu0 %v466
    %775 = vmatmul.mubr.f32.gmra.mxu0 %v458
    %v776 = vpop.f32.mrf.mxu0
    %v777 = vadd.f32 %v707, %v776
    %v778 = vpop.f32.mrf.mxu0
    %779 = vdwg.mxu0
    %780 = vmatprep.subr.mxu0 0.0
    %781 = vmatpush1.msra.mxu0 %v139
    %782 = vmatprep.subr.mxu0 0.0
    %783 = vmatpush1.msra.mxu0 %v138
    %784 = vmatprep.subr.mxu0 0.0
    %785 = vmatpush1.msra.mxu0 %v137
    %786 = vmatprep.subr.mxu0 0.0
    %787 = vmatpush1.msra.mxu0 %v136
    %788 = vmatprep.subr.mxu0 0.0
    %789 = vmatpush1.msra.mxu0 %v135
    %790 = vmatprep.subr.mxu0 0.0
    %791 = vmatpush1.msra.mxu0 %v134
    %792 = vmatprep.subr.mxu0 0.0
    %793 = vmatpush1.msra.mxu0 %v133
    %794 = vmatprep.subr.mxu0 0.0
    %795 = vmatpush1.msra.mxu0 %v132
    %796 = vmatprep.subr.mxu0 0.0
    %797 = vmatpush1.msra.mxu0 %v131
    %798 = vmatprep.subr.mxu0 0.0
    %799 = vmatpush1.msra.mxu0 %v130
    %800 = vmatprep.subr.mxu0 0.0
    %801 = vmatpush1.msra.mxu0 %v129
    %802 = vmatprep.subr.mxu0 0.0
    %803 = vmatpush1.msra.mxu0 %v128
    %804 = vmatprep.subr.mxu0 0.0
    %805 = vmatpush1.msra.mxu0 %v127
    %806 = vmatprep.subr.mxu0 0.0
    %807 = vmatpush1.msra.mxu0 %v126
    %808 = vmatprep.subr.mxu0 0.0
    %809 = vmatpush1.msra.mxu0 %v125
    %810 = vmatprep.subr.mxu0 0.0
    %811 = vmatpush1.msra.mxu0 %v124
    %812 = vmatprep.subr.mxu0 0.0
    %813 = vmatpush2.msra.mxu0 %v155
    %814 = vmatprep.subr.mxu0 0.0
    %815 = vmatpush2.msra.mxu0 %v154
    %816 = vmatprep.subr.mxu0 0.0
    %817 = vmatpush2.msra.mxu0 %v153
    %818 = vmatprep.subr.mxu0 0.0
    %819 = vmatpush2.msra.mxu0 %v152
    %820 = vmatprep.subr.mxu0 0.0
    %821 = vmatpush2.msra.mxu0 %v151
    %822 = vmatprep.subr.mxu0 0.0
    %823 = vmatpush2.msra.mxu0 %v150
    %824 = vmatprep.subr.mxu0 0.0
    %825 = vmatpush2.msra.mxu0 %v149
    %826 = vmatprep.subr.mxu0 0.0
    %827 = vmatpush2.msra.mxu0 %v148
    %828 = vmatprep.subr.mxu0 0.0
    %829 = vmatpush2.msra.mxu0 %v147
    %830 = vmatprep.subr.mxu0 0.0
    %831 = vmatpush2.msra.mxu0 %v146
    %832 = vmatprep.subr.mxu0 0.0
    %833 = vmatpush2.msra.mxu0 %v145
    %834 = vmatprep.subr.mxu0 0.0
    %835 = vmatpush2.msra.mxu0 %v144
    %836 = vmatprep.subr.mxu0 0.0
    %837 = vmatpush2.msra.mxu0 %v143
    %838 = vmatprep.subr.mxu0 0.0
    %839 = vmatpush2.msra.mxu0 %v142
    %840 = vmatprep.subr.mxu0 0.0
    %841 = vmatpush2.msra.mxu0 %v141
    %842 = vmatprep.subr.mxu0 0.0
    %843 = vmatpush2.msra.mxu0 %v140
    %844 = vmatprep.mubr.f32.mxu0 %v467
    %845 = vmatmul.mubr.f32.gmra.mxu0 %v465
    %v846 = vpop.f32.mrf.mxu0
    %v847 = vadd.f32 %v777, %v846
    %v848 = vpop.f32.mrf.mxu0
    %849 = vdwg.mxu0
    %850 = vmatprep.subr.mxu0 0.0
    %851 = vmatpush1.msra.mxu0 %v171
    %852 = vmatprep.subr.mxu0 0.0
    %853 = vmatpush1.msra.mxu0 %v170
    %854 = vmatprep.subr.mxu0 0.0
    %855 = vmatpush1.msra.mxu0 %v169
    %856 = vmatprep.subr.mxu0 0.0
    %857 = vmatpush1.msra.mxu0 %v168
    %858 = vmatprep.subr.mxu0 0.0
    %859 = vmatpush1.msra.mxu0 %v167
    %860 = vmatprep.subr.mxu0 0.0
    %861 = vmatpush1.msra.mxu0 %v166
    %862 = vmatprep.subr.mxu0 0.0
    %863 = vmatpush1.msra.mxu0 %v165
    %864 = vmatprep.subr.mxu0 0.0
    %865 = vmatpush1.msra.mxu0 %v164
    %866 = vmatprep.subr.mxu0 0.0
    %867 = vmatpush1.msra.mxu0 %v163
    %868 = vmatprep.subr.mxu0 0.0
    %869 = vmatpush1.msra.mxu0 %v162
    %870 = vmatprep.subr.mxu0 0.0
    %871 = vmatpush1.msra.mxu0 %v161
    %872 = vmatprep.subr.mxu0 0.0
    %873 = vmatpush1.msra.mxu0 %v160
    %874 = vmatprep.subr.mxu0 0.0
    %875 = vmatpush1.msra.mxu0 %v159
    %876 = vmatprep.subr.mxu0 0.0
    %877 = vmatpush1.msra.mxu0 %v158
    %878 = vmatprep.subr.mxu0 0.0
    %879 = vmatpush1.msra.mxu0 %v157
    %880 = vmatprep.subr.mxu0 0.0
    %881 = vmatpush1.msra.mxu0 %v156
    %882 = vmatprep.subr.mxu0 0.0
    %883 = vmatpush2.msra.mxu0 %v187
    %884 = vmatprep.subr.mxu0 0.0
    %885 = vmatpush2.msra.mxu0 %v186
    %886 = vmatprep.subr.mxu0 0.0
    %887 = vmatpush2.msra.mxu0 %v185
    %888 = vmatprep.subr.mxu0 0.0
    %889 = vmatpush2.msra.mxu0 %v184
    %890 = vmatprep.subr.mxu0 0.0
    %891 = vmatpush2.msra.mxu0 %v183
    %892 = vmatprep.subr.mxu0 0.0
    %893 = vmatpush2.msra.mxu0 %v182
    %894 = vmatprep.subr.mxu0 0.0
    %895 = vmatpush2.msra.mxu0 %v181
    %896 = vmatprep.subr.mxu0 0.0
    %897 = vmatpush2.msra.mxu0 %v180
    %898 = vmatprep.subr.mxu0 0.0
    %899 = vmatpush2.msra.mxu0 %v179
    %900 = vmatprep.subr.mxu0 0.0
    %901 = vmatpush2.msra.mxu0 %v178
    %902 = vmatprep.subr.mxu0 0.0
    %903 = vmatpush2.msra.mxu0 %v177
    %904 = vmatprep.subr.mxu0 0.0
    %905 = vmatpush2.msra.mxu0 %v176
    %906 = vmatprep.subr.mxu0 0.0
    %907 = vmatpush2.msra.mxu0 %v175
    %908 = vmatprep.subr.mxu0 0.0
    %909 = vmatpush2.msra.mxu0 %v174
    %910 = vmatprep.subr.mxu0 0.0
    %911 = vmatpush2.msra.mxu0 %v173
    %912 = vmatprep.subr.mxu0 0.0
    %913 = vmatpush2.msra.mxu0 %v172
    %914 = vmatprep.mubr.f32.mxu0 %v483
    %915 = vmatmul.mubr.f32.gmra.mxu0 %v475
    %v916 = vpop.f32.mrf.mxu0
    %v917 = vadd.f32 %v847, %v916
    %v918 = vpop.f32.mrf.mxu0
    %919 = vdwg.mxu0
    %920 = vmatprep.subr.mxu0 0.0
    %921 = vmatpush1.msra.mxu0 %v203
    %922 = vmatprep.subr.mxu0 0.0
    %923 = vmatpush1.msra.mxu0 %v202
    %924 = vmatprep.subr.mxu0 0.0
    %925 = vmatpush1.msra.mxu0 %v201
    %926 = vmatprep.subr.mxu0 0.0
    %927 = vmatpush1.msra.mxu0 %v200
    %928 = vmatprep.subr.mxu0 0.0
    %929 = vmatpush1.msra.mxu0 %v199
    %930 = vmatprep.subr.mxu0 0.0
    %931 = vmatpush1.msra.mxu0 %v198
    %932 = vmatprep.subr.mxu0 0.0
    %933 = vmatpush1.msra.mxu0 %v197
    %934 = vmatprep.subr.mxu0 0.0
    %935 = vmatpush1.msra.mxu0 %v196
    %936 = vmatprep.subr.mxu0 0.0
    %937 = vmatpush1.msra.mxu0 %v195
    %938 = vmatprep.subr.mxu0 0.0
    %939 = vmatpush1.msra.mxu0 %v194
    %940 = vmatprep.subr.mxu0 0.0
    %941 = vmatpush1.msra.mxu0 %v193
    %942 = vmatprep.subr.mxu0 0.0
    %943 = vmatpush1.msra.mxu0 %v192
    %944 = vmatprep.subr.mxu0 0.0
    %945 = vmatpush1.msra.mxu0 %v191
    %946 = vmatprep.subr.mxu0 0.0
    %947 = vmatpush1.msra.mxu0 %v190
    %948 = vmatprep.subr.mxu0 0.0
    %949 = vmatpush1.msra.mxu0 %v189
    %950 = vmatprep.subr.mxu0 0.0
    %951 = vmatpush1.msra.mxu0 %v188
    %952 = vmatprep.subr.mxu0 0.0
    %953 = vmatpush2.msra.mxu0 %v219
    %954 = vmatprep.subr.mxu0 0.0
    %955 = vmatpush2.msra.mxu0 %v218
    %956 = vmatprep.subr.mxu0 0.0
    %957 = vmatpush2.msra.mxu0 %v217
    %958 = vmatprep.subr.mxu0 0.0
    %959 = vmatpush2.msra.mxu0 %v216
    %960 = vmatprep.subr.mxu0 0.0
    %961 = vmatpush2.msra.mxu0 %v215
    %962 = vmatprep.subr.mxu0 0.0
    %963 = vmatpush2.msra.mxu0 %v214
    %964 = vmatprep.subr.mxu0 0.0
    %965 = vmatpush2.msra.mxu0 %v213
    %966 = vmatprep.subr.mxu0 0.0
    %967 = vmatpush2.msra.mxu0 %v212
    %968 = vmatprep.subr.mxu0 0.0
    %969 = vmatpush2.msra.mxu0 %v211
    %970 = vmatprep.subr.mxu0 0.0
    %971 = vmatpush2.msra.mxu0 %v210
    %972 = vmatprep.subr.mxu0 0.0
    %973 = vmatpush2.msra.mxu0 %v209
    %974 = vmatprep.subr.mxu0 0.0
    %975 = vmatpush2.msra.mxu0 %v208
    %976 = vmatprep.subr.mxu0 0.0
    %977 = vmatpush2.msra.mxu0 %v207
    %978 = vmatprep.subr.mxu0 0.0
    %979 = vmatpush2.msra.mxu0 %v206
    %980 = vmatprep.subr.mxu0 0.0
    %981 = vmatpush2.msra.mxu0 %v205
    %982 = vmatprep.subr.mxu0 0.0
    %983 = vmatpush2.msra.mxu0 %v204
    %984 = vmatprep.mubr.f32.mxu0 %v484
    %985 = vmatmul.mubr.f32.gmra.mxu0 %v482
    %v986 = vpop.f32.mrf.mxu0
    %v987 = vadd.f32 %v917, %v986
    %v988 = vpop.f32.mrf.mxu0
    %989 = vdwg.mxu0
    %990 = vmatprep.subr.mxu0 0.0
    %991 = vmatpush1.msra.mxu0 %v235
    %992 = vmatprep.subr.mxu0 0.0
    %993 = vmatpush1.msra.mxu0 %v234
    %994 = vmatprep.subr.mxu0 0.0
    %995 = vmatpush1.msra.mxu0 %v233
    %996 = vmatprep.subr.mxu0 0.0
    %997 = vmatpush1.msra.mxu0 %v232
    %998 = vmatprep.subr.mxu0 0.0
    %999 = vmatpush1.msra.mxu0 %v231
    %1000 = vmatprep.subr.mxu0 0.0
    %1001 = vmatpush1.msra.mxu0 %v230
    %1002 = vmatprep.subr.mxu0 0.0
    %1003 = vmatpush1.msra.mxu0 %v229
    %1004 = vmatprep.subr.mxu0 0.0
    %1005 = vmatpush1.msra.mxu0 %v228
    %1006 = vmatprep.subr.mxu0 0.0
    %1007 = vmatpush1.msra.mxu0 %v227
    %1008 = vmatprep.subr.mxu0 0.0
    %1009 = vmatpush1.msra.mxu0 %v226
    %1010 = vmatprep.subr.mxu0 0.0
    %1011 = vmatpush1.msra.mxu0 %v225
    %1012 = vmatprep.subr.mxu0 0.0
    %1013 = vmatpush1.msra.mxu0 %v224
    %1014 = vmatprep.subr.mxu0 0.0
    %1015 = vmatpush1.msra.mxu0 %v223
    %1016 = vmatprep.subr.mxu0 0.0
    %1017 = vmatpush1.msra.mxu0 %v222
    %1018 = vmatprep.subr.mxu0 0.0
    %1019 = vmatpush1.msra.mxu0 %v221
    %1020 = vmatprep.subr.mxu0 0.0
    %1021 = vmatpush1.msra.mxu0 %v220
    %1022 = vmatprep.subr.mxu0 0.0
    %1023 = vmatpush2.msra.mxu0 %v251
    %1024 = vmatprep.subr.mxu0 0.0
    %1025 = vmatpush2.msra.mxu0 %v250
    %1026 = vmatprep.subr.mxu0 0.0
    %1027 = vmatpush2.msra.mxu0 %v249
    %1028 = vmatprep.subr.mxu0 0.0
    %1029 = vmatpush2.msra.mxu0 %v248
    %1030 = vmatprep.subr.mxu0 0.0
    %1031 = vmatpush2.msra.mxu0 %v247
    %1032 = vmatprep.subr.mxu0 0.0
    %1033 = vmatpush2.msra.mxu0 %v246
    %1034 = vmatprep.subr.mxu0 0.0
    %1035 = vmatpush2.msra.mxu0 %v245
    %1036 = vmatprep.subr.mxu0 0.0
    %1037 = vmatpush2.msra.mxu0 %v244
    %1038 = vmatprep.subr.mxu0 0.0
    %1039 = vmatpush2.msra.mxu0 %v243
    %1040 = vmatprep.subr.mxu0 0.0
    %1041 = vmatpush2.msra.mxu0 %v242
    %1042 = vmatprep.subr.mxu0 0.0
    %1043 = vmatpush2.msra.mxu0 %v241
    %1044 = vmatprep.subr.mxu0 0.0
    %1045 = vmatpush2.msra.mxu0 %v240
    %1046 = vmatprep.subr.mxu0 0.0
    %1047 = vmatpush2.msra.mxu0 %v239
    %1048 = vmatprep.subr.mxu0 0.0
    %1049 = vmatpush2.msra.mxu0 %v238
    %1050 = vmatprep.subr.mxu0 0.0
    %1051 = vmatpush2.msra.mxu0 %v237
    %1052 = vmatprep.subr.mxu0 0.0
    %1053 = vmatpush2.msra.mxu0 %v236
    %1054 = vmatprep.mubr.f32.mxu0 %v500
    %1055 = vmatmul.mubr.f32.gmra.mxu0 %v492
    %v1056 = vpop.f32.mrf.mxu0
    %v1057 = vadd.f32 %v987, %v1056
    %v1058 = vpop.f32.mrf.mxu0
    %1059 = vdwg.mxu0
    %1060 = vmatprep.subr.mxu0 0.0
    %1061 = vmatpush1.msra.mxu0 %v267
    %1062 = vmatprep.subr.mxu0 0.0
    %1063 = vmatpush1.msra.mxu0 %v266
    %1064 = vmatprep.subr.mxu0 0.0
    %1065 = vmatpush1.msra.mxu0 %v265
    %1066 = vmatprep.subr.mxu0 0.0
    %1067 = vmatpush1.msra.mxu0 %v264
    %1068 = vmatprep.subr.mxu0 0.0
    %1069 = vmatpush1.msra.mxu0 %v263
    %1070 = vmatprep.subr.mxu0 0.0
    %1071 = vmatpush1.msra.mxu0 %v262
    %1072 = vmatprep.subr.mxu0 0.0
    %1073 = vmatpush1.msra.mxu0 %v261
    %1074 = vmatprep.subr.mxu0 0.0
    %1075 = vmatpush1.msra.mxu0 %v260
    %1076 = vmatprep.subr.mxu0 0.0
    %1077 = vmatpush1.msra.mxu0 %v259
    %1078 = vmatprep.subr.mxu0 0.0
    %1079 = vmatpush1.msra.mxu0 %v258
    %1080 = vmatprep.subr.mxu0 0.0
    %1081 = vmatpush1.msra.mxu0 %v257
    %1082 = vmatprep.subr.mxu0 0.0
    %1083 = vmatpush1.msra.mxu0 %v256
    %1084 = vmatprep.subr.mxu0 0.0
    %1085 = vmatpush1.msra.mxu0 %v255
    %1086 = vmatprep.subr.mxu0 0.0
    %1087 = vmatpush1.msra.mxu0 %v254
    %1088 = vmatprep.subr.mxu0 0.0
    %1089 = vmatpush1.msra.mxu0 %v253
    %1090 = vmatprep.subr.mxu0 0.0
    %1091 = vmatpush1.msra.mxu0 %v252
    %1092 = vmatprep.subr.mxu0 0.0
    %1093 = vmatpush2.msra.mxu0 %v283
    %1094 = vmatprep.subr.mxu0 0.0
    %1095 = vmatpush2.msra.mxu0 %v282
    %1096 = vmatprep.subr.mxu0 0.0
    %1097 = vmatpush2.msra.mxu0 %v281
    %1098 = vmatprep.subr.mxu0 0.0
    %1099 = vmatpush2.msra.mxu0 %v280
    %1100 = vmatprep.subr.mxu0 0.0
    %1101 = vmatpush2.msra.mxu0 %v279
    %1102 = vmatprep.subr.mxu0 0.0
    %1103 = vmatpush2.msra.mxu0 %v278
    %1104 = vmatprep.subr.mxu0 0.0
    %1105 = vmatpush2.msra.mxu0 %v277
    %1106 = vmatprep.subr.mxu0 0.0
    %1107 = vmatpush2.msra.mxu0 %v276
    %1108 = vmatprep.subr.mxu0 0.0
    %1109 = vmatpush2.msra.mxu0 %v275
    %1110 = vmatprep.subr.mxu0 0.0
    %1111 = vmatpush2.msra.mxu0 %v274
    %1112 = vmatprep.subr.mxu0 0.0
    %1113 = vmatpush2.msra.mxu0 %v273
    %1114 = vmatprep.subr.mxu0 0.0
    %1115 = vmatpush2.msra.mxu0 %v272
    %1116 = vmatprep.subr.mxu0 0.0
    %1117 = vmatpush2.msra.mxu0 %v271
    %1118 = vmatprep.subr.mxu0 0.0
    %1119 = vmatpush2.msra.mxu0 %v270
    %1120 = vmatprep.subr.mxu0 0.0
    %1121 = vmatpush2.msra.mxu0 %v269
    %1122 = vmatprep.subr.mxu0 0.0
    %1123 = vmatpush2.msra.mxu0 %v268
    %1124 = vmatprep.mubr.f32.mxu0 %v501
    %1125 = vmatmul.mubr.f32.gmra.mxu0 %v499
    %v1126 = vpop.f32.mrf.mxu0
    %v1127 = vadd.f32 %v1057, %v1126
    %v1128 = vpop.f32.mrf.mxu0
    %1129 = vdwg.mxu0
    %1130 = vmatprep.subr.mxu0 0.0
    %1131 = vmatpush1.msra.mxu0 %v299
    %1132 = vmatprep.subr.mxu0 0.0
    %1133 = vmatpush1.msra.mxu0 %v298
    %1134 = vmatprep.subr.mxu0 0.0
    %1135 = vmatpush1.msra.mxu0 %v297
    %1136 = vmatprep.subr.mxu0 0.0
    %1137 = vmatpush1.msra.mxu0 %v296
    %1138 = vmatprep.subr.mxu0 0.0
    %1139 = vmatpush1.msra.mxu0 %v295
    %1140 = vmatprep.subr.mxu0 0.0
    %1141 = vmatpush1.msra.mxu0 %v294
    %1142 = vmatprep.subr.mxu0 0.0
    %1143 = vmatpush1.msra.mxu0 %v293
    %1144 = vmatprep.subr.mxu0 0.0
    %1145 = vmatpush1.msra.mxu0 %v292
    %1146 = vmatprep.subr.mxu0 0.0
    %1147 = vmatpush1.msra.mxu0 %v291
    %1148 = vmatprep.subr.mxu0 0.0
    %1149 = vmatpush1.msra.mxu0 %v290
    %1150 = vmatprep.subr.mxu0 0.0
    %1151 = vmatpush1.msra.mxu0 %v289
    %1152 = vmatprep.subr.mxu0 0.0
    %1153 = vmatpush1.msra.mxu0 %v288
    %1154 = vmatprep.subr.mxu0 0.0
    %1155 = vmatpush1.msra.mxu0 %v287
    %1156 = vmatprep.subr.mxu0 0.0
    %1157 = vmatpush1.msra.mxu0 %v286
    %1158 = vmatprep.subr.mxu0 0.0
    %1159 = vmatpush1.msra.mxu0 %v285
    %1160 = vmatprep.subr.mxu0 0.0
    %1161 = vmatpush1.msra.mxu0 %v284
    %1162 = vmatprep.subr.mxu0 0.0
    %1163 = vmatpush2.msra.mxu0 %v315
    %1164 = vmatprep.subr.mxu0 0.0
    %1165 = vmatpush2.msra.mxu0 %v314
    %1166 = vmatprep.subr.mxu0 0.0
    %1167 = vmatpush2.msra.mxu0 %v313
    %1168 = vmatprep.subr.mxu0 0.0
    %1169 = vmatpush2.msra.mxu0 %v312
    %1170 = vmatprep.subr.mxu0 0.0
    %1171 = vmatpush2.msra.mxu0 %v311
    %1172 = vmatprep.subr.mxu0 0.0
    %1173 = vmatpush2.msra.mxu0 %v310
    %1174 = vmatprep.subr.mxu0 0.0
    %1175 = vmatpush2.msra.mxu0 %v309
    %1176 = vmatprep.subr.mxu0 0.0
    %1177 = vmatpush2.msra.mxu0 %v308
    %1178 = vmatprep.subr.mxu0 0.0
    %1179 = vmatpush2.msra.mxu0 %v307
    %1180 = vmatprep.subr.mxu0 0.0
    %1181 = vmatpush2.msra.mxu0 %v306
    %1182 = vmatprep.subr.mxu0 0.0
    %1183 = vmatpush2.msra.mxu0 %v305
    %1184 = vmatprep.subr.mxu0 0.0
    %1185 = vmatpush2.msra.mxu0 %v304
    %1186 = vmatprep.subr.mxu0 0.0
    %1187 = vmatpush2.msra.mxu0 %v303
    %1188 = vmatprep.subr.mxu0 0.0
    %1189 = vmatpush2.msra.mxu0 %v302
    %1190 = vmatprep.subr.mxu0 0.0
    %1191 = vmatpush2.msra.mxu0 %v301
    %1192 = vmatprep.subr.mxu0 0.0
    %1193 = vmatpush2.msra.mxu0 %v300
    %1194 = vmatprep.mubr.f32.mxu0 %v517
    %1195 = vmatmul.mubr.f32.gmra.mxu0 %v509
    %v1196 = vpop.f32.mrf.mxu0
    %v1197 = vadd.f32 %v1127, %v1196
    %v1198 = vpop.f32.mrf.mxu0
    %1199 = vdwg.mxu0
    %1200 = vmatprep.subr.mxu0 0.0
    %1201 = vmatpush1.msra.mxu0 %v331
    %1202 = vmatprep.subr.mxu0 0.0
    %1203 = vmatpush1.msra.mxu0 %v330
    %1204 = vmatprep.subr.mxu0 0.0
    %1205 = vmatpush1.msra.mxu0 %v329
    %1206 = vmatprep.subr.mxu0 0.0
    %1207 = vmatpush1.msra.mxu0 %v328
    %1208 = vmatprep.subr.mxu0 0.0
    %1209 = vmatpush1.msra.mxu0 %v327
    %1210 = vmatprep.subr.mxu0 0.0
    %1211 = vmatpush1.msra.mxu0 %v326
    %1212 = vmatprep.subr.mxu0 0.0
    %1213 = vmatpush1.msra.mxu0 %v325
    %1214 = vmatprep.subr.mxu0 0.0
    %1215 = vmatpush1.msra.mxu0 %v324
    %1216 = vmatprep.subr.mxu0 0.0
    %1217 = vmatpush1.msra.mxu0 %v323
    %1218 = vmatprep.subr.mxu0 0.0
    %1219 = vmatpush1.msra.mxu0 %v322
    %1220 = vmatprep.subr.mxu0 0.0
    %1221 = vmatpush1.msra.mxu0 %v321
    %1222 = vmatprep.subr.mxu0 0.0
    %1223 = vmatpush1.msra.mxu0 %v320
    %1224 = vmatprep.subr.mxu0 0.0
    %1225 = vmatpush1.msra.mxu0 %v319
    %1226 = vmatprep.subr.mxu0 0.0
    %1227 = vmatpush1.msra.mxu0 %v318
    %1228 = vmatprep.subr.mxu0 0.0
    %1229 = vmatpush1.msra.mxu0 %v317
    %1230 = vmatprep.subr.mxu0 0.0
    %1231 = vmatpush1.msra.mxu0 %v316
    %1232 = vmatprep.subr.mxu0 0.0
    %1233 = vmatpush2.msra.mxu0 %v347
    %1234 = vmatprep.subr.mxu0 0.0
    %1235 = vmatpush2.msra.mxu0 %v346
    %1236 = vmatprep.subr.mxu0 0.0
    %1237 = vmatpush2.msra.mxu0 %v345
    %1238 = vmatprep.subr.mxu0 0.0
    %1239 = vmatpush2.msra.mxu0 %v344
    %1240 = vmatprep.subr.mxu0 0.0
    %1241 = vmatpush2.msra.mxu0 %v343
    %1242 = vmatprep.subr.mxu0 0.0
    %1243 = vmatpush2.msra.mxu0 %v342
    %1244 = vmatprep.subr.mxu0 0.0
    %1245 = vmatpush2.msra.mxu0 %v341
    %1246 = vmatprep.subr.mxu0 0.0
    %1247 = vmatpush2.msra.mxu0 %v340
    %1248 = vmatprep.subr.mxu0 0.0
    %1249 = vmatpush2.msra.mxu0 %v339
    %1250 = vmatprep.subr.mxu0 0.0
    %1251 = vmatpush2.msra.mxu0 %v338
    %1252 = vmatprep.subr.mxu0 0.0
    %1253 = vmatpush2.msra.mxu0 %v337
    %1254 = vmatprep.subr.mxu0 0.0
    %1255 = vmatpush2.msra.mxu0 %v336
    %1256 = vmatprep.subr.mxu0 0.0
    %1257 = vmatpush2.msra.mxu0 %v335
    %1258 = vmatprep.subr.mxu0 0.0
    %1259 = vmatpush2.msra.mxu0 %v334
    %1260 = vmatprep.subr.mxu0 0.0
    %1261 = vmatpush2.msra.mxu0 %v333
    %1262 = vmatprep.subr.mxu0 0.0
    %1263 = vmatpush2.msra.mxu0 %v332
    %1264 = vmatprep.mubr.f32.mxu0 %v518
    %1265 = vmatmul.mubr.f32.gmra.mxu0 %v516
    %v1266 = vpop.f32.mrf.mxu0
    %v1267 = vadd.f32 %v1197, %v1266
    %v1268 = vpop.f32.mrf.mxu0
    %1269 = vdwg.mxu0
    %1270 = vmatprep.subr.mxu0 0.0
    %1271 = vmatpush1.msra.mxu0 %v363
    %1272 = vmatprep.subr.mxu0 0.0
    %1273 = vmatpush1.msra.mxu0 %v362
    %1274 = vmatprep.subr.mxu0 0.0
    %1275 = vmatpush1.msra.mxu0 %v361
    %1276 = vmatprep.subr.mxu0 0.0
    %1277 = vmatpush1.msra.mxu0 %v360
    %1278 = vmatprep.subr.mxu0 0.0
    %1279 = vmatpush1.msra.mxu0 %v359
    %1280 = vmatprep.subr.mxu0 0.0
    %1281 = vmatpush1.msra.mxu0 %v358
    %1282 = vmatprep.subr.mxu0 0.0
    %1283 = vmatpush1.msra.mxu0 %v357
    %1284 = vmatprep.subr.mxu0 0.0
    %1285 = vmatpush1.msra.mxu0 %v356
    %1286 = vmatprep.subr.mxu0 0.0
    %1287 = vmatpush1.msra.mxu0 %v355
    %1288 = vmatprep.subr.mxu0 0.0
    %1289 = vmatpush1.msra.mxu0 %v354
    %1290 = vmatprep.subr.mxu0 0.0
    %1291 = vmatpush1.msra.mxu0 %v353
    %1292 = vmatprep.subr.mxu0 0.0
    %1293 = vmatpush1.msra.mxu0 %v352
    %1294 = vmatprep.subr.mxu0 0.0
    %1295 = vmatpush1.msra.mxu0 %v351
    %1296 = vmatprep.subr.mxu0 0.0
    %1297 = vmatpush1.msra.mxu0 %v350
    %1298 = vmatprep.subr.mxu0 0.0
    %1299 = vmatpush1.msra.mxu0 %v349
    %1300 = vmatprep.subr.mxu0 0.0
    %1301 = vmatpush1.msra.mxu0 %v348
    %1302 = vmatprep.subr.mxu0 0.0
    %1303 = vmatpush2.msra.mxu0 %v379
    %1304 = vmatprep.subr.mxu0 0.0
    %1305 = vmatpush2.msra.mxu0 %v378
    %1306 = vmatprep.subr.mxu0 0.0
    %1307 = vmatpush2.msra.mxu0 %v377
    %1308 = vmatprep.subr.mxu0 0.0
    %1309 = vmatpush2.msra.mxu0 %v376
    %1310 = vmatprep.subr.mxu0 0.0
    %1311 = vmatpush2.msra.mxu0 %v375
    %1312 = vmatprep.subr.mxu0 0.0
    %1313 = vmatpush2.msra.mxu0 %v374
    %1314 = vmatprep.subr.mxu0 0.0
    %1315 = vmatpush2.msra.mxu0 %v373
    %1316 = vmatprep.subr.mxu0 0.0
    %1317 = vmatpush2.msra.mxu0 %v372
    %1318 = vmatprep.subr.mxu0 0.0
    %1319 = vmatpush2.msra.mxu0 %v371
    %1320 = vmatprep.subr.mxu0 0.0
    %1321 = vmatpush2.msra.mxu0 %v370
    %1322 = vmatprep.subr.mxu0 0.0
    %1323 = vmatpush2.msra.mxu0 %v369
    %1324 = vmatprep.subr.mxu0 0.0
    %1325 = vmatpush2.msra.mxu0 %v368
    %1326 = vmatprep.subr.mxu0 0.0
    %1327 = vmatpush2.msra.mxu0 %v367
    %1328 = vmatprep.subr.mxu0 0.0
    %1329 = vmatpush2.msra.mxu0 %v366
    %1330 = vmatprep.subr.mxu0 0.0
    %1331 = vmatpush2.msra.mxu0 %v365
    %1332 = vmatprep.subr.mxu0 0.0
    %1333 = vmatpush2.msra.mxu0 %v364
    %1334 = vmatprep.mubr.f32.mxu0 %v534
    %1335 = vmatmul.mubr.f32.gmra.mxu0 %v526
    %v1336 = vpop.f32.mrf.mxu0
    %v1337 = vadd.f32 %v1267, %v1336
    %v1338 = vpop.f32.mrf.mxu0
    %1339 = vdwg.mxu0
    %1340 = vmatprep.subr.mxu0 0.0
    %1341 = vmatpush1.msra.mxu0 %v395
    %1342 = vmatprep.subr.mxu0 0.0
    %1343 = vmatpush1.msra.mxu0 %v394
    %1344 = vmatprep.subr.mxu0 0.0
    %1345 = vmatpush1.msra.mxu0 %v393
    %1346 = vmatprep.subr.mxu0 0.0
    %1347 = vmatpush1.msra.mxu0 %v392
    %1348 = vmatprep.subr.mxu0 0.0
    %1349 = vmatpush1.msra.mxu0 %v391
    %1350 = vmatprep.subr.mxu0 0.0
    %1351 = vmatpush1.msra.mxu0 %v390
    %1352 = vmatprep.subr.mxu0 0.0
    %1353 = vmatpush1.msra.mxu0 %v389
    %1354 = vmatprep.subr.mxu0 0.0
    %1355 = vmatpush1.msra.mxu0 %v388
    %1356 = vmatprep.subr.mxu0 0.0
    %1357 = vmatpush1.msra.mxu0 %v387
    %1358 = vmatprep.subr.mxu0 0.0
    %1359 = vmatpush1.msra.mxu0 %v386
    %1360 = vmatprep.subr.mxu0 0.0
    %1361 = vmatpush1.msra.mxu0 %v385
    %1362 = vmatprep.subr.mxu0 0.0
    %1363 = vmatpush1.msra.mxu0 %v384
    %1364 = vmatprep.subr.mxu0 0.0
    %1365 = vmatpush1.msra.mxu0 %v383
    %1366 = vmatprep.subr.mxu0 0.0
    %1367 = vmatpush1.msra.mxu0 %v382
    %1368 = vmatprep.subr.mxu0 0.0
    %1369 = vmatpush1.msra.mxu0 %v381
    %1370 = vmatprep.subr.mxu0 0.0
    %1371 = vmatpush1.msra.mxu0 %v380
    %1372 = vmatprep.subr.mxu0 0.0
    %1373 = vmatpush2.msra.mxu0 %v411
    %1374 = vmatprep.subr.mxu0 0.0
    %1375 = vmatpush2.msra.mxu0 %v410
    %1376 = vmatprep.subr.mxu0 0.0
    %1377 = vmatpush2.msra.mxu0 %v409
    %1378 = vmatprep.subr.mxu0 0.0
    %1379 = vmatpush2.msra.mxu0 %v408
    %1380 = vmatprep.subr.mxu0 0.0
    %1381 = vmatpush2.msra.mxu0 %v407
    %1382 = vmatprep.subr.mxu0 0.0
    %1383 = vmatpush2.msra.mxu0 %v406
    %1384 = vmatprep.subr.mxu0 0.0
    %1385 = vmatpush2.msra.mxu0 %v405
    %1386 = vmatprep.subr.mxu0 0.0
    %1387 = vmatpush2.msra.mxu0 %v404
    %1388 = vmatprep.subr.mxu0 0.0
    %1389 = vmatpush2.msra.mxu0 %v403
    %1390 = vmatprep.subr.mxu0 0.0
    %1391 = vmatpush2.msra.mxu0 %v402
    %1392 = vmatprep.subr.mxu0 0.0
    %1393 = vmatpush2.msra.mxu0 %v401
    %1394 = vmatprep.subr.mxu0 0.0
    %1395 = vmatpush2.msra.mxu0 %v400
    %1396 = vmatprep.subr.mxu0 0.0
    %1397 = vmatpush2.msra.mxu0 %v399
    %1398 = vmatprep.subr.mxu0 0.0
    %1399 = vmatpush2.msra.mxu0 %v398
    %1400 = vmatprep.subr.mxu0 0.0
    %1401 = vmatpush2.msra.mxu0 %v397
    %1402 = vmatprep.subr.mxu0 0.0
    %1403 = vmatpush2.msra.mxu0 %v396
    %1404 = vmatprep.mubr.f32.mxu0 %v535
    %1405 = vmatmul.mubr.f32.gmra.mxu0 %v533
    %v1406 = vpop.f32.mrf.mxu0
    %v1407 = vadd.f32 %v1337, %v1406
    %v1408 = vpop.f32.mrf.mxu0
    %1409 = vdwg.mxu0
    %1410 = vmatprep.subr.mxu0 0.0
    %1411 = vmatpush1.msra.mxu0 0.0
    %1412 = vmatprep.subr.mxu0 0.0
    %1413 = vmatpush1.msra.mxu0 0.0
    %1414 = vmatprep.subr.mxu0 0.0
    %1415 = vmatpush1.msra.mxu0 0.0
    %1416 = vmatprep.subr.mxu0 0.0
    %1417 = vmatpush1.msra.mxu0 0.0
    %1418 = vmatprep.subr.mxu0 0.0
    %1419 = vmatpush1.msra.mxu0 0.0
    %1420 = vmatprep.subr.mxu0 0.0
    %1421 = vmatpush1.msra.mxu0 0.0
    %1422 = vmatprep.subr.mxu0 0.0
    %1423 = vmatpush1.msra.mxu0 0.0
    %1424 = vmatprep.subr.mxu0 0.0
    %1425 = vmatpush1.msra.mxu0 0.0
    %1426 = vmatprep.subr.mxu0 0.0
    %1427 = vmatpush1.msra.mxu0 %v419
    %1428 = vmatprep.subr.mxu0 0.0
    %1429 = vmatpush1.msra.mxu0 %v418
    %1430 = vmatprep.subr.mxu0 0.0
    %1431 = vmatpush1.msra.mxu0 %v417
    %1432 = vmatprep.subr.mxu0 0.0
    %1433 = vmatpush1.msra.mxu0 %v416
    %1434 = vmatprep.subr.mxu0 0.0
    %1435 = vmatpush1.msra.mxu0 %v415
    %1436 = vmatprep.subr.mxu0 0.0
    %1437 = vmatpush1.msra.mxu0 %v414
    %1438 = vmatprep.subr.mxu0 0.0
    %1439 = vmatpush1.msra.mxu0 %v413
    %1440 = vmatprep.subr.mxu0 0.0
    %1441 = vmatpush1.msra.mxu0 %v412
    %1442 = vmatprep.subr.mxu0 0.0
    %1443 = vmatpush2.msra.mxu0 0.0
    %1444 = vmatprep.subr.mxu0 0.0
    %1445 = vmatpush2.msra.mxu0 0.0
    %1446 = vmatprep.subr.mxu0 0.0
    %1447 = vmatpush2.msra.mxu0 0.0
    %1448 = vmatprep.subr.mxu0 0.0
    %1449 = vmatpush2.msra.mxu0 0.0
    %1450 = vmatprep.subr.mxu0 0.0
    %1451 = vmatpush2.msra.mxu0 0.0
    %1452 = vmatprep.subr.mxu0 0.0
    %1453 = vmatpush2.msra.mxu0 0.0
    %1454 = vmatprep.subr.mxu0 0.0
    %1455 = vmatpush2.msra.mxu0 0.0
    %1456 = vmatprep.subr.mxu0 0.0
    %1457 = vmatpush2.msra.mxu0 0.0
    %1458 = vmatprep.subr.mxu0 0.0
    %1459 = vmatpush2.msra.mxu0 0.0
    %1460 = vmatprep.subr.mxu0 0.0
    %1461 = vmatpush2.msra.mxu0 0.0
    %1462 = vmatprep.subr.mxu0 0.0
    %1463 = vmatpush2.msra.mxu0 0.0
    %1464 = vmatprep.subr.mxu0 0.0
    %1465 = vmatpush2.msra.mxu0 0.0
    %1466 = vmatprep.subr.mxu0 0.0
    %1467 = vmatpush2.msra.mxu0 0.0
    %1468 = vmatprep.subr.mxu0 0.0
    %1469 = vmatpush2.msra.mxu0 0.0
    %1470 = vmatprep.subr.mxu0 0.0
    %1471 = vmatpush2.msra.mxu0 0.0
    %1472 = vmatprep.subr.mxu0 0.0
    %1473 = vmatpush2.msra.mxu0 0.0
    %1474 = vmatprep.mubr.f32.mxu0 0.0
    %1475 = vmatmul.mubr.f32.gmra.mxu0 %v568
    %v1476 = vpop.f32.mrf.mxu0
    %v1477 = vadd.f32 %v1407, %v1476
    %v1478 = vpop.f32.mrf.mxu0
    %1479 = vdwg.mxu0
    %v1480 = vmax.f32 %v1477, 0.0
    %v1481 = vld [vmem:[%s3] sm:$0xff]
    %v1482 = vld [vmem:[%s3 + $0x8] sm:$0xff]
    %v1483 = vld [vmem:[%s3 + $0x10] sm:$0xff]
    %v1484 = vld [vmem:[%s3 + $0x18] sm:$0xff]
    %v1485 = vld [vmem:[%s3 + $0x20] sm:$0xff]
    %v1486 = vld [vmem:[%s3 + $0x28] sm:$0xff]
    %v1487 = vld [vmem:[%s3 + $0x30] sm:$0xff]
    %v1488 = vld [vmem:[%s3 + $0x38] sm:$0xff]
    %v1489 = vld [vmem:[%s3 + $0x40] sm:$0xff]
    %v1490 = vld [vmem:[%s3 + $0x48] sm:$0xff]
    %v1491 = vld [vmem:[%s3 + $0x50] sm:$0xff]
    %v1492 = vld [vmem:[%s3 + $0x58] sm:$0xff]
    %v1493 = vld [vmem:[%s3 + $0x60] sm:$0xff]
    %v1494 = vld [vmem:[%s3 + $0x68] sm:$0xff]
    %v1495 = vld [vmem:[%s3 + $0x70] sm:$0xff]
    %v1496 = vld [vmem:[%s3 + $0x78] sm:$0xff]
    %v1497 = vld [vmem:[%s4] sm:$0x1]
    %v1499 = vlaneseq
    %v1500 = vshrl.u32 %v1499, 7
    %v1501 = vsub.s32 0, %v1500
    %v1502 = vrot.slane %v1497, %v1501
    %1504 = vmatprep.subr.mxu0 0.0
    %1505 = vmatpush1.msra.mxu0 %v1496
    %1506 = vmatprep.subr.mxu0 0.0
    %1507 = vmatpush1.msra.mxu0 %v1495
    %1508 = vmatprep.subr.mxu0 0.0
    %1509 = vmatpush1.msra.mxu0 %v1494
    %1510 = vmatprep.subr.mxu0 0.0
    %1511 = vmatpush1.msra.mxu0 %v1493
    %1512 = vmatprep.subr.mxu0 0.0
    %1513 = vmatpush1.msra.mxu0 %v1492
    %1514 = vmatprep.subr.mxu0 0.0
    %1515 = vmatpush1.msra.mxu0 %v1491
    %1516 = vmatprep.subr.mxu0 0.0
    %1517 = vmatpush1.msra.mxu0 %v1490
    %1518 = vmatprep.subr.mxu0 0.0
    %1519 = vmatpush1.msra.mxu0 %v1489
    %1520 = vmatprep.subr.mxu0 0.0
    %1521 = vmatpush1.msra.mxu0 %v1488
    %1522 = vmatprep.subr.mxu0 0.0
    %1523 = vmatpush1.msra.mxu0 %v1487
    %1524 = vmatprep.subr.mxu0 0.0
    %1525 = vmatpush1.msra.mxu0 %v1486
    %1526 = vmatprep.subr.mxu0 0.0
    %1527 = vmatpush1.msra.mxu0 %v1485
    %1528 = vmatprep.subr.mxu0 0.0
    %1529 = vmatpush1.msra.mxu0 %v1484
    %1530 = vmatprep.subr.mxu0 0.0
    %1531 = vmatpush1.msra.mxu0 %v1483
    %1532 = vmatprep.subr.mxu0 0.0
    %1533 = vmatpush1.msra.mxu0 %v1482
    %1534 = vmatprep.subr.mxu0 0.0
    %1535 = vmatpush1.msra.mxu0 %v1481
    %1536 = vmatprep.subr.mxu0 0.0
    %1537 = vmatpush2.msra.mxu0 0.0
    %1538 = vmatprep.subr.mxu0 0.0
    %1539 = vmatpush2.msra.mxu0 0.0
    %1540 = vmatprep.subr.mxu0 0.0
    %1541 = vmatpush2.msra.mxu0 0.0
    %1542 = vmatprep.subr.mxu0 0.0
    %1543 = vmatpush2.msra.mxu0 0.0
    %1544 = vmatprep.subr.mxu0 0.0
    %1545 = vmatpush2.msra.mxu0 0.0
    %1546 = vmatprep.subr.mxu0 0.0
    %1547 = vmatpush2.msra.mxu0 0.0
    %1548 = vmatprep.subr.mxu0 0.0
    %1549 = vmatpush2.msra.mxu0 0.0
    %1550 = vmatprep.subr.mxu0 0.0
    %1551 = vmatpush2.msra.mxu0 0.0
    %1552 = vmatprep.subr.mxu0 0.0
    %1553 = vmatpush2.msra.mxu0 0.0
    %1554 = vmatprep.subr.mxu0 0.0
    %1555 = vmatpush2.msra.mxu0 0.0
    %1556 = vmatprep.subr.mxu0 0.0
    %1557 = vmatpush2.msra.mxu0 0.0
    %1558 = vmatprep.subr.mxu0 0.0
    %1559 = vmatpush2.msra.mxu0 0.0
    %1560 = vmatprep.subr.mxu0 0.0
    %1561 = vmatpush2.msra.mxu0 0.0
    %1562 = vmatprep.subr.mxu0 0.0
    %1563 = vmatpush2.msra.mxu0 0.0
    %1564 = vmatprep.subr.mxu0 0.0
    %1565 = vmatpush2.msra.mxu0 0.0
    %1566 = vmatprep.subr.mxu0 0.0
    %1567 = vmatpush2.msra.mxu0 0.0
    %1568 = vmatprep.mubr.f32.mxu0 0.0
    %1569 = vmatmul.mubr.f32.gmra.mxu0 %v1480
    %v1570 = vpop.f32.mrf.mxu0
    %v1571 = vadd.f32 %v1502, %v1570
    %v1572 = vpop.f32.mrf.mxu0
    %1573 = vdwg.mxu0
    %vm1574 = vcmask 74752
    %1575 = vst.msk [vmem:[#allocation2] sm:$0x3] %vm1574, %v1571
    // Predicated region
    $region22: #{cnn_forward.5} parent=1 // pred_check
      _
    $region23: #{cnn_forward.5} parent=1 // pred_check_branch
      %1577 = sbr.rel (0) target = $region25
    $region24: #{cnn_forward.5} parent=1 // pred_region
      %s1579 = ssub.s32 32, 32
      %1580 = vsyncadd [#allocation3], %s1579
      %s1582 = sshll.u32 [#allocation2], 4
      %s1583 = int_to_ptr.vmem [resolvable:$true] %s1582
      %1585 = dma.vmem_to_hbm [thread:$0]  %s1583, 32, %s5, [#allocation3]
    $region25: #{cnn_forward.5} parent=1 // pred_fallthru
      _
    // Predicated region
    $region26: #{cnn_forward.5} parent=1 // pred_check
      _
    $region27: #{cnn_forward.5} parent=1 // pred_check_branch
      %1587 = sbr.rel (0) target = $region29
    $region28: #{cnn_forward.5} parent=1 // pred_region
      %1588 = dma.done [#allocation3], 32
    $region29: #{cnn_forward.5} parent=1 // pred_fallthru
      _
    %1589 = vsyncpa [#allocation3], 1

// kernel: cnn_forward.4
$region0: #{cnn_forward.4}
  #allocation0 [shape = 'u32[]', space=smem, size = 0x4, offset = 0x4, fixed_abs, tag = 'smem constant byte address 0x4 - core index']
  #allocation1 [shape = 'u32[144,128]{1,0:T(1,128)}', space=vmem, size = 0x12000, scoped, tag = 'internal scratch']
  %s0 = inlined_call_operand.vmem [shape: f32[2,2,8,512], index: 0, kind: input, shape index: {}]
  %s1 = inlined_call_operand.vmem [shape: f32[2,3,512,448], index: 1, kind: input, shape index: {}]
  %s2 = inlined_call_operand.vmem [shape: f32[1,448], index: 2, kind: input, shape index: {}]
  %s3 = inlined_call_operand.vmem [shape: f32[2,7,448], index: 3, kind: output, shape index: {}]
  %s4 = sld [smem:[#allocation0]]
  $region45: #{cnn_forward.4} parent=0
    _
  %s6 = ssub.s32 1, %s4
  %s7 = scalar_select 0, %s6, %s4
  loop: start=0, step=1, limit=4
  $region2: #{cnn_forward.4} parent=0 // loop_pre_header
    _
  $region3: #{cnn_forward.4} parent=0 // loop_header
    %s9 = sphi 0, %s13
    %p10 = scmp.ge.s32.totalorder %s9, 4
    %s19 = sphi 0, %s21
    %s22 = sphi 0, %s19
    %s23 = sphi 0, %s22
    %s39 = sphi 0, %s23
    %s43 = sphi 0, %s43
    %s45 = sphi 0, %s43
    %s46 = sphi 0, %s45
    %s60 = sphi 0, %s46
    %s64 = sphi 0, %s64
    %s66 = sphi 0, %s64
    %s67 = sphi 0, %s66
    %s81 = sphi 0, %s67
    %s87 = sphi 0, %s89
    %s90 = sphi 0, %s87
    %s91 = sphi 0, %s90
    %s107 = sphi 0, %s91
  $region4: #{cnn_forward.4} parent=0 // loop_header_branch
    %12 = sbr.rel (%p10) target = $region8
  $region5: #{cnn_forward.4} parent=0 // loop_body
    %s14 = ssub.s32 %s9, 1
    %s15 = ssub.s32 %s9, 2
    %s16 = sadd.s32 %s9, 1
    %s17 = ssub.s32 %s9, %s16
    %p18 = scmp.eq.s32.totalorder %s17, 0
    %s20 = sadd.s32 %s19, 1
    %s21 = scalar_select %p18, %s19, %s20
    %p24 = pneg %p18
    %p25 = scmp.eq.s32.totalorder %s9, 1
    %p26 = por %p24, %p25
    %p27 = scmp.ne.s32.totalorder %s19, %s22
    %p28 = scmp.eq.s32.totalorder %s9, 0
    %p29 = por %p27, %p28
    %p30 = scmp.ne.s32.totalorder %s19, %s22
    %p31 = scmp.eq.s32.totalorder %s14, 1
    %p32 = por %p30, %p31
    %p33 = scmp.ne.s32.totalorder %s22, %s23
    %p34 = scmp.eq.s32.totalorder %s14, 0
    %p35 = por %p33, %p34
    %p36 = scmp.ne.s32.totalorder %s22, %s23
    %p37 = scmp.eq.s32.totalorder %s15, 1
    %p38 = por %p36, %p37
    %p40 = scmp.ne.s32.totalorder %s23, %s39
    %p41 = scmp.eq.s32.totalorder %s15, 0
    %p42 = por %p40, %p41
    %s44 = sadd.s32 %s43, 1
    %p47 = scmp.eq.s32.totalorder %s9, 1
    %p48 = scmp.ne.s32.totalorder %s43, %s45
    %p49 = scmp.eq.s32.totalorder %s9, 0
    %p50 = por %p48, %p49
    %p51 = scmp.ne.s32.totalorder %s43, %s45
    %p52 = scmp.eq.s32.totalorder %s14, 1
    %p53 = por %p51, %p52
    %p54 = scmp.ne.s32.totalorder %s45, %s46
    %p55 = scmp.eq.s32.totalorder %s14, 0
    %p56 = por %p54, %p55
    %p57 = scmp.ne.s32.totalorder %s45, %s46
    %p58 = scmp.eq.s32.totalorder %s15, 1
    %p59 = por %p57, %p58
    %p61 = scmp.ne.s32.totalorder %s46, %s60
    %p62 = scmp.eq.s32.totalorder %s15, 0
    %p63 = por %p61, %p62
    %s65 = sadd.s32 %s64, 1
    %p68 = scmp.eq.s32.totalorder %s9, 1
    %p69 = scmp.ne.s32.totalorder %s64, %s66
    %p70 = scmp.eq.s32.totalorder %s9, 0
    %p71 = por %p69, %p70
    %p72 = scmp.ne.s32.totalorder %s64, %s66
    %p73 = scmp.eq.s32.totalorder %s14, 1
    %p74 = por %p72, %p73
    %p75 = scmp.ne.s32.totalorder %s66, %s67
    %p76 = scmp.eq.s32.totalorder %s14, 0
    %p77 = por %p75, %p76
    %p78 = scmp.ne.s32.totalorder %s66, %s67
    %p79 = scmp.eq.s32.totalorder %s15, 1
    %p80 = por %p78, %p79
    %p82 = scmp.ne.s32.totalorder %s67, %s81
    %p83 = scmp.eq.s32.totalorder %s15, 0
    %p84 = por %p82, %p83
    %s85 = ssub.s32 %s9, %s16
    %p86 = scmp.eq.s32.totalorder %s85, 0
    %s88 = sadd.s32 %s87, 1
    %s89 = scalar_select %p86, %s87, %s88
    %p92 = pneg %p86
    %p93 = scmp.eq.s32.totalorder %s9, 1
    %p94 = por %p92, %p93
    %p95 = scmp.ne.s32.totalorder %s87, %s90
    %p96 = scmp.eq.s32.totalorder %s9, 0
    %p97 = por %p95, %p96
    %p98 = scmp.ne.s32.totalorder %s87, %s90
    %p99 = scmp.eq.s32.totalorder %s14, 1
    %p100 = por %p98, %p99
    %p101 = scmp.ne.s32.totalorder %s90, %s91
    %p102 = scmp.eq.s32.totalorder %s14, 0
    %p103 = por %p101, %p102
    %p104 = scmp.ne.s32.totalorder %s90, %s91
    %p105 = scmp.eq.s32.totalorder %s15, 1
    %p106 = por %p104, %p105
    %p108 = scmp.ne.s32.totalorder %s91, %s107
    %p109 = scmp.eq.s32.totalorder %s15, 0
    %p110 = por %p108, %p109
    %p111 = scmp.le.s32.totalorder 1, %s9
    %p112 = scmp.lt.s32.totalorder %s9, 3
    %p113 = pnand %p111, %p112
    %p114 = pneg %p113
    // Predicated region
    $region9: #{cnn_forward.4} parent=5 // pred_check
      _
    $region10: #{cnn_forward.4} parent=5 // pred_check_branch
      %116 = sbr.rel (%p113) target = $region12
    $region11: #{cnn_forward.4} parent=5 // pred_region
      %s117 = ssub.s32 %s9, 1
      // Predicated region
      $region13: #{cnn_forward.4} parent=11 // pred_check
        %p118 = pneg %p56
      $region14: #{cnn_forward.4} parent=11 // pred_check_branch
        %120 = sbr.rel (%p118) target = $region16
      $region15: #{cnn_forward.4} parent=11 // pred_region
        _
      $region16: #{cnn_forward.4} parent=11 // pred_fallthru
        _
      // Predicated region
      $region17: #{cnn_forward.4} parent=11 // pred_check
        %p121 = pneg %p77
      $region18: #{cnn_forward.4} parent=11 // pred_check_branch
        %123 = sbr.rel (%p121) target = $region20
      $region19: #{cnn_forward.4} parent=11 // pred_region
        _
      $region20: #{cnn_forward.4} parent=11 // pred_fallthru
        _
    $region12: #{cnn_forward.4} parent=5 // pred_fallthru
      _
    %p124 = scmp.lt.s32.totalorder %s9, 2
    // Predicated region
    $region21: #{cnn_forward.4} parent=5 // pred_check
      %p125 = pneg %p124
    $region22: #{cnn_forward.4} parent=5 // pred_check_branch
      %127 = sbr.rel (%p125) target = $region24
    $region23: #{cnn_forward.4} parent=5 // pred_region
      // Predicated region
      $region25: #{cnn_forward.4} parent=23 // pred_check
        %p128 = pneg %p29
      $region26: #{cnn_forward.4} parent=23 // pred_check_branch
        %130 = sbr.rel (%p128) target = $region28
      $region27: #{cnn_forward.4} parent=23 // pred_region
        %p131 = scmp.lt.s32.totalorder %s9, 1
        %s132 = scalar_select %p131, %s9, 1
        %s133 = smul.addr %s132, 8
        %s134 = smul.addr %s133, 8
        %s135 = scalar_lea.vmem %s0, %s134
      $region28: #{cnn_forward.4} parent=23 // pred_fallthru
        _
    $region24: #{cnn_forward.4} parent=5 // pred_fallthru
      _
    %p136 = scmp.le.s32.totalorder 1, %s9
    %p137 = scmp.lt.s32.totalorder %s9, 3
    %p138 = pnand %p136, %p137
    %p139 = pneg %p138
    // Predicated region
    $region29: #{cnn_forward.4} parent=5 // pred_check
      _
    $region30: #{cnn_forward.4} parent=5 // pred_check_branch
      %141 = sbr.rel (%p138) target = $region32
    $region31: #{cnn_forward.4} parent=5 // pred_region
      %s142 = ssub.s32 %s9, 1
      %p143 = scmp.lt.s32.totalorder %s14, 1
      %s144 = scalar_select %p143, %s14, 1
      %s145 = smul.addr %s144, 8
      %s146 = smul.addr %s145, 8
      %s147 = scalar_lea.vmem %s0, %s146
      %p148 = pneg %p35
      %p149 = pneg %p32
      %p150 = pneg %p56
      %p151 = pneg %p53
      %p152 = pneg %p77
      %p153 = pneg %p74
      %p154 = pneg %p103
      %p155 = pneg %p100
      %p156 = scmp.lt.s32.totalorder %s14, 1
      %s157 = scalar_select %p156, %s14, 1
      %s158 = smul.addr %s157, 4
      %s159 = smul.addr %s158, 8
      %s160 = scalar_lea.vmem %s3, %s159
      %p161 = scmp.lt.s32.totalorder %s14, 1
      %s162 = scalar_select %p161, %s14, 1
      %s163 = smul.addr %s162, 8
      %s164 = smul.addr %s163, 8
      %s165 = scalar_lea.vmem %s0, %s164
      %p166 = scmp.lt.s32.totalorder %s14, 1
      %s167 = scalar_select %p166, %s14, 1
      %s168 = smul.addr %s167, 4
      %s169 = smul.addr %s168, 8
      %s170 = scalar_lea.vmem %s3, %s169
      %v171 = vld [vmem:[%s165] sm:$0x7f]
      %v172 = vld [vmem:[%s165 + $0x8] sm:$0x7f]
      %v173 = vld [vmem:[%s165 + $0x10] sm:$0x7f]
      %v174 = vld [vmem:[%s165 + $0x18] sm:$0x7f]
      %v175 = vld [vmem:[%s1] sm:$0xff]
      %v176 = vld [vmem:[%s1 + $0x8] sm:$0xff]
      %v177 = vld [vmem:[%s1 + $0x10] sm:$0xff]
      %v178 = vld [vmem:[%s1 + $0x18] sm:$0xff]
      %v179 = vld [vmem:[%s1 + $0x20] sm:$0xff]
      %v180 = vld [vmem:[%s1 + $0x28] sm:$0xff]
      %v181 = vld [vmem:[%s1 + $0x30] sm:$0xff]
      %v182 = vld [vmem:[%s1 + $0x38] sm:$0xff]
      %v183 = vld [vmem:[%s1 + $0x40] sm:$0xff]
      %v184 = vld [vmem:[%s1 + $0x48] sm:$0xff]
      %v185 = vld [vmem:[%s1 + $0x50] sm:$0xff]
      %v186 = vld [vmem:[%s1 + $0x58] sm:$0xff]
      %v187 = vld [vmem:[%s1 + $0x60] sm:$0xff]
      %v188 = vld [vmem:[%s1 + $0x68] sm:$0xff]
      %v189 = vld [vmem:[%s1 + $0x70] sm:$0xff]
      %v190 = vld [vmem:[%s1 + $0x78] sm:$0xff]
      %v191 = vld [vmem:[%s1 + $0x80] sm:$0xff]
      %v192 = vld [vmem:[%s1 + $0x88] sm:$0xff]
      %v193 = vld [vmem:[%s1 + $0x90] sm:$0xff]
      %v194 = vld [vmem:[%s1 + $0x98] sm:$0xff]
      %v195 = vld [vmem:[%s1 + $0xa0] sm:$0xff]
      %v196 = vld [vmem:[%s1 + $0xa8] sm:$0xff]
      %v197 = vld [vmem:[%s1 + $0xb0] sm:$0xff]
      %v198 = vld [vmem:[%s1 + $0xb8] sm:$0xff]
      %v199 = vld [vmem:[%s1 + $0xc0] sm:$0xff]
      %v200 = vld [vmem:[%s1 + $0xc8] sm:$0xff]
      %v201 = vld [vmem:[%s1 + $0xd0] sm:$0xff]
      %v202 = vld [vmem:[%s1 + $0xd8] sm:$0xff]
      %v203 = vld [vmem:[%s1 + $0xe0] sm:$0xff]
      %v204 = vld [vmem:[%s1 + $0xe8] sm:$0xff]
      %v205 = vld [vmem:[%s1 + $0xf0] sm:$0xff]
      %v206 = vld [vmem:[%s1 + $0xf8] sm:$0xff]
      %v207 = vld [vmem:[%s1 + $0x100] sm:$0xff]
      %v208 = vld [vmem:[%s1 + $0x108] sm:$0xff]
      %v209 = vld [vmem:[%s1 + $0x110] sm:$0xff]
      %v210 = vld [vmem:[%s1 + $0x118] sm:$0xff]
      %v211 = vld [vmem:[%s1 + $0x120] sm:$0xff]
      %v212 = vld [vmem:[%s1 + $0x128] sm:$0xff]
      %v213 = vld [vmem:[%s1 + $0x130] sm:$0xff]
      %v214 = vld [vmem:[%s1 + $0x138] sm:$0xff]
      %v215 = vld [vmem:[%s1 + $0x140] sm:$0xff]
      %v216 = vld [vmem:[%s1 + $0x148] sm:$0xff]
      %v217 = vld [vmem:[%s1 + $0x150] sm:$0xff]
      %v218 = vld [vmem:[%s1 + $0x158] sm:$0xff]
      %v219 = vld [vmem:[%s1 + $0x160] sm:$0xff]
      %v220 = vld [vmem:[%s1 + $0x168] sm:$0xff]
      %v221 = vld [vmem:[%s1 + $0x170] sm:$0xff]
      %v222 = vld [vmem:[%s1 + $0x178] sm:$0xff]
      %v223 = vld [vmem:[%s1 + $0x180] sm:$0xff]
      %v224 = vld [vmem:[%s1 + $0x188] sm:$0xff]
      %v225 = vld [vmem:[%s1 + $0x190] sm:$0xff]
      %v226 = vld [vmem:[%s1 + $0x198] sm:$0xff]
      %v227 = vld [vmem:[%s1 + $0x1a0] sm:$0xff]
      %v228 = vld [vmem:[%s1 + $0x1a8] sm:$0xff]
      %v229 = vld [vmem:[%s1 + $0x1b0] sm:$0xff]
      %v230 = vld [vmem:[%s1 + $0x1b8] sm:$0xff]
      %v231 = vld [vmem:[%s1 + $0x1c0] sm:$0xff]
      %v232 = vld [vmem:[%s1 + $0x1c8] sm:$0xff]
      %v233 = vld [vmem:[%s1 + $0x1d0] sm:$0xff]
      %v234 = vld [vmem:[%s1 + $0x1d8] sm:$0xff]
      %v235 = vld [vmem:[%s1 + $0x1e0] sm:$0xff]
      %v236 = vld [vmem:[%s1 + $0x1e8] sm:$0xff]
      %v237 = vld [vmem:[%s1 + $0x1f0] sm:$0xff]
      %v238 = vld [vmem:[%s1 + $0x1f8] sm:$0xff]
      %v239 = vld [vmem:[%s1 + $0x200] sm:$0xff]
      %v240 = vld [vmem:[%s1 + $0x208] sm:$0xff]
      %v241 = vld [vmem:[%s1 + $0x210] sm:$0xff]
      %v242 = vld [vmem:[%s1 + $0x218] sm:$0xff]
      %v243 = vld [vmem:[%s1 + $0x220] sm:$0xff]
      %v244 = vld [vmem:[%s1 + $0x228] sm:$0xff]
      %v245 = vld [vmem:[%s1 + $0x230] sm:$0xff]
      %v246 = vld [vmem:[%s1 + $0x238] sm:$0xff]
      %v247 = vld [vmem:[%s1 + $0x240] sm:$0xff]
      %v248 = vld [vmem:[%s1 + $0x248] sm:$0xff]
      %v249 = vld [vmem:[%s1 + $0x250] sm:$0xff]
      %v250 = vld [vmem:[%s1 + $0x258] sm:$0xff]
      %v251 = vld [vmem:[%s1 + $0x260] sm:$0xff]
      %v252 = vld [vmem:[%s1 + $0x268] sm:$0xff]
      %v253 = vld [vmem:[%s1 + $0x270] sm:$0xff]
      %v254 = vld [vmem:[%s1 + $0x278] sm:$0xff]
      %v255 = vld [vmem:[%s1 + $0x280] sm:$0xff]
      %v256 = vld [vmem:[%s1 + $0x288] sm:$0xff]
      %v257 = vld [vmem:[%s1 + $0x290] sm:$0xff]
      %v258 = vld [vmem:[%s1 + $0x298] sm:$0xff]
      %v259 = vld [vmem:[%s1 + $0x2a0] sm:$0xff]
      %v260 = vld [vmem:[%s1 + $0x2a8] sm:$0xff]
      %v261 = vld [vmem:[%s1 + $0x2b0] sm:$0xff]
      %v262 = vld [vmem:[%s1 + $0x2b8] sm:$0xff]
      %v263 = vld [vmem:[%s1 + $0x2c0] sm:$0xff]
      %v264 = vld [vmem:[%s1 + $0x2c8] sm:$0xff]
      %v265 = vld [vmem:[%s1 + $0x2d0] sm:$0xff]
      %v266 = vld [vmem:[%s1 + $0x2d8] sm:$0xff]
      %v267 = vld [vmem:[%s1 + $0x2e0] sm:$0xff]
      %v268 = vld [vmem:[%s1 + $0x2e8] sm:$0xff]
      %v269 = vld [vmem:[%s1 + $0x2f0] sm:$0xff]
      %v270 = vld [vmem:[%s1 + $0x2f8] sm:$0xff]
      %v271 = vld [vmem:[%s1 + $0x300] sm:$0xff]
      %v272 = vld [vmem:[%s1 + $0x308] sm:$0xff]
      %v273 = vld [vmem:[%s1 + $0x310] sm:$0xff]
      %v274 = vld [vmem:[%s1 + $0x318] sm:$0xff]
      %v275 = vld [vmem:[%s1 + $0x320] sm:$0xff]
      %v276 = vld [vmem:[%s1 + $0x328] sm:$0xff]
      %v277 = vld [vmem:[%s1 + $0x330] sm:$0xff]
      %v278 = vld [vmem:[%s1 + $0x338] sm:$0xff]
      %v279 = vld [vmem:[%s1 + $0x340] sm:$0xff]
      %v280 = vld [vmem:[%s1 + $0x348] sm:$0xff]
      %v281 = vld [vmem:[%s1 + $0x350] sm:$0xff]
      %v282 = vld [vmem:[%s1 + $0x358] sm:$0xff]
      %v283 = vld [vmem:[%s1 + $0x360] sm:$0xff]
      %v284 = vld [vmem:[%s1 + $0x368] sm:$0xff]
      %v285 = vld [vmem:[%s1 + $0x370] sm:$0xff]
      %v286 = vld [vmem:[%s1 + $0x378] sm:$0xff]
      %v287 = vld [vmem:[%s1 + $0x380] sm:$0xff]
      %v288 = vld [vmem:[%s1 + $0x388] sm:$0xff]
      %v289 = vld [vmem:[%s1 + $0x390] sm:$0xff]
      %v290 = vld [vmem:[%s1 + $0x398] sm:$0xff]
      %v291 = vld [vmem:[%s1 + $0x3a0] sm:$0xff]
      %v292 = vld [vmem:[%s1 + $0x3a8] sm:$0xff]
      %v293 = vld [vmem:[%s1 + $0x3b0] sm:$0xff]
      %v294 = vld [vmem:[%s1 + $0x3b8] sm:$0xff]
      %v295 = vld [vmem:[%s1 + $0x3c0] sm:$0xff]
      %v296 = vld [vmem:[%s1 + $0x3c8] sm:$0xff]
      %v297 = vld [vmem:[%s1 + $0x3d0] sm:$0xff]
      %v298 = vld [vmem:[%s1 + $0x3d8] sm:$0xff]
      %v299 = vld [vmem:[%s1 + $0x3e0] sm:$0xff]
      %v300 = vld [vmem:[%s1 + $0x3e8] sm:$0xff]
      %v301 = vld [vmem:[%s1 + $0x3f0] sm:$0xff]
      %v302 = vld [vmem:[%s1 + $0x3f8] sm:$0xff]
      %v303 = vld [vmem:[%s1 + $0x400] sm:$0xff]
      %v304 = vld [vmem:[%s1 + $0x408] sm:$0xff]
      %v305 = vld [vmem:[%s1 + $0x410] sm:$0xff]
      %v306 = vld [vmem:[%s1 + $0x418] sm:$0xff]
      %v307 = vld [vmem:[%s1 + $0x420] sm:$0xff]
      %v308 = vld [vmem:[%s1 + $0x428] sm:$0xff]
      %v309 = vld [vmem:[%s1 + $0x430] sm:$0xff]
      %v310 = vld [vmem:[%s1 + $0x438] sm:$0xff]
      %v311 = vld [vmem:[%s1 + $0x440] sm:$0xff]
      %v312 = vld [vmem:[%s1 + $0x448] sm:$0xff]
      %v313 = vld [vmem:[%s1 + $0x450] sm:$0xff]
      %v314 = vld [vmem:[%s1 + $0x458] sm:$0xff]
      %v315 = vld [vmem:[%s1 + $0x460] sm:$0xff]
      %v316 = vld [vmem:[%s1 + $0x468] sm:$0xff]
      %v317 = vld [vmem:[%s1 + $0x470] sm:$0xff]
      %v318 = vld [vmem:[%s1 + $0x478] sm:$0xff]
      %v319 = vld [vmem:[%s1 + $0x480] sm:$0xff]
      %v320 = vld [vmem:[%s1 + $0x488] sm:$0xff]
      %v321 = vld [vmem:[%s1 + $0x490] sm:$0xff]
      %v322 = vld [vmem:[%s1 + $0x498] sm:$0xff]
      %v323 = vld [vmem:[%s1 + $0x4a0] sm:$0xff]
      %v324 = vld [vmem:[%s1 + $0x4a8] sm:$0xff]
      %v325 = vld [vmem:[%s1 + $0x4b0] sm:$0xff]
      %v326 = vld [vmem:[%s1 + $0x4b8] sm:$0xff]
      %v327 = vld [vmem:[%s1 + $0x4c0] sm:$0xff]
      %v328 = vld [vmem:[%s1 + $0x4c8] sm:$0xff]
      %v329 = vld [vmem:[%s1 + $0x4d0] sm:$0xff]
      %v330 = vld [vmem:[%s1 + $0x4d8] sm:$0xff]
      %v331 = vld [vmem:[%s1 + $0x4e0] sm:$0xff]
      %v332 = vld [vmem:[%s1 + $0x4e8] sm:$0xff]
      %v333 = vld [vmem:[%s1 + $0x4f0] sm:$0xff]
      %v334 = vld [vmem:[%s1 + $0x4f8] sm:$0xff]
      %v335 = vld [vmem:[%s1 + $0x500] sm:$0xff]
      %v336 = vld [vmem:[%s1 + $0x508] sm:$0xff]
      %v337 = vld [vmem:[%s1 + $0x510] sm:$0xff]
      %v338 = vld [vmem:[%s1 + $0x518] sm:$0xff]
      %v339 = vld [vmem:[%s1 + $0x520] sm:$0xff]
      %v340 = vld [vmem:[%s1 + $0x528] sm:$0xff]
      %v341 = vld [vmem:[%s1 + $0x530] sm:$0xff]
      %v342 = vld [vmem:[%s1 + $0x538] sm:$0xff]
      %v343 = vld [vmem:[%s1 + $0x540] sm:$0xff]
      %v344 = vld [vmem:[%s1 + $0x548] sm:$0xff]
      %v345 = vld [vmem:[%s1 + $0x550] sm:$0xff]
      %v346 = vld [vmem:[%s1 + $0x558] sm:$0xff]
      %v347 = vld [vmem:[%s1 + $0x560] sm:$0xff]
      %v348 = vld [vmem:[%s1 + $0x568] sm:$0xff]
      %v349 = vld [vmem:[%s1 + $0x570] sm:$0xff]
      %v350 = vld [vmem:[%s1 + $0x578] sm:$0xff]
      %v351 = vld [vmem:[%s1 + $0x580] sm:$0xff]
      %v352 = vld [vmem:[%s1 + $0x588] sm:$0xff]
      %v353 = vld [vmem:[%s1 + $0x590] sm:$0xff]
      %v354 = vld [vmem:[%s1 + $0x598] sm:$0xff]
      %v355 = vld [vmem:[%s1 + $0x5a0] sm:$0xff]
      %v356 = vld [vmem:[%s1 + $0x5a8] sm:$0xff]
      %v357 = vld [vmem:[%s1 + $0x5b0] sm:$0xff]
      %v358 = vld [vmem:[%s1 + $0x5b8] sm:$0xff]
      %v359 = vld [vmem:[%s1 + $0x5c0] sm:$0xff]
      %v360 = vld [vmem:[%s1 + $0x5c8] sm:$0xff]
      %v361 = vld [vmem:[%s1 + $0x5d0] sm:$0xff]
      %v362 = vld [vmem:[%s1 + $0x5d8] sm:$0xff]
      %v363 = vld [vmem:[%s1 + $0x5e0] sm:$0xff]
      %v364 = vld [vmem:[%s1 + $0x5e8] sm:$0xff]
      %v365 = vld [vmem:[%s1 + $0x5f0] sm:$0xff]
      %v366 = vld [vmem:[%s1 + $0x5f8] sm:$0xff]
      %v367 = vld [vmem:[%s1 + $0x600] sm:$0xff]
      %v368 = vld [vmem:[%s1 + $0x608] sm:$0xff]
      %v369 = vld [vmem:[%s1 + $0x610] sm:$0xff]
      %v370 = vld [vmem:[%s1 + $0x618] sm:$0xff]
      %v371 = vld [vmem:[%s1 + $0x620] sm:$0xff]
      %v372 = vld [vmem:[%s1 + $0x628] sm:$0xff]
      %v373 = vld [vmem:[%s1 + $0x630] sm:$0xff]
      %v374 = vld [vmem:[%s1 + $0x638] sm:$0xff]
      %v375 = vld [vmem:[%s1 + $0x640] sm:$0xff]
      %v376 = vld [vmem:[%s1 + $0x648] sm:$0xff]
      %v377 = vld [vmem:[%s1 + $0x650] sm:$0xff]
      %v378 = vld [vmem:[%s1 + $0x658] sm:$0xff]
      %v379 = vld [vmem:[%s1 + $0x660] sm:$0xff]
      %v380 = vld [vmem:[%s1 + $0x668] sm:$0xff]
      %v381 = vld [vmem:[%s1 + $0x670] sm:$0xff]
      %v382 = vld [vmem:[%s1 + $0x678] sm:$0xff]
      %v383 = vld [vmem:[%s1 + $0x680] sm:$0xff]
      %v384 = vld [vmem:[%s1 + $0x688] sm:$0xff]
      %v385 = vld [vmem:[%s1 + $0x690] sm:$0xff]
      %v386 = vld [vmem:[%s1 + $0x698] sm:$0xff]
      %v387 = vld [vmem:[%s1 + $0x6a0] sm:$0xff]
      %v388 = vld [vmem:[%s1 + $0x6a8] sm:$0xff]
      %v389 = vld [vmem:[%s1 + $0x6b0] sm:$0xff]
      %v390 = vld [vmem:[%s1 + $0x6b8] sm:$0xff]
      %v391 = vld [vmem:[%s1 + $0x6c0] sm:$0xff]
      %v392 = vld [vmem:[%s1 + $0x6c8] sm:$0xff]
      %v393 = vld [vmem:[%s1 + $0x6d0] sm:$0xff]
      %v394 = vld [vmem:[%s1 + $0x6d8] sm:$0xff]
      %v395 = vld [vmem:[%s1 + $0x6e0] sm:$0xff]
      %v396 = vld [vmem:[%s1 + $0x6e8] sm:$0xff]
      %v397 = vld [vmem:[%s1 + $0x6f0] sm:$0xff]
      %v398 = vld [vmem:[%s1 + $0x6f8] sm:$0xff]
      %v399 = vld [vmem:[%s1 + $0x700] sm:$0xff]
      %v400 = vld [vmem:[%s1 + $0x708] sm:$0xff]
      %v401 = vld [vmem:[%s1 + $0x710] sm:$0xff]
      %v402 = vld [vmem:[%s1 + $0x718] sm:$0xff]
      %v403 = vld [vmem:[%s1 + $0x720] sm:$0xff]
      %v404 = vld [vmem:[%s1 + $0x728] sm:$0xff]
      %v405 = vld [vmem:[%s1 + $0x730] sm:$0xff]
      %v406 = vld [vmem:[%s1 + $0x738] sm:$0xff]
      %v407 = vld [vmem:[%s1 + $0x740] sm:$0xff]
      %v408 = vld [vmem:[%s1 + $0x748] sm:$0xff]
      %v409 = vld [vmem:[%s1 + $0x750] sm:$0xff]
      %v410 = vld [vmem:[%s1 + $0x758] sm:$0xff]
      %v411 = vld [vmem:[%s1 + $0x760] sm:$0xff]
      %v412 = vld [vmem:[%s1 + $0x768] sm:$0xff]
      %v413 = vld [vmem:[%s1 + $0x770] sm:$0xff]
      %v414 = vld [vmem:[%s1 + $0x778] sm:$0xff]
      %v415 = vld [vmem:[%s1 + $0x780] sm:$0xff]
      %v416 = vld [vmem:[%s1 + $0x788] sm:$0xff]
      %v417 = vld [vmem:[%s1 + $0x790] sm:$0xff]
      %v418 = vld [vmem:[%s1 + $0x798] sm:$0xff]
      %v419 = vld [vmem:[%s1 + $0x7a0] sm:$0xff]
      %v420 = vld [vmem:[%s1 + $0x7a8] sm:$0xff]
      %v421 = vld [vmem:[%s1 + $0x7b0] sm:$0xff]
      %v422 = vld [vmem:[%s1 + $0x7b8] sm:$0xff]
      %v423 = vld [vmem:[%s1 + $0x7c0] sm:$0xff]
      %v424 = vld [vmem:[%s1 + $0x7c8] sm:$0xff]
      %v425 = vld [vmem:[%s1 + $0x7d0] sm:$0xff]
      %v426 = vld [vmem:[%s1 + $0x7d8] sm:$0xff]
      %v427 = vld [vmem:[%s1 + $0x7e0] sm:$0xff]
      %v428 = vld [vmem:[%s1 + $0x7e8] sm:$0xff]
      %v429 = vld [vmem:[%s1 + $0x7f0] sm:$0xff]
      %v430 = vld [vmem:[%s1 + $0x7f8] sm:$0xff]
      %s431 = scalar_lea.vmem %s165, 32
      %v432 = vld [vmem:[%s431] sm:$0x7f]
      %v433 = vld [vmem:[%s431 + $0x8] sm:$0x7f]
      %v434 = vld [vmem:[%s431 + $0x10] sm:$0x7f]
      %v435 = vld [vmem:[%s431 + $0x18] sm:$0x7f]
      %s436 = scalar_lea.vmem %s1, 2048
      %v437 = vld [vmem:[%s436] sm:$0xff]
      %v438 = vld [vmem:[%s436 + $0x8] sm:$0xff]
      %v439 = vld [vmem:[%s436 + $0x10] sm:$0xff]
      %v440 = vld [vmem:[%s436 + $0x18] sm:$0xff]
      %v441 = vld [vmem:[%s436 + $0x20] sm:$0xff]
      %v442 = vld [vmem:[%s436 + $0x28] sm:$0xff]
      %v443 = vld [vmem:[%s436 + $0x30] sm:$0xff]
      %v444 = vld [vmem:[%s436 + $0x38] sm:$0xff]
      %v445 = vld [vmem:[%s436 + $0x40] sm:$0xff]
      %v446 = vld [vmem:[%s436 + $0x48] sm:$0xff]
      %v447 = vld [vmem:[%s436 + $0x50] sm:$0xff]
      %v448 = vld [vmem:[%s436 + $0x58] sm:$0xff]
      %v449 = vld [vmem:[%s436 + $0x60] sm:$0xff]
      %v450 = vld [vmem:[%s436 + $0x68] sm:$0xff]
      %v451 = vld [vmem:[%s436 + $0x70] sm:$0xff]
      %v452 = vld [vmem:[%s436 + $0x78] sm:$0xff]
      %v453 = vld [vmem:[%s436 + $0x80] sm:$0xff]
      %v454 = vld [vmem:[%s436 + $0x88] sm:$0xff]
      %v455 = vld [vmem:[%s436 + $0x90] sm:$0xff]
      %v456 = vld [vmem:[%s436 + $0x98] sm:$0xff]
      %v457 = vld [vmem:[%s436 + $0xa0] sm:$0xff]
      %v458 = vld [vmem:[%s436 + $0xa8] sm:$0xff]
      %v459 = vld [vmem:[%s436 + $0xb0] sm:$0xff]
      %v460 = vld [vmem:[%s436 + $0xb8] sm:$0xff]
      %v461 = vld [vmem:[%s436 + $0xc0] sm:$0xff]
      %v462 = vld [vmem:[%s436 + $0xc8] sm:$0xff]
      %v463 = vld [vmem:[%s436 + $0xd0] sm:$0xff]
      %v464 = vld [vmem:[%s436 + $0xd8] sm:$0xff]
      %v465 = vld [vmem:[%s436 + $0xe0] sm:$0xff]
      %v466 = vld [vmem:[%s436 + $0xe8] sm:$0xff]
      %v467 = vld [vmem:[%s436 + $0xf0] sm:$0xff]
      %v468 = vld [vmem:[%s436 + $0xf8] sm:$0xff]
      %v469 = vld [vmem:[%s436 + $0x100] sm:$0xff]
      %v470 = vld [vmem:[%s436 + $0x108] sm:$0xff]
      %v471 = vld [vmem:[%s436 + $0x110] sm:$0xff]
      %v472 = vld [vmem:[%s436 + $0x118] sm:$0xff]
      %v473 = vld [vmem:[%s436 + $0x120] sm:$0xff]
      %v474 = vld [vmem:[%s436 + $0x128] sm:$0xff]
      %v475 = vld [vmem:[%s436 + $0x130] sm:$0xff]
      %v476 = vld [vmem:[%s436 + $0x138] sm:$0xff]
      %v477 = vld [vmem:[%s436 + $0x140] sm:$0xff]
      %v478 = vld [vmem:[%s436 + $0x148] sm:$0xff]
      %v479 = vld [vmem:[%s436 + $0x150] sm:$0xff]
      %v480 = vld [vmem:[%s436 + $0x158] sm:$0xff]
      %v481 = vld [vmem:[%s436 + $0x160] sm:$0xff]
      %v482 = vld [vmem:[%s436 + $0x168] sm:$0xff]
      %v483 = vld [vmem:[%s436 + $0x170] sm:$0xff]
      %v484 = vld [vmem:[%s436 + $0x178] sm:$0xff]
      %v485 = vld [vmem:[%s436 + $0x180] sm:$0xff]
      %v486 = vld [vmem:[%s436 + $0x188] sm:$0xff]
      %v487 = vld [vmem:[%s436 + $0x190] sm:$0xff]
      %v488 = vld [vmem:[%s436 + $0x198] sm:$0xff]
      %v489 = vld [vmem:[%s436 + $0x1a0] sm:$0xff]
      %v490 = vld [vmem:[%s436 + $0x1a8] sm:$0xff]
      %v491 = vld [vmem:[%s436 + $0x1b0] sm:$0xff]
      %v492 = vld [vmem:[%s436 + $0x1b8] sm:$0xff]
      %v493 = vld [vmem:[%s436 + $0x1c0] sm:$0xff]
      %v494 = vld [vmem:[%s436 + $0x1c8] sm:$0xff]
      %v495 = vld [vmem:[%s436 + $0x1d0] sm:$0xff]
      %v496 = vld [vmem:[%s436 + $0x1d8] sm:$0xff]
      %v497 = vld [vmem:[%s436 + $0x1e0] sm:$0xff]
      %v498 = vld [vmem:[%s436 + $0x1e8] sm:$0xff]
      %v499 = vld [vmem:[%s436 + $0x1f0] sm:$0xff]
      %v500 = vld [vmem:[%s436 + $0x1f8] sm:$0xff]
      %v501 = vld [vmem:[%s436 + $0x200] sm:$0xff]
      %v502 = vld [vmem:[%s436 + $0x208] sm:$0xff]
      %v503 = vld [vmem:[%s436 + $0x210] sm:$0xff]
      %v504 = vld [vmem:[%s436 + $0x218] sm:$0xff]
      %v505 = vld [vmem:[%s436 + $0x220] sm:$0xff]
      %v506 = vld [vmem:[%s436 + $0x228] sm:$0xff]
      %v507 = vld [vmem:[%s436 + $0x230] sm:$0xff]
      %v508 = vld [vmem:[%s436 + $0x238] sm:$0xff]
      %v509 = vld [vmem:[%s436 + $0x240] sm:$0xff]
      %v510 = vld [vmem:[%s436 + $0x248] sm:$0xff]
      %v511 = vld [vmem:[%s436 + $0x250] sm:$0xff]
      %v512 = vld [vmem:[%s436 + $0x258] sm:$0xff]
      %v513 = vld [vmem:[%s436 + $0x260] sm:$0xff]
      %v514 = vld [vmem:[%s436 + $0x268] sm:$0xff]
      %v515 = vld [vmem:[%s436 + $0x270] sm:$0xff]
      %v516 = vld [vmem:[%s436 + $0x278] sm:$0xff]
      %v517 = vld [vmem:[%s436 + $0x280] sm:$0xff]
      %v518 = vld [vmem:[%s436 + $0x288] sm:$0xff]
      %v519 = vld [vmem:[%s436 + $0x290] sm:$0xff]
      %v520 = vld [vmem:[%s436 + $0x298] sm:$0xff]
      %v521 = vld [vmem:[%s436 + $0x2a0] sm:$0xff]
      %v522 = vld [vmem:[%s436 + $0x2a8] sm:$0xff]
      %v523 = vld [vmem:[%s436 + $0x2b0] sm:$0xff]
      %v524 = vld [vmem:[%s436 + $0x2b8] sm:$0xff]
      %v525 = vld [vmem:[%s436 + $0x2c0] sm:$0xff]
      %v526 = vld [vmem:[%s436 + $0x2c8] sm:$0xff]
      %v527 = vld [vmem:[%s436 + $0x2d0] sm:$0xff]
      %v528 = vld [vmem:[%s436 + $0x2d8] sm:$0xff]
      %v529 = vld [vmem:[%s436 + $0x2e0] sm:$0xff]
      %v530 = vld [vmem:[%s436 + $0x2e8] sm:$0xff]
      %v531 = vld [vmem:[%s436 + $0x2f0] sm:$0xff]
      %v532 = vld [vmem:[%s436 + $0x2f8] sm:$0xff]
      %v533 = vld [vmem:[%s436 + $0x300] sm:$0xff]
      %v534 = vld [vmem:[%s436 + $0x308] sm:$0xff]
      %v535 = vld [vmem:[%s436 + $0x310] sm:$0xff]
      %v536 = vld [vmem:[%s436 + $0x318] sm:$0xff]
      %v537 = vld [vmem:[%s436 + $0x320] sm:$0xff]
      %v538 = vld [vmem:[%s436 + $0x328] sm:$0xff]
      %v539 = vld [vmem:[%s436 + $0x330] sm:$0xff]
      %v540 = vld [vmem:[%s436 + $0x338] sm:$0xff]
      %v541 = vld [vmem:[%s436 + $0x340] sm:$0xff]
      %v542 = vld [vmem:[%s436 + $0x348] sm:$0xff]
      %v543 = vld [vmem:[%s436 + $0x350] sm:$0xff]
      %v544 = vld [vmem:[%s436 + $0x358] sm:$0xff]
      %v545 = vld [vmem:[%s436 + $0x360] sm:$0xff]
      %v546 = vld [vmem:[%s436 + $0x368] sm:$0xff]
      %v547 = vld [vmem:[%s436 + $0x370] sm:$0xff]
      %v548 = vld [vmem:[%s436 + $0x378] sm:$0xff]
      %v549 = vld [vmem:[%s436 + $0x380] sm:$0xff]
      %v550 = vld [vmem:[%s436 + $0x388] sm:$0xff]
      %v551 = vld [vmem:[%s436 + $0x390] sm:$0xff]
      %v552 = vld [vmem:[%s436 + $0x398] sm:$0xff]
      %v553 = vld [vmem:[%s436 + $0x3a0] sm:$0xff]
      %v554 = vld [vmem:[%s436 + $0x3a8] sm:$0xff]
      %v555 = vld [vmem:[%s436 + $0x3b0] sm:$0xff]
      %v556 = vld [vmem:[%s436 + $0x3b8] sm:$0xff]
      %v557 = vld [vmem:[%s436 + $0x3c0] sm:$0xff]
      %v558 = vld [vmem:[%s436 + $0x3c8] sm:$0xff]
      %v559 = vld [vmem:[%s436 + $0x3d0] sm:$0xff]
      %v560 = vld [vmem:[%s436 + $0x3d8] sm:$0xff]
      %v561 = vld [vmem:[%s436 + $0x3e0] sm:$0xff]
      %v562 = vld [vmem:[%s436 + $0x3e8] sm:$0xff]
      %v563 = vld [vmem:[%s436 + $0x3f0] sm:$0xff]
      %v564 = vld [vmem:[%s436 + $0x3f8] sm:$0xff]
      %v565 = vld [vmem:[%s436 + $0x400] sm:$0xff]
      %v566 = vld [vmem:[%s436 + $0x408] sm:$0xff]
      %v567 = vld [vmem:[%s436 + $0x410] sm:$0xff]
      %v568 = vld [vmem:[%s436 + $0x418] sm:$0xff]
      %v569 = vld [vmem:[%s436 + $0x420] sm:$0xff]
      %v570 = vld [vmem:[%s436 + $0x428] sm:$0xff]
      %v571 = vld [vmem:[%s436 + $0x430] sm:$0xff]
      %v572 = vld [vmem:[%s436 + $0x438] sm:$0xff]
      %v573 = vld [vmem:[%s436 + $0x440] sm:$0xff]
      %v574 = vld [vmem:[%s436 + $0x448] sm:$0xff]
      %v575 = vld [vmem:[%s436 + $0x450] sm:$0xff]
      %v576 = vld [vmem:[%s436 + $0x458] sm:$0xff]
      %v577 = vld [vmem:[%s436 + $0x460] sm:$0xff]
      %v578 = vld [vmem:[%s436 + $0x468] sm:$0xff]
      %v579 = vld [vmem:[%s436 + $0x470] sm:$0xff]
      %v580 = vld [vmem:[%s436 + $0x478] sm:$0xff]
      %v581 = vld [vmem:[%s436 + $0x480] sm:$0xff]
      %v582 = vld [vmem:[%s436 + $0x488] sm:$0xff]
      %v583 = vld [vmem:[%s436 + $0x490] sm:$0xff]
      %v584 = vld [vmem:[%s436 + $0x498] sm:$0xff]
      %v585 = vld [vmem:[%s436 + $0x4a0] sm:$0xff]
      %v586 = vld [vmem:[%s436 + $0x4a8] sm:$0xff]
      %v587 = vld [vmem:[%s436 + $0x4b0] sm:$0xff]
      %v588 = vld [vmem:[%s436 + $0x4b8] sm:$0xff]
      %v589 = vld [vmem:[%s436 + $0x4c0] sm:$0xff]
      %v590 = vld [vmem:[%s436 + $0x4c8] sm:$0xff]
      %v591 = vld [vmem:[%s436 + $0x4d0] sm:$0xff]
      %v592 = vld [vmem:[%s436 + $0x4d8] sm:$0xff]
      %v593 = vld [vmem:[%s436 + $0x4e0] sm:$0xff]
      %v594 = vld [vmem:[%s436 + $0x4e8] sm:$0xff]
      %v595 = vld [vmem:[%s436 + $0x4f0] sm:$0xff]
      %v596 = vld [vmem:[%s436 + $0x4f8] sm:$0xff]
      %v597 = vld [vmem:[%s436 + $0x500] sm:$0xff]
      %v598 = vld [vmem:[%s436 + $0x508] sm:$0xff]
      %v599 = vld [vmem:[%s436 + $0x510] sm:$0xff]
      %v600 = vld [vmem:[%s436 + $0x518] sm:$0xff]
      %v601 = vld [vmem:[%s436 + $0x520] sm:$0xff]
      %v602 = vld [vmem:[%s436 + $0x528] sm:$0xff]
      %v603 = vld [vmem:[%s436 + $0x530] sm:$0xff]
      %v604 = vld [vmem:[%s436 + $0x538] sm:$0xff]
      %v605 = vld [vmem:[%s436 + $0x540] sm:$0xff]
      %v606 = vld [vmem:[%s436 + $0x548] sm:$0xff]
      %v607 = vld [vmem:[%s436 + $0x550] sm:$0xff]
      %v608 = vld [vmem:[%s436 + $0x558] sm:$0xff]
      %v609 = vld [vmem:[%s436 + $0x560] sm:$0xff]
      %v610 = vld [vmem:[%s436 + $0x568] sm:$0xff]
      %v611 = vld [vmem:[%s436 + $0x570] sm:$0xff]
      %v612 = vld [vmem:[%s436 + $0x578] sm:$0xff]
      %v613 = vld [vmem:[%s436 + $0x580] sm:$0xff]
      %v614 = vld [vmem:[%s436 + $0x588] sm:$0xff]
      %v615 = vld [vmem:[%s436 + $0x590] sm:$0xff]
      %v616 = vld [vmem:[%s436 + $0x598] sm:$0xff]
      %v617 = vld [vmem:[%s436 + $0x5a0] sm:$0xff]
      %v618 = vld [vmem:[%s436 + $0x5a8] sm:$0xff]
      %v619 = vld [vmem:[%s436 + $0x5b0] sm:$0xff]
      %v620 = vld [vmem:[%s436 + $0x5b8] sm:$0xff]
      %v621 = vld [vmem:[%s436 + $0x5c0] sm:$0xff]
      %v622 = vld [vmem:[%s436 + $0x5c8] sm:$0xff]
      %v623 = vld [vmem:[%s436 + $0x5d0] sm:$0xff]
      %v624 = vld [vmem:[%s436 + $0x5d8] sm:$0xff]
      %v625 = vld [vmem:[%s436 + $0x5e0] sm:$0xff]
      %v626 = vld [vmem:[%s436 + $0x5e8] sm:$0xff]
      %v627 = vld [vmem:[%s436 + $0x5f0] sm:$0xff]
      %v628 = vld [vmem:[%s436 + $0x5f8] sm:$0xff]
      %v629 = vld [vmem:[%s436 + $0x600] sm:$0xff]
      %v630 = vld [vmem:[%s436 + $0x608] sm:$0xff]
      %v631 = vld [vmem:[%s436 + $0x610] sm:$0xff]
      %v632 = vld [vmem:[%s436 + $0x618] sm:$0xff]
      %v633 = vld [vmem:[%s436 + $0x620] sm:$0xff]
      %v634 = vld [vmem:[%s436 + $0x628] sm:$0xff]
      %v635 = vld [vmem:[%s436 + $0x630] sm:$0xff]
      %v636 = vld [vmem:[%s436 + $0x638] sm:$0xff]
      %v637 = vld [vmem:[%s436 + $0x640] sm:$0xff]
      %v638 = vld [vmem:[%s436 + $0x648] sm:$0xff]
      %v639 = vld [vmem:[%s436 + $0x650] sm:$0xff]
      %v640 = vld [vmem:[%s436 + $0x658] sm:$0xff]
      %v641 = vld [vmem:[%s436 + $0x660] sm:$0xff]
      %v642 = vld [vmem:[%s436 + $0x668] sm:$0xff]
      %v643 = vld [vmem:[%s436 + $0x670] sm:$0xff]
      %v644 = vld [vmem:[%s436 + $0x678] sm:$0xff]
      %v645 = vld [vmem:[%s436 + $0x680] sm:$0xff]
      %v646 = vld [vmem:[%s436 + $0x688] sm:$0xff]
      %v647 = vld [vmem:[%s436 + $0x690] sm:$0xff]
      %v648 = vld [vmem:[%s436 + $0x698] sm:$0xff]
      %v649 = vld [vmem:[%s436 + $0x6a0] sm:$0xff]
      %v650 = vld [vmem:[%s436 + $0x6a8] sm:$0xff]
      %v651 = vld [vmem:[%s436 + $0x6b0] sm:$0xff]
      %v652 = vld [vmem:[%s436 + $0x6b8] sm:$0xff]
      %v653 = vld [vmem:[%s436 + $0x6c0] sm:$0xff]
      %v654 = vld [vmem:[%s436 + $0x6c8] sm:$0xff]
      %v655 = vld [vmem:[%s436 + $0x6d0] sm:$0xff]
      %v656 = vld [vmem:[%s436 + $0x6d8] sm:$0xff]
      %v657 = vld [vmem:[%s436 + $0x6e0] sm:$0xff]
      %v658 = vld [vmem:[%s436 + $0x6e8] sm:$0xff]
      %v659 = vld [vmem:[%s436 + $0x6f0] sm:$0xff]
      %v660 = vld [vmem:[%s436 + $0x6f8] sm:$0xff]
      %v661 = vld [vmem:[%s436 + $0x700] sm:$0xff]
      %v662 = vld [vmem:[%s436 + $0x708] sm:$0xff]
      %v663 = vld [vmem:[%s436 + $0x710] sm:$0xff]
      %v664 = vld [vmem:[%s436 + $0x718] sm:$0xff]
      %v665 = vld [vmem:[%s436 + $0x720] sm:$0xff]
      %v666 = vld [vmem:[%s436 + $0x728] sm:$0xff]
      %v667 = vld [vmem:[%s436 + $0x730] sm:$0xff]
      %v668 = vld [vmem:[%s436 + $0x738] sm:$0xff]
      %v669 = vld [vmem:[%s436 + $0x740] sm:$0xff]
      %v670 = vld [vmem:[%s436 + $0x748] sm:$0xff]
      %v671 = vld [vmem:[%s436 + $0x750] sm:$0xff]
      %v672 = vld [vmem:[%s436 + $0x758] sm:$0xff]
      %v673 = vld [vmem:[%s436 + $0x760] sm:$0xff]
      %v674 = vld [vmem:[%s436 + $0x768] sm:$0xff]
      %v675 = vld [vmem:[%s436 + $0x770] sm:$0xff]
      %v676 = vld [vmem:[%s436 + $0x778] sm:$0xff]
      %v677 = vld [vmem:[%s436 + $0x780] sm:$0xff]
      %v678 = vld [vmem:[%s436 + $0x788] sm:$0xff]
      %v679 = vld [vmem:[%s436 + $0x790] sm:$0xff]
      %v680 = vld [vmem:[%s436 + $0x798] sm:$0xff]
      %v681 = vld [vmem:[%s436 + $0x7a0] sm:$0xff]
      %v682 = vld [vmem:[%s436 + $0x7a8] sm:$0xff]
      %v683 = vld [vmem:[%s436 + $0x7b0] sm:$0xff]
      %v684 = vld [vmem:[%s436 + $0x7b8] sm:$0xff]
      %v685 = vld [vmem:[%s436 + $0x7c0] sm:$0xff]
      %v686 = vld [vmem:[%s436 + $0x7c8] sm:$0xff]
      %v687 = vld [vmem:[%s436 + $0x7d0] sm:$0xff]
      %v688 = vld [vmem:[%s436 + $0x7d8] sm:$0xff]
      %v689 = vld [vmem:[%s436 + $0x7e0] sm:$0xff]
      %v690 = vld [vmem:[%s436 + $0x7e8] sm:$0xff]
      %v691 = vld [vmem:[%s436 + $0x7f0] sm:$0xff]
      %v692 = vld [vmem:[%s436 + $0x7f8] sm:$0xff]
      %693 = vmatprep.subr.mxu0 %v498
      %694 = vmatpush1.msra.mxu0 %v497
      %695 = vmatprep.subr.mxu0 %v494
      %696 = vmatpush1.msra.mxu0 %v493
      %697 = vmatprep.subr.mxu0 %v490
      %698 = vmatpush1.msra.mxu0 %v489
      %699 = vmatprep.subr.mxu0 %v486
      %700 = vmatpush1.msra.mxu0 %v485
      %701 = vmatprep.subr.mxu0 %v482
      %702 = vmatpush1.msra.mxu0 %v481
      %703 = vmatprep.subr.mxu0 %v478
      %704 = vmatpush1.msra.mxu0 %v477
      %705 = vmatprep.subr.mxu0 %v474
      %706 = vmatpush1.msra.mxu0 %v473
      %707 = vmatprep.subr.mxu0 %v470
      %708 = vmatpush1.msra.mxu0 %v469
      %709 = vmatprep.subr.mxu0 %v466
      %710 = vmatpush1.msra.mxu0 %v465
      %711 = vmatprep.subr.mxu0 %v462
      %712 = vmatpush1.msra.mxu0 %v461
      %713 = vmatprep.subr.mxu0 %v458
      %714 = vmatpush1.msra.mxu0 %v457
      %715 = vmatprep.subr.mxu0 %v454
      %716 = vmatpush1.msra.mxu0 %v453
      %717 = vmatprep.subr.mxu0 %v450
      %718 = vmatpush1.msra.mxu0 %v449
      %719 = vmatprep.subr.mxu0 %v446
      %720 = vmatpush1.msra.mxu0 %v445
      %721 = vmatprep.subr.mxu0 %v442
      %722 = vmatpush1.msra.mxu0 %v441
      %723 = vmatprep.subr.mxu0 %v438
      %724 = vmatpush1.msra.mxu0 %v437
      %725 = vmatprep.subr.mxu0 %v562
      %726 = vmatpush2.msra.mxu0 %v561
      %727 = vmatprep.subr.mxu0 %v558
      %728 = vmatpush2.msra.mxu0 %v557
      %729 = vmatprep.subr.mxu0 %v554
      %730 = vmatpush2.msra.mxu0 %v553
      %731 = vmatprep.subr.mxu0 %v550
      %732 = vmatpush2.msra.mxu0 %v549
      %733 = vmatprep.subr.mxu0 %v546
      %734 = vmatpush2.msra.mxu0 %v545
      %735 = vmatprep.subr.mxu0 %v542
      %736 = vmatpush2.msra.mxu0 %v541
      %737 = vmatprep.subr.mxu0 %v538
      %738 = vmatpush2.msra.mxu0 %v537
      %739 = vmatprep.subr.mxu0 %v534
      %740 = vmatpush2.msra.mxu0 %v533
      %741 = vmatprep.subr.mxu0 %v530
      %742 = vmatpush2.msra.mxu0 %v529
      %743 = vmatprep.subr.mxu0 %v526
      %744 = vmatpush2.msra.mxu0 %v525
      %745 = vmatprep.subr.mxu0 %v522
      %746 = vmatpush2.msra.mxu0 %v521
      %747 = vmatprep.subr.mxu0 %v518
      %748 = vmatpush2.msra.mxu0 %v517
      %749 = vmatprep.subr.mxu0 %v514
      %750 = vmatpush2.msra.mxu0 %v513
      %751 = vmatprep.subr.mxu0 %v510
      %752 = vmatpush2.msra.mxu0 %v509
      %753 = vmatprep.subr.mxu0 %v506
      %754 = vmatpush2.msra.mxu0 %v505
      %755 = vmatprep.subr.mxu0 %v502
      %756 = vmatpush2.msra.mxu0 %v501
      %757 = vmatprep.mubr.f32.mxu0 %v433
      %758 = vmatmul.mubr.f32.gmra.mxu0 %v432
      %v759 = vpop.f32.mrf.mxu0
      %v760 = vadd.f32 0.0, %v759
      %v761 = vpop.f32.mrf.mxu0
      %v762 = vadd.f32 0.0, %v761
      %763 = vdwg.mxu0
      %764 = vmatprep.subr.mxu0 %v626
      %765 = vmatpush1.msra.mxu0 %v625
      %766 = vmatprep.subr.mxu0 %v622
      %767 = vmatpush1.msra.mxu0 %v621
      %768 = vmatprep.subr.mxu0 %v618
      %769 = vmatpush1.msra.mxu0 %v617
      %770 = vmatprep.subr.mxu0 %v614
      %771 = vmatpush1.msra.mxu0 %v613
      %772 = vmatprep.subr.mxu0 %v610
      %773 = vmatpush1.msra.mxu0 %v609
      %774 = vmatprep.subr.mxu0 %v606
      %775 = vmatpush1.msra.mxu0 %v605
      %776 = vmatprep.subr.mxu0 %v602
      %777 = vmatpush1.msra.mxu0 %v601
      %778 = vmatprep.subr.mxu0 %v598
      %779 = vmatpush1.msra.mxu0 %v597
      %780 = vmatprep.subr.mxu0 %v594
      %781 = vmatpush1.msra.mxu0 %v593
      %782 = vmatprep.subr.mxu0 %v590
      %783 = vmatpush1.msra.mxu0 %v589
      %784 = vmatprep.subr.mxu0 %v586
      %785 = vmatpush1.msra.mxu0 %v585
      %786 = vmatprep.subr.mxu0 %v582
      %787 = vmatpush1.msra.mxu0 %v581
      %788 = vmatprep.subr.mxu0 %v578
      %789 = vmatpush1.msra.mxu0 %v577
      %790 = vmatprep.subr.mxu0 %v574
      %791 = vmatpush1.msra.mxu0 %v573
      %792 = vmatprep.subr.mxu0 %v570
      %793 = vmatpush1.msra.mxu0 %v569
      %794 = vmatprep.subr.mxu0 %v566
      %795 = vmatpush1.msra.mxu0 %v565
      %796 = vmatprep.subr.mxu0 %v690
      %797 = vmatpush2.msra.mxu0 %v689
      %798 = vmatprep.subr.mxu0 %v686
      %799 = vmatpush2.msra.mxu0 %v685
      %800 = vmatprep.subr.mxu0 %v682
      %801 = vmatpush2.msra.mxu0 %v681
      %802 = vmatprep.subr.mxu0 %v678
      %803 = vmatpush2.msra.mxu0 %v677
      %804 = vmatprep.subr.mxu0 %v674
      %805 = vmatpush2.msra.mxu0 %v673
      %806 = vmatprep.subr.mxu0 %v670
      %807 = vmatpush2.msra.mxu0 %v669
      %808 = vmatprep.subr.mxu0 %v666
      %809 = vmatpush2.msra.mxu0 %v665
      %810 = vmatprep.subr.mxu0 %v662
      %811 = vmatpush2.msra.mxu0 %v661
      %812 = vmatprep.subr.mxu0 %v658
      %813 = vmatpush2.msra.mxu0 %v657
      %814 = vmatprep.subr.mxu0 %v654
      %815 = vmatpush2.msra.mxu0 %v653
      %816 = vmatprep.subr.mxu0 %v650
      %817 = vmatpush2.msra.mxu0 %v649
      %818 = vmatprep.subr.mxu0 %v646
      %819 = vmatpush2.msra.mxu0 %v645
      %820 = vmatprep.subr.mxu0 %v642
      %821 = vmatpush2.msra.mxu0 %v641
      %822 = vmatprep.subr.mxu0 %v638
      %823 = vmatpush2.msra.mxu0 %v637
      %824 = vmatprep.subr.mxu0 %v634
      %825 = vmatpush2.msra.mxu0 %v633
      %826 = vmatprep.subr.mxu0 %v630
      %827 = vmatpush2.msra.mxu0 %v629
      %828 = vmatprep.mubr.f32.mxu0 %v435
      %829 = vmatmul.mubr.f32.gmra.mxu0 %v434
      %v830 = vpop.f32.mrf.mxu0
      %v831 = vadd.f32 %v760, %v830
      %v832 = vpop.f32.mrf.mxu0
      %v833 = vadd.f32 %v762, %v832
      %834 = vdwg.mxu0
      %835 = vmatprep.subr.mxu0 %v500
      %836 = vmatpush1.msra.mxu0 %v499
      %837 = vmatprep.subr.mxu0 %v496
      %838 = vmatpush1.msra.mxu0 %v495
      %839 = vmatprep.subr.mxu0 %v492
      %840 = vmatpush1.msra.mxu0 %v491
      %841 = vmatprep.subr.mxu0 %v488
      %842 = vmatpush1.msra.mxu0 %v487
      %843 = vmatprep.subr.mxu0 %v484
      %844 = vmatpush1.msra.mxu0 %v483
      %845 = vmatprep.subr.mxu0 %v480
      %846 = vmatpush1.msra.mxu0 %v479
      %847 = vmatprep.subr.mxu0 %v476
      %848 = vmatpush1.msra.mxu0 %v475
      %849 = vmatprep.subr.mxu0 %v472
      %850 = vmatpush1.msra.mxu0 %v471
      %851 = vmatprep.subr.mxu0 %v468
      %852 = vmatpush1.msra.mxu0 %v467
      %853 = vmatprep.subr.mxu0 %v464
      %854 = vmatpush1.msra.mxu0 %v463
      %855 = vmatprep.subr.mxu0 %v460
      %856 = vmatpush1.msra.mxu0 %v459
      %857 = vmatprep.subr.mxu0 %v456
      %858 = vmatpush1.msra.mxu0 %v455
      %859 = vmatprep.subr.mxu0 %v452
      %860 = vmatpush1.msra.mxu0 %v451
      %861 = vmatprep.subr.mxu0 %v448
      %862 = vmatpush1.msra.mxu0 %v447
      %863 = vmatprep.subr.mxu0 %v444
      %864 = vmatpush1.msra.mxu0 %v443
      %865 = vmatprep.subr.mxu0 %v440
      %866 = vmatpush1.msra.mxu0 %v439
      %867 = vmatprep.subr.mxu0 %v564
      %868 = vmatpush2.msra.mxu0 %v563
      %869 = vmatprep.subr.mxu0 %v560
      %870 = vmatpush2.msra.mxu0 %v559
      %871 = vmatprep.subr.mxu0 %v556
      %872 = vmatpush2.msra.mxu0 %v555
      %873 = vmatprep.subr.mxu0 %v552
      %874 = vmatpush2.msra.mxu0 %v551
      %875 = vmatprep.subr.mxu0 %v548
      %876 = vmatpush2.msra.mxu0 %v547
      %877 = vmatprep.subr.mxu0 %v544
      %878 = vmatpush2.msra.mxu0 %v543
      %879 = vmatprep.subr.mxu0 %v540
      %880 = vmatpush2.msra.mxu0 %v539
      %881 = vmatprep.subr.mxu0 %v536
      %882 = vmatpush2.msra.mxu0 %v535
      %883 = vmatprep.subr.mxu0 %v532
      %884 = vmatpush2.msra.mxu0 %v531
      %885 = vmatprep.subr.mxu0 %v528
      %886 = vmatpush2.msra.mxu0 %v527
      %887 = vmatprep.subr.mxu0 %v524
      %888 = vmatpush2.msra.mxu0 %v523
      %889 = vmatprep.subr.mxu0 %v520
      %890 = vmatpush2.msra.mxu0 %v519
      %891 = vmatprep.subr.mxu0 %v516
      %892 = vmatpush2.msra.mxu0 %v515
      %893 = vmatprep.subr.mxu0 %v512
      %894 = vmatpush2.msra.mxu0 %v511
      %895 = vmatprep.subr.mxu0 %v508
      %896 = vmatpush2.msra.mxu0 %v507
      %897 = vmatprep.subr.mxu0 %v504
      %898 = vmatpush2.msra.mxu0 %v503
      %899 = vmatprep.mubr.f32.mxu0 %v433
      %900 = vmatmul.mubr.f32.gmra.mxu0 %v432
      %v901 = vpop.f32.mrf.mxu0
      %v902 = vadd.f32 0.0, %v901
      %v903 = vpop.f32.mrf.mxu0
      %v904 = vadd.f32 0.0, %v903
      %905 = vdwg.mxu0
      %906 = vmatprep.subr.mxu0 %v628
      %907 = vmatpush1.msra.mxu0 %v627
      %908 = vmatprep.subr.mxu0 %v624
      %909 = vmatpush1.msra.mxu0 %v623
      %910 = vmatprep.subr.mxu0 %v620
      %911 = vmatpush1.msra.mxu0 %v619
      %912 = vmatprep.subr.mxu0 %v616
      %913 = vmatpush1.msra.mxu0 %v615
      %914 = vmatprep.subr.mxu0 %v612
      %915 = vmatpush1.msra.mxu0 %v611
      %916 = vmatprep.subr.mxu0 %v608
      %917 = vmatpush1.msra.mxu0 %v607
      %918 = vmatprep.subr.mxu0 %v604
      %919 = vmatpush1.msra.mxu0 %v603
      %920 = vmatprep.subr.mxu0 %v600
      %921 = vmatpush1.msra.mxu0 %v599
      %922 = vmatprep.subr.mxu0 %v596
      %923 = vmatpush1.msra.mxu0 %v595
      %924 = vmatprep.subr.mxu0 %v592
      %925 = vmatpush1.msra.mxu0 %v591
      %926 = vmatprep.subr.mxu0 %v588
      %927 = vmatpush1.msra.mxu0 %v587
      %928 = vmatprep.subr.mxu0 %v584
      %929 = vmatpush1.msra.mxu0 %v583
      %930 = vmatprep.subr.mxu0 %v580
      %931 = vmatpush1.msra.mxu0 %v579
      %932 = vmatprep.subr.mxu0 %v576
      %933 = vmatpush1.msra.mxu0 %v575
      %934 = vmatprep.subr.mxu0 %v572
      %935 = vmatpush1.msra.mxu0 %v571
      %936 = vmatprep.subr.mxu0 %v568
      %937 = vmatpush1.msra.mxu0 %v567
      %938 = vmatprep.subr.mxu0 %v692
      %939 = vmatpush2.msra.mxu0 %v691
      %940 = vmatprep.subr.mxu0 %v688
      %941 = vmatpush2.msra.mxu0 %v687
      %942 = vmatprep.subr.mxu0 %v684
      %943 = vmatpush2.msra.mxu0 %v683
      %944 = vmatprep.subr.mxu0 %v680
      %945 = vmatpush2.msra.mxu0 %v679
      %946 = vmatprep.subr.mxu0 %v676
      %947 = vmatpush2.msra.mxu0 %v675
      %948 = vmatprep.subr.mxu0 %v672
      %949 = vmatpush2.msra.mxu0 %v671
      %950 = vmatprep.subr.mxu0 %v668
      %951 = vmatpush2.msra.mxu0 %v667
      %952 = vmatprep.subr.mxu0 %v664
      %953 = vmatpush2.msra.mxu0 %v663
      %954 = vmatprep.subr.mxu0 %v660
      %955 = vmatpush2.msra.mxu0 %v659
      %956 = vmatprep.subr.mxu0 %v656
      %957 = vmatpush2.msra.mxu0 %v655
      %958 = vmatprep.subr.mxu0 %v652
      %959 = vmatpush2.msra.mxu0 %v651
      %960 = vmatprep.subr.mxu0 %v648
      %961 = vmatpush2.msra.mxu0 %v647
      %962 = vmatprep.subr.mxu0 %v644
      %963 = vmatpush2.msra.mxu0 %v643
      %964 = vmatprep.subr.mxu0 %v640
      %965 = vmatpush2.msra.mxu0 %v639
      %966 = vmatprep.subr.mxu0 %v636
      %967 = vmatpush2.msra.mxu0 %v635
      %968 = vmatprep.subr.mxu0 %v632
      %969 = vmatpush2.msra.mxu0 %v631
      %970 = vmatprep.mubr.f32.mxu0 %v435
      %971 = vmatmul.mubr.f32.gmra.mxu0 %v434
      %v972 = vpop.f32.mrf.mxu0
      %v973 = vadd.f32 %v902, %v972
      %v974 = vpop.f32.mrf.mxu0
      %v975 = vadd.f32 %v904, %v974
      %976 = vdwg.mxu0
      %977 = vmatprep.subr.mxu0 %v236
      %978 = vmatpush1.msra.mxu0 %v235
      %979 = vmatprep.subr.mxu0 %v232
      %980 = vmatpush1.msra.mxu0 %v231
      %981 = vmatprep.subr.mxu0 %v228
      %982 = vmatpush1.msra.mxu0 %v227
      %983 = vmatprep.subr.mxu0 %v224
      %984 = vmatpush1.msra.mxu0 %v223
      %985 = vmatprep.subr.mxu0 %v220
      %986 = vmatpush1.msra.mxu0 %v219
      %987 = vmatprep.subr.mxu0 %v216
      %988 = vmatpush1.msra.mxu0 %v215
      %989 = vmatprep.subr.mxu0 %v212
      %990 = vmatpush1.msra.mxu0 %v211
      %991 = vmatprep.subr.mxu0 %v208
      %992 = vmatpush1.msra.mxu0 %v207
      %993 = vmatprep.subr.mxu0 %v204
      %994 = vmatpush1.msra.mxu0 %v203
      %995 = vmatprep.subr.mxu0 %v200
      %996 = vmatpush1.msra.mxu0 %v199
      %997 = vmatprep.subr.mxu0 %v196
      %998 = vmatpush1.msra.mxu0 %v195
      %999 = vmatprep.subr.mxu0 %v192
      %1000 = vmatpush1.msra.mxu0 %v191
      %1001 = vmatprep.subr.mxu0 %v188
      %1002 = vmatpush1.msra.mxu0 %v187
      %1003 = vmatprep.subr.mxu0 %v184
      %1004 = vmatpush1.msra.mxu0 %v183
      %1005 = vmatprep.subr.mxu0 %v180
      %1006 = vmatpush1.msra.mxu0 %v179
      %1007 = vmatprep.subr.mxu0 %v176
      %1008 = vmatpush1.msra.mxu0 %v175
      %1009 = vmatprep.subr.mxu0 %v300
      %1010 = vmatpush2.msra.mxu0 %v299
      %1011 = vmatprep.subr.mxu0 %v296
      %1012 = vmatpush2.msra.mxu0 %v295
      %1013 = vmatprep.subr.mxu0 %v292
      %1014 = vmatpush2.msra.mxu0 %v291
      %1015 = vmatprep.subr.mxu0 %v288
      %1016 = vmatpush2.msra.mxu0 %v287
      %1017 = vmatprep.subr.mxu0 %v284
      %1018 = vmatpush2.msra.mxu0 %v283
      %1019 = vmatprep.subr.mxu0 %v280
      %1020 = vmatpush2.msra.mxu0 %v279
      %1021 = vmatprep.subr.mxu0 %v276
      %1022 = vmatpush2.msra.mxu0 %v275
      %1023 = vmatprep.subr.mxu0 %v272
      %1024 = vmatpush2.msra.mxu0 %v271
      %1025 = vmatprep.subr.mxu0 %v268
      %1026 = vmatpush2.msra.mxu0 %v267
      %1027 = vmatprep.subr.mxu0 %v264
      %1028 = vmatpush2.msra.mxu0 %v263
      %1029 = vmatprep.subr.mxu0 %v260
      %1030 = vmatpush2.msra.mxu0 %v259
      %1031 = vmatprep.subr.mxu0 %v256
      %1032 = vmatpush2.msra.mxu0 %v255
      %1033 = vmatprep.subr.mxu0 %v252
      %1034 = vmatpush2.msra.mxu0 %v251
      %1035 = vmatprep.subr.mxu0 %v248
      %1036 = vmatpush2.msra.mxu0 %v247
      %1037 = vmatprep.subr.mxu0 %v244
      %1038 = vmatpush2.msra.mxu0 %v243
      %1039 = vmatprep.subr.mxu0 %v240
      %1040 = vmatpush2.msra.mxu0 %v239
      %1041 = vmatprep.mubr.f32.mxu0 %v172
      %1042 = vmatmul.mubr.f32.gmra.mxu0 %v171
      %v1043 = vpop.f32.mrf.mxu0
      %v1044 = vadd.f32 %v831, %v1043
      %v1045 = vpop.f32.mrf.mxu0
      %v1046 = vadd.f32 %v833, %v1045
      %1047 = vdwg.mxu0
      %1048 = vmatprep.subr.mxu0 %v364
      %1049 = vmatpush1.msra.mxu0 %v363
      %1050 = vmatprep.subr.mxu0 %v360
      %1051 = vmatpush1.msra.mxu0 %v359
      %1052 = vmatprep.subr.mxu0 %v356
      %1053 = vmatpush1.msra.mxu0 %v355
      %1054 = vmatprep.subr.mxu0 %v352
      %1055 = vmatpush1.msra.mxu0 %v351
      %1056 = vmatprep.subr.mxu0 %v348
      %1057 = vmatpush1.msra.mxu0 %v347
      %1058 = vmatprep.subr.mxu0 %v344
      %1059 = vmatpush1.msra.mxu0 %v343
      %1060 = vmatprep.subr.mxu0 %v340
      %1061 = vmatpush1.msra.mxu0 %v339
      %1062 = vmatprep.subr.mxu0 %v336
      %1063 = vmatpush1.msra.mxu0 %v335
      %1064 = vmatprep.subr.mxu0 %v332
      %1065 = vmatpush1.msra.mxu0 %v331
      %1066 = vmatprep.subr.mxu0 %v328
      %1067 = vmatpush1.msra.mxu0 %v327
      %1068 = vmatprep.subr.mxu0 %v324
      %1069 = vmatpush1.msra.mxu0 %v323
      %1070 = vmatprep.subr.mxu0 %v320
      %1071 = vmatpush1.msra.mxu0 %v319
      %1072 = vmatprep.subr.mxu0 %v316
      %1073 = vmatpush1.msra.mxu0 %v315
      %1074 = vmatprep.subr.mxu0 %v312
      %1075 = vmatpush1.msra.mxu0 %v311
      %1076 = vmatprep.subr.mxu0 %v308
      %1077 = vmatpush1.msra.mxu0 %v307
      %1078 = vmatprep.subr.mxu0 %v304
      %1079 = vmatpush1.msra.mxu0 %v303
      %1080 = vmatprep.subr.mxu0 %v428
      %1081 = vmatpush2.msra.mxu0 %v427
      %1082 = vmatprep.subr.mxu0 %v424
      %1083 = vmatpush2.msra.mxu0 %v423
      %1084 = vmatprep.subr.mxu0 %v420
      %1085 = vmatpush2.msra.mxu0 %v419
      %1086 = vmatprep.subr.mxu0 %v416
      %1087 = vmatpush2.msra.mxu0 %v415
      %1088 = vmatprep.subr.mxu0 %v412
      %1089 = vmatpush2.msra.mxu0 %v411
      %1090 = vmatprep.subr.mxu0 %v408
      %1091 = vmatpush2.msra.mxu0 %v407
      %1092 = vmatprep.subr.mxu0 %v404
      %1093 = vmatpush2.msra.mxu0 %v403
      %1094 = vmatprep.subr.mxu0 %v400
      %1095 = vmatpush2.msra.mxu0 %v399
      %1096 = vmatprep.subr.mxu0 %v396
      %1097 = vmatpush2.msra.mxu0 %v395
      %1098 = vmatprep.subr.mxu0 %v392
      %1099 = vmatpush2.msra.mxu0 %v391
      %1100 = vmatprep.subr.mxu0 %v388
      %1101 = vmatpush2.msra.mxu0 %v387
      %1102 = vmatprep.subr.mxu0 %v384
      %1103 = vmatpush2.msra.mxu0 %v383
      %1104 = vmatprep.subr.mxu0 %v380
      %1105 = vmatpush2.msra.mxu0 %v379
      %1106 = vmatprep.subr.mxu0 %v376
      %1107 = vmatpush2.msra.mxu0 %v375
      %1108 = vmatprep.subr.mxu0 %v372
      %1109 = vmatpush2.msra.mxu0 %v371
      %1110 = vmatprep.subr.mxu0 %v368
      %1111 = vmatpush2.msra.mxu0 %v367
      %1112 = vmatprep.mubr.f32.mxu0 %v174
      %1113 = vmatmul.mubr.f32.gmra.mxu0 %v173
      %v1114 = vpop.f32.mrf.mxu0
      %v1115 = vadd.f32 %v1044, %v1114
      %v1116 = vpop.f32.mrf.mxu0
      %v1117 = vadd.f32 %v1046, %v1116
      %1118 = vdwg.mxu0
      %1119 = vmatprep.subr.mxu0 %v238
      %1120 = vmatpush1.msra.mxu0 %v237
      %1121 = vmatprep.subr.mxu0 %v234
      %1122 = vmatpush1.msra.mxu0 %v233
      %1123 = vmatprep.subr.mxu0 %v230
      %1124 = vmatpush1.msra.mxu0 %v229
      %1125 = vmatprep.subr.mxu0 %v226
      %1126 = vmatpush1.msra.mxu0 %v225
      %1127 = vmatprep.subr.mxu0 %v222
      %1128 = vmatpush1.msra.mxu0 %v221
      %1129 = vmatprep.subr.mxu0 %v218
      %1130 = vmatpush1.msra.mxu0 %v217
      %1131 = vmatprep.subr.mxu0 %v214
      %1132 = vmatpush1.msra.mxu0 %v213
      %1133 = vmatprep.subr.mxu0 %v210
      %1134 = vmatpush1.msra.mxu0 %v209
      %1135 = vmatprep.subr.mxu0 %v206
      %1136 = vmatpush1.msra.mxu0 %v205
      %1137 = vmatprep.subr.mxu0 %v202
      %1138 = vmatpush1.msra.mxu0 %v201
      %1139 = vmatprep.subr.mxu0 %v198
      %1140 = vmatpush1.msra.mxu0 %v197
      %1141 = vmatprep.subr.mxu0 %v194
      %1142 = vmatpush1.msra.mxu0 %v193
      %1143 = vmatprep.subr.mxu0 %v190
      %1144 = vmatpush1.msra.mxu0 %v189
      %1145 = vmatprep.subr.mxu0 %v186
      %1146 = vmatpush1.msra.mxu0 %v185
      %1147 = vmatprep.subr.mxu0 %v182
      %1148 = vmatpush1.msra.mxu0 %v181
      %1149 = vmatprep.subr.mxu0 %v178
      %1150 = vmatpush1.msra.mxu0 %v177
      %1151 = vmatprep.subr.mxu0 %v302
      %1152 = vmatpush2.msra.mxu0 %v301
      %1153 = vmatprep.subr.mxu0 %v298
      %1154 = vmatpush2.msra.mxu0 %v297
      %1155 = vmatprep.subr.mxu0 %v294
      %1156 = vmatpush2.msra.mxu0 %v293
      %1157 = vmatprep.subr.mxu0 %v290
      %1158 = vmatpush2.msra.mxu0 %v289
      %1159 = vmatprep.subr.mxu0 %v286
      %1160 = vmatpush2.msra.mxu0 %v285
      %1161 = vmatprep.subr.mxu0 %v282
      %1162 = vmatpush2.msra.mxu0 %v281
      %1163 = vmatprep.subr.mxu0 %v278
      %1164 = vmatpush2.msra.mxu0 %v277
      %1165 = vmatprep.subr.mxu0 %v274
      %1166 = vmatpush2.msra.mxu0 %v273
      %1167 = vmatprep.subr.mxu0 %v270
      %1168 = vmatpush2.msra.mxu0 %v269
      %1169 = vmatprep.subr.mxu0 %v266
      %1170 = vmatpush2.msra.mxu0 %v265
      %1171 = vmatprep.subr.mxu0 %v262
      %1172 = vmatpush2.msra.mxu0 %v261
      %1173 = vmatprep.subr.mxu0 %v258
      %1174 = vmatpush2.msra.mxu0 %v257
      %1175 = vmatprep.subr.mxu0 %v254
      %1176 = vmatpush2.msra.mxu0 %v253
      %1177 = vmatprep.subr.mxu0 %v250
      %1178 = vmatpush2.msra.mxu0 %v249
      %1179 = vmatprep.subr.mxu0 %v246
      %1180 = vmatpush2.msra.mxu0 %v245
      %1181 = vmatprep.subr.mxu0 %v242
      %1182 = vmatpush2.msra.mxu0 %v241
      %1183 = vmatprep.mubr.f32.mxu0 %v172
      %1184 = vmatmul.mubr.f32.gmra.mxu0 %v171
      %v1185 = vpop.f32.mrf.mxu0
      %v1186 = vadd.f32 %v973, %v1185
      %v1187 = vpop.f32.mrf.mxu0
      %v1188 = vadd.f32 %v975, %v1187
      %1189 = vdwg.mxu0
      %1190 = vmatprep.subr.mxu0 %v366
      %1191 = vmatpush1.msra.mxu0 %v365
      %1192 = vmatprep.subr.mxu0 %v362
      %1193 = vmatpush1.msra.mxu0 %v361
      %1194 = vmatprep.subr.mxu0 %v358
      %1195 = vmatpush1.msra.mxu0 %v357
      %1196 = vmatprep.subr.mxu0 %v354
      %1197 = vmatpush1.msra.mxu0 %v353
      %1198 = vmatprep.subr.mxu0 %v350
      %1199 = vmatpush1.msra.mxu0 %v349
      %1200 = vmatprep.subr.mxu0 %v346
      %1201 = vmatpush1.msra.mxu0 %v345
      %1202 = vmatprep.subr.mxu0 %v342
      %1203 = vmatpush1.msra.mxu0 %v341
      %1204 = vmatprep.subr.mxu0 %v338
      %1205 = vmatpush1.msra.mxu0 %v337
      %1206 = vmatprep.subr.mxu0 %v334
      %1207 = vmatpush1.msra.mxu0 %v333
      %1208 = vmatprep.subr.mxu0 %v330
      %1209 = vmatpush1.msra.mxu0 %v329
      %1210 = vmatprep.subr.mxu0 %v326
      %1211 = vmatpush1.msra.mxu0 %v325
      %1212 = vmatprep.subr.mxu0 %v322
      %1213 = vmatpush1.msra.mxu0 %v321
      %1214 = vmatprep.subr.mxu0 %v318
      %1215 = vmatpush1.msra.mxu0 %v317
      %1216 = vmatprep.subr.mxu0 %v314
      %1217 = vmatpush1.msra.mxu0 %v313
      %1218 = vmatprep.subr.mxu0 %v310
      %1219 = vmatpush1.msra.mxu0 %v309
      %1220 = vmatprep.subr.mxu0 %v306
      %1221 = vmatpush1.msra.mxu0 %v305
      %1222 = vmatprep.subr.mxu0 %v430
      %1223 = vmatpush2.msra.mxu0 %v429
      %1224 = vmatprep.subr.mxu0 %v426
      %1225 = vmatpush2.msra.mxu0 %v425
      %1226 = vmatprep.subr.mxu0 %v422
      %1227 = vmatpush2.msra.mxu0 %v421
      %1228 = vmatprep.subr.mxu0 %v418
      %1229 = vmatpush2.msra.mxu0 %v417
      %1230 = vmatprep.subr.mxu0 %v414
      %1231 = vmatpush2.msra.mxu0 %v413
      %1232 = vmatprep.subr.mxu0 %v410
      %1233 = vmatpush2.msra.mxu0 %v409
      %1234 = vmatprep.subr.mxu0 %v406
      %1235 = vmatpush2.msra.mxu0 %v405
      %1236 = vmatprep.subr.mxu0 %v402
      %1237 = vmatpush2.msra.mxu0 %v401
      %1238 = vmatprep.subr.mxu0 %v398
      %1239 = vmatpush2.msra.mxu0 %v397
      %1240 = vmatprep.subr.mxu0 %v394
      %1241 = vmatpush2.msra.mxu0 %v393
      %1242 = vmatprep.subr.mxu0 %v390
      %1243 = vmatpush2.msra.mxu0 %v389
      %1244 = vmatprep.subr.mxu0 %v386
      %1245 = vmatpush2.msra.mxu0 %v385
      %1246 = vmatprep.subr.mxu0 %v382
      %1247 = vmatpush2.msra.mxu0 %v381
      %1248 = vmatprep.subr.mxu0 %v378
      %1249 = vmatpush2.msra.mxu0 %v377
      %1250 = vmatprep.subr.mxu0 %v374
      %1251 = vmatpush2.msra.mxu0 %v373
      %1252 = vmatprep.subr.mxu0 %v370
      %1253 = vmatpush2.msra.mxu0 %v369
      %1254 = vmatprep.mubr.f32.mxu0 %v174
      %1255 = vmatmul.mubr.f32.gmra.mxu0 %v173
      %v1256 = vpop.f32.mrf.mxu0
      %v1257 = vadd.f32 %v1186, %v1256
      %v1258 = vpop.f32.mrf.mxu0
      %v1259 = vadd.f32 %v1188, %v1258
      %1260 = vdwg.mxu0
      %v1261 = vld [vmem:[%s165] sm:$0xfe]
      %v1262 = vld [vmem:[%s165 + $0x8] sm:$0xfe]
      %v1263 = vld [vmem:[%s165 + $0x10] sm:$0xfe]
      %v1264 = vld [vmem:[%s165 + $0x18] sm:$0xfe]
      %s1265 = scalar_lea.vmem %s1, 4096
      %v1266 = vld [vmem:[%s1265] sm:$0xff]
      %v1267 = vld [vmem:[%s1265 + $0x8] sm:$0xff]
      %v1268 = vld [vmem:[%s1265 + $0x10] sm:$0xff]
      %v1269 = vld [vmem:[%s1265 + $0x18] sm:$0xff]
      %v1270 = vld [vmem:[%s1265 + $0x20] sm:$0xff]
      %v1271 = vld [vmem:[%s1265 + $0x28] sm:$0xff]
      %v1272 = vld [vmem:[%s1265 + $0x30] sm:$0xff]
      %v1273 = vld [vmem:[%s1265 + $0x38] sm:$0xff]
      %v1274 = vld [vmem:[%s1265 + $0x40] sm:$0xff]
      %v1275 = vld [vmem:[%s1265 + $0x48] sm:$0xff]
      %v1276 = vld [vmem:[%s1265 + $0x50] sm:$0xff]
      %v1277 = vld [vmem:[%s1265 + $0x58] sm:$0xff]
      %v1278 = vld [vmem:[%s1265 + $0x60] sm:$0xff]
      %v1279 = vld [vmem:[%s1265 + $0x68] sm:$0xff]
      %v1280 = vld [vmem:[%s1265 + $0x70] sm:$0xff]
      %v1281 = vld [vmem:[%s1265 + $0x78] sm:$0xff]
      %v1282 = vld [vmem:[%s1265 + $0x80] sm:$0xff]
      %v1283 = vld [vmem:[%s1265 + $0x88] sm:$0xff]
      %v1284 = vld [vmem:[%s1265 + $0x90] sm:$0xff]
      %v1285 = vld [vmem:[%s1265 + $0x98] sm:$0xff]
      %v1286 = vld [vmem:[%s1265 + $0xa0] sm:$0xff]
      %v1287 = vld [vmem:[%s1265 + $0xa8] sm:$0xff]
      %v1288 = vld [vmem:[%s1265 + $0xb0] sm:$0xff]
      %v1289 = vld [vmem:[%s1265 + $0xb8] sm:$0xff]
      %v1290 = vld [vmem:[%s1265 + $0xc0] sm:$0xff]
      %v1291 = vld [vmem:[%s1265 + $0xc8] sm:$0xff]
      %v1292 = vld [vmem:[%s1265 + $0xd0] sm:$0xff]
      %v1293 = vld [vmem:[%s1265 + $0xd8] sm:$0xff]
      %v1294 = vld [vmem:[%s1265 + $0xe0] sm:$0xff]
      %v1295 = vld [vmem:[%s1265 + $0xe8] sm:$0xff]
      %v1296 = vld [vmem:[%s1265 + $0xf0] sm:$0xff]
      %v1297 = vld [vmem:[%s1265 + $0xf8] sm:$0xff]
      %v1298 = vld [vmem:[%s1265 + $0x100] sm:$0xff]
      %v1299 = vld [vmem:[%s1265 + $0x108] sm:$0xff]
      %v1300 = vld [vmem:[%s1265 + $0x110] sm:$0xff]
      %v1301 = vld [vmem:[%s1265 + $0x118] sm:$0xff]
      %v1302 = vld [vmem:[%s1265 + $0x120] sm:$0xff]
      %v1303 = vld [vmem:[%s1265 + $0x128] sm:$0xff]
      %v1304 = vld [vmem:[%s1265 + $0x130] sm:$0xff]
      %v1305 = vld [vmem:[%s1265 + $0x138] sm:$0xff]
      %v1306 = vld [vmem:[%s1265 + $0x140] sm:$0xff]
      %v1307 = vld [vmem:[%s1265 + $0x148] sm:$0xff]
      %v1308 = vld [vmem:[%s1265 + $0x150] sm:$0xff]
      %v1309 = vld [vmem:[%s1265 + $0x158] sm:$0xff]
      %v1310 = vld [vmem:[%s1265 + $0x160] sm:$0xff]
      %v1311 = vld [vmem:[%s1265 + $0x168] sm:$0xff]
      %v1312 = vld [vmem:[%s1265 + $0x170] sm:$0xff]
      %v1313 = vld [vmem:[%s1265 + $0x178] sm:$0xff]
      %v1314 = vld [vmem:[%s1265 + $0x180] sm:$0xff]
      %v1315 = vld [vmem:[%s1265 + $0x188] sm:$0xff]
      %v1316 = vld [vmem:[%s1265 + $0x190] sm:$0xff]
      %v1317 = vld [vmem:[%s1265 + $0x198] sm:$0xff]
      %v1318 = vld [vmem:[%s1265 + $0x1a0] sm:$0xff]
      %v1319 = vld [vmem:[%s1265 + $0x1a8] sm:$0xff]
      %v1320 = vld [vmem:[%s1265 + $0x1b0] sm:$0xff]
      %v1321 = vld [vmem:[%s1265 + $0x1b8] sm:$0xff]
      %v1322 = vld [vmem:[%s1265 + $0x1c0] sm:$0xff]
      %v1323 = vld [vmem:[%s1265 + $0x1c8] sm:$0xff]
      %v1324 = vld [vmem:[%s1265 + $0x1d0] sm:$0xff]
      %v1325 = vld [vmem:[%s1265 + $0x1d8] sm:$0xff]
      %v1326 = vld [vmem:[%s1265 + $0x1e0] sm:$0xff]
      %v1327 = vld [vmem:[%s1265 + $0x1e8] sm:$0xff]
      %v1328 = vld [vmem:[%s1265 + $0x1f0] sm:$0xff]
      %v1329 = vld [vmem:[%s1265 + $0x1f8] sm:$0xff]
      %v1330 = vld [vmem:[%s1265 + $0x200] sm:$0xff]
      %v1331 = vld [vmem:[%s1265 + $0x208] sm:$0xff]
      %v1332 = vld [vmem:[%s1265 + $0x210] sm:$0xff]
      %v1333 = vld [vmem:[%s1265 + $0x218] sm:$0xff]
      %v1334 = vld [vmem:[%s1265 + $0x220] sm:$0xff]
      %v1335 = vld [vmem:[%s1265 + $0x228] sm:$0xff]
      %v1336 = vld [vmem:[%s1265 + $0x230] sm:$0xff]
      %v1337 = vld [vmem:[%s1265 + $0x238] sm:$0xff]
      %v1338 = vld [vmem:[%s1265 + $0x240] sm:$0xff]
      %v1339 = vld [vmem:[%s1265 + $0x248] sm:$0xff]
      %v1340 = vld [vmem:[%s1265 + $0x250] sm:$0xff]
      %v1341 = vld [vmem:[%s1265 + $0x258] sm:$0xff]
      %v1342 = vld [vmem:[%s1265 + $0x260] sm:$0xff]
      %v1343 = vld [vmem:[%s1265 + $0x268] sm:$0xff]
      %v1344 = vld [vmem:[%s1265 + $0x270] sm:$0xff]
      %v1345 = vld [vmem:[%s1265 + $0x278] sm:$0xff]
      %v1346 = vld [vmem:[%s1265 + $0x280] sm:$0xff]
      %v1347 = vld [vmem:[%s1265 + $0x288] sm:$0xff]
      %v1348 = vld [vmem:[%s1265 + $0x290] sm:$0xff]
      %v1349 = vld [vmem:[%s1265 + $0x298] sm:$0xff]
      %v1350 = vld [vmem:[%s1265 + $0x2a0] sm:$0xff]
      %v1351 = vld [vmem:[%s1265 + $0x2a8] sm:$0xff]
      %v1352 = vld [vmem:[%s1265 + $0x2b0] sm:$0xff]
      %v1353 = vld [vmem:[%s1265 + $0x2b8] sm:$0xff]
      %v1354 = vld [vmem:[%s1265 + $0x2c0] sm:$0xff]
      %v1355 = vld [vmem:[%s1265 + $0x2c8] sm:$0xff]
      %v1356 = vld [vmem:[%s1265 + $0x2d0] sm:$0xff]
      %v1357 = vld [vmem:[%s1265 + $0x2d8] sm:$0xff]
      %v1358 = vld [vmem:[%s1265 + $0x2e0] sm:$0xff]
      %v1359 = vld [vmem:[%s1265 + $0x2e8] sm:$0xff]
      %v1360 = vld [vmem:[%s1265 + $0x2f0] sm:$0xff]
      %v1361 = vld [vmem:[%s1265 + $0x2f8] sm:$0xff]
      %v1362 = vld [vmem:[%s1265 + $0x300] sm:$0xff]
      %v1363 = vld [vmem:[%s1265 + $0x308] sm:$0xff]
      %v1364 = vld [vmem:[%s1265 + $0x310] sm:$0xff]
      %v1365 = vld [vmem:[%s1265 + $0x318] sm:$0xff]
      %v1366 = vld [vmem:[%s1265 + $0x320] sm:$0xff]
      %v1367 = vld [vmem:[%s1265 + $0x328] sm:$0xff]
      %v1368 = vld [vmem:[%s1265 + $0x330] sm:$0xff]
      %v1369 = vld [vmem:[%s1265 + $0x338] sm:$0xff]
      %v1370 = vld [vmem:[%s1265 + $0x340] sm:$0xff]
      %v1371 = vld [vmem:[%s1265 + $0x348] sm:$0xff]
      %v1372 = vld [vmem:[%s1265 + $0x350] sm:$0xff]
      %v1373 = vld [vmem:[%s1265 + $0x358] sm:$0xff]
      %v1374 = vld [vmem:[%s1265 + $0x360] sm:$0xff]
      %v1375 = vld [vmem:[%s1265 + $0x368] sm:$0xff]
      %v1376 = vld [vmem:[%s1265 + $0x370] sm:$0xff]
      %v1377 = vld [vmem:[%s1265 + $0x378] sm:$0xff]
      %v1378 = vld [vmem:[%s1265 + $0x380] sm:$0xff]
      %v1379 = vld [vmem:[%s1265 + $0x388] sm:$0xff]
      %v1380 = vld [vmem:[%s1265 + $0x390] sm:$0xff]
      %v1381 = vld [vmem:[%s1265 + $0x398] sm:$0xff]
      %v1382 = vld [vmem:[%s1265 + $0x3a0] sm:$0xff]
      %v1383 = vld [vmem:[%s1265 + $0x3a8] sm:$0xff]
      %v1384 = vld [vmem:[%s1265 + $0x3b0] sm:$0xff]
      %v1385 = vld [vmem:[%s1265 + $0x3b8] sm:$0xff]
      %v1386 = vld [vmem:[%s1265 + $0x3c0] sm:$0xff]
      %v1387 = vld [vmem:[%s1265 + $0x3c8] sm:$0xff]
      %v1388 = vld [vmem:[%s1265 + $0x3d0] sm:$0xff]
      %v1389 = vld [vmem:[%s1265 + $0x3d8] sm:$0xff]
      %v1390 = vld [vmem:[%s1265 + $0x3e0] sm:$0xff]
      %v1391 = vld [vmem:[%s1265 + $0x3e8] sm:$0xff]
      %v1392 = vld [vmem:[%s1265 + $0x3f0] sm:$0xff]
      %v1393 = vld [vmem:[%s1265 + $0x3f8] sm:$0xff]
      %v1394 = vld [vmem:[%s1265 + $0x400] sm:$0xff]
      %v1395 = vld [vmem:[%s1265 + $0x408] sm:$0xff]
      %v1396 = vld [vmem:[%s1265 + $0x410] sm:$0xff]
      %v1397 = vld [vmem:[%s1265 + $0x418] sm:$0xff]
      %v1398 = vld [vmem:[%s1265 + $0x420] sm:$0xff]
      %v1399 = vld [vmem:[%s1265 + $0x428] sm:$0xff]
      %v1400 = vld [vmem:[%s1265 + $0x430] sm:$0xff]
      %v1401 = vld [vmem:[%s1265 + $0x438] sm:$0xff]
      %v1402 = vld [vmem:[%s1265 + $0x440] sm:$0xff]
      %v1403 = vld [vmem:[%s1265 + $0x448] sm:$0xff]
      %v1404 = vld [vmem:[%s1265 + $0x450] sm:$0xff]
      %v1405 = vld [vmem:[%s1265 + $0x458] sm:$0xff]
      %v1406 = vld [vmem:[%s1265 + $0x460] sm:$0xff]
      %v1407 = vld [vmem:[%s1265 + $0x468] sm:$0xff]
      %v1408 = vld [vmem:[%s1265 + $0x470] sm:$0xff]
      %v1409 = vld [vmem:[%s1265 + $0x478] sm:$0xff]
      %v1410 = vld [vmem:[%s1265 + $0x480] sm:$0xff]
      %v1411 = vld [vmem:[%s1265 + $0x488] sm:$0xff]
      %v1412 = vld [vmem:[%s1265 + $0x490] sm:$0xff]
      %v1413 = vld [vmem:[%s1265 + $0x498] sm:$0xff]
      %v1414 = vld [vmem:[%s1265 + $0x4a0] sm:$0xff]
      %v1415 = vld [vmem:[%s1265 + $0x4a8] sm:$0xff]
      %v1416 = vld [vmem:[%s1265 + $0x4b0] sm:$0xff]
      %v1417 = vld [vmem:[%s1265 + $0x4b8] sm:$0xff]
      %v1418 = vld [vmem:[%s1265 + $0x4c0] sm:$0xff]
      %v1419 = vld [vmem:[%s1265 + $0x4c8] sm:$0xff]
      %v1420 = vld [vmem:[%s1265 + $0x4d0] sm:$0xff]
      %v1421 = vld [vmem:[%s1265 + $0x4d8] sm:$0xff]
      %v1422 = vld [vmem:[%s1265 + $0x4e0] sm:$0xff]
      %v1423 = vld [vmem:[%s1265 + $0x4e8] sm:$0xff]
      %v1424 = vld [vmem:[%s1265 + $0x4f0] sm:$0xff]
      %v1425 = vld [vmem:[%s1265 + $0x4f8] sm:$0xff]
      %v1426 = vld [vmem:[%s1265 + $0x500] sm:$0xff]
      %v1427 = vld [vmem:[%s1265 + $0x508] sm:$0xff]
      %v1428 = vld [vmem:[%s1265 + $0x510] sm:$0xff]
      %v1429 = vld [vmem:[%s1265 + $0x518] sm:$0xff]
      %v1430 = vld [vmem:[%s1265 + $0x520] sm:$0xff]
      %v1431 = vld [vmem:[%s1265 + $0x528] sm:$0xff]
      %v1432 = vld [vmem:[%s1265 + $0x530] sm:$0xff]
      %v1433 = vld [vmem:[%s1265 + $0x538] sm:$0xff]
      %v1434 = vld [vmem:[%s1265 + $0x540] sm:$0xff]
      %v1435 = vld [vmem:[%s1265 + $0x548] sm:$0xff]
      %v1436 = vld [vmem:[%s1265 + $0x550] sm:$0xff]
      %v1437 = vld [vmem:[%s1265 + $0x558] sm:$0xff]
      %v1438 = vld [vmem:[%s1265 + $0x560] sm:$0xff]
      %v1439 = vld [vmem:[%s1265 + $0x568] sm:$0xff]
      %v1440 = vld [vmem:[%s1265 + $0x570] sm:$0xff]
      %v1441 = vld [vmem:[%s1265 + $0x578] sm:$0xff]
      %v1442 = vld [vmem:[%s1265 + $0x580] sm:$0xff]
      %v1443 = vld [vmem:[%s1265 + $0x588] sm:$0xff]
      %v1444 = vld [vmem:[%s1265 + $0x590] sm:$0xff]
      %v1445 = vld [vmem:[%s1265 + $0x598] sm:$0xff]
      %v1446 = vld [vmem:[%s1265 + $0x5a0] sm:$0xff]
      %v1447 = vld [vmem:[%s1265 + $0x5a8] sm:$0xff]
      %v1448 = vld [vmem:[%s1265 + $0x5b0] sm:$0xff]
      %v1449 = vld [vmem:[%s1265 + $0x5b8] sm:$0xff]
      %v1450 = vld [vmem:[%s1265 + $0x5c0] sm:$0xff]
      %v1451 = vld [vmem:[%s1265 + $0x5c8] sm:$0xff]
      %v1452 = vld [vmem:[%s1265 + $0x5d0] sm:$0xff]
      %v1453 = vld [vmem:[%s1265 + $0x5d8] sm:$0xff]
      %v1454 = vld [vmem:[%s1265 + $0x5e0] sm:$0xff]
      %v1455 = vld [vmem:[%s1265 + $0x5e8] sm:$0xff]
      %v1456 = vld [vmem:[%s1265 + $0x5f0] sm:$0xff]
      %v1457 = vld [vmem:[%s1265 + $0x5f8] sm:$0xff]
      %v1458 = vld [vmem:[%s1265 + $0x600] sm:$0xff]
      %v1459 = vld [vmem:[%s1265 + $0x608] sm:$0xff]
      %v1460 = vld [vmem:[%s1265 + $0x610] sm:$0xff]
      %v1461 = vld [vmem:[%s1265 + $0x618] sm:$0xff]
      %v1462 = vld [vmem:[%s1265 + $0x620] sm:$0xff]
      %v1463 = vld [vmem:[%s1265 + $0x628] sm:$0xff]
      %v1464 = vld [vmem:[%s1265 + $0x630] sm:$0xff]
      %v1465 = vld [vmem:[%s1265 + $0x638] sm:$0xff]
      %v1466 = vld [vmem:[%s1265 + $0x640] sm:$0xff]
      %v1467 = vld [vmem:[%s1265 + $0x648] sm:$0xff]
      %v1468 = vld [vmem:[%s1265 + $0x650] sm:$0xff]
      %v1469 = vld [vmem:[%s1265 + $0x658] sm:$0xff]
      %v1470 = vld [vmem:[%s1265 + $0x660] sm:$0xff]
      %v1471 = vld [vmem:[%s1265 + $0x668] sm:$0xff]
      %v1472 = vld [vmem:[%s1265 + $0x670] sm:$0xff]
      %v1473 = vld [vmem:[%s1265 + $0x678] sm:$0xff]
      %v1474 = vld [vmem:[%s1265 + $0x680] sm:$0xff]
      %v1475 = vld [vmem:[%s1265 + $0x688] sm:$0xff]
      %v1476 = vld [vmem:[%s1265 + $0x690] sm:$0xff]
      %v1477 = vld [vmem:[%s1265 + $0x698] sm:$0xff]
      %v1478 = vld [vmem:[%s1265 + $0x6a0] sm:$0xff]
      %v1479 = vld [vmem:[%s1265 + $0x6a8] sm:$0xff]
      %v1480 = vld [vmem:[%s1265 + $0x6b0] sm:$0xff]
      %v1481 = vld [vmem:[%s1265 + $0x6b8] sm:$0xff]
      %v1482 = vld [vmem:[%s1265 + $0x6c0] sm:$0xff]
      %v1483 = vld [vmem:[%s1265 + $0x6c8] sm:$0xff]
      %v1484 = vld [vmem:[%s1265 + $0x6d0] sm:$0xff]
      %v1485 = vld [vmem:[%s1265 + $0x6d8] sm:$0xff]
      %v1486 = vld [vmem:[%s1265 + $0x6e0] sm:$0xff]
      %v1487 = vld [vmem:[%s1265 + $0x6e8] sm:$0xff]
      %v1488 = vld [vmem:[%s1265 + $0x6f0] sm:$0xff]
      %v1489 = vld [vmem:[%s1265 + $0x6f8] sm:$0xff]
      %v1490 = vld [vmem:[%s1265 + $0x700] sm:$0xff]
      %v1491 = vld [vmem:[%s1265 + $0x708] sm:$0xff]
      %v1492 = vld [vmem:[%s1265 + $0x710] sm:$0xff]
      %v1493 = vld [vmem:[%s1265 + $0x718] sm:$0xff]
      %v1494 = vld [vmem:[%s1265 + $0x720] sm:$0xff]
      %v1495 = vld [vmem:[%s1265 + $0x728] sm:$0xff]
      %v1496 = vld [vmem:[%s1265 + $0x730] sm:$0xff]
      %v1497 = vld [vmem:[%s1265 + $0x738] sm:$0xff]
      %v1498 = vld [vmem:[%s1265 + $0x740] sm:$0xff]
      %v1499 = vld [vmem:[%s1265 + $0x748] sm:$0xff]
      %v1500 = vld [vmem:[%s1265 + $0x750] sm:$0xff]
      %v1501 = vld [vmem:[%s1265 + $0x758] sm:$0xff]
      %v1502 = vld [vmem:[%s1265 + $0x760] sm:$0xff]
      %v1503 = vld [vmem:[%s1265 + $0x768] sm:$0xff]
      %v1504 = vld [vmem:[%s1265 + $0x770] sm:$0xff]
      %v1505 = vld [vmem:[%s1265 + $0x778] sm:$0xff]
      %v1506 = vld [vmem:[%s1265 + $0x780] sm:$0xff]
      %v1507 = vld [vmem:[%s1265 + $0x788] sm:$0xff]
      %v1508 = vld [vmem:[%s1265 + $0x790] sm:$0xff]
      %v1509 = vld [vmem:[%s1265 + $0x798] sm:$0xff]
      %v1510 = vld [vmem:[%s1265 + $0x7a0] sm:$0xff]
      %v1511 = vld [vmem:[%s1265 + $0x7a8] sm:$0xff]
      %v1512 = vld [vmem:[%s1265 + $0x7b0] sm:$0xff]
      %v1513 = vld [vmem:[%s1265 + $0x7b8] sm:$0xff]
      %v1514 = vld [vmem:[%s1265 + $0x7c0] sm:$0xff]
      %v1515 = vld [vmem:[%s1265 + $0x7c8] sm:$0xff]
      %v1516 = vld [vmem:[%s1265 + $0x7d0] sm:$0xff]
      %v1517 = vld [vmem:[%s1265 + $0x7d8] sm:$0xff]
      %v1518 = vld [vmem:[%s1265 + $0x7e0] sm:$0xff]
      %v1519 = vld [vmem:[%s1265 + $0x7e8] sm:$0xff]
      %v1520 = vld [vmem:[%s1265 + $0x7f0] sm:$0xff]
      %v1521 = vld [vmem:[%s1265 + $0x7f8] sm:$0xff]
      %v1526 = vrot.slane %v1261, 1
      %v1527 = vrot.slane %v1262, 1
      %v1528 = vrot.slane %v1263, 1
      %v1529 = vrot.slane %v1264, 1
      %1534 = vmatprep.subr.mxu0 %v1327
      %1535 = vmatpush1.msra.mxu0 %v1326
      %1536 = vmatprep.subr.mxu0 %v1323
      %1537 = vmatpush1.msra.mxu0 %v1322
      %1538 = vmatprep.subr.mxu0 %v1319
      %1539 = vmatpush1.msra.mxu0 %v1318
      %1540 = vmatprep.subr.mxu0 %v1315
      %1541 = vmatpush1.msra.mxu0 %v1314
      %1542 = vmatprep.subr.mxu0 %v1311
      %1543 = vmatpush1.msra.mxu0 %v1310
      %1544 = vmatprep.subr.mxu0 %v1307
      %1545 = vmatpush1.msra.mxu0 %v1306
      %1546 = vmatprep.subr.mxu0 %v1303
      %1547 = vmatpush1.msra.mxu0 %v1302
      %1548 = vmatprep.subr.mxu0 %v1299
      %1549 = vmatpush1.msra.mxu0 %v1298
      %1550 = vmatprep.subr.mxu0 %v1295
      %1551 = vmatpush1.msra.mxu0 %v1294
      %1552 = vmatprep.subr.mxu0 %v1291
      %1553 = vmatpush1.msra.mxu0 %v1290
      %1554 = vmatprep.subr.mxu0 %v1287
      %1555 = vmatpush1.msra.mxu0 %v1286
      %1556 = vmatprep.subr.mxu0 %v1283
      %1557 = vmatpush1.msra.mxu0 %v1282
      %1558 = vmatprep.subr.mxu0 %v1279
      %1559 = vmatpush1.msra.mxu0 %v1278
      %1560 = vmatprep.subr.mxu0 %v1275
      %1561 = vmatpush1.msra.mxu0 %v1274
      %1562 = vmatprep.subr.mxu0 %v1271
      %1563 = vmatpush1.msra.mxu0 %v1270
      %1564 = vmatprep.subr.mxu0 %v1267
      %1565 = vmatpush1.msra.mxu0 %v1266
      %1566 = vmatprep.subr.mxu0 %v1391
      %1567 = vmatpush2.msra.mxu0 %v1390
      %1568 = vmatprep.subr.mxu0 %v1387
      %1569 = vmatpush2.msra.mxu0 %v1386
      %1570 = vmatprep.subr.mxu0 %v1383
      %1571 = vmatpush2.msra.mxu0 %v1382
      %1572 = vmatprep.subr.mxu0 %v1379
      %1573 = vmatpush2.msra.mxu0 %v1378
      %1574 = vmatprep.subr.mxu0 %v1375
      %1575 = vmatpush2.msra.mxu0 %v1374
      %1576 = vmatprep.subr.mxu0 %v1371
      %1577 = vmatpush2.msra.mxu0 %v1370
      %1578 = vmatprep.subr.mxu0 %v1367
      %1579 = vmatpush2.msra.mxu0 %v1366
      %1580 = vmatprep.subr.mxu0 %v1363
      %1581 = vmatpush2.msra.mxu0 %v1362
      %1582 = vmatprep.subr.mxu0 %v1359
      %1583 = vmatpush2.msra.mxu0 %v1358
      %1584 = vmatprep.subr.mxu0 %v1355
      %1585 = vmatpush2.msra.mxu0 %v1354
      %1586 = vmatprep.subr.mxu0 %v1351
      %1587 = vmatpush2.msra.mxu0 %v1350
      %1588 = vmatprep.subr.mxu0 %v1347
      %1589 = vmatpush2.msra.mxu0 %v1346
      %1590 = vmatprep.subr.mxu0 %v1343
      %1591 = vmatpush2.msra.mxu0 %v1342
      %1592 = vmatprep.subr.mxu0 %v1339
      %1593 = vmatpush2.msra.mxu0 %v1338
      %1594 = vmatprep.subr.mxu0 %v1335
      %1595 = vmatpush2.msra.mxu0 %v1334
      %1596 = vmatprep.subr.mxu0 %v1331
      %1597 = vmatpush2.msra.mxu0 %v1330
      %1598 = vmatprep.mubr.f32.mxu0 %v1527
      %1599 = vmatmul.mubr.f32.gmra.mxu0 %v1526
      %v1600 = vpop.f32.mrf.mxu0
      %v1601 = vadd.f32 0.0, %v1600
      %v1602 = vpop.f32.mrf.mxu0
      %v1603 = vadd.f32 0.0, %v1602
      %1604 = vdwg.mxu0
      %1605 = vmatprep.subr.mxu0 %v1455
      %1606 = vmatpush1.msra.mxu0 %v1454
      %1607 = vmatprep.subr.mxu0 %v1451
      %1608 = vmatpush1.msra.mxu0 %v1450
      %1609 = vmatprep.subr.mxu0 %v1447
      %1610 = vmatpush1.msra.mxu0 %v1446
      %1611 = vmatprep.subr.mxu0 %v1443
      %1612 = vmatpush1.msra.mxu0 %v1442
      %1613 = vmatprep.subr.mxu0 %v1439
      %1614 = vmatpush1.msra.mxu0 %v1438
      %1615 = vmatprep.subr.mxu0 %v1435
      %1616 = vmatpush1.msra.mxu0 %v1434
      %1617 = vmatprep.subr.mxu0 %v1431
      %1618 = vmatpush1.msra.mxu0 %v1430
      %1619 = vmatprep.subr.mxu0 %v1427
      %1620 = vmatpush1.msra.mxu0 %v1426
      %1621 = vmatprep.subr.mxu0 %v1423
      %1622 = vmatpush1.msra.mxu0 %v1422
      %1623 = vmatprep.subr.mxu0 %v1419
      %1624 = vmatpush1.msra.mxu0 %v1418
      %1625 = vmatprep.subr.mxu0 %v1415
      %1626 = vmatpush1.msra.mxu0 %v1414
      %1627 = vmatprep.subr.mxu0 %v1411
      %1628 = vmatpush1.msra.mxu0 %v1410
      %1629 = vmatprep.subr.mxu0 %v1407
      %1630 = vmatpush1.msra.mxu0 %v1406
      %1631 = vmatprep.subr.mxu0 %v1403
      %1632 = vmatpush1.msra.mxu0 %v1402
      %1633 = vmatprep.subr.mxu0 %v1399
      %1634 = vmatpush1.msra.mxu0 %v1398
      %1635 = vmatprep.subr.mxu0 %v1395
      %1636 = vmatpush1.msra.mxu0 %v1394
      %1637 = vmatprep.subr.mxu0 %v1519
      %1638 = vmatpush2.msra.mxu0 %v1518
      %1639 = vmatprep.subr.mxu0 %v1515
      %1640 = vmatpush2.msra.mxu0 %v1514
      %1641 = vmatprep.subr.mxu0 %v1511
      %1642 = vmatpush2.msra.mxu0 %v1510
      %1643 = vmatprep.subr.mxu0 %v1507
      %1644 = vmatpush2.msra.mxu0 %v1506
      %1645 = vmatprep.subr.mxu0 %v1503
      %1646 = vmatpush2.msra.mxu0 %v1502
      %1647 = vmatprep.subr.mxu0 %v1499
      %1648 = vmatpush2.msra.mxu0 %v1498
      %1649 = vmatprep.subr.mxu0 %v1495
      %1650 = vmatpush2.msra.mxu0 %v1494
      %1651 = vmatprep.subr.mxu0 %v1491
      %1652 = vmatpush2.msra.mxu0 %v1490
      %1653 = vmatprep.subr.mxu0 %v1487
      %1654 = vmatpush2.msra.mxu0 %v1486
      %1655 = vmatprep.subr.mxu0 %v1483
      %1656 = vmatpush2.msra.mxu0 %v1482
      %1657 = vmatprep.subr.mxu0 %v1479
      %1658 = vmatpush2.msra.mxu0 %v1478
      %1659 = vmatprep.subr.mxu0 %v1475
      %1660 = vmatpush2.msra.mxu0 %v1474
      %1661 = vmatprep.subr.mxu0 %v1471
      %1662 = vmatpush2.msra.mxu0 %v1470
      %1663 = vmatprep.subr.mxu0 %v1467
      %1664 = vmatpush2.msra.mxu0 %v1466
      %1665 = vmatprep.subr.mxu0 %v1463
      %1666 = vmatpush2.msra.mxu0 %v1462
      %1667 = vmatprep.subr.mxu0 %v1459
      %1668 = vmatpush2.msra.mxu0 %v1458
      %1669 = vmatprep.mubr.f32.mxu0 %v1529
      %1670 = vmatmul.mubr.f32.gmra.mxu0 %v1528
      %v1671 = vpop.f32.mrf.mxu0
      %v1672 = vadd.f32 %v1601, %v1671
      %v1673 = vpop.f32.mrf.mxu0
      %v1674 = vadd.f32 %v1603, %v1673
      %1675 = vdwg.mxu0
      %1676 = vmatprep.subr.mxu0 %v1329
      %1677 = vmatpush1.msra.mxu0 %v1328
      %1678 = vmatprep.subr.mxu0 %v1325
      %1679 = vmatpush1.msra.mxu0 %v1324
      %1680 = vmatprep.subr.mxu0 %v1321
      %1681 = vmatpush1.msra.mxu0 %v1320
      %1682 = vmatprep.subr.mxu0 %v1317
      %1683 = vmatpush1.msra.mxu0 %v1316
      %1684 = vmatprep.subr.mxu0 %v1313
      %1685 = vmatpush1.msra.mxu0 %v1312
      %1686 = vmatprep.subr.mxu0 %v1309
      %1687 = vmatpush1.msra.mxu0 %v1308
      %1688 = vmatprep.subr.mxu0 %v1305
      %1689 = vmatpush1.msra.mxu0 %v1304
      %1690 = vmatprep.subr.mxu0 %v1301
      %1691 = vmatpush1.msra.mxu0 %v1300
      %1692 = vmatprep.subr.mxu0 %v1297
      %1693 = vmatpush1.msra.mxu0 %v1296
      %1694 = vmatprep.subr.mxu0 %v1293
      %1695 = vmatpush1.msra.mxu0 %v1292
      %1696 = vmatprep.subr.mxu0 %v1289
      %1697 = vmatpush1.msra.mxu0 %v1288
      %1698 = vmatprep.subr.mxu0 %v1285
      %1699 = vmatpush1.msra.mxu0 %v1284
      %1700 = vmatprep.subr.mxu0 %v1281
      %1701 = vmatpush1.msra.mxu0 %v1280
      %1702 = vmatprep.subr.mxu0 %v1277
      %1703 = vmatpush1.msra.mxu0 %v1276
      %1704 = vmatprep.subr.mxu0 %v1273
      %1705 = vmatpush1.msra.mxu0 %v1272
      %1706 = vmatprep.subr.mxu0 %v1269
      %1707 = vmatpush1.msra.mxu0 %v1268
      %1708 = vmatprep.subr.mxu0 %v1393
      %1709 = vmatpush2.msra.mxu0 %v1392
      %1710 = vmatprep.subr.mxu0 %v1389
      %1711 = vmatpush2.msra.mxu0 %v1388
      %1712 = vmatprep.subr.mxu0 %v1385
      %1713 = vmatpush2.msra.mxu0 %v1384
      %1714 = vmatprep.subr.mxu0 %v1381
      %1715 = vmatpush2.msra.mxu0 %v1380
      %1716 = vmatprep.subr.mxu0 %v1377
      %1717 = vmatpush2.msra.mxu0 %v1376
      %1718 = vmatprep.subr.mxu0 %v1373
      %1719 = vmatpush2.msra.mxu0 %v1372
      %1720 = vmatprep.subr.mxu0 %v1369
      %1721 = vmatpush2.msra.mxu0 %v1368
      %1722 = vmatprep.subr.mxu0 %v1365
      %1723 = vmatpush2.msra.mxu0 %v1364
      %1724 = vmatprep.subr.mxu0 %v1361
      %1725 = vmatpush2.msra.mxu0 %v1360
      %1726 = vmatprep.subr.mxu0 %v1357
      %1727 = vmatpush2.msra.mxu0 %v1356
      %1728 = vmatprep.subr.mxu0 %v1353
      %1729 = vmatpush2.msra.mxu0 %v1352
      %1730 = vmatprep.subr.mxu0 %v1349
      %1731 = vmatpush2.msra.mxu0 %v1348
      %1732 = vmatprep.subr.mxu0 %v1345
      %1733 = vmatpush2.msra.mxu0 %v1344
      %1734 = vmatprep.subr.mxu0 %v1341
      %1735 = vmatpush2.msra.mxu0 %v1340
      %1736 = vmatprep.subr.mxu0 %v1337
      %1737 = vmatpush2.msra.mxu0 %v1336
      %1738 = vmatprep.subr.mxu0 %v1333
      %1739 = vmatpush2.msra.mxu0 %v1332
      %1740 = vmatprep.mubr.f32.mxu0 %v1527
      %1741 = vmatmul.mubr.f32.gmra.mxu0 %v1526
      %v1742 = vpop.f32.mrf.mxu0
      %v1743 = vadd.f32 0.0, %v1742
      %v1744 = vpop.f32.mrf.mxu0
      %v1745 = vadd.f32 0.0, %v1744
      %1746 = vdwg.mxu0
      %1747 = vmatprep.subr.mxu0 %v1457
      %1748 = vmatpush1.msra.mxu0 %v1456
      %1749 = vmatprep.subr.mxu0 %v1453
      %1750 = vmatpush1.msra.mxu0 %v1452
      %1751 = vmatprep.subr.mxu0 %v1449
      %1752 = vmatpush1.msra.mxu0 %v1448
      %1753 = vmatprep.subr.mxu0 %v1445
      %1754 = vmatpush1.msra.mxu0 %v1444
      %1755 = vmatprep.subr.mxu0 %v1441
      %1756 = vmatpush1.msra.mxu0 %v1440
      %1757 = vmatprep.subr.mxu0 %v1437
      %1758 = vmatpush1.msra.mxu0 %v1436
      %1759 = vmatprep.subr.mxu0 %v1433
      %1760 = vmatpush1.msra.mxu0 %v1432
      %1761 = vmatprep.subr.mxu0 %v1429
      %1762 = vmatpush1.msra.mxu0 %v1428
      %1763 = vmatprep.subr.mxu0 %v1425
      %1764 = vmatpush1.msra.mxu0 %v1424
      %1765 = vmatprep.subr.mxu0 %v1421
      %1766 = vmatpush1.msra.mxu0 %v1420
      %1767 = vmatprep.subr.mxu0 %v1417
      %1768 = vmatpush1.msra.mxu0 %v1416
      %1769 = vmatprep.subr.mxu0 %v1413
      %1770 = vmatpush1.msra.mxu0 %v1412
      %1771 = vmatprep.subr.mxu0 %v1409
      %1772 = vmatpush1.msra.mxu0 %v1408
      %1773 = vmatprep.subr.mxu0 %v1405
      %1774 = vmatpush1.msra.mxu0 %v1404
      %1775 = vmatprep.subr.mxu0 %v1401
      %1776 = vmatpush1.msra.mxu0 %v1400
      %1777 = vmatprep.subr.mxu0 %v1397
      %1778 = vmatpush1.msra.mxu0 %v1396
      %1779 = vmatprep.subr.mxu0 %v1521
      %1780 = vmatpush2.msra.mxu0 %v1520
      %1781 = vmatprep.subr.mxu0 %v1517
      %1782 = vmatpush2.msra.mxu0 %v1516
      %1783 = vmatprep.subr.mxu0 %v1513
      %1784 = vmatpush2.msra.mxu0 %v1512
      %1785 = vmatprep.subr.mxu0 %v1509
      %1786 = vmatpush2.msra.mxu0 %v1508
      %1787 = vmatprep.subr.mxu0 %v1505
      %1788 = vmatpush2.msra.mxu0 %v1504
      %1789 = vmatprep.subr.mxu0 %v1501
      %1790 = vmatpush2.msra.mxu0 %v1500
      %1791 = vmatprep.subr.mxu0 %v1497
      %1792 = vmatpush2.msra.mxu0 %v1496
      %1793 = vmatprep.subr.mxu0 %v1493
      %1794 = vmatpush2.msra.mxu0 %v1492
      %1795 = vmatprep.subr.mxu0 %v1489
      %1796 = vmatpush2.msra.mxu0 %v1488
      %1797 = vmatprep.subr.mxu0 %v1485
      %1798 = vmatpush2.msra.mxu0 %v1484
      %1799 = vmatprep.subr.mxu0 %v1481
      %1800 = vmatpush2.msra.mxu0 %v1480
      %1801 = vmatprep.subr.mxu0 %v1477
      %1802 = vmatpush2.msra.mxu0 %v1476
      %1803 = vmatprep.subr.mxu0 %v1473
      %1804 = vmatpush2.msra.mxu0 %v1472
      %1805 = vmatprep.subr.mxu0 %v1469
      %1806 = vmatpush2.msra.mxu0 %v1468
      %1807 = vmatprep.subr.mxu0 %v1465
      %1808 = vmatpush2.msra.mxu0 %v1464
      %1809 = vmatprep.subr.mxu0 %v1461
      %1810 = vmatpush2.msra.mxu0 %v1460
      %1811 = vmatprep.mubr.f32.mxu0 %v1529
      %1812 = vmatmul.mubr.f32.gmra.mxu0 %v1528
      %v1813 = vpop.f32.mrf.mxu0
      %v1814 = vadd.f32 %v1743, %v1813
      %v1815 = vpop.f32.mrf.mxu0
      %v1816 = vadd.f32 %v1745, %v1815
      %1817 = vdwg.mxu0
      %v1818 = vadd.f32 %v1115, %v1672
      %v1819 = vadd.f32 %v1117, %v1674
      %v1820 = vadd.f32 %v1257, %v1814
      %v1821 = vadd.f32 %v1259, %v1816
      %s1822 = scalar_lea.vmem %s1, 6144
      %v1823 = vld [vmem:[%s1822] sm:$0xff]
      %v1824 = vld [vmem:[%s1822 + $0x8] sm:$0xff]
      %v1825 = vld [vmem:[%s1822 + $0x10] sm:$0xff]
      %v1826 = vld [vmem:[%s1822 + $0x18] sm:$0xff]
      %v1827 = vld [vmem:[%s1822 + $0x20] sm:$0xff]
      %v1828 = vld [vmem:[%s1822 + $0x28] sm:$0xff]
      %v1829 = vld [vmem:[%s1822 + $0x30] sm:$0xff]
      %v1830 = vld [vmem:[%s1822 + $0x38] sm:$0xff]
      %v1831 = vld [vmem:[%s1822 + $0x40] sm:$0xff]
      %v1832 = vld [vmem:[%s1822 + $0x48] sm:$0xff]
      %v1833 = vld [vmem:[%s1822 + $0x50] sm:$0xff]
      %v1834 = vld [vmem:[%s1822 + $0x58] sm:$0xff]
      %v1835 = vld [vmem:[%s1822 + $0x60] sm:$0xff]
      %v1836 = vld [vmem:[%s1822 + $0x68] sm:$0xff]
      %v1837 = vld [vmem:[%s1822 + $0x70] sm:$0xff]
      %v1838 = vld [vmem:[%s1822 + $0x78] sm:$0xff]
      %v1839 = vld [vmem:[%s1822 + $0x80] sm:$0xff]
      %v1840 = vld [vmem:[%s1822 + $0x88] sm:$0xff]
      %v1841 = vld [vmem:[%s1822 + $0x90] sm:$0xff]
      %v1842 = vld [vmem:[%s1822 + $0x98] sm:$0xff]
      %v1843 = vld [vmem:[%s1822 + $0xa0] sm:$0xff]
      %v1844 = vld [vmem:[%s1822 + $0xa8] sm:$0xff]
      %v1845 = vld [vmem:[%s1822 + $0xb0] sm:$0xff]
      %v1846 = vld [vmem:[%s1822 + $0xb8] sm:$0xff]
      %v1847 = vld [vmem:[%s1822 + $0xc0] sm:$0xff]
      %v1848 = vld [vmem:[%s1822 + $0xc8] sm:$0xff]
      %v1849 = vld [vmem:[%s1822 + $0xd0] sm:$0xff]
      %v1850 = vld [vmem:[%s1822 + $0xd8] sm:$0xff]
      %v1851 = vld [vmem:[%s1822 + $0xe0] sm:$0xff]
      %v1852 = vld [vmem:[%s1822 + $0xe8] sm:$0xff]
      %v1853 = vld [vmem:[%s1822 + $0xf0] sm:$0xff]
      %v1854 = vld [vmem:[%s1822 + $0xf8] sm:$0xff]
      %v1855 = vld [vmem:[%s1822 + $0x100] sm:$0xff]
      %v1856 = vld [vmem:[%s1822 + $0x108] sm:$0xff]
      %v1857 = vld [vmem:[%s1822 + $0x110] sm:$0xff]
      %v1858 = vld [vmem:[%s1822 + $0x118] sm:$0xff]
      %v1859 = vld [vmem:[%s1822 + $0x120] sm:$0xff]
      %v1860 = vld [vmem:[%s1822 + $0x128] sm:$0xff]
      %v1861 = vld [vmem:[%s1822 + $0x130] sm:$0xff]
      %v1862 = vld [vmem:[%s1822 + $0x138] sm:$0xff]
      %v1863 = vld [vmem:[%s1822 + $0x140] sm:$0xff]
      %v1864 = vld [vmem:[%s1822 + $0x148] sm:$0xff]
      %v1865 = vld [vmem:[%s1822 + $0x150] sm:$0xff]
      %v1866 = vld [vmem:[%s1822 + $0x158] sm:$0xff]
      %v1867 = vld [vmem:[%s1822 + $0x160] sm:$0xff]
      %v1868 = vld [vmem:[%s1822 + $0x168] sm:$0xff]
      %v1869 = vld [vmem:[%s1822 + $0x170] sm:$0xff]
      %v1870 = vld [vmem:[%s1822 + $0x178] sm:$0xff]
      %v1871 = vld [vmem:[%s1822 + $0x180] sm:$0xff]
      %v1872 = vld [vmem:[%s1822 + $0x188] sm:$0xff]
      %v1873 = vld [vmem:[%s1822 + $0x190] sm:$0xff]
      %v1874 = vld [vmem:[%s1822 + $0x198] sm:$0xff]
      %v1875 = vld [vmem:[%s1822 + $0x1a0] sm:$0xff]
      %v1876 = vld [vmem:[%s1822 + $0x1a8] sm:$0xff]
      %v1877 = vld [vmem:[%s1822 + $0x1b0] sm:$0xff]
      %v1878 = vld [vmem:[%s1822 + $0x1b8] sm:$0xff]
      %v1879 = vld [vmem:[%s1822 + $0x1c0] sm:$0xff]
      %v1880 = vld [vmem:[%s1822 + $0x1c8] sm:$0xff]
      %v1881 = vld [vmem:[%s1822 + $0x1d0] sm:$0xff]
      %v1882 = vld [vmem:[%s1822 + $0x1d8] sm:$0xff]
      %v1883 = vld [vmem:[%s1822 + $0x1e0] sm:$0xff]
      %v1884 = vld [vmem:[%s1822 + $0x1e8] sm:$0xff]
      %v1885 = vld [vmem:[%s1822 + $0x1f0] sm:$0xff]
      %v1886 = vld [vmem:[%s1822 + $0x1f8] sm:$0xff]
      %v1887 = vld [vmem:[%s1822 + $0x200] sm:$0xff]
      %v1888 = vld [vmem:[%s1822 + $0x208] sm:$0xff]
      %v1889 = vld [vmem:[%s1822 + $0x210] sm:$0xff]
      %v1890 = vld [vmem:[%s1822 + $0x218] sm:$0xff]
      %v1891 = vld [vmem:[%s1822 + $0x220] sm:$0xff]
      %v1892 = vld [vmem:[%s1822 + $0x228] sm:$0xff]
      %v1893 = vld [vmem:[%s1822 + $0x230] sm:$0xff]
      %v1894 = vld [vmem:[%s1822 + $0x238] sm:$0xff]
      %v1895 = vld [vmem:[%s1822 + $0x240] sm:$0xff]
      %v1896 = vld [vmem:[%s1822 + $0x248] sm:$0xff]
      %v1897 = vld [vmem:[%s1822 + $0x250] sm:$0xff]
      %v1898 = vld [vmem:[%s1822 + $0x258] sm:$0xff]
      %v1899 = vld [vmem:[%s1822 + $0x260] sm:$0xff]
      %v1900 = vld [vmem:[%s1822 + $0x268] sm:$0xff]
      %v1901 = vld [vmem:[%s1822 + $0x270] sm:$0xff]
      %v1902 = vld [vmem:[%s1822 + $0x278] sm:$0xff]
      %v1903 = vld [vmem:[%s1822 + $0x280] sm:$0xff]
      %v1904 = vld [vmem:[%s1822 + $0x288] sm:$0xff]
      %v1905 = vld [vmem:[%s1822 + $0x290] sm:$0xff]
      %v1906 = vld [vmem:[%s1822 + $0x298] sm:$0xff]
      %v1907 = vld [vmem:[%s1822 + $0x2a0] sm:$0xff]
      %v1908 = vld [vmem:[%s1822 + $0x2a8] sm:$0xff]
      %v1909 = vld [vmem:[%s1822 + $0x2b0] sm:$0xff]
      %v1910 = vld [vmem:[%s1822 + $0x2b8] sm:$0xff]
      %v1911 = vld [vmem:[%s1822 + $0x2c0] sm:$0xff]
      %v1912 = vld [vmem:[%s1822 + $0x2c8] sm:$0xff]
      %v1913 = vld [vmem:[%s1822 + $0x2d0] sm:$0xff]
      %v1914 = vld [vmem:[%s1822 + $0x2d8] sm:$0xff]
      %v1915 = vld [vmem:[%s1822 + $0x2e0] sm:$0xff]
      %v1916 = vld [vmem:[%s1822 + $0x2e8] sm:$0xff]
      %v1917 = vld [vmem:[%s1822 + $0x2f0] sm:$0xff]
      %v1918 = vld [vmem:[%s1822 + $0x2f8] sm:$0xff]
      %v1919 = vld [vmem:[%s1822 + $0x300] sm:$0xff]
      %v1920 = vld [vmem:[%s1822 + $0x308] sm:$0xff]
      %v1921 = vld [vmem:[%s1822 + $0x310] sm:$0xff]
      %v1922 = vld [vmem:[%s1822 + $0x318] sm:$0xff]
      %v1923 = vld [vmem:[%s1822 + $0x320] sm:$0xff]
      %v1924 = vld [vmem:[%s1822 + $0x328] sm:$0xff]
      %v1925 = vld [vmem:[%s1822 + $0x330] sm:$0xff]
      %v1926 = vld [vmem:[%s1822 + $0x338] sm:$0xff]
      %v1927 = vld [vmem:[%s1822 + $0x340] sm:$0xff]
      %v1928 = vld [vmem:[%s1822 + $0x348] sm:$0xff]
      %v1929 = vld [vmem:[%s1822 + $0x350] sm:$0xff]
      %v1930 = vld [vmem:[%s1822 + $0x358] sm:$0xff]
      %v1931 = vld [vmem:[%s1822 + $0x360] sm:$0xff]
      %v1932 = vld [vmem:[%s1822 + $0x368] sm:$0xff]
      %v1933 = vld [vmem:[%s1822 + $0x370] sm:$0xff]
      %v1934 = vld [vmem:[%s1822 + $0x378] sm:$0xff]
      %v1935 = vld [vmem:[%s1822 + $0x380] sm:$0xff]
      %v1936 = vld [vmem:[%s1822 + $0x388] sm:$0xff]
      %v1937 = vld [vmem:[%s1822 + $0x390] sm:$0xff]
      %v1938 = vld [vmem:[%s1822 + $0x398] sm:$0xff]
      %v1939 = vld [vmem:[%s1822 + $0x3a0] sm:$0xff]
      %v1940 = vld [vmem:[%s1822 + $0x3a8] sm:$0xff]
      %v1941 = vld [vmem:[%s1822 + $0x3b0] sm:$0xff]
      %v1942 = vld [vmem:[%s1822 + $0x3b8] sm:$0xff]
      %v1943 = vld [vmem:[%s1822 + $0x3c0] sm:$0xff]
      %v1944 = vld [vmem:[%s1822 + $0x3c8] sm:$0xff]
      %v1945 = vld [vmem:[%s1822 + $0x3d0] sm:$0xff]
      %v1946 = vld [vmem:[%s1822 + $0x3d8] sm:$0xff]
      %v1947 = vld [vmem:[%s1822 + $0x3e0] sm:$0xff]
      %v1948 = vld [vmem:[%s1822 + $0x3e8] sm:$0xff]
      %v1949 = vld [vmem:[%s1822 + $0x3f0] sm:$0xff]
      %v1950 = vld [vmem:[%s1822 + $0x3f8] sm:$0xff]
      %v1951 = vld [vmem:[%s1822 + $0x400] sm:$0xff]
      %v1952 = vld [vmem:[%s1822 + $0x408] sm:$0xff]
      %v1953 = vld [vmem:[%s1822 + $0x410] sm:$0xff]
      %v1954 = vld [vmem:[%s1822 + $0x418] sm:$0xff]
      %v1955 = vld [vmem:[%s1822 + $0x420] sm:$0xff]
      %v1956 = vld [vmem:[%s1822 + $0x428] sm:$0xff]
      %v1957 = vld [vmem:[%s1822 + $0x430] sm:$0xff]
      %v1958 = vld [vmem:[%s1822 + $0x438] sm:$0xff]
      %v1959 = vld [vmem:[%s1822 + $0x440] sm:$0xff]
      %v1960 = vld [vmem:[%s1822 + $0x448] sm:$0xff]
      %v1961 = vld [vmem:[%s1822 + $0x450] sm:$0xff]
      %v1962 = vld [vmem:[%s1822 + $0x458] sm:$0xff]
      %v1963 = vld [vmem:[%s1822 + $0x460] sm:$0xff]
      %v1964 = vld [vmem:[%s1822 + $0x468] sm:$0xff]
      %v1965 = vld [vmem:[%s1822 + $0x470] sm:$0xff]
      %v1966 = vld [vmem:[%s1822 + $0x478] sm:$0xff]
      %v1967 = vld [vmem:[%s1822 + $0x480] sm:$0xff]
      %v1968 = vld [vmem:[%s1822 + $0x488] sm:$0xff]
      %v1969 = vld [vmem:[%s1822 + $0x490] sm:$0xff]
      %v1970 = vld [vmem:[%s1822 + $0x498] sm:$0xff]
      %v1971 = vld [vmem:[%s1822 + $0x4a0] sm:$0xff]
      %v1972 = vld [vmem:[%s1822 + $0x4a8] sm:$0xff]
      %v1973 = vld [vmem:[%s1822 + $0x4b0] sm:$0xff]
      %v1974 = vld [vmem:[%s1822 + $0x4b8] sm:$0xff]
      %v1975 = vld [vmem:[%s1822 + $0x4c0] sm:$0xff]
      %v1976 = vld [vmem:[%s1822 + $0x4c8] sm:$0xff]
      %v1977 = vld [vmem:[%s1822 + $0x4d0] sm:$0xff]
      %v1978 = vld [vmem:[%s1822 + $0x4d8] sm:$0xff]
      %v1979 = vld [vmem:[%s1822 + $0x4e0] sm:$0xff]
      %v1980 = vld [vmem:[%s1822 + $0x4e8] sm:$0xff]
      %v1981 = vld [vmem:[%s1822 + $0x4f0] sm:$0xff]
      %v1982 = vld [vmem:[%s1822 + $0x4f8] sm:$0xff]
      %v1983 = vld [vmem:[%s1822 + $0x500] sm:$0xff]
      %v1984 = vld [vmem:[%s1822 + $0x508] sm:$0xff]
      %v1985 = vld [vmem:[%s1822 + $0x510] sm:$0xff]
      %v1986 = vld [vmem:[%s1822 + $0x518] sm:$0xff]
      %v1987 = vld [vmem:[%s1822 + $0x520] sm:$0xff]
      %v1988 = vld [vmem:[%s1822 + $0x528] sm:$0xff]
      %v1989 = vld [vmem:[%s1822 + $0x530] sm:$0xff]
      %v1990 = vld [vmem:[%s1822 + $0x538] sm:$0xff]
      %v1991 = vld [vmem:[%s1822 + $0x540] sm:$0xff]
      %v1992 = vld [vmem:[%s1822 + $0x548] sm:$0xff]
      %v1993 = vld [vmem:[%s1822 + $0x550] sm:$0xff]
      %v1994 = vld [vmem:[%s1822 + $0x558] sm:$0xff]
      %v1995 = vld [vmem:[%s1822 + $0x560] sm:$0xff]
      %v1996 = vld [vmem:[%s1822 + $0x568] sm:$0xff]
      %v1997 = vld [vmem:[%s1822 + $0x570] sm:$0xff]
      %v1998 = vld [vmem:[%s1822 + $0x578] sm:$0xff]
      %v1999 = vld [vmem:[%s1822 + $0x580] sm:$0xff]
      %v2000 = vld [vmem:[%s1822 + $0x588] sm:$0xff]
      %v2001 = vld [vmem:[%s1822 + $0x590] sm:$0xff]
      %v2002 = vld [vmem:[%s1822 + $0x598] sm:$0xff]
      %v2003 = vld [vmem:[%s1822 + $0x5a0] sm:$0xff]
      %v2004 = vld [vmem:[%s1822 + $0x5a8] sm:$0xff]
      %v2005 = vld [vmem:[%s1822 + $0x5b0] sm:$0xff]
      %v2006 = vld [vmem:[%s1822 + $0x5b8] sm:$0xff]
      %v2007 = vld [vmem:[%s1822 + $0x5c0] sm:$0xff]
      %v2008 = vld [vmem:[%s1822 + $0x5c8] sm:$0xff]
      %v2009 = vld [vmem:[%s1822 + $0x5d0] sm:$0xff]
      %v2010 = vld [vmem:[%s1822 + $0x5d8] sm:$0xff]
      %v2011 = vld [vmem:[%s1822 + $0x5e0] sm:$0xff]
      %v2012 = vld [vmem:[%s1822 + $0x5e8] sm:$0xff]
      %v2013 = vld [vmem:[%s1822 + $0x5f0] sm:$0xff]
      %v2014 = vld [vmem:[%s1822 + $0x5f8] sm:$0xff]
      %v2015 = vld [vmem:[%s1822 + $0x600] sm:$0xff]
      %v2016 = vld [vmem:[%s1822 + $0x608] sm:$0xff]
      %v2017 = vld [vmem:[%s1822 + $0x610] sm:$0xff]
      %v2018 = vld [vmem:[%s1822 + $0x618] sm:$0xff]
      %v2019 = vld [vmem:[%s1822 + $0x620] sm:$0xff]
      %v2020 = vld [vmem:[%s1822 + $0x628] sm:$0xff]
      %v2021 = vld [vmem:[%s1822 + $0x630] sm:$0xff]
      %v2022 = vld [vmem:[%s1822 + $0x638] sm:$0xff]
      %v2023 = vld [vmem:[%s1822 + $0x640] sm:$0xff]
      %v2024 = vld [vmem:[%s1822 + $0x648] sm:$0xff]
      %v2025 = vld [vmem:[%s1822 + $0x650] sm:$0xff]
      %v2026 = vld [vmem:[%s1822 + $0x658] sm:$0xff]
      %v2027 = vld [vmem:[%s1822 + $0x660] sm:$0xff]
      %v2028 = vld [vmem:[%s1822 + $0x668] sm:$0xff]
      %v2029 = vld [vmem:[%s1822 + $0x670] sm:$0xff]
      %v2030 = vld [vmem:[%s1822 + $0x678] sm:$0xff]
      %v2031 = vld [vmem:[%s1822 + $0x680] sm:$0xff]
      %v2032 = vld [vmem:[%s1822 + $0x688] sm:$0xff]
      %v2033 = vld [vmem:[%s1822 + $0x690] sm:$0xff]
      %v2034 = vld [vmem:[%s1822 + $0x698] sm:$0xff]
      %v2035 = vld [vmem:[%s1822 + $0x6a0] sm:$0xff]
      %v2036 = vld [vmem:[%s1822 + $0x6a8] sm:$0xff]
      %v2037 = vld [vmem:[%s1822 + $0x6b0] sm:$0xff]
      %v2038 = vld [vmem:[%s1822 + $0x6b8] sm:$0xff]
      %v2039 = vld [vmem:[%s1822 + $0x6c0] sm:$0xff]
      %v2040 = vld [vmem:[%s1822 + $0x6c8] sm:$0xff]
      %v2041 = vld [vmem:[%s1822 + $0x6d0] sm:$0xff]
      %v2042 = vld [vmem:[%s1822 + $0x6d8] sm:$0xff]
      %v2043 = vld [vmem:[%s1822 + $0x6e0] sm:$0xff]
      %v2044 = vld [vmem:[%s1822 + $0x6e8] sm:$0xff]
      %v2045 = vld [vmem:[%s1822 + $0x6f0] sm:$0xff]
      %v2046 = vld [vmem:[%s1822 + $0x6f8] sm:$0xff]
      %v2047 = vld [vmem:[%s1822 + $0x700] sm:$0xff]
      %v2048 = vld [vmem:[%s1822 + $0x708] sm:$0xff]
      %v2049 = vld [vmem:[%s1822 + $0x710] sm:$0xff]
      %v2050 = vld [vmem:[%s1822 + $0x718] sm:$0xff]
      %v2051 = vld [vmem:[%s1822 + $0x720] sm:$0xff]
      %v2052 = vld [vmem:[%s1822 + $0x728] sm:$0xff]
      %v2053 = vld [vmem:[%s1822 + $0x730] sm:$0xff]
      %v2054 = vld [vmem:[%s1822 + $0x738] sm:$0xff]
      %v2055 = vld [vmem:[%s1822 + $0x740] sm:$0xff]
      %v2056 = vld [vmem:[%s1822 + $0x748] sm:$0xff]
      %v2057 = vld [vmem:[%s1822 + $0x750] sm:$0xff]
      %v2058 = vld [vmem:[%s1822 + $0x758] sm:$0xff]
      %v2059 = vld [vmem:[%s1822 + $0x760] sm:$0xff]
      %v2060 = vld [vmem:[%s1822 + $0x768] sm:$0xff]
      %v2061 = vld [vmem:[%s1822 + $0x770] sm:$0xff]
      %v2062 = vld [vmem:[%s1822 + $0x778] sm:$0xff]
      %v2063 = vld [vmem:[%s1822 + $0x780] sm:$0xff]
      %v2064 = vld [vmem:[%s1822 + $0x788] sm:$0xff]
      %v2065 = vld [vmem:[%s1822 + $0x790] sm:$0xff]
      %v2066 = vld [vmem:[%s1822 + $0x798] sm:$0xff]
      %v2067 = vld [vmem:[%s1822 + $0x7a0] sm:$0xff]
      %v2068 = vld [vmem:[%s1822 + $0x7a8] sm:$0xff]
      %v2069 = vld [vmem:[%s1822 + $0x7b0] sm:$0xff]
      %v2070 = vld [vmem:[%s1822 + $0x7b8] sm:$0xff]
      %v2071 = vld [vmem:[%s1822 + $0x7c0] sm:$0xff]
      %v2072 = vld [vmem:[%s1822 + $0x7c8] sm:$0xff]
      %v2073 = vld [vmem:[%s1822 + $0x7d0] sm:$0xff]
      %v2074 = vld [vmem:[%s1822 + $0x7d8] sm:$0xff]
      %v2075 = vld [vmem:[%s1822 + $0x7e0] sm:$0xff]
      %v2076 = vld [vmem:[%s1822 + $0x7e8] sm:$0xff]
      %v2077 = vld [vmem:[%s1822 + $0x7f0] sm:$0xff]
      %v2078 = vld [vmem:[%s1822 + $0x7f8] sm:$0xff]
      %s2079 = scalar_lea.vmem %s1, 8192
      %v2080 = vld [vmem:[%s2079] sm:$0xff]
      %v2081 = vld [vmem:[%s2079 + $0x8] sm:$0xff]
      %v2082 = vld [vmem:[%s2079 + $0x10] sm:$0xff]
      %v2083 = vld [vmem:[%s2079 + $0x18] sm:$0xff]
      %v2084 = vld [vmem:[%s2079 + $0x20] sm:$0xff]
      %v2085 = vld [vmem:[%s2079 + $0x28] sm:$0xff]
      %v2086 = vld [vmem:[%s2079 + $0x30] sm:$0xff]
      %v2087 = vld [vmem:[%s2079 + $0x38] sm:$0xff]
      %v2088 = vld [vmem:[%s2079 + $0x40] sm:$0xff]
      %v2089 = vld [vmem:[%s2079 + $0x48] sm:$0xff]
      %v2090 = vld [vmem:[%s2079 + $0x50] sm:$0xff]
      %v2091 = vld [vmem:[%s2079 + $0x58] sm:$0xff]
      %v2092 = vld [vmem:[%s2079 + $0x60] sm:$0xff]
      %v2093 = vld [vmem:[%s2079 + $0x68] sm:$0xff]
      %v2094 = vld [vmem:[%s2079 + $0x70] sm:$0xff]
      %v2095 = vld [vmem:[%s2079 + $0x78] sm:$0xff]
      %v2096 = vld [vmem:[%s2079 + $0x80] sm:$0xff]
      %v2097 = vld [vmem:[%s2079 + $0x88] sm:$0xff]
      %v2098 = vld [vmem:[%s2079 + $0x90] sm:$0xff]
      %v2099 = vld [vmem:[%s2079 + $0x98] sm:$0xff]
      %v2100 = vld [vmem:[%s2079 + $0xa0] sm:$0xff]
      %v2101 = vld [vmem:[%s2079 + $0xa8] sm:$0xff]
      %v2102 = vld [vmem:[%s2079 + $0xb0] sm:$0xff]
      %v2103 = vld [vmem:[%s2079 + $0xb8] sm:$0xff]
      %v2104 = vld [vmem:[%s2079 + $0xc0] sm:$0xff]
      %v2105 = vld [vmem:[%s2079 + $0xc8] sm:$0xff]
      %v2106 = vld [vmem:[%s2079 + $0xd0] sm:$0xff]
      %v2107 = vld [vmem:[%s2079 + $0xd8] sm:$0xff]
      %v2108 = vld [vmem:[%s2079 + $0xe0] sm:$0xff]
      %v2109 = vld [vmem:[%s2079 + $0xe8] sm:$0xff]
      %v2110 = vld [vmem:[%s2079 + $0xf0] sm:$0xff]
      %v2111 = vld [vmem:[%s2079 + $0xf8] sm:$0xff]
      %v2112 = vld [vmem:[%s2079 + $0x100] sm:$0xff]
      %v2113 = vld [vmem:[%s2079 + $0x108] sm:$0xff]
      %v2114 = vld [vmem:[%s2079 + $0x110] sm:$0xff]
      %v2115 = vld [vmem:[%s2079 + $0x118] sm:$0xff]
      %v2116 = vld [vmem:[%s2079 + $0x120] sm:$0xff]
      %v2117 = vld [vmem:[%s2079 + $0x128] sm:$0xff]
      %v2118 = vld [vmem:[%s2079 + $0x130] sm:$0xff]
      %v2119 = vld [vmem:[%s2079 + $0x138] sm:$0xff]
      %v2120 = vld [vmem:[%s2079 + $0x140] sm:$0xff]
      %v2121 = vld [vmem:[%s2079 + $0x148] sm:$0xff]
      %v2122 = vld [vmem:[%s2079 + $0x150] sm:$0xff]
      %v2123 = vld [vmem:[%s2079 + $0x158] sm:$0xff]
      %v2124 = vld [vmem:[%s2079 + $0x160] sm:$0xff]
      %v2125 = vld [vmem:[%s2079 + $0x168] sm:$0xff]
      %v2126 = vld [vmem:[%s2079 + $0x170] sm:$0xff]
      %v2127 = vld [vmem:[%s2079 + $0x178] sm:$0xff]
      %v2128 = vld [vmem:[%s2079 + $0x180] sm:$0xff]
      %v2129 = vld [vmem:[%s2079 + $0x188] sm:$0xff]
      %v2130 = vld [vmem:[%s2079 + $0x190] sm:$0xff]
      %v2131 = vld [vmem:[%s2079 + $0x198] sm:$0xff]
      %v2132 = vld [vmem:[%s2079 + $0x1a0] sm:$0xff]
      %v2133 = vld [vmem:[%s2079 + $0x1a8] sm:$0xff]
      %v2134 = vld [vmem:[%s2079 + $0x1b0] sm:$0xff]
      %v2135 = vld [vmem:[%s2079 + $0x1b8] sm:$0xff]
      %v2136 = vld [vmem:[%s2079 + $0x1c0] sm:$0xff]
      %v2137 = vld [vmem:[%s2079 + $0x1c8] sm:$0xff]
      %v2138 = vld [vmem:[%s2079 + $0x1d0] sm:$0xff]
      %v2139 = vld [vmem:[%s2079 + $0x1d8] sm:$0xff]
      %v2140 = vld [vmem:[%s2079 + $0x1e0] sm:$0xff]
      %v2141 = vld [vmem:[%s2079 + $0x1e8] sm:$0xff]
      %v2142 = vld [vmem:[%s2079 + $0x1f0] sm:$0xff]
      %v2143 = vld [vmem:[%s2079 + $0x1f8] sm:$0xff]
      %v2144 = vld [vmem:[%s2079 + $0x200] sm:$0xff]
      %v2145 = vld [vmem:[%s2079 + $0x208] sm:$0xff]
      %v2146 = vld [vmem:[%s2079 + $0x210] sm:$0xff]
      %v2147 = vld [vmem:[%s2079 + $0x218] sm:$0xff]
      %v2148 = vld [vmem:[%s2079 + $0x220] sm:$0xff]
      %v2149 = vld [vmem:[%s2079 + $0x228] sm:$0xff]
      %v2150 = vld [vmem:[%s2079 + $0x230] sm:$0xff]
      %v2151 = vld [vmem:[%s2079 + $0x238] sm:$0xff]
      %v2152 = vld [vmem:[%s2079 + $0x240] sm:$0xff]
      %v2153 = vld [vmem:[%s2079 + $0x248] sm:$0xff]
      %v2154 = vld [vmem:[%s2079 + $0x250] sm:$0xff]
      %v2155 = vld [vmem:[%s2079 + $0x258] sm:$0xff]
      %v2156 = vld [vmem:[%s2079 + $0x260] sm:$0xff]
      %v2157 = vld [vmem:[%s2079 + $0x268] sm:$0xff]
      %v2158 = vld [vmem:[%s2079 + $0x270] sm:$0xff]
      %v2159 = vld [vmem:[%s2079 + $0x278] sm:$0xff]
      %v2160 = vld [vmem:[%s2079 + $0x280] sm:$0xff]
      %v2161 = vld [vmem:[%s2079 + $0x288] sm:$0xff]
      %v2162 = vld [vmem:[%s2079 + $0x290] sm:$0xff]
      %v2163 = vld [vmem:[%s2079 + $0x298] sm:$0xff]
      %v2164 = vld [vmem:[%s2079 + $0x2a0] sm:$0xff]
      %v2165 = vld [vmem:[%s2079 + $0x2a8] sm:$0xff]
      %v2166 = vld [vmem:[%s2079 + $0x2b0] sm:$0xff]
      %v2167 = vld [vmem:[%s2079 + $0x2b8] sm:$0xff]
      %v2168 = vld [vmem:[%s2079 + $0x2c0] sm:$0xff]
      %v2169 = vld [vmem:[%s2079 + $0x2c8] sm:$0xff]
      %v2170 = vld [vmem:[%s2079 + $0x2d0] sm:$0xff]
      %v2171 = vld [vmem:[%s2079 + $0x2d8] sm:$0xff]
      %v2172 = vld [vmem:[%s2079 + $0x2e0] sm:$0xff]
      %v2173 = vld [vmem:[%s2079 + $0x2e8] sm:$0xff]
      %v2174 = vld [vmem:[%s2079 + $0x2f0] sm:$0xff]
      %v2175 = vld [vmem:[%s2079 + $0x2f8] sm:$0xff]
      %v2176 = vld [vmem:[%s2079 + $0x300] sm:$0xff]
      %v2177 = vld [vmem:[%s2079 + $0x308] sm:$0xff]
      %v2178 = vld [vmem:[%s2079 + $0x310] sm:$0xff]
      %v2179 = vld [vmem:[%s2079 + $0x318] sm:$0xff]
      %v2180 = vld [vmem:[%s2079 + $0x320] sm:$0xff]
      %v2181 = vld [vmem:[%s2079 + $0x328] sm:$0xff]
      %v2182 = vld [vmem:[%s2079 + $0x330] sm:$0xff]
      %v2183 = vld [vmem:[%s2079 + $0x338] sm:$0xff]
      %v2184 = vld [vmem:[%s2079 + $0x340] sm:$0xff]
      %v2185 = vld [vmem:[%s2079 + $0x348] sm:$0xff]
      %v2186 = vld [vmem:[%s2079 + $0x350] sm:$0xff]
      %v2187 = vld [vmem:[%s2079 + $0x358] sm:$0xff]
      %v2188 = vld [vmem:[%s2079 + $0x360] sm:$0xff]
      %v2189 = vld [vmem:[%s2079 + $0x368] sm:$0xff]
      %v2190 = vld [vmem:[%s2079 + $0x370] sm:$0xff]
      %v2191 = vld [vmem:[%s2079 + $0x378] sm:$0xff]
      %v2192 = vld [vmem:[%s2079 + $0x380] sm:$0xff]
      %v2193 = vld [vmem:[%s2079 + $0x388] sm:$0xff]
      %v2194 = vld [vmem:[%s2079 + $0x390] sm:$0xff]
      %v2195 = vld [vmem:[%s2079 + $0x398] sm:$0xff]
      %v2196 = vld [vmem:[%s2079 + $0x3a0] sm:$0xff]
      %v2197 = vld [vmem:[%s2079 + $0x3a8] sm:$0xff]
      %v2198 = vld [vmem:[%s2079 + $0x3b0] sm:$0xff]
      %v2199 = vld [vmem:[%s2079 + $0x3b8] sm:$0xff]
      %v2200 = vld [vmem:[%s2079 + $0x3c0] sm:$0xff]
      %v2201 = vld [vmem:[%s2079 + $0x3c8] sm:$0xff]
      %v2202 = vld [vmem:[%s2079 + $0x3d0] sm:$0xff]
      %v2203 = vld [vmem:[%s2079 + $0x3d8] sm:$0xff]
      %v2204 = vld [vmem:[%s2079 + $0x3e0] sm:$0xff]
      %v2205 = vld [vmem:[%s2079 + $0x3e8] sm:$0xff]
      %v2206 = vld [vmem:[%s2079 + $0x3f0] sm:$0xff]
      %v2207 = vld [vmem:[%s2079 + $0x3f8] sm:$0xff]
      %v2208 = vld [vmem:[%s2079 + $0x400] sm:$0xff]
      %v2209 = vld [vmem:[%s2079 + $0x408] sm:$0xff]
      %v2210 = vld [vmem:[%s2079 + $0x410] sm:$0xff]
      %v2211 = vld [vmem:[%s2079 + $0x418] sm:$0xff]
      %v2212 = vld [vmem:[%s2079 + $0x420] sm:$0xff]
      %v2213 = vld [vmem:[%s2079 + $0x428] sm:$0xff]
      %v2214 = vld [vmem:[%s2079 + $0x430] sm:$0xff]
      %v2215 = vld [vmem:[%s2079 + $0x438] sm:$0xff]
      %v2216 = vld [vmem:[%s2079 + $0x440] sm:$0xff]
      %v2217 = vld [vmem:[%s2079 + $0x448] sm:$0xff]
      %v2218 = vld [vmem:[%s2079 + $0x450] sm:$0xff]
      %v2219 = vld [vmem:[%s2079 + $0x458] sm:$0xff]
      %v2220 = vld [vmem:[%s2079 + $0x460] sm:$0xff]
      %v2221 = vld [vmem:[%s2079 + $0x468] sm:$0xff]
      %v2222 = vld [vmem:[%s2079 + $0x470] sm:$0xff]
      %v2223 = vld [vmem:[%s2079 + $0x478] sm:$0xff]
      %v2224 = vld [vmem:[%s2079 + $0x480] sm:$0xff]
      %v2225 = vld [vmem:[%s2079 + $0x488] sm:$0xff]
      %v2226 = vld [vmem:[%s2079 + $0x490] sm:$0xff]
      %v2227 = vld [vmem:[%s2079 + $0x498] sm:$0xff]
      %v2228 = vld [vmem:[%s2079 + $0x4a0] sm:$0xff]
      %v2229 = vld [vmem:[%s2079 + $0x4a8] sm:$0xff]
      %v2230 = vld [vmem:[%s2079 + $0x4b0] sm:$0xff]
      %v2231 = vld [vmem:[%s2079 + $0x4b8] sm:$0xff]
      %v2232 = vld [vmem:[%s2079 + $0x4c0] sm:$0xff]
      %v2233 = vld [vmem:[%s2079 + $0x4c8] sm:$0xff]
      %v2234 = vld [vmem:[%s2079 + $0x4d0] sm:$0xff]
      %v2235 = vld [vmem:[%s2079 + $0x4d8] sm:$0xff]
      %v2236 = vld [vmem:[%s2079 + $0x4e0] sm:$0xff]
      %v2237 = vld [vmem:[%s2079 + $0x4e8] sm:$0xff]
      %v2238 = vld [vmem:[%s2079 + $0x4f0] sm:$0xff]
      %v2239 = vld [vmem:[%s2079 + $0x4f8] sm:$0xff]
      %v2240 = vld [vmem:[%s2079 + $0x500] sm:$0xff]
      %v2241 = vld [vmem:[%s2079 + $0x508] sm:$0xff]
      %v2242 = vld [vmem:[%s2079 + $0x510] sm:$0xff]
      %v2243 = vld [vmem:[%s2079 + $0x518] sm:$0xff]
      %v2244 = vld [vmem:[%s2079 + $0x520] sm:$0xff]
      %v2245 = vld [vmem:[%s2079 + $0x528] sm:$0xff]
      %v2246 = vld [vmem:[%s2079 + $0x530] sm:$0xff]
      %v2247 = vld [vmem:[%s2079 + $0x538] sm:$0xff]
      %v2248 = vld [vmem:[%s2079 + $0x540] sm:$0xff]
      %v2249 = vld [vmem:[%s2079 + $0x548] sm:$0xff]
      %v2250 = vld [vmem:[%s2079 + $0x550] sm:$0xff]
      %v2251 = vld [vmem:[%s2079 + $0x558] sm:$0xff]
      %v2252 = vld [vmem:[%s2079 + $0x560] sm:$0xff]
      %v2253 = vld [vmem:[%s2079 + $0x568] sm:$0xff]
      %v2254 = vld [vmem:[%s2079 + $0x570] sm:$0xff]
      %v2255 = vld [vmem:[%s2079 + $0x578] sm:$0xff]
      %v2256 = vld [vmem:[%s2079 + $0x580] sm:$0xff]
      %v2257 = vld [vmem:[%s2079 + $0x588] sm:$0xff]
      %v2258 = vld [vmem:[%s2079 + $0x590] sm:$0xff]
      %v2259 = vld [vmem:[%s2079 + $0x598] sm:$0xff]
      %v2260 = vld [vmem:[%s2079 + $0x5a0] sm:$0xff]
      %v2261 = vld [vmem:[%s2079 + $0x5a8] sm:$0xff]
      %v2262 = vld [vmem:[%s2079 + $0x5b0] sm:$0xff]
      %v2263 = vld [vmem:[%s2079 + $0x5b8] sm:$0xff]
      %v2264 = vld [vmem:[%s2079 + $0x5c0] sm:$0xff]
      %v2265 = vld [vmem:[%s2079 + $0x5c8] sm:$0xff]
      %v2266 = vld [vmem:[%s2079 + $0x5d0] sm:$0xff]
      %v2267 = vld [vmem:[%s2079 + $0x5d8] sm:$0xff]
      %v2268 = vld [vmem:[%s2079 + $0x5e0] sm:$0xff]
      %v2269 = vld [vmem:[%s2079 + $0x5e8] sm:$0xff]
      %v2270 = vld [vmem:[%s2079 + $0x5f0] sm:$0xff]
      %v2271 = vld [vmem:[%s2079 + $0x5f8] sm:$0xff]
      %v2272 = vld [vmem:[%s2079 + $0x600] sm:$0xff]
      %v2273 = vld [vmem:[%s2079 + $0x608] sm:$0xff]
      %v2274 = vld [vmem:[%s2079 + $0x610] sm:$0xff]
      %v2275 = vld [vmem:[%s2079 + $0x618] sm:$0xff]
      %v2276 = vld [vmem:[%s2079 + $0x620] sm:$0xff]
      %v2277 = vld [vmem:[%s2079 + $0x628] sm:$0xff]
      %v2278 = vld [vmem:[%s2079 + $0x630] sm:$0xff]
      %v2279 = vld [vmem:[%s2079 + $0x638] sm:$0xff]
      %v2280 = vld [vmem:[%s2079 + $0x640] sm:$0xff]
      %v2281 = vld [vmem:[%s2079 + $0x648] sm:$0xff]
      %v2282 = vld [vmem:[%s2079 + $0x650] sm:$0xff]
      %v2283 = vld [vmem:[%s2079 + $0x658] sm:$0xff]
      %v2284 = vld [vmem:[%s2079 + $0x660] sm:$0xff]
      %v2285 = vld [vmem:[%s2079 + $0x668] sm:$0xff]
      %v2286 = vld [vmem:[%s2079 + $0x670] sm:$0xff]
      %v2287 = vld [vmem:[%s2079 + $0x678] sm:$0xff]
      %v2288 = vld [vmem:[%s2079 + $0x680] sm:$0xff]
      %v2289 = vld [vmem:[%s2079 + $0x688] sm:$0xff]
      %v2290 = vld [vmem:[%s2079 + $0x690] sm:$0xff]
      %v2291 = vld [vmem:[%s2079 + $0x698] sm:$0xff]
      %v2292 = vld [vmem:[%s2079 + $0x6a0] sm:$0xff]
      %v2293 = vld [vmem:[%s2079 + $0x6a8] sm:$0xff]
      %v2294 = vld [vmem:[%s2079 + $0x6b0] sm:$0xff]
      %v2295 = vld [vmem:[%s2079 + $0x6b8] sm:$0xff]
      %v2296 = vld [vmem:[%s2079 + $0x6c0] sm:$0xff]
      %v2297 = vld [vmem:[%s2079 + $0x6c8] sm:$0xff]
      %v2298 = vld [vmem:[%s2079 + $0x6d0] sm:$0xff]
      %v2299 = vld [vmem:[%s2079 + $0x6d8] sm:$0xff]
      %v2300 = vld [vmem:[%s2079 + $0x6e0] sm:$0xff]
      %v2301 = vld [vmem:[%s2079 + $0x6e8] sm:$0xff]
      %v2302 = vld [vmem:[%s2079 + $0x6f0] sm:$0xff]
      %v2303 = vld [vmem:[%s2079 + $0x6f8] sm:$0xff]
      %v2304 = vld [vmem:[%s2079 + $0x700] sm:$0xff]
      %v2305 = vld [vmem:[%s2079 + $0x708] sm:$0xff]
      %v2306 = vld [vmem:[%s2079 + $0x710] sm:$0xff]
      %v2307 = vld [vmem:[%s2079 + $0x718] sm:$0xff]
      %v2308 = vld [vmem:[%s2079 + $0x720] sm:$0xff]
      %v2309 = vld [vmem:[%s2079 + $0x728] sm:$0xff]
      %v2310 = vld [vmem:[%s2079 + $0x730] sm:$0xff]
      %v2311 = vld [vmem:[%s2079 + $0x738] sm:$0xff]
      %v2312 = vld [vmem:[%s2079 + $0x740] sm:$0xff]
      %v2313 = vld [vmem:[%s2079 + $0x748] sm:$0xff]
      %v2314 = vld [vmem:[%s2079 + $0x750] sm:$0xff]
      %v2315 = vld [vmem:[%s2079 + $0x758] sm:$0xff]
      %v2316 = vld [vmem:[%s2079 + $0x760] sm:$0xff]
      %v2317 = vld [vmem:[%s2079 + $0x768] sm:$0xff]
      %v2318 = vld [vmem:[%s2079 + $0x770] sm:$0xff]
      %v2319 = vld [vmem:[%s2079 + $0x778] sm:$0xff]
      %v2320 = vld [vmem:[%s2079 + $0x780] sm:$0xff]
      %v2321 = vld [vmem:[%s2079 + $0x788] sm:$0xff]
      %v2322 = vld [vmem:[%s2079 + $0x790] sm:$0xff]
      %v2323 = vld [vmem:[%s2079 + $0x798] sm:$0xff]
      %v2324 = vld [vmem:[%s2079 + $0x7a0] sm:$0xff]
      %v2325 = vld [vmem:[%s2079 + $0x7a8] sm:$0xff]
      %v2326 = vld [vmem:[%s2079 + $0x7b0] sm:$0xff]
      %v2327 = vld [vmem:[%s2079 + $0x7b8] sm:$0xff]
      %v2328 = vld [vmem:[%s2079 + $0x7c0] sm:$0xff]
      %v2329 = vld [vmem:[%s2079 + $0x7c8] sm:$0xff]
      %v2330 = vld [vmem:[%s2079 + $0x7d0] sm:$0xff]
      %v2331 = vld [vmem:[%s2079 + $0x7d8] sm:$0xff]
      %v2332 = vld [vmem:[%s2079 + $0x7e0] sm:$0xff]
      %v2333 = vld [vmem:[%s2079 + $0x7e8] sm:$0xff]
      %v2334 = vld [vmem:[%s2079 + $0x7f0] sm:$0xff]
      %v2335 = vld [vmem:[%s2079 + $0x7f8] sm:$0xff]
      %2336 = vmatprep.subr.mxu0 %v2141
      %2337 = vmatpush1.msra.mxu0 %v2140
      %2338 = vmatprep.subr.mxu0 %v2137
      %2339 = vmatpush1.msra.mxu0 %v2136
      %2340 = vmatprep.subr.mxu0 %v2133
      %2341 = vmatpush1.msra.mxu0 %v2132
      %2342 = vmatprep.subr.mxu0 %v2129
      %2343 = vmatpush1.msra.mxu0 %v2128
      %2344 = vmatprep.subr.mxu0 %v2125
      %2345 = vmatpush1.msra.mxu0 %v2124
      %2346 = vmatprep.subr.mxu0 %v2121
      %2347 = vmatpush1.msra.mxu0 %v2120
      %2348 = vmatprep.subr.mxu0 %v2117
      %2349 = vmatpush1.msra.mxu0 %v2116
      %2350 = vmatprep.subr.mxu0 %v2113
      %2351 = vmatpush1.msra.mxu0 %v2112
      %2352 = vmatprep.subr.mxu0 %v2109
      %2353 = vmatpush1.msra.mxu0 %v2108
      %2354 = vmatprep.subr.mxu0 %v2105
      %2355 = vmatpush1.msra.mxu0 %v2104
      %2356 = vmatprep.subr.mxu0 %v2101
      %2357 = vmatpush1.msra.mxu0 %v2100
      %2358 = vmatprep.subr.mxu0 %v2097
      %2359 = vmatpush1.msra.mxu0 %v2096
      %2360 = vmatprep.subr.mxu0 %v2093
      %2361 = vmatpush1.msra.mxu0 %v2092
      %2362 = vmatprep.subr.mxu0 %v2089
      %2363 = vmatpush1.msra.mxu0 %v2088
      %2364 = vmatprep.subr.mxu0 %v2085
      %2365 = vmatpush1.msra.mxu0 %v2084
      %2366 = vmatprep.subr.mxu0 %v2081
      %2367 = vmatpush1.msra.mxu0 %v2080
      %2368 = vmatprep.subr.mxu0 %v2205
      %2369 = vmatpush2.msra.mxu0 %v2204
      %2370 = vmatprep.subr.mxu0 %v2201
      %2371 = vmatpush2.msra.mxu0 %v2200
      %2372 = vmatprep.subr.mxu0 %v2197
      %2373 = vmatpush2.msra.mxu0 %v2196
      %2374 = vmatprep.subr.mxu0 %v2193
      %2375 = vmatpush2.msra.mxu0 %v2192
      %2376 = vmatprep.subr.mxu0 %v2189
      %2377 = vmatpush2.msra.mxu0 %v2188
      %2378 = vmatprep.subr.mxu0 %v2185
      %2379 = vmatpush2.msra.mxu0 %v2184
      %2380 = vmatprep.subr.mxu0 %v2181
      %2381 = vmatpush2.msra.mxu0 %v2180
      %2382 = vmatprep.subr.mxu0 %v2177
      %2383 = vmatpush2.msra.mxu0 %v2176
      %2384 = vmatprep.subr.mxu0 %v2173
      %2385 = vmatpush2.msra.mxu0 %v2172
      %2386 = vmatprep.subr.mxu0 %v2169
      %2387 = vmatpush2.msra.mxu0 %v2168
      %2388 = vmatprep.subr.mxu0 %v2165
      %2389 = vmatpush2.msra.mxu0 %v2164
      %2390 = vmatprep.subr.mxu0 %v2161
      %2391 = vmatpush2.msra.mxu0 %v2160
      %2392 = vmatprep.subr.mxu0 %v2157
      %2393 = vmatpush2.msra.mxu0 %v2156
      %2394 = vmatprep.subr.mxu0 %v2153
      %2395 = vmatpush2.msra.mxu0 %v2152
      %2396 = vmatprep.subr.mxu0 %v2149
      %2397 = vmatpush2.msra.mxu0 %v2148
      %2398 = vmatprep.subr.mxu0 %v2145
      %2399 = vmatpush2.msra.mxu0 %v2144
      %2400 = vmatprep.mubr.f32.mxu0 %v433
      %2401 = vmatmul.mubr.f32.gmra.mxu0 %v432
      %v2402 = vpop.f32.mrf.mxu0
      %v2403 = vadd.f32 0.0, %v2402
      %v2404 = vpop.f32.mrf.mxu0
      %v2405 = vadd.f32 0.0, %v2404
      %2406 = vdwg.mxu0
      %2407 = vmatprep.subr.mxu0 %v2269
      %2408 = vmatpush1.msra.mxu0 %v2268
      %2409 = vmatprep.subr.mxu0 %v2265
      %2410 = vmatpush1.msra.mxu0 %v2264
      %2411 = vmatprep.subr.mxu0 %v2261
      %2412 = vmatpush1.msra.mxu0 %v2260
      %2413 = vmatprep.subr.mxu0 %v2257
      %2414 = vmatpush1.msra.mxu0 %v2256
      %2415 = vmatprep.subr.mxu0 %v2253
      %2416 = vmatpush1.msra.mxu0 %v2252
      %2417 = vmatprep.subr.mxu0 %v2249
      %2418 = vmatpush1.msra.mxu0 %v2248
      %2419 = vmatprep.subr.mxu0 %v2245
      %2420 = vmatpush1.msra.mxu0 %v2244
      %2421 = vmatprep.subr.mxu0 %v2241
      %2422 = vmatpush1.msra.mxu0 %v2240
      %2423 = vmatprep.subr.mxu0 %v2237
      %2424 = vmatpush1.msra.mxu0 %v2236
      %2425 = vmatprep.subr.mxu0 %v2233
      %2426 = vmatpush1.msra.mxu0 %v2232
      %2427 = vmatprep.subr.mxu0 %v2229
      %2428 = vmatpush1.msra.mxu0 %v2228
      %2429 = vmatprep.subr.mxu0 %v2225
      %2430 = vmatpush1.msra.mxu0 %v2224
      %2431 = vmatprep.subr.mxu0 %v2221
      %2432 = vmatpush1.msra.mxu0 %v2220
      %2433 = vmatprep.subr.mxu0 %v2217
      %2434 = vmatpush1.msra.mxu0 %v2216
      %2435 = vmatprep.subr.mxu0 %v2213
      %2436 = vmatpush1.msra.mxu0 %v2212
      %2437 = vmatprep.subr.mxu0 %v2209
      %2438 = vmatpush1.msra.mxu0 %v2208
      %2439 = vmatprep.subr.mxu0 %v2333
      %2440 = vmatpush2.msra.mxu0 %v2332
      %2441 = vmatprep.subr.mxu0 %v2329
      %2442 = vmatpush2.msra.mxu0 %v2328
      %2443 = vmatprep.subr.mxu0 %v2325
      %2444 = vmatpush2.msra.mxu0 %v2324
      %2445 = vmatprep.subr.mxu0 %v2321
      %2446 = vmatpush2.msra.mxu0 %v2320
      %2447 = vmatprep.subr.mxu0 %v2317
      %2448 = vmatpush2.msra.mxu0 %v2316
      %2449 = vmatprep.subr.mxu0 %v2313
      %2450 = vmatpush2.msra.mxu0 %v2312
      %2451 = vmatprep.subr.mxu0 %v2309
      %2452 = vmatpush2.msra.mxu0 %v2308
      %2453 = vmatprep.subr.mxu0 %v2305
      %2454 = vmatpush2.msra.mxu0 %v2304
      %2455 = vmatprep.subr.mxu0 %v2301
      %2456 = vmatpush2.msra.mxu0 %v2300
      %2457 = vmatprep.subr.mxu0 %v2297
      %2458 = vmatpush2.msra.mxu0 %v2296
      %2459 = vmatprep.subr.mxu0 %v2293
      %2460 = vmatpush2.msra.mxu0 %v2292
      %2461 = vmatprep.subr.mxu0 %v2289
      %2462 = vmatpush2.msra.mxu0 %v2288
      %2463 = vmatprep.subr.mxu0 %v2285
      %2464 = vmatpush2.msra.mxu0 %v2284
      %2465 = vmatprep.subr.mxu0 %v2281
      %2466 = vmatpush2.msra.mxu0 %v2280
      %2467 = vmatprep.subr.mxu0 %v2277
      %2468 = vmatpush2.msra.mxu0 %v2276
      %2469 = vmatprep.subr.mxu0 %v2273
      %2470 = vmatpush2.msra.mxu0 %v2272
      %2471 = vmatprep.mubr.f32.mxu0 %v435
      %2472 = vmatmul.mubr.f32.gmra.mxu0 %v434
      %v2473 = vpop.f32.mrf.mxu0
      %v2474 = vadd.f32 %v2403, %v2473
      %v2475 = vpop.f32.mrf.mxu0
      %v2476 = vadd.f32 %v2405, %v2475
      %2477 = vdwg.mxu0
      %2478 = vmatprep.subr.mxu0 %v2143
      %2479 = vmatpush1.msra.mxu0 %v2142
      %2480 = vmatprep.subr.mxu0 %v2139
      %2481 = vmatpush1.msra.mxu0 %v2138
      %2482 = vmatprep.subr.mxu0 %v2135
      %2483 = vmatpush1.msra.mxu0 %v2134
      %2484 = vmatprep.subr.mxu0 %v2131
      %2485 = vmatpush1.msra.mxu0 %v2130
      %2486 = vmatprep.subr.mxu0 %v2127
      %2487 = vmatpush1.msra.mxu0 %v2126
      %2488 = vmatprep.subr.mxu0 %v2123
      %2489 = vmatpush1.msra.mxu0 %v2122
      %2490 = vmatprep.subr.mxu0 %v2119
      %2491 = vmatpush1.msra.mxu0 %v2118
      %2492 = vmatprep.subr.mxu0 %v2115
      %2493 = vmatpush1.msra.mxu0 %v2114
      %2494 = vmatprep.subr.mxu0 %v2111
      %2495 = vmatpush1.msra.mxu0 %v2110
      %2496 = vmatprep.subr.mxu0 %v2107
      %2497 = vmatpush1.msra.mxu0 %v2106
      %2498 = vmatprep.subr.mxu0 %v2103
      %2499 = vmatpush1.msra.mxu0 %v2102
      %2500 = vmatprep.subr.mxu0 %v2099
      %2501 = vmatpush1.msra.mxu0 %v2098
      %2502 = vmatprep.subr.mxu0 %v2095
      %2503 = vmatpush1.msra.mxu0 %v2094
      %2504 = vmatprep.subr.mxu0 %v2091
      %2505 = vmatpush1.msra.mxu0 %v2090
      %2506 = vmatprep.subr.mxu0 %v2087
      %2507 = vmatpush1.msra.mxu0 %v2086
      %2508 = vmatprep.subr.mxu0 %v2083
      %2509 = vmatpush1.msra.mxu0 %v2082
      %2510 = vmatprep.subr.mxu0 %v2207
      %2511 = vmatpush2.msra.mxu0 %v2206
      %2512 = vmatprep.subr.mxu0 %v2203
      %2513 = vmatpush2.msra.mxu0 %v2202
      %2514 = vmatprep.subr.mxu0 %v2199
      %2515 = vmatpush2.msra.mxu0 %v2198
      %2516 = vmatprep.subr.mxu0 %v2195
      %2517 = vmatpush2.msra.mxu0 %v2194
      %2518 = vmatprep.subr.mxu0 %v2191
      %2519 = vmatpush2.msra.mxu0 %v2190
      %2520 = vmatprep.subr.mxu0 %v2187
      %2521 = vmatpush2.msra.mxu0 %v2186
      %2522 = vmatprep.subr.mxu0 %v2183
      %2523 = vmatpush2.msra.mxu0 %v2182
      %2524 = vmatprep.subr.mxu0 %v2179
      %2525 = vmatpush2.msra.mxu0 %v2178
      %2526 = vmatprep.subr.mxu0 %v2175
      %2527 = vmatpush2.msra.mxu0 %v2174
      %2528 = vmatprep.subr.mxu0 %v2171
      %2529 = vmatpush2.msra.mxu0 %v2170
      %2530 = vmatprep.subr.mxu0 %v2167
      %2531 = vmatpush2.msra.mxu0 %v2166
      %2532 = vmatprep.subr.mxu0 %v2163
      %2533 = vmatpush2.msra.mxu0 %v2162
      %2534 = vmatprep.subr.mxu0 %v2159
      %2535 = vmatpush2.msra.mxu0 %v2158
      %2536 = vmatprep.subr.mxu0 %v2155
      %2537 = vmatpush2.msra.mxu0 %v2154
      %2538 = vmatprep.subr.mxu0 %v2151
      %2539 = vmatpush2.msra.mxu0 %v2150
      %2540 = vmatprep.subr.mxu0 %v2147
      %2541 = vmatpush2.msra.mxu0 %v2146
      %2542 = vmatprep.mubr.f32.mxu0 %v433
      %2543 = vmatmul.mubr.f32.gmra.mxu0 %v432
      %v2544 = vpop.f32.mrf.mxu0
      %v2545 = vadd.f32 0.0, %v2544
      %v2546 = vpop.f32.mrf.mxu0
      %v2547 = vadd.f32 0.0, %v2546
      %2548 = vdwg.mxu0
      %2549 = vmatprep.subr.mxu0 %v2271
      %2550 = vmatpush1.msra.mxu0 %v2270
      %2551 = vmatprep.subr.mxu0 %v2267
      %2552 = vmatpush1.msra.mxu0 %v2266
      %2553 = vmatprep.subr.mxu0 %v2263
      %2554 = vmatpush1.msra.mxu0 %v2262
      %2555 = vmatprep.subr.mxu0 %v2259
      %2556 = vmatpush1.msra.mxu0 %v2258
      %2557 = vmatprep.subr.mxu0 %v2255
      %2558 = vmatpush1.msra.mxu0 %v2254
      %2559 = vmatprep.subr.mxu0 %v2251
      %2560 = vmatpush1.msra.mxu0 %v2250
      %2561 = vmatprep.subr.mxu0 %v2247
      %2562 = vmatpush1.msra.mxu0 %v2246
      %2563 = vmatprep.subr.mxu0 %v2243
      %2564 = vmatpush1.msra.mxu0 %v2242
      %2565 = vmatprep.subr.mxu0 %v2239
      %2566 = vmatpush1.msra.mxu0 %v2238
      %2567 = vmatprep.subr.mxu0 %v2235
      %2568 = vmatpush1.msra.mxu0 %v2234
      %2569 = vmatprep.subr.mxu0 %v2231
      %2570 = vmatpush1.msra.mxu0 %v2230
      %2571 = vmatprep.subr.mxu0 %v2227
      %2572 = vmatpush1.msra.mxu0 %v2226
      %2573 = vmatprep.subr.mxu0 %v2223
      %2574 = vmatpush1.msra.mxu0 %v2222
      %2575 = vmatprep.subr.mxu0 %v2219
      %2576 = vmatpush1.msra.mxu0 %v2218
      %2577 = vmatprep.subr.mxu0 %v2215
      %2578 = vmatpush1.msra.mxu0 %v2214
      %2579 = vmatprep.subr.mxu0 %v2211
      %2580 = vmatpush1.msra.mxu0 %v2210
      %2581 = vmatprep.subr.mxu0 %v2335
      %2582 = vmatpush2.msra.mxu0 %v2334
      %2583 = vmatprep.subr.mxu0 %v2331
      %2584 = vmatpush2.msra.mxu0 %v2330
      %2585 = vmatprep.subr.mxu0 %v2327
      %2586 = vmatpush2.msra.mxu0 %v2326
      %2587 = vmatprep.subr.mxu0 %v2323
      %2588 = vmatpush2.msra.mxu0 %v2322
      %2589 = vmatprep.subr.mxu0 %v2319
      %2590 = vmatpush2.msra.mxu0 %v2318
      %2591 = vmatprep.subr.mxu0 %v2315
      %2592 = vmatpush2.msra.mxu0 %v2314
      %2593 = vmatprep.subr.mxu0 %v2311
      %2594 = vmatpush2.msra.mxu0 %v2310
      %2595 = vmatprep.subr.mxu0 %v2307
      %2596 = vmatpush2.msra.mxu0 %v2306
      %2597 = vmatprep.subr.mxu0 %v2303
      %2598 = vmatpush2.msra.mxu0 %v2302
      %2599 = vmatprep.subr.mxu0 %v2299
      %2600 = vmatpush2.msra.mxu0 %v2298
      %2601 = vmatprep.subr.mxu0 %v2295
      %2602 = vmatpush2.msra.mxu0 %v2294
      %2603 = vmatprep.subr.mxu0 %v2291
      %2604 = vmatpush2.msra.mxu0 %v2290
      %2605 = vmatprep.subr.mxu0 %v2287
      %2606 = vmatpush2.msra.mxu0 %v2286
      %2607 = vmatprep.subr.mxu0 %v2283
      %2608 = vmatpush2.msra.mxu0 %v2282
      %2609 = vmatprep.subr.mxu0 %v2279
      %2610 = vmatpush2.msra.mxu0 %v2278
      %2611 = vmatprep.subr.mxu0 %v2275
      %2612 = vmatpush2.msra.mxu0 %v2274
      %2613 = vmatprep.mubr.f32.mxu0 %v435
      %2614 = vmatmul.mubr.f32.gmra.mxu0 %v434
      %v2615 = vpop.f32.mrf.mxu0
      %v2616 = vadd.f32 %v2545, %v2615
      %v2617 = vpop.f32.mrf.mxu0
      %v2618 = vadd.f32 %v2547, %v2617
      %2619 = vdwg.mxu0
      %2620 = vmatprep.subr.mxu0 %v1884
      %2621 = vmatpush1.msra.mxu0 %v1883
      %2622 = vmatprep.subr.mxu0 %v1880
      %2623 = vmatpush1.msra.mxu0 %v1879
      %2624 = vmatprep.subr.mxu0 %v1876
      %2625 = vmatpush1.msra.mxu0 %v1875
      %2626 = vmatprep.subr.mxu0 %v1872
      %2627 = vmatpush1.msra.mxu0 %v1871
      %2628 = vmatprep.subr.mxu0 %v1868
      %2629 = vmatpush1.msra.mxu0 %v1867
      %2630 = vmatprep.subr.mxu0 %v1864
      %2631 = vmatpush1.msra.mxu0 %v1863
      %2632 = vmatprep.subr.mxu0 %v1860
      %2633 = vmatpush1.msra.mxu0 %v1859
      %2634 = vmatprep.subr.mxu0 %v1856
      %2635 = vmatpush1.msra.mxu0 %v1855
      %2636 = vmatprep.subr.mxu0 %v1852
      %2637 = vmatpush1.msra.mxu0 %v1851
      %2638 = vmatprep.subr.mxu0 %v1848
      %2639 = vmatpush1.msra.mxu0 %v1847
      %2640 = vmatprep.subr.mxu0 %v1844
      %2641 = vmatpush1.msra.mxu0 %v1843
      %2642 = vmatprep.subr.mxu0 %v1840
      %2643 = vmatpush1.msra.mxu0 %v1839
      %2644 = vmatprep.subr.mxu0 %v1836
      %2645 = vmatpush1.msra.mxu0 %v1835
      %2646 = vmatprep.subr.mxu0 %v1832
      %2647 = vmatpush1.msra.mxu0 %v1831
      %2648 = vmatprep.subr.mxu0 %v1828
      %2649 = vmatpush1.msra.mxu0 %v1827
      %2650 = vmatprep.subr.mxu0 %v1824
      %2651 = vmatpush1.msra.mxu0 %v1823
      %2652 = vmatprep.subr.mxu0 %v1948
      %2653 = vmatpush2.msra.mxu0 %v1947
      %2654 = vmatprep.subr.mxu0 %v1944
      %2655 = vmatpush2.msra.mxu0 %v1943
      %2656 = vmatprep.subr.mxu0 %v1940
      %2657 = vmatpush2.msra.mxu0 %v1939
      %2658 = vmatprep.subr.mxu0 %v1936
      %2659 = vmatpush2.msra.mxu0 %v1935
      %2660 = vmatprep.subr.mxu0 %v1932
      %2661 = vmatpush2.msra.mxu0 %v1931
      %2662 = vmatprep.subr.mxu0 %v1928
      %2663 = vmatpush2.msra.mxu0 %v1927
      %2664 = vmatprep.subr.mxu0 %v1924
      %2665 = vmatpush2.msra.mxu0 %v1923
      %2666 = vmatprep.subr.mxu0 %v1920
      %2667 = vmatpush2.msra.mxu0 %v1919
      %2668 = vmatprep.subr.mxu0 %v1916
      %2669 = vmatpush2.msra.mxu0 %v1915
      %2670 = vmatprep.subr.mxu0 %v1912
      %2671 = vmatpush2.msra.mxu0 %v1911
      %2672 = vmatprep.subr.mxu0 %v1908
      %2673 = vmatpush2.msra.mxu0 %v1907
      %2674 = vmatprep.subr.mxu0 %v1904
      %2675 = vmatpush2.msra.mxu0 %v1903
      %2676 = vmatprep.subr.mxu0 %v1900
      %2677 = vmatpush2.msra.mxu0 %v1899
      %2678 = vmatprep.subr.mxu0 %v1896
      %2679 = vmatpush2.msra.mxu0 %v1895
      %2680 = vmatprep.subr.mxu0 %v1892
      %2681 = vmatpush2.msra.mxu0 %v1891
      %2682 = vmatprep.subr.mxu0 %v1888
      %2683 = vmatpush2.msra.mxu0 %v1887
      %2684 = vmatprep.mubr.f32.mxu0 %v172
      %2685 = vmatmul.mubr.f32.gmra.mxu0 %v171
      %v2686 = vpop.f32.mrf.mxu0
      %v2687 = vadd.f32 %v2474, %v2686
      %v2688 = vpop.f32.mrf.mxu0
      %v2689 = vadd.f32 %v2476, %v2688
      %2690 = vdwg.mxu0
      %2691 = vmatprep.subr.mxu0 %v2012
      %2692 = vmatpush1.msra.mxu0 %v2011
      %2693 = vmatprep.subr.mxu0 %v2008
      %2694 = vmatpush1.msra.mxu0 %v2007
      %2695 = vmatprep.subr.mxu0 %v2004
      %2696 = vmatpush1.msra.mxu0 %v2003
      %2697 = vmatprep.subr.mxu0 %v2000
      %2698 = vmatpush1.msra.mxu0 %v1999
      %2699 = vmatprep.subr.mxu0 %v1996
      %2700 = vmatpush1.msra.mxu0 %v1995
      %2701 = vmatprep.subr.mxu0 %v1992
      %2702 = vmatpush1.msra.mxu0 %v1991
      %2703 = vmatprep.subr.mxu0 %v1988
      %2704 = vmatpush1.msra.mxu0 %v1987
      %2705 = vmatprep.subr.mxu0 %v1984
      %2706 = vmatpush1.msra.mxu0 %v1983
      %2707 = vmatprep.subr.mxu0 %v1980
      %2708 = vmatpush1.msra.mxu0 %v1979
      %2709 = vmatprep.subr.mxu0 %v1976
      %2710 = vmatpush1.msra.mxu0 %v1975
      %2711 = vmatprep.subr.mxu0 %v1972
      %2712 = vmatpush1.msra.mxu0 %v1971
      %2713 = vmatprep.subr.mxu0 %v1968
      %2714 = vmatpush1.msra.mxu0 %v1967
      %2715 = vmatprep.subr.mxu0 %v1964
      %2716 = vmatpush1.msra.mxu0 %v1963
      %2717 = vmatprep.subr.mxu0 %v1960
      %2718 = vmatpush1.msra.mxu0 %v1959
      %2719 = vmatprep.subr.mxu0 %v1956
      %2720 = vmatpush1.msra.mxu0 %v1955
      %2721 = vmatprep.subr.mxu0 %v1952
      %2722 = vmatpush1.msra.mxu0 %v1951
      %2723 = vmatprep.subr.mxu0 %v2076
      %2724 = vmatpush2.msra.mxu0 %v2075
      %2725 = vmatprep.subr.mxu0 %v2072
      %2726 = vmatpush2.msra.mxu0 %v2071
      %2727 = vmatprep.subr.mxu0 %v2068
      %2728 = vmatpush2.msra.mxu0 %v2067
      %2729 = vmatprep.subr.mxu0 %v2064
      %2730 = vmatpush2.msra.mxu0 %v2063
      %2731 = vmatprep.subr.mxu0 %v2060
      %2732 = vmatpush2.msra.mxu0 %v2059
      %2733 = vmatprep.subr.mxu0 %v2056
      %2734 = vmatpush2.msra.mxu0 %v2055
      %2735 = vmatprep.subr.mxu0 %v2052
      %2736 = vmatpush2.msra.mxu0 %v2051
      %2737 = vmatprep.subr.mxu0 %v2048
      %2738 = vmatpush2.msra.mxu0 %v2047
      %2739 = vmatprep.subr.mxu0 %v2044
      %2740 = vmatpush2.msra.mxu0 %v2043
      %2741 = vmatprep.subr.mxu0 %v2040
      %2742 = vmatpush2.msra.mxu0 %v2039
      %2743 = vmatprep.subr.mxu0 %v2036
      %2744 = vmatpush2.msra.mxu0 %v2035
      %2745 = vmatprep.subr.mxu0 %v2032
      %2746 = vmatpush2.msra.mxu0 %v2031
      %2747 = vmatprep.subr.mxu0 %v2028
      %2748 = vmatpush2.msra.mxu0 %v2027
      %2749 = vmatprep.subr.mxu0 %v2024
      %2750 = vmatpush2.msra.mxu0 %v2023
      %2751 = vmatprep.subr.mxu0 %v2020
      %2752 = vmatpush2.msra.mxu0 %v2019
      %2753 = vmatprep.subr.mxu0 %v2016
      %2754 = vmatpush2.msra.mxu0 %v2015
      %2755 = vmatprep.mubr.f32.mxu0 %v174
      %2756 = vmatmul.mubr.f32.gmra.mxu0 %v173
      %v2757 = vpop.f32.mrf.mxu0
      %v2758 = vadd.f32 %v2687, %v2757
      %v2759 = vpop.f32.mrf.mxu0
      %v2760 = vadd.f32 %v2689, %v2759
      %2761 = vdwg.mxu0
      %2762 = vmatprep.subr.mxu0 %v1886
      %2763 = vmatpush1.msra.mxu0 %v1885
      %2764 = vmatprep.subr.mxu0 %v1882
      %2765 = vmatpush1.msra.mxu0 %v1881
      %2766 = vmatprep.subr.mxu0 %v1878
      %2767 = vmatpush1.msra.mxu0 %v1877
      %2768 = vmatprep.subr.mxu0 %v1874
      %2769 = vmatpush1.msra.mxu0 %v1873
      %2770 = vmatprep.subr.mxu0 %v1870
      %2771 = vmatpush1.msra.mxu0 %v1869
      %2772 = vmatprep.subr.mxu0 %v1866
      %2773 = vmatpush1.msra.mxu0 %v1865
      %2774 = vmatprep.subr.mxu0 %v1862
      %2775 = vmatpush1.msra.mxu0 %v1861
      %2776 = vmatprep.subr.mxu0 %v1858
      %2777 = vmatpush1.msra.mxu0 %v1857
      %2778 = vmatprep.subr.mxu0 %v1854
      %2779 = vmatpush1.msra.mxu0 %v1853
      %2780 = vmatprep.subr.mxu0 %v1850
      %2781 = vmatpush1.msra.mxu0 %v1849
      %2782 = vmatprep.subr.mxu0 %v1846
      %2783 = vmatpush1.msra.mxu0 %v1845
      %2784 = vmatprep.subr.mxu0 %v1842
      %2785 = vmatpush1.msra.mxu0 %v1841
      %2786 = vmatprep.subr.mxu0 %v1838
      %2787 = vmatpush1.msra.mxu0 %v1837
      %2788 = vmatprep.subr.mxu0 %v1834
      %2789 = vmatpush1.msra.mxu0 %v1833
      %2790 = vmatprep.subr.mxu0 %v1830
      %2791 = vmatpush1.msra.mxu0 %v1829
      %2792 = vmatprep.subr.mxu0 %v1826
      %2793 = vmatpush1.msra.mxu0 %v1825
      %2794 = vmatprep.subr.mxu0 %v1950
      %2795 = vmatpush2.msra.mxu0 %v1949
      %2796 = vmatprep.subr.mxu0 %v1946
      %2797 = vmatpush2.msra.mxu0 %v1945
      %2798 = vmatprep.subr.mxu0 %v1942
      %2799 = vmatpush2.msra.mxu0 %v1941
      %2800 = vmatprep.subr.mxu0 %v1938
      %2801 = vmatpush2.msra.mxu0 %v1937
      %2802 = vmatprep.subr.mxu0 %v1934
      %2803 = vmatpush2.msra.mxu0 %v1933
      %2804 = vmatprep.subr.mxu0 %v1930
      %2805 = vmatpush2.msra.mxu0 %v1929
      %2806 = vmatprep.subr.mxu0 %v1926
      %2807 = vmatpush2.msra.mxu0 %v1925
      %2808 = vmatprep.subr.mxu0 %v1922
      %2809 = vmatpush2.msra.mxu0 %v1921
      %2810 = vmatprep.subr.mxu0 %v1918
      %2811 = vmatpush2.msra.mxu0 %v1917
      %2812 = vmatprep.subr.mxu0 %v1914
      %2813 = vmatpush2.msra.mxu0 %v1913
      %2814 = vmatprep.subr.mxu0 %v1910
      %2815 = vmatpush2.msra.mxu0 %v1909
      %2816 = vmatprep.subr.mxu0 %v1906
      %2817 = vmatpush2.msra.mxu0 %v1905
      %2818 = vmatprep.subr.mxu0 %v1902
      %2819 = vmatpush2.msra.mxu0 %v1901
      %2820 = vmatprep.subr.mxu0 %v1898
      %2821 = vmatpush2.msra.mxu0 %v1897
      %2822 = vmatprep.subr.mxu0 %v1894
      %2823 = vmatpush2.msra.mxu0 %v1893
      %2824 = vmatprep.subr.mxu0 %v1890
      %2825 = vmatpush2.msra.mxu0 %v1889
      %2826 = vmatprep.mubr.f32.mxu0 %v172
      %2827 = vmatmul.mubr.f32.gmra.mxu0 %v171
      %v2828 = vpop.f32.mrf.mxu0
      %v2829 = vadd.f32 %v2616, %v2828
      %v2830 = vpop.f32.mrf.mxu0
      %v2831 = vadd.f32 %v2618, %v2830
      %2832 = vdwg.mxu0
      %2833 = vmatprep.subr.mxu0 %v2014
      %2834 = vmatpush1.msra.mxu0 %v2013
      %2835 = vmatprep.subr.mxu0 %v2010
      %2836 = vmatpush1.msra.mxu0 %v2009
      %2837 = vmatprep.subr.mxu0 %v2006
      %2838 = vmatpush1.msra.mxu0 %v2005
      %2839 = vmatprep.subr.mxu0 %v2002
      %2840 = vmatpush1.msra.mxu0 %v2001
      %2841 = vmatprep.subr.mxu0 %v1998
      %2842 = vmatpush1.msra.mxu0 %v1997
      %2843 = vmatprep.subr.mxu0 %v1994
      %2844 = vmatpush1.msra.mxu0 %v1993
      %2845 = vmatprep.subr.mxu0 %v1990
      %2846 = vmatpush1.msra.mxu0 %v1989
      %2847 = vmatprep.subr.mxu0 %v1986
      %2848 = vmatpush1.msra.mxu0 %v1985
      %2849 = vmatprep.subr.mxu0 %v1982
      %2850 = vmatpush1.msra.mxu0 %v1981
      %2851 = vmatprep.subr.mxu0 %v1978
      %2852 = vmatpush1.msra.mxu0 %v1977
      %2853 = vmatprep.subr.mxu0 %v1974
      %2854 = vmatpush1.msra.mxu0 %v1973
      %2855 = vmatprep.subr.mxu0 %v1970
      %2856 = vmatpush1.msra.mxu0 %v1969
      %2857 = vmatprep.subr.mxu0 %v1966
      %2858 = vmatpush1.msra.mxu0 %v1965
      %2859 = vmatprep.subr.mxu0 %v1962
      %2860 = vmatpush1.msra.mxu0 %v1961
      %2861 = vmatprep.subr.mxu0 %v1958
      %2862 = vmatpush1.msra.mxu0 %v1957
      %2863 = vmatprep.subr.mxu0 %v1954
      %2864 = vmatpush1.msra.mxu0 %v1953
      %2865 = vmatprep.subr.mxu0 %v2078
      %2866 = vmatpush2.msra.mxu0 %v2077
      %2867 = vmatprep.subr.mxu0 %v2074
      %2868 = vmatpush2.msra.mxu0 %v2073
      %2869 = vmatprep.subr.mxu0 %v2070
      %2870 = vmatpush2.msra.mxu0 %v2069
      %2871 = vmatprep.subr.mxu0 %v2066
      %2872 = vmatpush2.msra.mxu0 %v2065
      %2873 = vmatprep.subr.mxu0 %v2062
      %2874 = vmatpush2.msra.mxu0 %v2061
      %2875 = vmatprep.subr.mxu0 %v2058
      %2876 = vmatpush2.msra.mxu0 %v2057
      %2877 = vmatprep.subr.mxu0 %v2054
      %2878 = vmatpush2.msra.mxu0 %v2053
      %2879 = vmatprep.subr.mxu0 %v2050
      %2880 = vmatpush2.msra.mxu0 %v2049
      %2881 = vmatprep.subr.mxu0 %v2046
      %2882 = vmatpush2.msra.mxu0 %v2045
      %2883 = vmatprep.subr.mxu0 %v2042
      %2884 = vmatpush2.msra.mxu0 %v2041
      %2885 = vmatprep.subr.mxu0 %v2038
      %2886 = vmatpush2.msra.mxu0 %v2037
      %2887 = vmatprep.subr.mxu0 %v2034
      %2888 = vmatpush2.msra.mxu0 %v2033
      %2889 = vmatprep.subr.mxu0 %v2030
      %2890 = vmatpush2.msra.mxu0 %v2029
      %2891 = vmatprep.subr.mxu0 %v2026
      %2892 = vmatpush2.msra.mxu0 %v2025
      %2893 = vmatprep.subr.mxu0 %v2022
      %2894 = vmatpush2.msra.mxu0 %v2021
      %2895 = vmatprep.subr.mxu0 %v2018
      %2896 = vmatpush2.msra.mxu0 %v2017
      %2897 = vmatprep.mubr.f32.mxu0 %v174
      %2898 = vmatmul.mubr.f32.gmra.mxu0 %v173
      %v2899 = vpop.f32.mrf.mxu0
      %v2900 = vadd.f32 %v2829, %v2899
      %v2901 = vpop.f32.mrf.mxu0
      %v2902 = vadd.f32 %v2831, %v2901
      %2903 = vdwg.mxu0
      %s2904 = scalar_lea.vmem %s1, 10240
      %v2905 = vld [vmem:[%s2904] sm:$0xff]
      %v2906 = vld [vmem:[%s2904 + $0x8] sm:$0xff]
      %v2907 = vld [vmem:[%s2904 + $0x10] sm:$0xff]
      %v2908 = vld [vmem:[%s2904 + $0x18] sm:$0xff]
      %v2909 = vld [vmem:[%s2904 + $0x20] sm:$0xff]
      %v2910 = vld [vmem:[%s2904 + $0x28] sm:$0xff]
      %v2911 = vld [vmem:[%s2904 + $0x30] sm:$0xff]
      %v2912 = vld [vmem:[%s2904 + $0x38] sm:$0xff]
      %v2913 = vld [vmem:[%s2904 + $0x40] sm:$0xff]
      %v2914 = vld [vmem:[%s2904 + $0x48] sm:$0xff]
      %v2915 = vld [vmem:[%s2904 + $0x50] sm:$0xff]
      %v2916 = vld [vmem:[%s2904 + $0x58] sm:$0xff]
      %v2917 = vld [vmem:[%s2904 + $0x60] sm:$0xff]
      %v2918 = vld [vmem:[%s2904 + $0x68] sm:$0xff]
      %v2919 = vld [vmem:[%s2904 + $0x70] sm:$0xff]
      %v2920 = vld [vmem:[%s2904 + $0x78] sm:$0xff]
      %v2921 = vld [vmem:[%s2904 + $0x80] sm:$0xff]
      %v2922 = vld [vmem:[%s2904 + $0x88] sm:$0xff]
      %v2923 = vld [vmem:[%s2904 + $0x90] sm:$0xff]
      %v2924 = vld [vmem:[%s2904 + $0x98] sm:$0xff]
      %v2925 = vld [vmem:[%s2904 + $0xa0] sm:$0xff]
      %v2926 = vld [vmem:[%s2904 + $0xa8] sm:$0xff]
      %v2927 = vld [vmem:[%s2904 + $0xb0] sm:$0xff]
      %v2928 = vld [vmem:[%s2904 + $0xb8] sm:$0xff]
      %v2929 = vld [vmem:[%s2904 + $0xc0] sm:$0xff]
      %v2930 = vld [vmem:[%s2904 + $0xc8] sm:$0xff]
      %v2931 = vld [vmem:[%s2904 + $0xd0] sm:$0xff]
      %v2932 = vld [vmem:[%s2904 + $0xd8] sm:$0xff]
      %v2933 = vld [vmem:[%s2904 + $0xe0] sm:$0xff]
      %v2934 = vld [vmem:[%s2904 + $0xe8] sm:$0xff]
      %v2935 = vld [vmem:[%s2904 + $0xf0] sm:$0xff]
      %v2936 = vld [vmem:[%s2904 + $0xf8] sm:$0xff]
      %v2937 = vld [vmem:[%s2904 + $0x100] sm:$0xff]
      %v2938 = vld [vmem:[%s2904 + $0x108] sm:$0xff]
      %v2939 = vld [vmem:[%s2904 + $0x110] sm:$0xff]
      %v2940 = vld [vmem:[%s2904 + $0x118] sm:$0xff]
      %v2941 = vld [vmem:[%s2904 + $0x120] sm:$0xff]
      %v2942 = vld [vmem:[%s2904 + $0x128] sm:$0xff]
      %v2943 = vld [vmem:[%s2904 + $0x130] sm:$0xff]
      %v2944 = vld [vmem:[%s2904 + $0x138] sm:$0xff]
      %v2945 = vld [vmem:[%s2904 + $0x140] sm:$0xff]
      %v2946 = vld [vmem:[%s2904 + $0x148] sm:$0xff]
      %v2947 = vld [vmem:[%s2904 + $0x150] sm:$0xff]
      %v2948 = vld [vmem:[%s2904 + $0x158] sm:$0xff]
      %v2949 = vld [vmem:[%s2904 + $0x160] sm:$0xff]
      %v2950 = vld [vmem:[%s2904 + $0x168] sm:$0xff]
      %v2951 = vld [vmem:[%s2904 + $0x170] sm:$0xff]
      %v2952 = vld [vmem:[%s2904 + $0x178] sm:$0xff]
      %v2953 = vld [vmem:[%s2904 + $0x180] sm:$0xff]
      %v2954 = vld [vmem:[%s2904 + $0x188] sm:$0xff]
      %v2955 = vld [vmem:[%s2904 + $0x190] sm:$0xff]
      %v2956 = vld [vmem:[%s2904 + $0x198] sm:$0xff]
      %v2957 = vld [vmem:[%s2904 + $0x1a0] sm:$0xff]
      %v2958 = vld [vmem:[%s2904 + $0x1a8] sm:$0xff]
      %v2959 = vld [vmem:[%s2904 + $0x1b0] sm:$0xff]
      %v2960 = vld [vmem:[%s2904 + $0x1b8] sm:$0xff]
      %v2961 = vld [vmem:[%s2904 + $0x1c0] sm:$0xff]
      %v2962 = vld [vmem:[%s2904 + $0x1c8] sm:$0xff]
      %v2963 = vld [vmem:[%s2904 + $0x1d0] sm:$0xff]
      %v2964 = vld [vmem:[%s2904 + $0x1d8] sm:$0xff]
      %v2965 = vld [vmem:[%s2904 + $0x1e0] sm:$0xff]
      %v2966 = vld [vmem:[%s2904 + $0x1e8] sm:$0xff]
      %v2967 = vld [vmem:[%s2904 + $0x1f0] sm:$0xff]
      %v2968 = vld [vmem:[%s2904 + $0x1f8] sm:$0xff]
      %v2969 = vld [vmem:[%s2904 + $0x200] sm:$0xff]
      %v2970 = vld [vmem:[%s2904 + $0x208] sm:$0xff]
      %v2971 = vld [vmem:[%s2904 + $0x210] sm:$0xff]
      %v2972 = vld [vmem:[%s2904 + $0x218] sm:$0xff]
      %v2973 = vld [vmem:[%s2904 + $0x220] sm:$0xff]
      %v2974 = vld [vmem:[%s2904 + $0x228] sm:$0xff]
      %v2975 = vld [vmem:[%s2904 + $0x230] sm:$0xff]
      %v2976 = vld [vmem:[%s2904 + $0x238] sm:$0xff]
      %v2977 = vld [vmem:[%s2904 + $0x240] sm:$0xff]
      %v2978 = vld [vmem:[%s2904 + $0x248] sm:$0xff]
      %v2979 = vld [vmem:[%s2904 + $0x250] sm:$0xff]
      %v2980 = vld [vmem:[%s2904 + $0x258] sm:$0xff]
      %v2981 = vld [vmem:[%s2904 + $0x260] sm:$0xff]
      %v2982 = vld [vmem:[%s2904 + $0x268] sm:$0xff]
      %v2983 = vld [vmem:[%s2904 + $0x270] sm:$0xff]
      %v2984 = vld [vmem:[%s2904 + $0x278] sm:$0xff]
      %v2985 = vld [vmem:[%s2904 + $0x280] sm:$0xff]
      %v2986 = vld [vmem:[%s2904 + $0x288] sm:$0xff]
      %v2987 = vld [vmem:[%s2904 + $0x290] sm:$0xff]
      %v2988 = vld [vmem:[%s2904 + $0x298] sm:$0xff]
      %v2989 = vld [vmem:[%s2904 + $0x2a0] sm:$0xff]
      %v2990 = vld [vmem:[%s2904 + $0x2a8] sm:$0xff]
      %v2991 = vld [vmem:[%s2904 + $0x2b0] sm:$0xff]
      %v2992 = vld [vmem:[%s2904 + $0x2b8] sm:$0xff]
      %v2993 = vld [vmem:[%s2904 + $0x2c0] sm:$0xff]
      %v2994 = vld [vmem:[%s2904 + $0x2c8] sm:$0xff]
      %v2995 = vld [vmem:[%s2904 + $0x2d0] sm:$0xff]
      %v2996 = vld [vmem:[%s2904 + $0x2d8] sm:$0xff]
      %v2997 = vld [vmem:[%s2904 + $0x2e0] sm:$0xff]
      %v2998 = vld [vmem:[%s2904 + $0x2e8] sm:$0xff]
      %v2999 = vld [vmem:[%s2904 + $0x2f0] sm:$0xff]
      %v3000 = vld [vmem:[%s2904 + $0x2f8] sm:$0xff]
      %v3001 = vld [vmem:[%s2904 + $0x300] sm:$0xff]
      %v3002 = vld [vmem:[%s2904 + $0x308] sm:$0xff]
      %v3003 = vld [vmem:[%s2904 + $0x310] sm:$0xff]
      %v3004 = vld [vmem:[%s2904 + $0x318] sm:$0xff]
      %v3005 = vld [vmem:[%s2904 + $0x320] sm:$0xff]
      %v3006 = vld [vmem:[%s2904 + $0x328] sm:$0xff]
      %v3007 = vld [vmem:[%s2904 + $0x330] sm:$0xff]
      %v3008 = vld [vmem:[%s2904 + $0x338] sm:$0xff]
      %v3009 = vld [vmem:[%s2904 + $0x340] sm:$0xff]
      %v3010 = vld [vmem:[%s2904 + $0x348] sm:$0xff]
      %v3011 = vld [vmem:[%s2904 + $0x350] sm:$0xff]
      %v3012 = vld [vmem:[%s2904 + $0x358] sm:$0xff]
      %v3013 = vld [vmem:[%s2904 + $0x360] sm:$0xff]
      %v3014 = vld [vmem:[%s2904 + $0x368] sm:$0xff]
      %v3015 = vld [vmem:[%s2904 + $0x370] sm:$0xff]
      %v3016 = vld [vmem:[%s2904 + $0x378] sm:$0xff]
      %v3017 = vld [vmem:[%s2904 + $0x380] sm:$0xff]
      %v3018 = vld [vmem:[%s2904 + $0x388] sm:$0xff]
      %v3019 = vld [vmem:[%s2904 + $0x390] sm:$0xff]
      %v3020 = vld [vmem:[%s2904 + $0x398] sm:$0xff]
      %v3021 = vld [vmem:[%s2904 + $0x3a0] sm:$0xff]
      %v3022 = vld [vmem:[%s2904 + $0x3a8] sm:$0xff]
      %v3023 = vld [vmem:[%s2904 + $0x3b0] sm:$0xff]
      %v3024 = vld [vmem:[%s2904 + $0x3b8] sm:$0xff]
      %v3025 = vld [vmem:[%s2904 + $0x3c0] sm:$0xff]
      %v3026 = vld [vmem:[%s2904 + $0x3c8] sm:$0xff]
      %v3027 = vld [vmem:[%s2904 + $0x3d0] sm:$0xff]
      %v3028 = vld [vmem:[%s2904 + $0x3d8] sm:$0xff]
      %v3029 = vld [vmem:[%s2904 + $0x3e0] sm:$0xff]
      %v3030 = vld [vmem:[%s2904 + $0x3e8] sm:$0xff]
      %v3031 = vld [vmem:[%s2904 + $0x3f0] sm:$0xff]
      %v3032 = vld [vmem:[%s2904 + $0x3f8] sm:$0xff]
      %v3033 = vld [vmem:[%s2904 + $0x400] sm:$0xff]
      %v3034 = vld [vmem:[%s2904 + $0x408] sm:$0xff]
      %v3035 = vld [vmem:[%s2904 + $0x410] sm:$0xff]
      %v3036 = vld [vmem:[%s2904 + $0x418] sm:$0xff]
      %v3037 = vld [vmem:[%s2904 + $0x420] sm:$0xff]
      %v3038 = vld [vmem:[%s2904 + $0x428] sm:$0xff]
      %v3039 = vld [vmem:[%s2904 + $0x430] sm:$0xff]
      %v3040 = vld [vmem:[%s2904 + $0x438] sm:$0xff]
      %v3041 = vld [vmem:[%s2904 + $0x440] sm:$0xff]
      %v3042 = vld [vmem:[%s2904 + $0x448] sm:$0xff]
      %v3043 = vld [vmem:[%s2904 + $0x450] sm:$0xff]
      %v3044 = vld [vmem:[%s2904 + $0x458] sm:$0xff]
      %v3045 = vld [vmem:[%s2904 + $0x460] sm:$0xff]
      %v3046 = vld [vmem:[%s2904 + $0x468] sm:$0xff]
      %v3047 = vld [vmem:[%s2904 + $0x470] sm:$0xff]
      %v3048 = vld [vmem:[%s2904 + $0x478] sm:$0xff]
      %v3049 = vld [vmem:[%s2904 + $0x480] sm:$0xff]
      %v3050 = vld [vmem:[%s2904 + $0x488] sm:$0xff]
      %v3051 = vld [vmem:[%s2904 + $0x490] sm:$0xff]
      %v3052 = vld [vmem:[%s2904 + $0x498] sm:$0xff]
      %v3053 = vld [vmem:[%s2904 + $0x4a0] sm:$0xff]
      %v3054 = vld [vmem:[%s2904 + $0x4a8] sm:$0xff]
      %v3055 = vld [vmem:[%s2904 + $0x4b0] sm:$0xff]
      %v3056 = vld [vmem:[%s2904 + $0x4b8] sm:$0xff]
      %v3057 = vld [vmem:[%s2904 + $0x4c0] sm:$0xff]
      %v3058 = vld [vmem:[%s2904 + $0x4c8] sm:$0xff]
      %v3059 = vld [vmem:[%s2904 + $0x4d0] sm:$0xff]
      %v3060 = vld [vmem:[%s2904 + $0x4d8] sm:$0xff]
      %v3061 = vld [vmem:[%s2904 + $0x4e0] sm:$0xff]
      %v3062 = vld [vmem:[%s2904 + $0x4e8] sm:$0xff]
      %v3063 = vld [vmem:[%s2904 + $0x4f0] sm:$0xff]
      %v3064 = vld [vmem:[%s2904 + $0x4f8] sm:$0xff]
      %v3065 = vld [vmem:[%s2904 + $0x500] sm:$0xff]
      %v3066 = vld [vmem:[%s2904 + $0x508] sm:$0xff]
      %v3067 = vld [vmem:[%s2904 + $0x510] sm:$0xff]
      %v3068 = vld [vmem:[%s2904 + $0x518] sm:$0xff]
      %v3069 = vld [vmem:[%s2904 + $0x520] sm:$0xff]
      %v3070 = vld [vmem:[%s2904 + $0x528] sm:$0xff]
      %v3071 = vld [vmem:[%s2904 + $0x530] sm:$0xff]
      %v3072 = vld [vmem:[%s2904 + $0x538] sm:$0xff]
      %v3073 = vld [vmem:[%s2904 + $0x540] sm:$0xff]
      %v3074 = vld [vmem:[%s2904 + $0x548] sm:$0xff]
      %v3075 = vld [vmem:[%s2904 + $0x550] sm:$0xff]
      %v3076 = vld [vmem:[%s2904 + $0x558] sm:$0xff]
      %v3077 = vld [vmem:[%s2904 + $0x560] sm:$0xff]
      %v3078 = vld [vmem:[%s2904 + $0x568] sm:$0xff]
      %v3079 = vld [vmem:[%s2904 + $0x570] sm:$0xff]
      %v3080 = vld [vmem:[%s2904 + $0x578] sm:$0xff]
      %v3081 = vld [vmem:[%s2904 + $0x580] sm:$0xff]
      %v3082 = vld [vmem:[%s2904 + $0x588] sm:$0xff]
      %v3083 = vld [vmem:[%s2904 + $0x590] sm:$0xff]
      %v3084 = vld [vmem:[%s2904 + $0x598] sm:$0xff]
      %v3085 = vld [vmem:[%s2904 + $0x5a0] sm:$0xff]
      %v3086 = vld [vmem:[%s2904 + $0x5a8] sm:$0xff]
      %v3087 = vld [vmem:[%s2904 + $0x5b0] sm:$0xff]
      %v3088 = vld [vmem:[%s2904 + $0x5b8] sm:$0xff]
      %v3089 = vld [vmem:[%s2904 + $0x5c0] sm:$0xff]
      %v3090 = vld [vmem:[%s2904 + $0x5c8] sm:$0xff]
      %v3091 = vld [vmem:[%s2904 + $0x5d0] sm:$0xff]
      %v3092 = vld [vmem:[%s2904 + $0x5d8] sm:$0xff]
      %v3093 = vld [vmem:[%s2904 + $0x5e0] sm:$0xff]
      %v3094 = vld [vmem:[%s2904 + $0x5e8] sm:$0xff]
      %v3095 = vld [vmem:[%s2904 + $0x5f0] sm:$0xff]
      %v3096 = vld [vmem:[%s2904 + $0x5f8] sm:$0xff]
      %v3097 = vld [vmem:[%s2904 + $0x600] sm:$0xff]
      %v3098 = vld [vmem:[%s2904 + $0x608] sm:$0xff]
      %v3099 = vld [vmem:[%s2904 + $0x610] sm:$0xff]
      %v3100 = vld [vmem:[%s2904 + $0x618] sm:$0xff]
      %v3101 = vld [vmem:[%s2904 + $0x620] sm:$0xff]
      %v3102 = vld [vmem:[%s2904 + $0x628] sm:$0xff]
      %v3103 = vld [vmem:[%s2904 + $0x630] sm:$0xff]
      %v3104 = vld [vmem:[%s2904 + $0x638] sm:$0xff]
      %v3105 = vld [vmem:[%s2904 + $0x640] sm:$0xff]
      %v3106 = vld [vmem:[%s2904 + $0x648] sm:$0xff]
      %v3107 = vld [vmem:[%s2904 + $0x650] sm:$0xff]
      %v3108 = vld [vmem:[%s2904 + $0x658] sm:$0xff]
      %v3109 = vld [vmem:[%s2904 + $0x660] sm:$0xff]
      %v3110 = vld [vmem:[%s2904 + $0x668] sm:$0xff]
      %v3111 = vld [vmem:[%s2904 + $0x670] sm:$0xff]
      %v3112 = vld [vmem:[%s2904 + $0x678] sm:$0xff]
      %v3113 = vld [vmem:[%s2904 + $0x680] sm:$0xff]
      %v3114 = vld [vmem:[%s2904 + $0x688] sm:$0xff]
      %v3115 = vld [vmem:[%s2904 + $0x690] sm:$0xff]
      %v3116 = vld [vmem:[%s2904 + $0x698] sm:$0xff]
      %v3117 = vld [vmem:[%s2904 + $0x6a0] sm:$0xff]
      %v3118 = vld [vmem:[%s2904 + $0x6a8] sm:$0xff]
      %v3119 = vld [vmem:[%s2904 + $0x6b0] sm:$0xff]
      %v3120 = vld [vmem:[%s2904 + $0x6b8] sm:$0xff]
      %v3121 = vld [vmem:[%s2904 + $0x6c0] sm:$0xff]
      %v3122 = vld [vmem:[%s2904 + $0x6c8] sm:$0xff]
      %v3123 = vld [vmem:[%s2904 + $0x6d0] sm:$0xff]
      %v3124 = vld [vmem:[%s2904 + $0x6d8] sm:$0xff]
      %v3125 = vld [vmem:[%s2904 + $0x6e0] sm:$0xff]
      %v3126 = vld [vmem:[%s2904 + $0x6e8] sm:$0xff]
      %v3127 = vld [vmem:[%s2904 + $0x6f0] sm:$0xff]
      %v3128 = vld [vmem:[%s2904 + $0x6f8] sm:$0xff]
      %v3129 = vld [vmem:[%s2904 + $0x700] sm:$0xff]
      %v3130 = vld [vmem:[%s2904 + $0x708] sm:$0xff]
      %v3131 = vld [vmem:[%s2904 + $0x710] sm:$0xff]
      %v3132 = vld [vmem:[%s2904 + $0x718] sm:$0xff]
      %v3133 = vld [vmem:[%s2904 + $0x720] sm:$0xff]
      %v3134 = vld [vmem:[%s2904 + $0x728] sm:$0xff]
      %v3135 = vld [vmem:[%s2904 + $0x730] sm:$0xff]
      %v3136 = vld [vmem:[%s2904 + $0x738] sm:$0xff]
      %v3137 = vld [vmem:[%s2904 + $0x740] sm:$0xff]
      %v3138 = vld [vmem:[%s2904 + $0x748] sm:$0xff]
      %v3139 = vld [vmem:[%s2904 + $0x750] sm:$0xff]
      %v3140 = vld [vmem:[%s2904 + $0x758] sm:$0xff]
      %v3141 = vld [vmem:[%s2904 + $0x760] sm:$0xff]
      %v3142 = vld [vmem:[%s2904 + $0x768] sm:$0xff]
      %v3143 = vld [vmem:[%s2904 + $0x770] sm:$0xff]
      %v3144 = vld [vmem:[%s2904 + $0x778] sm:$0xff]
      %v3145 = vld [vmem:[%s2904 + $0x780] sm:$0xff]
      %v3146 = vld [vmem:[%s2904 + $0x788] sm:$0xff]
      %v3147 = vld [vmem:[%s2904 + $0x790] sm:$0xff]
      %v3148 = vld [vmem:[%s2904 + $0x798] sm:$0xff]
      %v3149 = vld [vmem:[%s2904 + $0x7a0] sm:$0xff]
      %v3150 = vld [vmem:[%s2904 + $0x7a8] sm:$0xff]
      %v3151 = vld [vmem:[%s2904 + $0x7b0] sm:$0xff]
      %v3152 = vld [vmem:[%s2904 + $0x7b8] sm:$0xff]
      %v3153 = vld [vmem:[%s2904 + $0x7c0] sm:$0xff]
      %v3154 = vld [vmem:[%s2904 + $0x7c8] sm:$0xff]
      %v3155 = vld [vmem:[%s2904 + $0x7d0] sm:$0xff]
      %v3156 = vld [vmem:[%s2904 + $0x7d8] sm:$0xff]
      %v3157 = vld [vmem:[%s2904 + $0x7e0] sm:$0xff]
      %v3158 = vld [vmem:[%s2904 + $0x7e8] sm:$0xff]
      %v3159 = vld [vmem:[%s2904 + $0x7f0] sm:$0xff]
      %v3160 = vld [vmem:[%s2904 + $0x7f8] sm:$0xff]
      %3161 = vmatprep.subr.mxu0 %v2966
      %3162 = vmatpush1.msra.mxu0 %v2965
      %3163 = vmatprep.subr.mxu0 %v2962
      %3164 = vmatpush1.msra.mxu0 %v2961
      %3165 = vmatprep.subr.mxu0 %v2958
      %3166 = vmatpush1.msra.mxu0 %v2957
      %3167 = vmatprep.subr.mxu0 %v2954
      %3168 = vmatpush1.msra.mxu0 %v2953
      %3169 = vmatprep.subr.mxu0 %v2950
      %3170 = vmatpush1.msra.mxu0 %v2949
      %3171 = vmatprep.subr.mxu0 %v2946
      %3172 = vmatpush1.msra.mxu0 %v2945
      %3173 = vmatprep.subr.mxu0 %v2942
      %3174 = vmatpush1.msra.mxu0 %v2941
      %3175 = vmatprep.subr.mxu0 %v2938
      %3176 = vmatpush1.msra.mxu0 %v2937
      %3177 = vmatprep.subr.mxu0 %v2934
      %3178 = vmatpush1.msra.mxu0 %v2933
      %3179 = vmatprep.subr.mxu0 %v2930
      %3180 = vmatpush1.msra.mxu0 %v2929
      %3181 = vmatprep.subr.mxu0 %v2926
      %3182 = vmatpush1.msra.mxu0 %v2925
      %3183 = vmatprep.subr.mxu0 %v2922
      %3184 = vmatpush1.msra.mxu0 %v2921
      %3185 = vmatprep.subr.mxu0 %v2918
      %3186 = vmatpush1.msra.mxu0 %v2917
      %3187 = vmatprep.subr.mxu0 %v2914
      %3188 = vmatpush1.msra.mxu0 %v2913
      %3189 = vmatprep.subr.mxu0 %v2910
      %3190 = vmatpush1.msra.mxu0 %v2909
      %3191 = vmatprep.subr.mxu0 %v2906
      %3192 = vmatpush1.msra.mxu0 %v2905
      %3193 = vmatprep.subr.mxu0 %v3030
      %3194 = vmatpush2.msra.mxu0 %v3029
      %3195 = vmatprep.subr.mxu0 %v3026
      %3196 = vmatpush2.msra.mxu0 %v3025
      %3197 = vmatprep.subr.mxu0 %v3022
      %3198 = vmatpush2.msra.mxu0 %v3021
      %3199 = vmatprep.subr.mxu0 %v3018
      %3200 = vmatpush2.msra.mxu0 %v3017
      %3201 = vmatprep.subr.mxu0 %v3014
      %3202 = vmatpush2.msra.mxu0 %v3013
      %3203 = vmatprep.subr.mxu0 %v3010
      %3204 = vmatpush2.msra.mxu0 %v3009
      %3205 = vmatprep.subr.mxu0 %v3006
      %3206 = vmatpush2.msra.mxu0 %v3005
      %3207 = vmatprep.subr.mxu0 %v3002
      %3208 = vmatpush2.msra.mxu0 %v3001
      %3209 = vmatprep.subr.mxu0 %v2998
      %3210 = vmatpush2.msra.mxu0 %v2997
      %3211 = vmatprep.subr.mxu0 %v2994
      %3212 = vmatpush2.msra.mxu0 %v2993
      %3213 = vmatprep.subr.mxu0 %v2990
      %3214 = vmatpush2.msra.mxu0 %v2989
      %3215 = vmatprep.subr.mxu0 %v2986
      %3216 = vmatpush2.msra.mxu0 %v2985
      %3217 = vmatprep.subr.mxu0 %v2982
      %3218 = vmatpush2.msra.mxu0 %v2981
      %3219 = vmatprep.subr.mxu0 %v2978
      %3220 = vmatpush2.msra.mxu0 %v2977
      %3221 = vmatprep.subr.mxu0 %v2974
      %3222 = vmatpush2.msra.mxu0 %v2973
      %3223 = vmatprep.subr.mxu0 %v2970
      %3224 = vmatpush2.msra.mxu0 %v2969
      %3225 = vmatprep.mubr.f32.mxu0 %v1527
      %3226 = vmatmul.mubr.f32.gmra.mxu0 %v1526
      %v3227 = vpop.f32.mrf.mxu0
      %v3228 = vadd.f32 0.0, %v3227
      %v3229 = vpop.f32.mrf.mxu0
      %v3230 = vadd.f32 0.0, %v3229
      %3231 = vdwg.mxu0
      %3232 = vmatprep.subr.mxu0 %v3094
      %3233 = vmatpush1.msra.mxu0 %v3093
      %3234 = vmatprep.subr.mxu0 %v3090
      %3235 = vmatpush1.msra.mxu0 %v3089
      %3236 = vmatprep.subr.mxu0 %v3086
      %3237 = vmatpush1.msra.mxu0 %v3085
      %3238 = vmatprep.subr.mxu0 %v3082
      %3239 = vmatpush1.msra.mxu0 %v3081
      %3240 = vmatprep.subr.mxu0 %v3078
      %3241 = vmatpush1.msra.mxu0 %v3077
      %3242 = vmatprep.subr.mxu0 %v3074
      %3243 = vmatpush1.msra.mxu0 %v3073
      %3244 = vmatprep.subr.mxu0 %v3070
      %3245 = vmatpush1.msra.mxu0 %v3069
      %3246 = vmatprep.subr.mxu0 %v3066
      %3247 = vmatpush1.msra.mxu0 %v3065
      %3248 = vmatprep.subr.mxu0 %v3062
      %3249 = vmatpush1.msra.mxu0 %v3061
      %3250 = vmatprep.subr.mxu0 %v3058
      %3251 = vmatpush1.msra.mxu0 %v3057
      %3252 = vmatprep.subr.mxu0 %v3054
      %3253 = vmatpush1.msra.mxu0 %v3053
      %3254 = vmatprep.subr.mxu0 %v3050
      %3255 = vmatpush1.msra.mxu0 %v3049
      %3256 = vmatprep.subr.mxu0 %v3046
      %3257 = vmatpush1.msra.mxu0 %v3045
      %3258 = vmatprep.subr.mxu0 %v3042
      %3259 = vmatpush1.msra.mxu0 %v3041
      %3260 = vmatprep.subr.mxu0 %v3038
      %3261 = vmatpush1.msra.mxu0 %v3037
      %3262 = vmatprep.subr.mxu0 %v3034
      %3263 = vmatpush1.msra.mxu0 %v3033
      %3264 = vmatprep.subr.mxu0 %v3158
      %3265 = vmatpush2.msra.mxu0 %v3157
      %3266 = vmatprep.subr.mxu0 %v3154
      %3267 = vmatpush2.msra.mxu0 %v3153
      %3268 = vmatprep.subr.mxu0 %v3150
      %3269 = vmatpush2.msra.mxu0 %v3149
      %3270 = vmatprep.subr.mxu0 %v3146
      %3271 = vmatpush2.msra.mxu0 %v3145
      %3272 = vmatprep.subr.mxu0 %v3142
      %3273 = vmatpush2.msra.mxu0 %v3141
      %3274 = vmatprep.subr.mxu0 %v3138
      %3275 = vmatpush2.msra.mxu0 %v3137
      %3276 = vmatprep.subr.mxu0 %v3134
      %3277 = vmatpush2.msra.mxu0 %v3133
      %3278 = vmatprep.subr.mxu0 %v3130
      %3279 = vmatpush2.msra.mxu0 %v3129
      %3280 = vmatprep.subr.mxu0 %v3126
      %3281 = vmatpush2.msra.mxu0 %v3125
      %3282 = vmatprep.subr.mxu0 %v3122
      %3283 = vmatpush2.msra.mxu0 %v3121
      %3284 = vmatprep.subr.mxu0 %v3118
      %3285 = vmatpush2.msra.mxu0 %v3117
      %3286 = vmatprep.subr.mxu0 %v3114
      %3287 = vmatpush2.msra.mxu0 %v3113
      %3288 = vmatprep.subr.mxu0 %v3110
      %3289 = vmatpush2.msra.mxu0 %v3109
      %3290 = vmatprep.subr.mxu0 %v3106
      %3291 = vmatpush2.msra.mxu0 %v3105
      %3292 = vmatprep.subr.mxu0 %v3102
      %3293 = vmatpush2.msra.mxu0 %v3101
      %3294 = vmatprep.subr.mxu0 %v3098
      %3295 = vmatpush2.msra.mxu0 %v3097
      %3296 = vmatprep.mubr.f32.mxu0 %v1529
      %3297 = vmatmul.mubr.f32.gmra.mxu0 %v1528
      %v3298 = vpop.f32.mrf.mxu0
      %v3299 = vadd.f32 %v3228, %v3298
      %v3300 = vpop.f32.mrf.mxu0
      %v3301 = vadd.f32 %v3230, %v3300
      %3302 = vdwg.mxu0
      %3303 = vmatprep.subr.mxu0 %v2968
      %3304 = vmatpush1.msra.mxu0 %v2967
      %3305 = vmatprep.subr.mxu0 %v2964
      %3306 = vmatpush1.msra.mxu0 %v2963
      %3307 = vmatprep.subr.mxu0 %v2960
      %3308 = vmatpush1.msra.mxu0 %v2959
      %3309 = vmatprep.subr.mxu0 %v2956
      %3310 = vmatpush1.msra.mxu0 %v2955
      %3311 = vmatprep.subr.mxu0 %v2952
      %3312 = vmatpush1.msra.mxu0 %v2951
      %3313 = vmatprep.subr.mxu0 %v2948
      %3314 = vmatpush1.msra.mxu0 %v2947
      %3315 = vmatprep.subr.mxu0 %v2944
      %3316 = vmatpush1.msra.mxu0 %v2943
      %3317 = vmatprep.subr.mxu0 %v2940
      %3318 = vmatpush1.msra.mxu0 %v2939
      %3319 = vmatprep.subr.mxu0 %v2936
      %3320 = vmatpush1.msra.mxu0 %v2935
      %3321 = vmatprep.subr.mxu0 %v2932
      %3322 = vmatpush1.msra.mxu0 %v2931
      %3323 = vmatprep.subr.mxu0 %v2928
      %3324 = vmatpush1.msra.mxu0 %v2927
      %3325 = vmatprep.subr.mxu0 %v2924
      %3326 = vmatpush1.msra.mxu0 %v2923
      %3327 = vmatprep.subr.mxu0 %v2920
      %3328 = vmatpush1.msra.mxu0 %v2919
      %3329 = vmatprep.subr.mxu0 %v2916
      %3330 = vmatpush1.msra.mxu0 %v2915
      %3331 = vmatprep.subr.mxu0 %v2912
      %3332 = vmatpush1.msra.mxu0 %v2911
      %3333 = vmatprep.subr.mxu0 %v2908
      %3334 = vmatpush1.msra.mxu0 %v2907
      %3335 = vmatprep.subr.mxu0 %v3032
      %3336 = vmatpush2.msra.mxu0 %v3031
      %3337 = vmatprep.subr.mxu0 %v3028
      %3338 = vmatpush2.msra.mxu0 %v3027
      %3339 = vmatprep.subr.mxu0 %v3024
      %3340 = vmatpush2.msra.mxu0 %v3023
      %3341 = vmatprep.subr.mxu0 %v3020
      %3342 = vmatpush2.msra.mxu0 %v3019
      %3343 = vmatprep.subr.mxu0 %v3016
      %3344 = vmatpush2.msra.mxu0 %v3015
      %3345 = vmatprep.subr.mxu0 %v3012
      %3346 = vmatpush2.msra.mxu0 %v3011
      %3347 = vmatprep.subr.mxu0 %v3008
      %3348 = vmatpush2.msra.mxu0 %v3007
      %3349 = vmatprep.subr.mxu0 %v3004
      %3350 = vmatpush2.msra.mxu0 %v3003
      %3351 = vmatprep.subr.mxu0 %v3000
      %3352 = vmatpush2.msra.mxu0 %v2999
      %3353 = vmatprep.subr.mxu0 %v2996
      %3354 = vmatpush2.msra.mxu0 %v2995
      %3355 = vmatprep.subr.mxu0 %v2992
      %3356 = vmatpush2.msra.mxu0 %v2991
      %3357 = vmatprep.subr.mxu0 %v2988
      %3358 = vmatpush2.msra.mxu0 %v2987
      %3359 = vmatprep.subr.mxu0 %v2984
      %3360 = vmatpush2.msra.mxu0 %v2983
      %3361 = vmatprep.subr.mxu0 %v2980
      %3362 = vmatpush2.msra.mxu0 %v2979
      %3363 = vmatprep.subr.mxu0 %v2976
      %3364 = vmatpush2.msra.mxu0 %v2975
      %3365 = vmatprep.subr.mxu0 %v2972
      %3366 = vmatpush2.msra.mxu0 %v2971
      %3367 = vmatprep.mubr.f32.mxu0 %v1527
      %3368 = vmatmul.mubr.f32.gmra.mxu0 %v1526
      %v3369 = vpop.f32.mrf.mxu0
      %v3370 = vadd.f32 0.0, %v3369
      %v3371 = vpop.f32.mrf.mxu0
      %v3372 = vadd.f32 0.0, %v3371
      %3373 = vdwg.mxu0
      %3374 = vmatprep.subr.mxu0 %v3096
      %3375 = vmatpush1.msra.mxu0 %v3095
      %3376 = vmatprep.subr.mxu0 %v3092
      %3377 = vmatpush1.msra.mxu0 %v3091
      %3378 = vmatprep.subr.mxu0 %v3088
      %3379 = vmatpush1.msra.mxu0 %v3087
      %3380 = vmatprep.subr.mxu0 %v3084
      %3381 = vmatpush1.msra.mxu0 %v3083
      %3382 = vmatprep.subr.mxu0 %v3080
      %3383 = vmatpush1.msra.mxu0 %v3079
      %3384 = vmatprep.subr.mxu0 %v3076
      %3385 = vmatpush1.msra.mxu0 %v3075
      %3386 = vmatprep.subr.mxu0 %v3072
      %3387 = vmatpush1.msra.mxu0 %v3071
      %3388 = vmatprep.subr.mxu0 %v3068
      %3389 = vmatpush1.msra.mxu0 %v3067
      %3390 = vmatprep.subr.mxu0 %v3064
      %3391 = vmatpush1.msra.mxu0 %v3063
      %3392 = vmatprep.subr.mxu0 %v3060
      %3393 = vmatpush1.msra.mxu0 %v3059
      %3394 = vmatprep.subr.mxu0 %v3056
      %3395 = vmatpush1.msra.mxu0 %v3055
      %3396 = vmatprep.subr.mxu0 %v3052
      %3397 = vmatpush1.msra.mxu0 %v3051
      %3398 = vmatprep.subr.mxu0 %v3048
      %3399 = vmatpush1.msra.mxu0 %v3047
      %3400 = vmatprep.subr.mxu0 %v3044
      %3401 = vmatpush1.msra.mxu0 %v3043
      %3402 = vmatprep.subr.mxu0 %v3040
      %3403 = vmatpush1.msra.mxu0 %v3039
      %3404 = vmatprep.subr.mxu0 %v3036
      %3405 = vmatpush1.msra.mxu0 %v3035
      %3406 = vmatprep.subr.mxu0 %v3160
      %3407 = vmatpush2.msra.mxu0 %v3159
      %3408 = vmatprep.subr.mxu0 %v3156
      %3409 = vmatpush2.msra.mxu0 %v3155
      %3410 = vmatprep.subr.mxu0 %v3152
      %3411 = vmatpush2.msra.mxu0 %v3151
      %3412 = vmatprep.subr.mxu0 %v3148
      %3413 = vmatpush2.msra.mxu0 %v3147
      %3414 = vmatprep.subr.mxu0 %v3144
      %3415 = vmatpush2.msra.mxu0 %v3143
      %3416 = vmatprep.subr.mxu0 %v3140
      %3417 = vmatpush2.msra.mxu0 %v3139
      %3418 = vmatprep.subr.mxu0 %v3136
      %3419 = vmatpush2.msra.mxu0 %v3135
      %3420 = vmatprep.subr.mxu0 %v3132
      %3421 = vmatpush2.msra.mxu0 %v3131
      %3422 = vmatprep.subr.mxu0 %v3128
      %3423 = vmatpush2.msra.mxu0 %v3127
      %3424 = vmatprep.subr.mxu0 %v3124
      %3425 = vmatpush2.msra.mxu0 %v3123
      %3426 = vmatprep.subr.mxu0 %v3120
      %3427 = vmatpush2.msra.mxu0 %v3119
      %3428 = vmatprep.subr.mxu0 %v3116
      %3429 = vmatpush2.msra.mxu0 %v3115
      %3430 = vmatprep.subr.mxu0 %v3112
      %3431 = vmatpush2.msra.mxu0 %v3111
      %3432 = vmatprep.subr.mxu0 %v3108
      %3433 = vmatpush2.msra.mxu0 %v3107
      %3434 = vmatprep.subr.mxu0 %v3104
      %3435 = vmatpush2.msra.mxu0 %v3103
      %3436 = vmatprep.subr.mxu0 %v3100
      %3437 = vmatpush2.msra.mxu0 %v3099
      %3438 = vmatprep.mubr.f32.mxu0 %v1529
      %3439 = vmatmul.mubr.f32.gmra.mxu0 %v1528
      %v3440 = vpop.f32.mrf.mxu0
      %v3441 = vadd.f32 %v3370, %v3440
      %v3442 = vpop.f32.mrf.mxu0
      %v3443 = vadd.f32 %v3372, %v3442
      %3444 = vdwg.mxu0
      %v3445 = vadd.f32 %v2758, %v3299
      %v3446 = vadd.f32 %v2760, %v3301
      %v3447 = vadd.f32 %v2900, %v3441
      %v3448 = vadd.f32 %v2902, %v3443
      %3449 = vmatprep.subr.mxu0 %v498
      %3450 = vmatpush1.msra.mxu0 %v497
      %3451 = vmatprep.subr.mxu0 %v494
      %3452 = vmatpush1.msra.mxu0 %v493
      %3453 = vmatprep.subr.mxu0 %v490
      %3454 = vmatpush1.msra.mxu0 %v489
      %3455 = vmatprep.subr.mxu0 %v486
      %3456 = vmatpush1.msra.mxu0 %v485
      %3457 = vmatprep.subr.mxu0 %v482
      %3458 = vmatpush1.msra.mxu0 %v481
      %3459 = vmatprep.subr.mxu0 %v478
      %3460 = vmatpush1.msra.mxu0 %v477
      %3461 = vmatprep.subr.mxu0 %v474
      %3462 = vmatpush1.msra.mxu0 %v473
      %3463 = vmatprep.subr.mxu0 %v470
      %3464 = vmatpush1.msra.mxu0 %v469
      %3465 = vmatprep.subr.mxu0 %v466
      %3466 = vmatpush1.msra.mxu0 %v465
      %3467 = vmatprep.subr.mxu0 %v462
      %3468 = vmatpush1.msra.mxu0 %v461
      %3469 = vmatprep.subr.mxu0 %v458
      %3470 = vmatpush1.msra.mxu0 %v457
      %3471 = vmatprep.subr.mxu0 %v454
      %3472 = vmatpush1.msra.mxu0 %v453
      %3473 = vmatprep.subr.mxu0 %v450
      %3474 = vmatpush1.msra.mxu0 %v449
      %3475 = vmatprep.subr.mxu0 %v446
      %3476 = vmatpush1.msra.mxu0 %v445
      %3477 = vmatprep.subr.mxu0 %v442
      %3478 = vmatpush1.msra.mxu0 %v441
      %3479 = vmatprep.subr.mxu0 %v438
      %3480 = vmatpush1.msra.mxu0 %v437
      %3481 = vmatprep.subr.mxu0 %v562
      %3482 = vmatpush2.msra.mxu0 %v561
      %3483 = vmatprep.subr.mxu0 %v558
      %3484 = vmatpush2.msra.mxu0 %v557
      %3485 = vmatprep.subr.mxu0 %v554
      %3486 = vmatpush2.msra.mxu0 %v553
      %3487 = vmatprep.subr.mxu0 %v550
      %3488 = vmatpush2.msra.mxu0 %v549
      %3489 = vmatprep.subr.mxu0 %v546
      %3490 = vmatpush2.msra.mxu0 %v545
      %3491 = vmatprep.subr.mxu0 %v542
      %3492 = vmatpush2.msra.mxu0 %v541
      %3493 = vmatprep.subr.mxu0 %v538
      %3494 = vmatpush2.msra.mxu0 %v537
      %3495 = vmatprep.subr.mxu0 %v534
      %3496 = vmatpush2.msra.mxu0 %v533
      %3497 = vmatprep.subr.mxu0 %v530
      %3498 = vmatpush2.msra.mxu0 %v529
      %3499 = vmatprep.subr.mxu0 %v526
      %3500 = vmatpush2.msra.mxu0 %v525
      %3501 = vmatprep.subr.mxu0 %v522
      %3502 = vmatpush2.msra.mxu0 %v521
      %3503 = vmatprep.subr.mxu0 %v518
      %3504 = vmatpush2.msra.mxu0 %v517
      %3505 = vmatprep.subr.mxu0 %v514
      %3506 = vmatpush2.msra.mxu0 %v513
      %3507 = vmatprep.subr.mxu0 %v510
      %3508 = vmatpush2.msra.mxu0 %v509
      %3509 = vmatprep.subr.mxu0 %v506
      %3510 = vmatpush2.msra.mxu0 %v505
      %3511 = vmatprep.subr.mxu0 %v502
      %3512 = vmatpush2.msra.mxu0 %v501
      %3513 = vmatprep.mubr.f32.mxu0 %v1527
      %3514 = vmatmul.mubr.f32.gmra.mxu0 %v1526
      %v3515 = vpop.f32.mrf.mxu0
      %v3516 = vadd.f32 0.0, %v3515
      %v3517 = vpop.f32.mrf.mxu0
      %v3518 = vadd.f32 0.0, %v3517
      %3519 = vdwg.mxu0
      %3520 = vmatprep.subr.mxu0 %v626
      %3521 = vmatpush1.msra.mxu0 %v625
      %3522 = vmatprep.subr.mxu0 %v622
      %3523 = vmatpush1.msra.mxu0 %v621
      %3524 = vmatprep.subr.mxu0 %v618
      %3525 = vmatpush1.msra.mxu0 %v617
      %3526 = vmatprep.subr.mxu0 %v614
      %3527 = vmatpush1.msra.mxu0 %v613
      %3528 = vmatprep.subr.mxu0 %v610
      %3529 = vmatpush1.msra.mxu0 %v609
      %3530 = vmatprep.subr.mxu0 %v606
      %3531 = vmatpush1.msra.mxu0 %v605
      %3532 = vmatprep.subr.mxu0 %v602
      %3533 = vmatpush1.msra.mxu0 %v601
      %3534 = vmatprep.subr.mxu0 %v598
      %3535 = vmatpush1.msra.mxu0 %v597
      %3536 = vmatprep.subr.mxu0 %v594
      %3537 = vmatpush1.msra.mxu0 %v593
      %3538 = vmatprep.subr.mxu0 %v590
      %3539 = vmatpush1.msra.mxu0 %v589
      %3540 = vmatprep.subr.mxu0 %v586
      %3541 = vmatpush1.msra.mxu0 %v585
      %3542 = vmatprep.subr.mxu0 %v582
      %3543 = vmatpush1.msra.mxu0 %v581
      %3544 = vmatprep.subr.mxu0 %v578
      %3545 = vmatpush1.msra.mxu0 %v577
      %3546 = vmatprep.subr.mxu0 %v574
      %3547 = vmatpush1.msra.mxu0 %v573
      %3548 = vmatprep.subr.mxu0 %v570
      %3549 = vmatpush1.msra.mxu0 %v569
      %3550 = vmatprep.subr.mxu0 %v566
      %3551 = vmatpush1.msra.mxu0 %v565
      %3552 = vmatprep.subr.mxu0 %v690
      %3553 = vmatpush2.msra.mxu0 %v689
      %3554 = vmatprep.subr.mxu0 %v686
      %3555 = vmatpush2.msra.mxu0 %v685
      %3556 = vmatprep.subr.mxu0 %v682
      %3557 = vmatpush2.msra.mxu0 %v681
      %3558 = vmatprep.subr.mxu0 %v678
      %3559 = vmatpush2.msra.mxu0 %v677
      %3560 = vmatprep.subr.mxu0 %v674
      %3561 = vmatpush2.msra.mxu0 %v673
      %3562 = vmatprep.subr.mxu0 %v670
      %3563 = vmatpush2.msra.mxu0 %v669
      %3564 = vmatprep.subr.mxu0 %v666
      %3565 = vmatpush2.msra.mxu0 %v665
      %3566 = vmatprep.subr.mxu0 %v662
      %3567 = vmatpush2.msra.mxu0 %v661
      %3568 = vmatprep.subr.mxu0 %v658
      %3569 = vmatpush2.msra.mxu0 %v657
      %3570 = vmatprep.subr.mxu0 %v654
      %3571 = vmatpush2.msra.mxu0 %v653
      %3572 = vmatprep.subr.mxu0 %v650
      %3573 = vmatpush2.msra.mxu0 %v649
      %3574 = vmatprep.subr.mxu0 %v646
      %3575 = vmatpush2.msra.mxu0 %v645
      %3576 = vmatprep.subr.mxu0 %v642
      %3577 = vmatpush2.msra.mxu0 %v641
      %3578 = vmatprep.subr.mxu0 %v638
      %3579 = vmatpush2.msra.mxu0 %v637
      %3580 = vmatprep.subr.mxu0 %v634
      %3581 = vmatpush2.msra.mxu0 %v633
      %3582 = vmatprep.subr.mxu0 %v630
      %3583 = vmatpush2.msra.mxu0 %v629
      %3584 = vmatprep.mubr.f32.mxu0 %v1529
      %3585 = vmatmul.mubr.f32.gmra.mxu0 %v1528
      %v3586 = vpop.f32.mrf.mxu0
      %v3587 = vadd.f32 %v3516, %v3586
      %v3588 = vpop.f32.mrf.mxu0
      %v3589 = vadd.f32 %v3518, %v3588
      %3590 = vdwg.mxu0
      %3591 = vmatprep.subr.mxu0 %v500
      %3592 = vmatpush1.msra.mxu0 %v499
      %3593 = vmatprep.subr.mxu0 %v496
      %3594 = vmatpush1.msra.mxu0 %v495
      %3595 = vmatprep.subr.mxu0 %v492
      %3596 = vmatpush1.msra.mxu0 %v491
      %3597 = vmatprep.subr.mxu0 %v488
      %3598 = vmatpush1.msra.mxu0 %v487
      %3599 = vmatprep.subr.mxu0 %v484
      %3600 = vmatpush1.msra.mxu0 %v483
      %3601 = vmatprep.subr.mxu0 %v480
      %3602 = vmatpush1.msra.mxu0 %v479
      %3603 = vmatprep.subr.mxu0 %v476
      %3604 = vmatpush1.msra.mxu0 %v475
      %3605 = vmatprep.subr.mxu0 %v472
      %3606 = vmatpush1.msra.mxu0 %v471
      %3607 = vmatprep.subr.mxu0 %v468
      %3608 = vmatpush1.msra.mxu0 %v467
      %3609 = vmatprep.subr.mxu0 %v464
      %3610 = vmatpush1.msra.mxu0 %v463
      %3611 = vmatprep.subr.mxu0 %v460
      %3612 = vmatpush1.msra.mxu0 %v459
      %3613 = vmatprep.subr.mxu0 %v456
      %3614 = vmatpush1.msra.mxu0 %v455
      %3615 = vmatprep.subr.mxu0 %v452
      %3616 = vmatpush1.msra.mxu0 %v451
      %3617 = vmatprep.subr.mxu0 %v448
      %3618 = vmatpush1.msra.mxu0 %v447
      %3619 = vmatprep.subr.mxu0 %v444
      %3620 = vmatpush1.msra.mxu0 %v443
      %3621 = vmatprep.subr.mxu0 %v440
      %3622 = vmatpush1.msra.mxu0 %v439
      %3623 = vmatprep.subr.mxu0 %v564
      %3624 = vmatpush2.msra.mxu0 %v563
      %3625 = vmatprep.subr.mxu0 %v560
      %3626 = vmatpush2.msra.mxu0 %v559
      %3627 = vmatprep.subr.mxu0 %v556
      %3628 = vmatpush2.msra.mxu0 %v555
      %3629 = vmatprep.subr.mxu0 %v552
      %3630 = vmatpush2.msra.mxu0 %v551
      %3631 = vmatprep.subr.mxu0 %v548
      %3632 = vmatpush2.msra.mxu0 %v547
      %3633 = vmatprep.subr.mxu0 %v544
      %3634 = vmatpush2.msra.mxu0 %v543
      %3635 = vmatprep.subr.mxu0 %v540
      %3636 = vmatpush2.msra.mxu0 %v539
      %3637 = vmatprep.subr.mxu0 %v536
      %3638 = vmatpush2.msra.mxu0 %v535
      %3639 = vmatprep.subr.mxu0 %v532
      %3640 = vmatpush2.msra.mxu0 %v531
      %3641 = vmatprep.subr.mxu0 %v528
      %3642 = vmatpush2.msra.mxu0 %v527
      %3643 = vmatprep.subr.mxu0 %v524
      %3644 = vmatpush2.msra.mxu0 %v523
      %3645 = vmatprep.subr.mxu0 %v520
      %3646 = vmatpush2.msra.mxu0 %v519
      %3647 = vmatprep.subr.mxu0 %v516
      %3648 = vmatpush2.msra.mxu0 %v515
      %3649 = vmatprep.subr.mxu0 %v512
      %3650 = vmatpush2.msra.mxu0 %v511
      %3651 = vmatprep.subr.mxu0 %v508
      %3652 = vmatpush2.msra.mxu0 %v507
      %3653 = vmatprep.subr.mxu0 %v504
      %3654 = vmatpush2.msra.mxu0 %v503
      %3655 = vmatprep.mubr.f32.mxu0 %v1527
      %3656 = vmatmul.mubr.f32.gmra.mxu0 %v1526
      %v3657 = vpop.f32.mrf.mxu0
      %v3658 = vadd.f32 0.0, %v3657
      %v3659 = vpop.f32.mrf.mxu0
      %v3660 = vadd.f32 0.0, %v3659
      %3661 = vdwg.mxu0
      %3662 = vmatprep.subr.mxu0 %v628
      %3663 = vmatpush1.msra.mxu0 %v627
      %3664 = vmatprep.subr.mxu0 %v624
      %3665 = vmatpush1.msra.mxu0 %v623
      %3666 = vmatprep.subr.mxu0 %v620
      %3667 = vmatpush1.msra.mxu0 %v619
      %3668 = vmatprep.subr.mxu0 %v616
      %3669 = vmatpush1.msra.mxu0 %v615
      %3670 = vmatprep.subr.mxu0 %v612
      %3671 = vmatpush1.msra.mxu0 %v611
      %3672 = vmatprep.subr.mxu0 %v608
      %3673 = vmatpush1.msra.mxu0 %v607
      %3674 = vmatprep.subr.mxu0 %v604
      %3675 = vmatpush1.msra.mxu0 %v603
      %3676 = vmatprep.subr.mxu0 %v600
      %3677 = vmatpush1.msra.mxu0 %v599
      %3678 = vmatprep.subr.mxu0 %v596
      %3679 = vmatpush1.msra.mxu0 %v595
      %3680 = vmatprep.subr.mxu0 %v592
      %3681 = vmatpush1.msra.mxu0 %v591
      %3682 = vmatprep.subr.mxu0 %v588
      %3683 = vmatpush1.msra.mxu0 %v587
      %3684 = vmatprep.subr.mxu0 %v584
      %3685 = vmatpush1.msra.mxu0 %v583
      %3686 = vmatprep.subr.mxu0 %v580
      %3687 = vmatpush1.msra.mxu0 %v579
      %3688 = vmatprep.subr.mxu0 %v576
      %3689 = vmatpush1.msra.mxu0 %v575
      %3690 = vmatprep.subr.mxu0 %v572
      %3691 = vmatpush1.msra.mxu0 %v571
      %3692 = vmatprep.subr.mxu0 %v568
      %3693 = vmatpush1.msra.mxu0 %v567
      %3694 = vmatprep.subr.mxu0 %v692
      %3695 = vmatpush2.msra.mxu0 %v691
      %3696 = vmatprep.subr.mxu0 %v688
      %3697 = vmatpush2.msra.mxu0 %v687
      %3698 = vmatprep.subr.mxu0 %v684
      %3699 = vmatpush2.msra.mxu0 %v683
      %3700 = vmatprep.subr.mxu0 %v680
      %3701 = vmatpush2.msra.mxu0 %v679
      %3702 = vmatprep.subr.mxu0 %v676
      %3703 = vmatpush2.msra.mxu0 %v675
      %3704 = vmatprep.subr.mxu0 %v672
      %3705 = vmatpush2.msra.mxu0 %v671
      %3706 = vmatprep.subr.mxu0 %v668
      %3707 = vmatpush2.msra.mxu0 %v667
      %3708 = vmatprep.subr.mxu0 %v664
      %3709 = vmatpush2.msra.mxu0 %v663
      %3710 = vmatprep.subr.mxu0 %v660
      %3711 = vmatpush2.msra.mxu0 %v659
      %3712 = vmatprep.subr.mxu0 %v656
      %3713 = vmatpush2.msra.mxu0 %v655
      %3714 = vmatprep.subr.mxu0 %v652
      %3715 = vmatpush2.msra.mxu0 %v651
      %3716 = vmatprep.subr.mxu0 %v648
      %3717 = vmatpush2.msra.mxu0 %v647
      %3718 = vmatprep.subr.mxu0 %v644
      %3719 = vmatpush2.msra.mxu0 %v643
      %3720 = vmatprep.subr.mxu0 %v640
      %3721 = vmatpush2.msra.mxu0 %v639
      %3722 = vmatprep.subr.mxu0 %v636
      %3723 = vmatpush2.msra.mxu0 %v635
      %3724 = vmatprep.subr.mxu0 %v632
      %3725 = vmatpush2.msra.mxu0 %v631
      %3726 = vmatprep.mubr.f32.mxu0 %v1529
      %3727 = vmatmul.mubr.f32.gmra.mxu0 %v1528
      %v3728 = vpop.f32.mrf.mxu0
      %v3729 = vadd.f32 %v3658, %v3728
      %v3730 = vpop.f32.mrf.mxu0
      %v3731 = vadd.f32 %v3660, %v3730
      %3732 = vdwg.mxu0
      %3733 = vmatprep.subr.mxu0 %v236
      %3734 = vmatpush1.msra.mxu0 %v235
      %3735 = vmatprep.subr.mxu0 %v232
      %3736 = vmatpush1.msra.mxu0 %v231
      %3737 = vmatprep.subr.mxu0 %v228
      %3738 = vmatpush1.msra.mxu0 %v227
      %3739 = vmatprep.subr.mxu0 %v224
      %3740 = vmatpush1.msra.mxu0 %v223
      %3741 = vmatprep.subr.mxu0 %v220
      %3742 = vmatpush1.msra.mxu0 %v219
      %3743 = vmatprep.subr.mxu0 %v216
      %3744 = vmatpush1.msra.mxu0 %v215
      %3745 = vmatprep.subr.mxu0 %v212
      %3746 = vmatpush1.msra.mxu0 %v211
      %3747 = vmatprep.subr.mxu0 %v208
      %3748 = vmatpush1.msra.mxu0 %v207
      %3749 = vmatprep.subr.mxu0 %v204
      %3750 = vmatpush1.msra.mxu0 %v203
      %3751 = vmatprep.subr.mxu0 %v200
      %3752 = vmatpush1.msra.mxu0 %v199
      %3753 = vmatprep.subr.mxu0 %v196
      %3754 = vmatpush1.msra.mxu0 %v195
      %3755 = vmatprep.subr.mxu0 %v192
      %3756 = vmatpush1.msra.mxu0 %v191
      %3757 = vmatprep.subr.mxu0 %v188
      %3758 = vmatpush1.msra.mxu0 %v187
      %3759 = vmatprep.subr.mxu0 %v184
      %3760 = vmatpush1.msra.mxu0 %v183
      %3761 = vmatprep.subr.mxu0 %v180
      %3762 = vmatpush1.msra.mxu0 %v179
      %3763 = vmatprep.subr.mxu0 %v176
      %3764 = vmatpush1.msra.mxu0 %v175
      %3765 = vmatprep.subr.mxu0 %v300
      %3766 = vmatpush2.msra.mxu0 %v299
      %3767 = vmatprep.subr.mxu0 %v296
      %3768 = vmatpush2.msra.mxu0 %v295
      %3769 = vmatprep.subr.mxu0 %v292
      %3770 = vmatpush2.msra.mxu0 %v291
      %3771 = vmatprep.subr.mxu0 %v288
      %3772 = vmatpush2.msra.mxu0 %v287
      %3773 = vmatprep.subr.mxu0 %v284
      %3774 = vmatpush2.msra.mxu0 %v283
      %3775 = vmatprep.subr.mxu0 %v280
      %3776 = vmatpush2.msra.mxu0 %v279
      %3777 = vmatprep.subr.mxu0 %v276
      %3778 = vmatpush2.msra.mxu0 %v275
      %3779 = vmatprep.subr.mxu0 %v272
      %3780 = vmatpush2.msra.mxu0 %v271
      %3781 = vmatprep.subr.mxu0 %v268
      %3782 = vmatpush2.msra.mxu0 %v267
      %3783 = vmatprep.subr.mxu0 %v264
      %3784 = vmatpush2.msra.mxu0 %v263
      %3785 = vmatprep.subr.mxu0 %v260
      %3786 = vmatpush2.msra.mxu0 %v259
      %3787 = vmatprep.subr.mxu0 %v256
      %3788 = vmatpush2.msra.mxu0 %v255
      %3789 = vmatprep.subr.mxu0 %v252
      %3790 = vmatpush2.msra.mxu0 %v251
      %3791 = vmatprep.subr.mxu0 %v248
      %3792 = vmatpush2.msra.mxu0 %v247
      %3793 = vmatprep.subr.mxu0 %v244
      %3794 = vmatpush2.msra.mxu0 %v243
      %3795 = vmatprep.subr.mxu0 %v240
      %3796 = vmatpush2.msra.mxu0 %v239
      %3797 = vmatprep.mubr.f32.mxu0 %v433
      %3798 = vmatmul.mubr.f32.gmra.mxu0 %v432
      %v3799 = vpop.f32.mrf.mxu0
      %v3800 = vadd.f32 %v3587, %v3799
      %v3801 = vpop.f32.mrf.mxu0
      %v3802 = vadd.f32 %v3589, %v3801
      %3803 = vdwg.mxu0
      %3804 = vmatprep.subr.mxu0 %v364
      %3805 = vmatpush1.msra.mxu0 %v363
      %3806 = vmatprep.subr.mxu0 %v360
      %3807 = vmatpush1.msra.mxu0 %v359
      %3808 = vmatprep.subr.mxu0 %v356
      %3809 = vmatpush1.msra.mxu0 %v355
      %3810 = vmatprep.subr.mxu0 %v352
      %3811 = vmatpush1.msra.mxu0 %v351
      %3812 = vmatprep.subr.mxu0 %v348
      %3813 = vmatpush1.msra.mxu0 %v347
      %3814 = vmatprep.subr.mxu0 %v344
      %3815 = vmatpush1.msra.mxu0 %v343
      %3816 = vmatprep.subr.mxu0 %v340
      %3817 = vmatpush1.msra.mxu0 %v339
      %3818 = vmatprep.subr.mxu0 %v336
      %3819 = vmatpush1.msra.mxu0 %v335
      %3820 = vmatprep.subr.mxu0 %v332
      %3821 = vmatpush1.msra.mxu0 %v331
      %3822 = vmatprep.subr.mxu0 %v328
      %3823 = vmatpush1.msra.mxu0 %v327
      %3824 = vmatprep.subr.mxu0 %v324
      %3825 = vmatpush1.msra.mxu0 %v323
      %3826 = vmatprep.subr.mxu0 %v320
      %3827 = vmatpush1.msra.mxu0 %v319
      %3828 = vmatprep.subr.mxu0 %v316
      %3829 = vmatpush1.msra.mxu0 %v315
      %3830 = vmatprep.subr.mxu0 %v312
      %3831 = vmatpush1.msra.mxu0 %v311
      %3832 = vmatprep.subr.mxu0 %v308
      %3833 = vmatpush1.msra.mxu0 %v307
      %3834 = vmatprep.subr.mxu0 %v304
      %3835 = vmatpush1.msra.mxu0 %v303
      %3836 = vmatprep.subr.mxu0 %v428
      %3837 = vmatpush2.msra.mxu0 %v427
      %3838 = vmatprep.subr.mxu0 %v424
      %3839 = vmatpush2.msra.mxu0 %v423
      %3840 = vmatprep.subr.mxu0 %v420
      %3841 = vmatpush2.msra.mxu0 %v419
      %3842 = vmatprep.subr.mxu0 %v416
      %3843 = vmatpush2.msra.mxu0 %v415
      %3844 = vmatprep.subr.mxu0 %v412
      %3845 = vmatpush2.msra.mxu0 %v411
      %3846 = vmatprep.subr.mxu0 %v408
      %3847 = vmatpush2.msra.mxu0 %v407
      %3848 = vmatprep.subr.mxu0 %v404
      %3849 = vmatpush2.msra.mxu0 %v403
      %3850 = vmatprep.subr.mxu0 %v400
      %3851 = vmatpush2.msra.mxu0 %v399
      %3852 = vmatprep.subr.mxu0 %v396
      %3853 = vmatpush2.msra.mxu0 %v395
      %3854 = vmatprep.subr.mxu0 %v392
      %3855 = vmatpush2.msra.mxu0 %v391
      %3856 = vmatprep.subr.mxu0 %v388
      %3857 = vmatpush2.msra.mxu0 %v387
      %3858 = vmatprep.subr.mxu0 %v384
      %3859 = vmatpush2.msra.mxu0 %v383
      %3860 = vmatprep.subr.mxu0 %v380
      %3861 = vmatpush2.msra.mxu0 %v379
      %3862 = vmatprep.subr.mxu0 %v376
      %3863 = vmatpush2.msra.mxu0 %v375
      %3864 = vmatprep.subr.mxu0 %v372
      %3865 = vmatpush2.msra.mxu0 %v371
      %3866 = vmatprep.subr.mxu0 %v368
      %3867 = vmatpush2.msra.mxu0 %v367
      %3868 = vmatprep.mubr.f32.mxu0 %v435
      %3869 = vmatmul.mubr.f32.gmra.mxu0 %v434
      %v3870 = vpop.f32.mrf.mxu0
      %v3871 = vadd.f32 %v3800, %v3870
      %v3872 = vpop.f32.mrf.mxu0
      %v3873 = vadd.f32 %v3802, %v3872
      %3874 = vdwg.mxu0
      %3875 = vmatprep.subr.mxu0 %v238
      %3876 = vmatpush1.msra.mxu0 %v237
      %3877 = vmatprep.subr.mxu0 %v234
      %3878 = vmatpush1.msra.mxu0 %v233
      %3879 = vmatprep.subr.mxu0 %v230
      %3880 = vmatpush1.msra.mxu0 %v229
      %3881 = vmatprep.subr.mxu0 %v226
      %3882 = vmatpush1.msra.mxu0 %v225
      %3883 = vmatprep.subr.mxu0 %v222
      %3884 = vmatpush1.msra.mxu0 %v221
      %3885 = vmatprep.subr.mxu0 %v218
      %3886 = vmatpush1.msra.mxu0 %v217
      %3887 = vmatprep.subr.mxu0 %v214
      %3888 = vmatpush1.msra.mxu0 %v213
      %3889 = vmatprep.subr.mxu0 %v210
      %3890 = vmatpush1.msra.mxu0 %v209
      %3891 = vmatprep.subr.mxu0 %v206
      %3892 = vmatpush1.msra.mxu0 %v205
      %3893 = vmatprep.subr.mxu0 %v202
      %3894 = vmatpush1.msra.mxu0 %v201
      %3895 = vmatprep.subr.mxu0 %v198
      %3896 = vmatpush1.msra.mxu0 %v197
      %3897 = vmatprep.subr.mxu0 %v194
      %3898 = vmatpush1.msra.mxu0 %v193
      %3899 = vmatprep.subr.mxu0 %v190
      %3900 = vmatpush1.msra.mxu0 %v189
      %3901 = vmatprep.subr.mxu0 %v186
      %3902 = vmatpush1.msra.mxu0 %v185
      %3903 = vmatprep.subr.mxu0 %v182
      %3904 = vmatpush1.msra.mxu0 %v181
      %3905 = vmatprep.subr.mxu0 %v178
      %3906 = vmatpush1.msra.mxu0 %v177
      %3907 = vmatprep.subr.mxu0 %v302
      %3908 = vmatpush2.msra.mxu0 %v301
      %3909 = vmatprep.subr.mxu0 %v298
      %3910 = vmatpush2.msra.mxu0 %v297
      %3911 = vmatprep.subr.mxu0 %v294
      %3912 = vmatpush2.msra.mxu0 %v293
      %3913 = vmatprep.subr.mxu0 %v290
      %3914 = vmatpush2.msra.mxu0 %v289
      %3915 = vmatprep.subr.mxu0 %v286
      %3916 = vmatpush2.msra.mxu0 %v285
      %3917 = vmatprep.subr.mxu0 %v282
      %3918 = vmatpush2.msra.mxu0 %v281
      %3919 = vmatprep.subr.mxu0 %v278
      %3920 = vmatpush2.msra.mxu0 %v277
      %3921 = vmatprep.subr.mxu0 %v274
      %3922 = vmatpush2.msra.mxu0 %v273
      %3923 = vmatprep.subr.mxu0 %v270
      %3924 = vmatpush2.msra.mxu0 %v269
      %3925 = vmatprep.subr.mxu0 %v266
      %3926 = vmatpush2.msra.mxu0 %v265
      %3927 = vmatprep.subr.mxu0 %v262
      %3928 = vmatpush2.msra.mxu0 %v261
      %3929 = vmatprep.subr.mxu0 %v258
      %3930 = vmatpush2.msra.mxu0 %v257
      %3931 = vmatprep.subr.mxu0 %v254
      %3932 = vmatpush2.msra.mxu0 %v253
      %3933 = vmatprep.subr.mxu0 %v250
      %3934 = vmatpush2.msra.mxu0 %v249
      %3935 = vmatprep.subr.mxu0 %v246
      %3936 = vmatpush2.msra.mxu0 %v245
      %3937 = vmatprep.subr.mxu0 %v242
      %3938 = vmatpush2.msra.mxu0 %v241
      %3939 = vmatprep.mubr.f32.mxu0 %v433
      %3940 = vmatmul.mubr.f32.gmra.mxu0 %v432
      %v3941 = vpop.f32.mrf.mxu0
      %v3942 = vadd.f32 %v3729, %v3941
      %v3943 = vpop.f32.mrf.mxu0
      %v3944 = vadd.f32 %v3731, %v3943
      %3945 = vdwg.mxu0
      %3946 = vmatprep.subr.mxu0 %v366
      %3947 = vmatpush1.msra.mxu0 %v365
      %3948 = vmatprep.subr.mxu0 %v362
      %3949 = vmatpush1.msra.mxu0 %v361
      %3950 = vmatprep.subr.mxu0 %v358
      %3951 = vmatpush1.msra.mxu0 %v357
      %3952 = vmatprep.subr.mxu0 %v354
      %3953 = vmatpush1.msra.mxu0 %v353
      %3954 = vmatprep.subr.mxu0 %v350
      %3955 = vmatpush1.msra.mxu0 %v349
      %3956 = vmatprep.subr.mxu0 %v346
      %3957 = vmatpush1.msra.mxu0 %v345
      %3958 = vmatprep.subr.mxu0 %v342
      %3959 = vmatpush1.msra.mxu0 %v341
      %3960 = vmatprep.subr.mxu0 %v338
      %3961 = vmatpush1.msra.mxu0 %v337
      %3962 = vmatprep.subr.mxu0 %v334
      %3963 = vmatpush1.msra.mxu0 %v333
      %3964 = vmatprep.subr.mxu0 %v330
      %3965 = vmatpush1.msra.mxu0 %v329
      %3966 = vmatprep.subr.mxu0 %v326
      %3967 = vmatpush1.msra.mxu0 %v325
      %3968 = vmatprep.subr.mxu0 %v322
      %3969 = vmatpush1.msra.mxu0 %v321
      %3970 = vmatprep.subr.mxu0 %v318
      %3971 = vmatpush1.msra.mxu0 %v317
      %3972 = vmatprep.subr.mxu0 %v314
      %3973 = vmatpush1.msra.mxu0 %v313
      %3974 = vmatprep.subr.mxu0 %v310
      %3975 = vmatpush1.msra.mxu0 %v309
      %3976 = vmatprep.subr.mxu0 %v306
      %3977 = vmatpush1.msra.mxu0 %v305
      %3978 = vmatprep.subr.mxu0 %v430
      %3979 = vmatpush2.msra.mxu0 %v429
      %3980 = vmatprep.subr.mxu0 %v426
      %3981 = vmatpush2.msra.mxu0 %v425
      %3982 = vmatprep.subr.mxu0 %v422
      %3983 = vmatpush2.msra.mxu0 %v421
      %3984 = vmatprep.subr.mxu0 %v418
      %3985 = vmatpush2.msra.mxu0 %v417
      %3986 = vmatprep.subr.mxu0 %v414
      %3987 = vmatpush2.msra.mxu0 %v413
      %3988 = vmatprep.subr.mxu0 %v410
      %3989 = vmatpush2.msra.mxu0 %v409
      %3990 = vmatprep.subr.mxu0 %v406
      %3991 = vmatpush2.msra.mxu0 %v405
      %3992 = vmatprep.subr.mxu0 %v402
      %3993 = vmatpush2.msra.mxu0 %v401
      %3994 = vmatprep.subr.mxu0 %v398
      %3995 = vmatpush2.msra.mxu0 %v397
      %3996 = vmatprep.subr.mxu0 %v394
      %3997 = vmatpush2.msra.mxu0 %v393
      %3998 = vmatprep.subr.mxu0 %v390
      %3999 = vmatpush2.msra.mxu0 %v389
      %4000 = vmatprep.subr.mxu0 %v386
      %4001 = vmatpush2.msra.mxu0 %v385
      %4002 = vmatprep.subr.mxu0 %v382
      %4003 = vmatpush2.msra.mxu0 %v381
      %4004 = vmatprep.subr.mxu0 %v378
      %4005 = vmatpush2.msra.mxu0 %v377
      %4006 = vmatprep.subr.mxu0 %v374
      %4007 = vmatpush2.msra.mxu0 %v373
      %4008 = vmatprep.subr.mxu0 %v370
      %4009 = vmatpush2.msra.mxu0 %v369
      %4010 = vmatprep.mubr.f32.mxu0 %v435
      %4011 = vmatmul.mubr.f32.gmra.mxu0 %v434
      %v4012 = vpop.f32.mrf.mxu0
      %v4013 = vadd.f32 %v3942, %v4012
      %v4014 = vpop.f32.mrf.mxu0
      %v4015 = vadd.f32 %v3944, %v4014
      %4016 = vdwg.mxu0
      %v4017 = vld [vmem:[%s431] sm:$0xfe]
      %v4018 = vld [vmem:[%s431 + $0x8] sm:$0xfe]
      %v4019 = vld [vmem:[%s431 + $0x10] sm:$0xfe]
      %v4020 = vld [vmem:[%s431 + $0x18] sm:$0xfe]
      %v4025 = vrot.slane %v4017, 1
      %v4026 = vrot.slane %v4018, 1
      %v4027 = vrot.slane %v4019, 1
      %v4028 = vrot.slane %v4020, 1
      %4033 = vmatprep.subr.mxu0 %v1327
      %4034 = vmatpush1.msra.mxu0 %v1326
      %4035 = vmatprep.subr.mxu0 %v1323
      %4036 = vmatpush1.msra.mxu0 %v1322
      %4037 = vmatprep.subr.mxu0 %v1319
      %4038 = vmatpush1.msra.mxu0 %v1318
      %4039 = vmatprep.subr.mxu0 %v1315
      %4040 = vmatpush1.msra.mxu0 %v1314
      %4041 = vmatprep.subr.mxu0 %v1311
      %4042 = vmatpush1.msra.mxu0 %v1310
      %4043 = vmatprep.subr.mxu0 %v1307
      %4044 = vmatpush1.msra.mxu0 %v1306
      %4045 = vmatprep.subr.mxu0 %v1303
      %4046 = vmatpush1.msra.mxu0 %v1302
      %4047 = vmatprep.subr.mxu0 %v1299
      %4048 = vmatpush1.msra.mxu0 %v1298
      %4049 = vmatprep.subr.mxu0 %v1295
      %4050 = vmatpush1.msra.mxu0 %v1294
      %4051 = vmatprep.subr.mxu0 %v1291
      %4052 = vmatpush1.msra.mxu0 %v1290
      %4053 = vmatprep.subr.mxu0 %v1287
      %4054 = vmatpush1.msra.mxu0 %v1286
      %4055 = vmatprep.subr.mxu0 %v1283
      %4056 = vmatpush1.msra.mxu0 %v1282
      %4057 = vmatprep.subr.mxu0 %v1279
      %4058 = vmatpush1.msra.mxu0 %v1278
      %4059 = vmatprep.subr.mxu0 %v1275
      %4060 = vmatpush1.msra.mxu0 %v1274
      %4061 = vmatprep.subr.mxu0 %v1271
      %4062 = vmatpush1.msra.mxu0 %v1270
      %4063 = vmatprep.subr.mxu0 %v1267
      %4064 = vmatpush1.msra.mxu0 %v1266
      %4065 = vmatprep.subr.mxu0 %v1391
      %4066 = vmatpush2.msra.mxu0 %v1390
      %4067 = vmatprep.subr.mxu0 %v1387
      %4068 = vmatpush2.msra.mxu0 %v1386
      %4069 = vmatprep.subr.mxu0 %v1383
      %4070 = vmatpush2.msra.mxu0 %v1382
      %4071 = vmatprep.subr.mxu0 %v1379
      %4072 = vmatpush2.msra.mxu0 %v1378
      %4073 = vmatprep.subr.mxu0 %v1375
      %4074 = vmatpush2.msra.mxu0 %v1374
      %4075 = vmatprep.subr.mxu0 %v1371
      %4076 = vmatpush2.msra.mxu0 %v1370
      %4077 = vmatprep.subr.mxu0 %v1367
      %4078 = vmatpush2.msra.mxu0 %v1366
      %4079 = vmatprep.subr.mxu0 %v1363
      %4080 = vmatpush2.msra.mxu0 %v1362
      %4081 = vmatprep.subr.mxu0 %v1359
      %4082 = vmatpush2.msra.mxu0 %v1358
      %4083 = vmatprep.subr.mxu0 %v1355
      %4084 = vmatpush2.msra.mxu0 %v1354
      %4085 = vmatprep.subr.mxu0 %v1351
      %4086 = vmatpush2.msra.mxu0 %v1350
      %4087 = vmatprep.subr.mxu0 %v1347
      %4088 = vmatpush2.msra.mxu0 %v1346
      %4089 = vmatprep.subr.mxu0 %v1343
      %4090 = vmatpush2.msra.mxu0 %v1342
      %4091 = vmatprep.subr.mxu0 %v1339
      %4092 = vmatpush2.msra.mxu0 %v1338
      %4093 = vmatprep.subr.mxu0 %v1335
      %4094 = vmatpush2.msra.mxu0 %v1334
      %4095 = vmatprep.subr.mxu0 %v1331
      %4096 = vmatpush2.msra.mxu0 %v1330
      %4097 = vmatprep.mubr.f32.mxu0 %v4026
      %4098 = vmatmul.mubr.f32.gmra.mxu0 %v4025
      %v4099 = vpop.f32.mrf.mxu0
      %v4100 = vadd.f32 0.0, %v4099
      %v4101 = vpop.f32.mrf.mxu0
      %v4102 = vadd.f32 0.0, %v4101
      %4103 = vdwg.mxu0
      %4104 = vmatprep.subr.mxu0 %v1455
      %4105 = vmatpush1.msra.mxu0 %v1454
      %4106 = vmatprep.subr.mxu0 %v1451
      %4107 = vmatpush1.msra.mxu0 %v1450
      %4108 = vmatprep.subr.mxu0 %v1447
      %4109 = vmatpush1.msra.mxu0 %v1446
      %4110 = vmatprep.subr.mxu0 %v1443
      %4111 = vmatpush1.msra.mxu0 %v1442
      %4112 = vmatprep.subr.mxu0 %v1439
      %4113 = vmatpush1.msra.mxu0 %v1438
      %4114 = vmatprep.subr.mxu0 %v1435
      %4115 = vmatpush1.msra.mxu0 %v1434
      %4116 = vmatprep.subr.mxu0 %v1431
      %4117 = vmatpush1.msra.mxu0 %v1430
      %4118 = vmatprep.subr.mxu0 %v1427
      %4119 = vmatpush1.msra.mxu0 %v1426
      %4120 = vmatprep.subr.mxu0 %v1423
      %4121 = vmatpush1.msra.mxu0 %v1422
      %4122 = vmatprep.subr.mxu0 %v1419
      %4123 = vmatpush1.msra.mxu0 %v1418
      %4124 = vmatprep.subr.mxu0 %v1415
      %4125 = vmatpush1.msra.mxu0 %v1414
      %4126 = vmatprep.subr.mxu0 %v1411
      %4127 = vmatpush1.msra.mxu0 %v1410
      %4128 = vmatprep.subr.mxu0 %v1407
      %4129 = vmatpush1.msra.mxu0 %v1406
      %4130 = vmatprep.subr.mxu0 %v1403
      %4131 = vmatpush1.msra.mxu0 %v1402
      %4132 = vmatprep.subr.mxu0 %v1399
      %4133 = vmatpush1.msra.mxu0 %v1398
      %4134 = vmatprep.subr.mxu0 %v1395
      %4135 = vmatpush1.msra.mxu0 %v1394
      %4136 = vmatprep.subr.mxu0 %v1519
      %4137 = vmatpush2.msra.mxu0 %v1518
      %4138 = vmatprep.subr.mxu0 %v1515
      %4139 = vmatpush2.msra.mxu0 %v1514
      %4140 = vmatprep.subr.mxu0 %v1511
      %4141 = vmatpush2.msra.mxu0 %v1510
      %4142 = vmatprep.subr.mxu0 %v1507
      %4143 = vmatpush2.msra.mxu0 %v1506
      %4144 = vmatprep.subr.mxu0 %v1503
      %4145 = vmatpush2.msra.mxu0 %v1502
      %4146 = vmatprep.subr.mxu0 %v1499
      %4147 = vmatpush2.msra.mxu0 %v1498
      %4148 = vmatprep.subr.mxu0 %v1495
      %4149 = vmatpush2.msra.mxu0 %v1494
      %4150 = vmatprep.subr.mxu0 %v1491
      %4151 = vmatpush2.msra.mxu0 %v1490
      %4152 = vmatprep.subr.mxu0 %v1487
      %4153 = vmatpush2.msra.mxu0 %v1486
      %4154 = vmatprep.subr.mxu0 %v1483
      %4155 = vmatpush2.msra.mxu0 %v1482
      %4156 = vmatprep.subr.mxu0 %v1479
      %4157 = vmatpush2.msra.mxu0 %v1478
      %4158 = vmatprep.subr.mxu0 %v1475
      %4159 = vmatpush2.msra.mxu0 %v1474
      %4160 = vmatprep.subr.mxu0 %v1471
      %4161 = vmatpush2.msra.mxu0 %v1470
      %4162 = vmatprep.subr.mxu0 %v1467
      %4163 = vmatpush2.msra.mxu0 %v1466
      %4164 = vmatprep.subr.mxu0 %v1463
      %4165 = vmatpush2.msra.mxu0 %v1462
      %4166 = vmatprep.subr.mxu0 %v1459
      %4167 = vmatpush2.msra.mxu0 %v1458
      %4168 = vmatprep.mubr.f32.mxu0 %v4028
      %4169 = vmatmul.mubr.f32.gmra.mxu0 %v4027
      %v4170 = vpop.f32.mrf.mxu0
      %v4171 = vadd.f32 %v4100, %v4170
      %v4172 = vpop.f32.mrf.mxu0
      %v4173 = vadd.f32 %v4102, %v4172
      %4174 = vdwg.mxu0
      %4175 = vmatprep.subr.mxu0 %v1329
      %4176 = vmatpush1.msra.mxu0 %v1328
      %4177 = vmatprep.subr.mxu0 %v1325
      %4178 = vmatpush1.msra.mxu0 %v1324
      %4179 = vmatprep.subr.mxu0 %v1321
      %4180 = vmatpush1.msra.mxu0 %v1320
      %4181 = vmatprep.subr.mxu0 %v1317
      %4182 = vmatpush1.msra.mxu0 %v1316
      %4183 = vmatprep.subr.mxu0 %v1313
      %4184 = vmatpush1.msra.mxu0 %v1312
      %4185 = vmatprep.subr.mxu0 %v1309
      %4186 = vmatpush1.msra.mxu0 %v1308
      %4187 = vmatprep.subr.mxu0 %v1305
      %4188 = vmatpush1.msra.mxu0 %v1304
      %4189 = vmatprep.subr.mxu0 %v1301
      %4190 = vmatpush1.msra.mxu0 %v1300
      %4191 = vmatprep.subr.mxu0 %v1297
      %4192 = vmatpush1.msra.mxu0 %v1296
      %4193 = vmatprep.subr.mxu0 %v1293
      %4194 = vmatpush1.msra.mxu0 %v1292
      %4195 = vmatprep.subr.mxu0 %v1289
      %4196 = vmatpush1.msra.mxu0 %v1288
      %4197 = vmatprep.subr.mxu0 %v1285
      %4198 = vmatpush1.msra.mxu0 %v1284
      %4199 = vmatprep.subr.mxu0 %v1281
      %4200 = vmatpush1.msra.mxu0 %v1280
      %4201 = vmatprep.subr.mxu0 %v1277
      %4202 = vmatpush1.msra.mxu0 %v1276
      %4203 = vmatprep.subr.mxu0 %v1273
      %4204 = vmatpush1.msra.mxu0 %v1272
      %4205 = vmatprep.subr.mxu0 %v1269
      %4206 = vmatpush1.msra.mxu0 %v1268
      %4207 = vmatprep.subr.mxu0 %v1393
      %4208 = vmatpush2.msra.mxu0 %v1392
      %4209 = vmatprep.subr.mxu0 %v1389
      %4210 = vmatpush2.msra.mxu0 %v1388
      %4211 = vmatprep.subr.mxu0 %v1385
      %4212 = vmatpush2.msra.mxu0 %v1384
      %4213 = vmatprep.subr.mxu0 %v1381
      %4214 = vmatpush2.msra.mxu0 %v1380
      %4215 = vmatprep.subr.mxu0 %v1377
      %4216 = vmatpush2.msra.mxu0 %v1376
      %4217 = vmatprep.subr.mxu0 %v1373
      %4218 = vmatpush2.msra.mxu0 %v1372
      %4219 = vmatprep.subr.mxu0 %v1369
      %4220 = vmatpush2.msra.mxu0 %v1368
      %4221 = vmatprep.subr.mxu0 %v1365
      %4222 = vmatpush2.msra.mxu0 %v1364
      %4223 = vmatprep.subr.mxu0 %v1361
      %4224 = vmatpush2.msra.mxu0 %v1360
      %4225 = vmatprep.subr.mxu0 %v1357
      %4226 = vmatpush2.msra.mxu0 %v1356
      %4227 = vmatprep.subr.mxu0 %v1353
      %4228 = vmatpush2.msra.mxu0 %v1352
      %4229 = vmatprep.subr.mxu0 %v1349
      %4230 = vmatpush2.msra.mxu0 %v1348
      %4231 = vmatprep.subr.mxu0 %v1345
      %4232 = vmatpush2.msra.mxu0 %v1344
      %4233 = vmatprep.subr.mxu0 %v1341
      %4234 = vmatpush2.msra.mxu0 %v1340
      %4235 = vmatprep.subr.mxu0 %v1337
      %4236 = vmatpush2.msra.mxu0 %v1336
      %4237 = vmatprep.subr.mxu0 %v1333
      %4238 = vmatpush2.msra.mxu0 %v1332
      %4239 = vmatprep.mubr.f32.mxu0 %v4026
      %4240 = vmatmul.mubr.f32.gmra.mxu0 %v4025
      %v4241 = vpop.f32.mrf.mxu0
      %v4242 = vadd.f32 0.0, %v4241
      %v4243 = vpop.f32.mrf.mxu0
      %v4244 = vadd.f32 0.0, %v4243
      %4245 = vdwg.mxu0
      %4246 = vmatprep.subr.mxu0 %v1457
      %4247 = vmatpush1.msra.mxu0 %v1456
      %4248 = vmatprep.subr.mxu0 %v1453
      %4249 = vmatpush1.msra.mxu0 %v1452
      %4250 = vmatprep.subr.mxu0 %v1449
      %4251 = vmatpush1.msra.mxu0 %v1448
      %4252 = vmatprep.subr.mxu0 %v1445
      %4253 = vmatpush1.msra.mxu0 %v1444
      %4254 = vmatprep.subr.mxu0 %v1441
      %4255 = vmatpush1.msra.mxu0 %v1440
      %4256 = vmatprep.subr.mxu0 %v1437
      %4257 = vmatpush1.msra.mxu0 %v1436
      %4258 = vmatprep.subr.mxu0 %v1433
      %4259 = vmatpush1.msra.mxu0 %v1432
      %4260 = vmatprep.subr.mxu0 %v1429
      %4261 = vmatpush1.msra.mxu0 %v1428
      %4262 = vmatprep.subr.mxu0 %v1425
      %4263 = vmatpush1.msra.mxu0 %v1424
      %4264 = vmatprep.subr.mxu0 %v1421
      %4265 = vmatpush1.msra.mxu0 %v1420
      %4266 = vmatprep.subr.mxu0 %v1417
      %4267 = vmatpush1.msra.mxu0 %v1416
      %4268 = vmatprep.subr.mxu0 %v1413
      %4269 = vmatpush1.msra.mxu0 %v1412
      %4270 = vmatprep.subr.mxu0 %v1409
      %4271 = vmatpush1.msra.mxu0 %v1408
      %4272 = vmatprep.subr.mxu0 %v1405
      %4273 = vmatpush1.msra.mxu0 %v1404
      %4274 = vmatprep.subr.mxu0 %v1401
      %4275 = vmatpush1.msra.mxu0 %v1400
      %4276 = vmatprep.subr.mxu0 %v1397
      %4277 = vmatpush1.msra.mxu0 %v1396
      %4278 = vmatprep.subr.mxu0 %v1521
      %4279 = vmatpush2.msra.mxu0 %v1520
      %4280 = vmatprep.subr.mxu0 %v1517
      %4281 = vmatpush2.msra.mxu0 %v1516
      %4282 = vmatprep.subr.mxu0 %v1513
      %4283 = vmatpush2.msra.mxu0 %v1512
      %4284 = vmatprep.subr.mxu0 %v1509
      %4285 = vmatpush2.msra.mxu0 %v1508
      %4286 = vmatprep.subr.mxu0 %v1505
      %4287 = vmatpush2.msra.mxu0 %v1504
      %4288 = vmatprep.subr.mxu0 %v1501
      %4289 = vmatpush2.msra.mxu0 %v1500
      %4290 = vmatprep.subr.mxu0 %v1497
      %4291 = vmatpush2.msra.mxu0 %v1496
      %4292 = vmatprep.subr.mxu0 %v1493
      %4293 = vmatpush2.msra.mxu0 %v1492
      %4294 = vmatprep.subr.mxu0 %v1489
      %4295 = vmatpush2.msra.mxu0 %v1488
      %4296 = vmatprep.subr.mxu0 %v1485
      %4297 = vmatpush2.msra.mxu0 %v1484
      %4298 = vmatprep.subr.mxu0 %v1481
      %4299 = vmatpush2.msra.mxu0 %v1480
      %4300 = vmatprep.subr.mxu0 %v1477
      %4301 = vmatpush2.msra.mxu0 %v1476
      %4302 = vmatprep.subr.mxu0 %v1473
      %4303 = vmatpush2.msra.mxu0 %v1472
      %4304 = vmatprep.subr.mxu0 %v1469
      %4305 = vmatpush2.msra.mxu0 %v1468
      %4306 = vmatprep.subr.mxu0 %v1465
      %4307 = vmatpush2.msra.mxu0 %v1464
      %4308 = vmatprep.subr.mxu0 %v1461
      %4309 = vmatpush2.msra.mxu0 %v1460
      %4310 = vmatprep.mubr.f32.mxu0 %v4028
      %4311 = vmatmul.mubr.f32.gmra.mxu0 %v4027
      %v4312 = vpop.f32.mrf.mxu0
      %v4313 = vadd.f32 %v4242, %v4312
      %v4314 = vpop.f32.mrf.mxu0
      %v4315 = vadd.f32 %v4244, %v4314
      %4316 = vdwg.mxu0
      %v4317 = vadd.f32 %v3871, %v4171
      %v4318 = vadd.f32 %v3873, %v4173
      %v4319 = vadd.f32 %v4013, %v4313
      %v4320 = vadd.f32 %v4015, %v4315
      %4321 = vmatprep.subr.mxu0 %v2141
      %4322 = vmatpush1.msra.mxu0 %v2140
      %4323 = vmatprep.subr.mxu0 %v2137
      %4324 = vmatpush1.msra.mxu0 %v2136
      %4325 = vmatprep.subr.mxu0 %v2133
      %4326 = vmatpush1.msra.mxu0 %v2132
      %4327 = vmatprep.subr.mxu0 %v2129
      %4328 = vmatpush1.msra.mxu0 %v2128
      %4329 = vmatprep.subr.mxu0 %v2125
      %4330 = vmatpush1.msra.mxu0 %v2124
      %4331 = vmatprep.subr.mxu0 %v2121
      %4332 = vmatpush1.msra.mxu0 %v2120
      %4333 = vmatprep.subr.mxu0 %v2117
      %4334 = vmatpush1.msra.mxu0 %v2116
      %4335 = vmatprep.subr.mxu0 %v2113
      %4336 = vmatpush1.msra.mxu0 %v2112
      %4337 = vmatprep.subr.mxu0 %v2109
      %4338 = vmatpush1.msra.mxu0 %v2108
      %4339 = vmatprep.subr.mxu0 %v2105
      %4340 = vmatpush1.msra.mxu0 %v2104
      %4341 = vmatprep.subr.mxu0 %v2101
      %4342 = vmatpush1.msra.mxu0 %v2100
      %4343 = vmatprep.subr.mxu0 %v2097
      %4344 = vmatpush1.msra.mxu0 %v2096
      %4345 = vmatprep.subr.mxu0 %v2093
      %4346 = vmatpush1.msra.mxu0 %v2092
      %4347 = vmatprep.subr.mxu0 %v2089
      %4348 = vmatpush1.msra.mxu0 %v2088
      %4349 = vmatprep.subr.mxu0 %v2085
      %4350 = vmatpush1.msra.mxu0 %v2084
      %4351 = vmatprep.subr.mxu0 %v2081
      %4352 = vmatpush1.msra.mxu0 %v2080
      %4353 = vmatprep.subr.mxu0 %v2205
      %4354 = vmatpush2.msra.mxu0 %v2204
      %4355 = vmatprep.subr.mxu0 %v2201
      %4356 = vmatpush2.msra.mxu0 %v2200
      %4357 = vmatprep.subr.mxu0 %v2197
      %4358 = vmatpush2.msra.mxu0 %v2196
      %4359 = vmatprep.subr.mxu0 %v2193
      %4360 = vmatpush2.msra.mxu0 %v2192
      %4361 = vmatprep.subr.mxu0 %v2189
      %4362 = vmatpush2.msra.mxu0 %v2188
      %4363 = vmatprep.subr.mxu0 %v2185
      %4364 = vmatpush2.msra.mxu0 %v2184
      %4365 = vmatprep.subr.mxu0 %v2181
      %4366 = vmatpush2.msra.mxu0 %v2180
      %4367 = vmatprep.subr.mxu0 %v2177
      %4368 = vmatpush2.msra.mxu0 %v2176
      %4369 = vmatprep.subr.mxu0 %v2173
      %4370 = vmatpush2.msra.mxu0 %v2172
      %4371 = vmatprep.subr.mxu0 %v2169
      %4372 = vmatpush2.msra.mxu0 %v2168
      %4373 = vmatprep.subr.mxu0 %v2165
      %4374 = vmatpush2.msra.mxu0 %v2164
      %4375 = vmatprep.subr.mxu0 %v2161
      %4376 = vmatpush2.msra.mxu0 %v2160
      %4377 = vmatprep.subr.mxu0 %v2157
      %4378 = vmatpush2.msra.mxu0 %v2156
      %4379 = vmatprep.subr.mxu0 %v2153
      %4380 = vmatpush2.msra.mxu0 %v2152
      %4381 = vmatprep.subr.mxu0 %v2149
      %4382 = vmatpush2.msra.mxu0 %v2148
      %4383 = vmatprep.subr.mxu0 %v2145
      %4384 = vmatpush2.msra.mxu0 %v2144
      %4385 = vmatprep.mubr.f32.mxu0 %v1527
      %4386 = vmatmul.mubr.f32.gmra.mxu0 %v1526
      %v4387 = vpop.f32.mrf.mxu0
      %v4388 = vadd.f32 0.0, %v4387
      %v4389 = vpop.f32.mrf.mxu0
      %v4390 = vadd.f32 0.0, %v4389
      %4391 = vdwg.mxu0
      %4392 = vmatprep.subr.mxu0 %v2269
      %4393 = vmatpush1.msra.mxu0 %v2268
      %4394 = vmatprep.subr.mxu0 %v2265
      %4395 = vmatpush1.msra.mxu0 %v2264
      %4396 = vmatprep.subr.mxu0 %v2261
      %4397 = vmatpush1.msra.mxu0 %v2260
      %4398 = vmatprep.subr.mxu0 %v2257
      %4399 = vmatpush1.msra.mxu0 %v2256
      %4400 = vmatprep.subr.mxu0 %v2253
      %4401 = vmatpush1.msra.mxu0 %v2252
      %4402 = vmatprep.subr.mxu0 %v2249
      %4403 = vmatpush1.msra.mxu0 %v2248
      %4404 = vmatprep.subr.mxu0 %v2245
      %4405 = vmatpush1.msra.mxu0 %v2244
      %4406 = vmatprep.subr.mxu0 %v2241
      %4407 = vmatpush1.msra.mxu0 %v2240
      %4408 = vmatprep.subr.mxu0 %v2237
      %4409 = vmatpush1.msra.mxu0 %v2236
      %4410 = vmatprep.subr.mxu0 %v2233
      %4411 = vmatpush1.msra.mxu0 %v2232
      %4412 = vmatprep.subr.mxu0 %v2229
      %4413 = vmatpush1.msra.mxu0 %v2228
      %4414 = vmatprep.subr.mxu0 %v2225
      %4415 = vmatpush1.msra.mxu0 %v2224
      %4416 = vmatprep.subr.mxu0 %v2221
      %4417 = vmatpush1.msra.mxu0 %v2220
      %4418 = vmatprep.subr.mxu0 %v2217
      %4419 = vmatpush1.msra.mxu0 %v2216
      %4420 = vmatprep.subr.mxu0 %v2213
      %4421 = vmatpush1.msra.mxu0 %v2212
      %4422 = vmatprep.subr.mxu0 %v2209
      %4423 = vmatpush1.msra.mxu0 %v2208
      %4424 = vmatprep.subr.mxu0 %v2333
      %4425 = vmatpush2.msra.mxu0 %v2332
      %4426 = vmatprep.subr.mxu0 %v2329
      %4427 = vmatpush2.msra.mxu0 %v2328
      %4428 = vmatprep.subr.mxu0 %v2325
      %4429 = vmatpush2.msra.mxu0 %v2324
      %4430 = vmatprep.subr.mxu0 %v2321
      %4431 = vmatpush2.msra.mxu0 %v2320
      %4432 = vmatprep.subr.mxu0 %v2317
      %4433 = vmatpush2.msra.mxu0 %v2316
      %4434 = vmatprep.subr.mxu0 %v2313
      %4435 = vmatpush2.msra.mxu0 %v2312
      %4436 = vmatprep.subr.mxu0 %v2309
      %4437 = vmatpush2.msra.mxu0 %v2308
      %4438 = vmatprep.subr.mxu0 %v2305
      %4439 = vmatpush2.msra.mxu0 %v2304
      %4440 = vmatprep.subr.mxu0 %v2301
      %4441 = vmatpush2.msra.mxu0 %v2300
      %4442 = vmatprep.subr.mxu0 %v2297
      %4443 = vmatpush2.msra.mxu0 %v2296
      %4444 = vmatprep.subr.mxu0 %v2293
      %4445 = vmatpush2.msra.mxu0 %v2292
      %4446 = vmatprep.subr.mxu0 %v2289
      %4447 = vmatpush2.msra.mxu0 %v2288
      %4448 = vmatprep.subr.mxu0 %v2285
      %4449 = vmatpush2.msra.mxu0 %v2284
      %4450 = vmatprep.subr.mxu0 %v2281
      %4451 = vmatpush2.msra.mxu0 %v2280
      %4452 = vmatprep.subr.mxu0 %v2277
      %4453 = vmatpush2.msra.mxu0 %v2276
      %4454 = vmatprep.subr.mxu0 %v2273
      %4455 = vmatpush2.msra.mxu0 %v2272
      %4456 = vmatprep.mubr.f32.mxu0 %v1529
      %4457 = vmatmul.mubr.f32.gmra.mxu0 %v1528
      %v4458 = vpop.f32.mrf.mxu0
      %v4459 = vadd.f32 %v4388, %v4458
      %v4460 = vpop.f32.mrf.mxu0
      %v4461 = vadd.f32 %v4390, %v4460
      %4462 = vdwg.mxu0
      %4463 = vmatprep.subr.mxu0 %v2143
      %4464 = vmatpush1.msra.mxu0 %v2142
      %4465 = vmatprep.subr.mxu0 %v2139
      %4466 = vmatpush1.msra.mxu0 %v2138
      %4467 = vmatprep.subr.mxu0 %v2135
      %4468 = vmatpush1.msra.mxu0 %v2134
      %4469 = vmatprep.subr.mxu0 %v2131
      %4470 = vmatpush1.msra.mxu0 %v2130
      %4471 = vmatprep.subr.mxu0 %v2127
      %4472 = vmatpush1.msra.mxu0 %v2126
      %4473 = vmatprep.subr.mxu0 %v2123
      %4474 = vmatpush1.msra.mxu0 %v2122
      %4475 = vmatprep.subr.mxu0 %v2119
      %4476 = vmatpush1.msra.mxu0 %v2118
      %4477 = vmatprep.subr.mxu0 %v2115
      %4478 = vmatpush1.msra.mxu0 %v2114
      %4479 = vmatprep.subr.mxu0 %v2111
      %4480 = vmatpush1.msra.mxu0 %v2110
      %4481 = vmatprep.subr.mxu0 %v2107
      %4482 = vmatpush1.msra.mxu0 %v2106
      %4483 = vmatprep.subr.mxu0 %v2103
      %4484 = vmatpush1.msra.mxu0 %v2102
      %4485 = vmatprep.subr.mxu0 %v2099
      %4486 = vmatpush1.msra.mxu0 %v2098
      %4487 = vmatprep.subr.mxu0 %v2095
      %4488 = vmatpush1.msra.mxu0 %v2094
      %4489 = vmatprep.subr.mxu0 %v2091
      %4490 = vmatpush1.msra.mxu0 %v2090
      %4491 = vmatprep.subr.mxu0 %v2087
      %4492 = vmatpush1.msra.mxu0 %v2086
      %4493 = vmatprep.subr.mxu0 %v2083
      %4494 = vmatpush1.msra.mxu0 %v2082
      %4495 = vmatprep.subr.mxu0 %v2207
      %4496 = vmatpush2.msra.mxu0 %v2206
      %4497 = vmatprep.subr.mxu0 %v2203
      %4498 = vmatpush2.msra.mxu0 %v2202
      %4499 = vmatprep.subr.mxu0 %v2199
      %4500 = vmatpush2.msra.mxu0 %v2198
      %4501 = vmatprep.subr.mxu0 %v2195
      %4502 = vmatpush2.msra.mxu0 %v2194
      %4503 = vmatprep.subr.mxu0 %v2191
      %4504 = vmatpush2.msra.mxu0 %v2190
      %4505 = vmatprep.subr.mxu0 %v2187
      %4506 = vmatpush2.msra.mxu0 %v2186
      %4507 = vmatprep.subr.mxu0 %v2183
      %4508 = vmatpush2.msra.mxu0 %v2182
      %4509 = vmatprep.subr.mxu0 %v2179
      %4510 = vmatpush2.msra.mxu0 %v2178
      %4511 = vmatprep.subr.mxu0 %v2175
      %4512 = vmatpush2.msra.mxu0 %v2174
      %4513 = vmatprep.subr.mxu0 %v2171
      %4514 = vmatpush2.msra.mxu0 %v2170
      %4515 = vmatprep.subr.mxu0 %v2167
      %4516 = vmatpush2.msra.mxu0 %v2166
      %4517 = vmatprep.subr.mxu0 %v2163
      %4518 = vmatpush2.msra.mxu0 %v2162
      %4519 = vmatprep.subr.mxu0 %v2159
      %4520 = vmatpush2.msra.mxu0 %v2158
      %4521 = vmatprep.subr.mxu0 %v2155
      %4522 = vmatpush2.msra.mxu0 %v2154
      %4523 = vmatprep.subr.mxu0 %v2151
      %4524 = vmatpush2.msra.mxu0 %v2150
      %4525 = vmatprep.subr.mxu0 %v2147
      %4526 = vmatpush2.msra.mxu0 %v2146
      %4527 = vmatprep.mubr.f32.mxu0 %v1527
      %4528 = vmatmul.mubr.f32.gmra.mxu0 %v1526
      %v4529 = vpop.f32.mrf.mxu0
      %v4530 = vadd.f32 0.0, %v4529
      %v4531 = vpop.f32.mrf.mxu0
      %v4532 = vadd.f32 0.0, %v4531
      %4533 = vdwg.mxu0
      %4534 = vmatprep.subr.mxu0 %v2271
      %4535 = vmatpush1.msra.mxu0 %v2270
      %4536 = vmatprep.subr.mxu0 %v2267
      %4537 = vmatpush1.msra.mxu0 %v2266
      %4538 = vmatprep.subr.mxu0 %v2263
      %4539 = vmatpush1.msra.mxu0 %v2262
      %4540 = vmatprep.subr.mxu0 %v2259
      %4541 = vmatpush1.msra.mxu0 %v2258
      %4542 = vmatprep.subr.mxu0 %v2255
      %4543 = vmatpush1.msra.mxu0 %v2254
      %4544 = vmatprep.subr.mxu0 %v2251
      %4545 = vmatpush1.msra.mxu0 %v2250
      %4546 = vmatprep.subr.mxu0 %v2247
      %4547 = vmatpush1.msra.mxu0 %v2246
      %4548 = vmatprep.subr.mxu0 %v2243
      %4549 = vmatpush1.msra.mxu0 %v2242
      %4550 = vmatprep.subr.mxu0 %v2239
      %4551 = vmatpush1.msra.mxu0 %v2238
      %4552 = vmatprep.subr.mxu0 %v2235
      %4553 = vmatpush1.msra.mxu0 %v2234
      %4554 = vmatprep.subr.mxu0 %v2231
      %4555 = vmatpush1.msra.mxu0 %v2230
      %4556 = vmatprep.subr.mxu0 %v2227
      %4557 = vmatpush1.msra.mxu0 %v2226
      %4558 = vmatprep.subr.mxu0 %v2223
      %4559 = vmatpush1.msra.mxu0 %v2222
      %4560 = vmatprep.subr.mxu0 %v2219
      %4561 = vmatpush1.msra.mxu0 %v2218
      %4562 = vmatprep.subr.mxu0 %v2215
      %4563 = vmatpush1.msra.mxu0 %v2214
      %4564 = vmatprep.subr.mxu0 %v2211
      %4565 = vmatpush1.msra.mxu0 %v2210
      %4566 = vmatprep.subr.mxu0 %v2335
      %4567 = vmatpush2.msra.mxu0 %v2334
      %4568 = vmatprep.subr.mxu0 %v2331
      %4569 = vmatpush2.msra.mxu0 %v2330
      %4570 = vmatprep.subr.mxu0 %v2327
      %4571 = vmatpush2.msra.mxu0 %v2326
      %4572 = vmatprep.subr.mxu0 %v2323
      %4573 = vmatpush2.msra.mxu0 %v2322
      %4574 = vmatprep.subr.mxu0 %v2319
      %4575 = vmatpush2.msra.mxu0 %v2318
      %4576 = vmatprep.subr.mxu0 %v2315
      %4577 = vmatpush2.msra.mxu0 %v2314
      %4578 = vmatprep.subr.mxu0 %v2311
      %4579 = vmatpush2.msra.mxu0 %v2310
      %4580 = vmatprep.subr.mxu0 %v2307
      %4581 = vmatpush2.msra.mxu0 %v2306
      %4582 = vmatprep.subr.mxu0 %v2303
      %4583 = vmatpush2.msra.mxu0 %v2302
      %4584 = vmatprep.subr.mxu0 %v2299
      %4585 = vmatpush2.msra.mxu0 %v2298
      %4586 = vmatprep.subr.mxu0 %v2295
      %4587 = vmatpush2.msra.mxu0 %v2294
      %4588 = vmatprep.subr.mxu0 %v2291
      %4589 = vmatpush2.msra.mxu0 %v2290
      %4590 = vmatprep.subr.mxu0 %v2287
      %4591 = vmatpush2.msra.mxu0 %v2286
      %4592 = vmatprep.subr.mxu0 %v2283
      %4593 = vmatpush2.msra.mxu0 %v2282
      %4594 = vmatprep.subr.mxu0 %v2279
      %4595 = vmatpush2.msra.mxu0 %v2278
      %4596 = vmatprep.subr.mxu0 %v2275
      %4597 = vmatpush2.msra.mxu0 %v2274
      %4598 = vmatprep.mubr.f32.mxu0 %v1529
      %4599 = vmatmul.mubr.f32.gmra.mxu0 %v1528
      %v4600 = vpop.f32.mrf.mxu0
      %v4601 = vadd.f32 %v4530, %v4600
      %v4602 = vpop.f32.mrf.mxu0
      %v4603 = vadd.f32 %v4532, %v4602
      %4604 = vdwg.mxu0
      %4605 = vmatprep.subr.mxu0 %v1884
      %4606 = vmatpush1.msra.mxu0 %v1883
      %4607 = vmatprep.subr.mxu0 %v1880
      %4608 = vmatpush1.msra.mxu0 %v1879
      %4609 = vmatprep.subr.mxu0 %v1876
      %4610 = vmatpush1.msra.mxu0 %v1875
      %4611 = vmatprep.subr.mxu0 %v1872
      %4612 = vmatpush1.msra.mxu0 %v1871
      %4613 = vmatprep.subr.mxu0 %v1868
      %4614 = vmatpush1.msra.mxu0 %v1867
      %4615 = vmatprep.subr.mxu0 %v1864
      %4616 = vmatpush1.msra.mxu0 %v1863
      %4617 = vmatprep.subr.mxu0 %v1860
      %4618 = vmatpush1.msra.mxu0 %v1859
      %4619 = vmatprep.subr.mxu0 %v1856
      %4620 = vmatpush1.msra.mxu0 %v1855
      %4621 = vmatprep.subr.mxu0 %v1852
      %4622 = vmatpush1.msra.mxu0 %v1851
      %4623 = vmatprep.subr.mxu0 %v1848
      %4624 = vmatpush1.msra.mxu0 %v1847
      %4625 = vmatprep.subr.mxu0 %v1844
      %4626 = vmatpush1.msra.mxu0 %v1843
      %4627 = vmatprep.subr.mxu0 %v1840
      %4628 = vmatpush1.msra.mxu0 %v1839
      %4629 = vmatprep.subr.mxu0 %v1836
      %4630 = vmatpush1.msra.mxu0 %v1835
      %4631 = vmatprep.subr.mxu0 %v1832
      %4632 = vmatpush1.msra.mxu0 %v1831
      %4633 = vmatprep.subr.mxu0 %v1828
      %4634 = vmatpush1.msra.mxu0 %v1827
      %4635 = vmatprep.subr.mxu0 %v1824
      %4636 = vmatpush1.msra.mxu0 %v1823
      %4637 = vmatprep.subr.mxu0 %v1948
      %4638 = vmatpush2.msra.mxu0 %v1947
      %4639 = vmatprep.subr.mxu0 %v1944
      %4640 = vmatpush2.msra.mxu0 %v1943
      %4641 = vmatprep.subr.mxu0 %v1940
      %4642 = vmatpush2.msra.mxu0 %v1939
      %4643 = vmatprep.subr.mxu0 %v1936
      %4644 = vmatpush2.msra.mxu0 %v1935
      %4645 = vmatprep.subr.mxu0 %v1932
      %4646 = vmatpush2.msra.mxu0 %v1931
      %4647 = vmatprep.subr.mxu0 %v1928
      %4648 = vmatpush2.msra.mxu0 %v1927
      %4649 = vmatprep.subr.mxu0 %v1924
      %4650 = vmatpush2.msra.mxu0 %v1923
      %4651 = vmatprep.subr.mxu0 %v1920
      %4652 = vmatpush2.msra.mxu0 %v1919
      %4653 = vmatprep.subr.mxu0 %v1916
      %4654 = vmatpush2.msra.mxu0 %v1915
      %4655 = vmatprep.subr.mxu0 %v1912
      %4656 = vmatpush2.msra.mxu0 %v1911
      %4657 = vmatprep.subr.mxu0 %v1908
      %4658 = vmatpush2.msra.mxu0 %v1907
      %4659 = vmatprep.subr.mxu0 %v1904
      %4660 = vmatpush2.msra.mxu0 %v1903
      %4661 = vmatprep.subr.mxu0 %v1900
      %4662 = vmatpush2.msra.mxu0 %v1899
      %4663 = vmatprep.subr.mxu0 %v1896
      %4664 = vmatpush2.msra.mxu0 %v1895
      %4665 = vmatprep.subr.mxu0 %v1892
      %4666 = vmatpush2.msra.mxu0 %v1891
      %4667 = vmatprep.subr.mxu0 %v1888
      %4668 = vmatpush2.msra.mxu0 %v1887
      %4669 = vmatprep.mubr.f32.mxu0 %v433
      %4670 = vmatmul.mubr.f32.gmra.mxu0 %v432
      %v4671 = vpop.f32.mrf.mxu0
      %v4672 = vadd.f32 %v4459, %v4671
      %v4673 = vpop.f32.mrf.mxu0
      %v4674 = vadd.f32 %v4461, %v4673
      %4675 = vdwg.mxu0
      %4676 = vmatprep.subr.mxu0 %v2012
      %4677 = vmatpush1.msra.mxu0 %v2011
      %4678 = vmatprep.subr.mxu0 %v2008
      %4679 = vmatpush1.msra.mxu0 %v2007
      %4680 = vmatprep.subr.mxu0 %v2004
      %4681 = vmatpush1.msra.mxu0 %v2003
      %4682 = vmatprep.subr.mxu0 %v2000
      %4683 = vmatpush1.msra.mxu0 %v1999
      %4684 = vmatprep.subr.mxu0 %v1996
      %4685 = vmatpush1.msra.mxu0 %v1995
      %4686 = vmatprep.subr.mxu0 %v1992
      %4687 = vmatpush1.msra.mxu0 %v1991
      %4688 = vmatprep.subr.mxu0 %v1988
      %4689 = vmatpush1.msra.mxu0 %v1987
      %4690 = vmatprep.subr.mxu0 %v1984
      %4691 = vmatpush1.msra.mxu0 %v1983
      %4692 = vmatprep.subr.mxu0 %v1980
      %4693 = vmatpush1.msra.mxu0 %v1979
      %4694 = vmatprep.subr.mxu0 %v1976
      %4695 = vmatpush1.msra.mxu0 %v1975
      %4696 = vmatprep.subr.mxu0 %v1972
      %4697 = vmatpush1.msra.mxu0 %v1971
      %4698 = vmatprep.subr.mxu0 %v1968
      %4699 = vmatpush1.msra.mxu0 %v1967
      %4700 = vmatprep.subr.mxu0 %v1964
      %4701 = vmatpush1.msra.mxu0 %v1963
      %4702 = vmatprep.subr.mxu0 %v1960
      %4703 = vmatpush1.msra.mxu0 %v1959
      %4704 = vmatprep.subr.mxu0 %v1956
      %4705 = vmatpush1.msra.mxu0 %v1955
      %4706 = vmatprep.subr.mxu0 %v1952
      %4707 = vmatpush1.msra.mxu0 %v1951
      %4708 = vmatprep.subr.mxu0 %v2076
      %4709 = vmatpush2.msra.mxu0 %v2075
      %4710 = vmatprep.subr.mxu0 %v2072
      %4711 = vmatpush2.msra.mxu0 %v2071
      %4712 = vmatprep.subr.mxu0 %v2068
      %4713 = vmatpush2.msra.mxu0 %v2067
      %4714 = vmatprep.subr.mxu0 %v2064
      %4715 = vmatpush2.msra.mxu0 %v2063
      %4716 = vmatprep.subr.mxu0 %v2060
      %4717 = vmatpush2.msra.mxu0 %v2059
      %4718 = vmatprep.subr.mxu0 %v2056
      %4719 = vmatpush2.msra.mxu0 %v2055
      %4720 = vmatprep.subr.mxu0 %v2052
      %4721 = vmatpush2.msra.mxu0 %v2051
      %4722 = vmatprep.subr.mxu0 %v2048
      %4723 = vmatpush2.msra.mxu0 %v2047
      %4724 = vmatprep.subr.mxu0 %v2044
      %4725 = vmatpush2.msra.mxu0 %v2043
      %4726 = vmatprep.subr.mxu0 %v2040
      %4727 = vmatpush2.msra.mxu0 %v2039
      %4728 = vmatprep.subr.mxu0 %v2036
      %4729 = vmatpush2.msra.mxu0 %v2035
      %4730 = vmatprep.subr.mxu0 %v2032
      %4731 = vmatpush2.msra.mxu0 %v2031
      %4732 = vmatprep.subr.mxu0 %v2028
      %4733 = vmatpush2.msra.mxu0 %v2027
      %4734 = vmatprep.subr.mxu0 %v2024
      %4735 = vmatpush2.msra.mxu0 %v2023
      %4736 = vmatprep.subr.mxu0 %v2020
      %4737 = vmatpush2.msra.mxu0 %v2019
      %4738 = vmatprep.subr.mxu0 %v2016
      %4739 = vmatpush2.msra.mxu0 %v2015
      %4740 = vmatprep.mubr.f32.mxu0 %v435
      %4741 = vmatmul.mubr.f32.gmra.mxu0 %v434
      %v4742 = vpop.f32.mrf.mxu0
      %v4743 = vadd.f32 %v4672, %v4742
      %v4744 = vpop.f32.mrf.mxu0
      %v4745 = vadd.f32 %v4674, %v4744
      %4746 = vdwg.mxu0
      %4747 = vmatprep.subr.mxu0 %v1886
      %4748 = vmatpush1.msra.mxu0 %v1885
      %4749 = vmatprep.subr.mxu0 %v1882
      %4750 = vmatpush1.msra.mxu0 %v1881
      %4751 = vmatprep.subr.mxu0 %v1878
      %4752 = vmatpush1.msra.mxu0 %v1877
      %4753 = vmatprep.subr.mxu0 %v1874
      %4754 = vmatpush1.msra.mxu0 %v1873
      %4755 = vmatprep.subr.mxu0 %v1870
      %4756 = vmatpush1.msra.mxu0 %v1869
      %4757 = vmatprep.subr.mxu0 %v1866
      %4758 = vmatpush1.msra.mxu0 %v1865
      %4759 = vmatprep.subr.mxu0 %v1862
      %4760 = vmatpush1.msra.mxu0 %v1861
      %4761 = vmatprep.subr.mxu0 %v1858
      %4762 = vmatpush1.msra.mxu0 %v1857
      %4763 = vmatprep.subr.mxu0 %v1854
      %4764 = vmatpush1.msra.mxu0 %v1853
      %4765 = vmatprep.subr.mxu0 %v1850
      %4766 = vmatpush1.msra.mxu0 %v1849
      %4767 = vmatprep.subr.mxu0 %v1846
      %4768 = vmatpush1.msra.mxu0 %v1845
      %4769 = vmatprep.subr.mxu0 %v1842
      %4770 = vmatpush1.msra.mxu0 %v1841
      %4771 = vmatprep.subr.mxu0 %v1838
      %4772 = vmatpush1.msra.mxu0 %v1837
      %4773 = vmatprep.subr.mxu0 %v1834
      %4774 = vmatpush1.msra.mxu0 %v1833
      %4775 = vmatprep.subr.mxu0 %v1830
      %4776 = vmatpush1.msra.mxu0 %v1829
      %4777 = vmatprep.subr.mxu0 %v1826
      %4778 = vmatpush1.msra.mxu0 %v1825
      %4779 = vmatprep.subr.mxu0 %v1950
      %4780 = vmatpush2.msra.mxu0 %v1949
      %4781 = vmatprep.subr.mxu0 %v1946
      %4782 = vmatpush2.msra.mxu0 %v1945
      %4783 = vmatprep.subr.mxu0 %v1942
      %4784 = vmatpush2.msra.mxu0 %v1941
      %4785 = vmatprep.subr.mxu0 %v1938
      %4786 = vmatpush2.msra.mxu0 %v1937
      %4787 = vmatprep.subr.mxu0 %v1934
      %4788 = vmatpush2.msra.mxu0 %v1933
      %4789 = vmatprep.subr.mxu0 %v1930
      %4790 = vmatpush2.msra.mxu0 %v1929
      %4791 = vmatprep.subr.mxu0 %v1926
      %4792 = vmatpush2.msra.mxu0 %v1925
      %4793 = vmatprep.subr.mxu0 %v1922
      %4794 = vmatpush2.msra.mxu0 %v1921
      %4795 = vmatprep.subr.mxu0 %v1918
      %4796 = vmatpush2.msra.mxu0 %v1917
      %4797 = vmatprep.subr.mxu0 %v1914
      %4798 = vmatpush2.msra.mxu0 %v1913
      %4799 = vmatprep.subr.mxu0 %v1910
      %4800 = vmatpush2.msra.mxu0 %v1909
      %4801 = vmatprep.subr.mxu0 %v1906
      %4802 = vmatpush2.msra.mxu0 %v1905
      %4803 = vmatprep.subr.mxu0 %v1902
      %4804 = vmatpush2.msra.mxu0 %v1901
      %4805 = vmatprep.subr.mxu0 %v1898
      %4806 = vmatpush2.msra.mxu0 %v1897
      %4807 = vmatprep.subr.mxu0 %v1894
      %4808 = vmatpush2.msra.mxu0 %v1893
      %4809 = vmatprep.subr.mxu0 %v1890
      %4810 = vmatpush2.msra.mxu0 %v1889
      %4811 = vmatprep.mubr.f32.mxu0 %v433
      %4812 = vmatmul.mubr.f32.gmra.mxu0 %v432
      %v4813 = vpop.f32.mrf.mxu0
      %v4814 = vadd.f32 %v4601, %v4813
      %v4815 = vpop.f32.mrf.mxu0
      %v4816 = vadd.f32 %v4603, %v4815
      %4817 = vdwg.mxu0
      %4818 = vmatprep.subr.mxu0 %v2014
      %4819 = vmatpush1.msra.mxu0 %v2013
      %4820 = vmatprep.subr.mxu0 %v2010
      %4821 = vmatpush1.msra.mxu0 %v2009
      %4822 = vmatprep.subr.mxu0 %v2006
      %4823 = vmatpush1.msra.mxu0 %v2005
      %4824 = vmatprep.subr.mxu0 %v2002
      %4825 = vmatpush1.msra.mxu0 %v2001
      %4826 = vmatprep.subr.mxu0 %v1998
      %4827 = vmatpush1.msra.mxu0 %v1997
      %4828 = vmatprep.subr.mxu0 %v1994
      %4829 = vmatpush1.msra.mxu0 %v1993
      %4830 = vmatprep.subr.mxu0 %v1990
      %4831 = vmatpush1.msra.mxu0 %v1989
      %4832 = vmatprep.subr.mxu0 %v1986
      %4833 = vmatpush1.msra.mxu0 %v1985
      %4834 = vmatprep.subr.mxu0 %v1982
      %4835 = vmatpush1.msra.mxu0 %v1981
      %4836 = vmatprep.subr.mxu0 %v1978
      %4837 = vmatpush1.msra.mxu0 %v1977
      %4838 = vmatprep.subr.mxu0 %v1974
      %4839 = vmatpush1.msra.mxu0 %v1973
      %4840 = vmatprep.subr.mxu0 %v1970
      %4841 = vmatpush1.msra.mxu0 %v1969
      %4842 = vmatprep.subr.mxu0 %v1966
      %4843 = vmatpush1.msra.mxu0 %v1965
      %4844 = vmatprep.subr.mxu0 %v1962
      %4845 = vmatpush1.msra.mxu0 %v1961
      %4846 = vmatprep.subr.mxu0 %v1958
      %4847 = vmatpush1.msra.mxu0 %v1957
      %4848 = vmatprep.subr.mxu0 %v1954
      %4849 = vmatpush1.msra.mxu0 %v1953
      %4850 = vmatprep.subr.mxu0 %v2078
      %4851 = vmatpush2.msra.mxu0 %v2077
      %4852 = vmatprep.subr.mxu0 %v2074
      %4853 = vmatpush2.msra.mxu0 %v2073
      %4854 = vmatprep.subr.mxu0 %v2070
      %4855 = vmatpush2.msra.mxu0 %v2069
      %4856 = vmatprep.subr.mxu0 %v2066
      %4857 = vmatpush2.msra.mxu0 %v2065
      %4858 = vmatprep.subr.mxu0 %v2062
      %4859 = vmatpush2.msra.mxu0 %v2061
      %4860 = vmatprep.subr.mxu0 %v2058
      %4861 = vmatpush2.msra.mxu0 %v2057
      %4862 = vmatprep.subr.mxu0 %v2054
      %4863 = vmatpush2.msra.mxu0 %v2053
      %4864 = vmatprep.subr.mxu0 %v2050
      %4865 = vmatpush2.msra.mxu0 %v2049
      %4866 = vmatprep.subr.mxu0 %v2046
      %4867 = vmatpush2.msra.mxu0 %v2045
      %4868 = vmatprep.subr.mxu0 %v2042
      %4869 = vmatpush2.msra.mxu0 %v2041
      %4870 = vmatprep.subr.mxu0 %v2038
      %4871 = vmatpush2.msra.mxu0 %v2037
      %4872 = vmatprep.subr.mxu0 %v2034
      %4873 = vmatpush2.msra.mxu0 %v2033
      %4874 = vmatprep.subr.mxu0 %v2030
      %4875 = vmatpush2.msra.mxu0 %v2029
      %4876 = vmatprep.subr.mxu0 %v2026
      %4877 = vmatpush2.msra.mxu0 %v2025
      %4878 = vmatprep.subr.mxu0 %v2022
      %4879 = vmatpush2.msra.mxu0 %v2021
      %4880 = vmatprep.subr.mxu0 %v2018
      %4881 = vmatpush2.msra.mxu0 %v2017
      %4882 = vmatprep.mubr.f32.mxu0 %v435
      %4883 = vmatmul.mubr.f32.gmra.mxu0 %v434
      %v4884 = vpop.f32.mrf.mxu0
      %v4885 = vadd.f32 %v4814, %v4884
      %v4886 = vpop.f32.mrf.mxu0
      %v4887 = vadd.f32 %v4816, %v4886
      %4888 = vdwg.mxu0
      %4889 = vmatprep.subr.mxu0 %v2966
      %4890 = vmatpush1.msra.mxu0 %v2965
      %4891 = vmatprep.subr.mxu0 %v2962
      %4892 = vmatpush1.msra.mxu0 %v2961
      %4893 = vmatprep.subr.mxu0 %v2958
      %4894 = vmatpush1.msra.mxu0 %v2957
      %4895 = vmatprep.subr.mxu0 %v2954
      %4896 = vmatpush1.msra.mxu0 %v2953
      %4897 = vmatprep.subr.mxu0 %v2950
      %4898 = vmatpush1.msra.mxu0 %v2949
      %4899 = vmatprep.subr.mxu0 %v2946
      %4900 = vmatpush1.msra.mxu0 %v2945
      %4901 = vmatprep.subr.mxu0 %v2942
      %4902 = vmatpush1.msra.mxu0 %v2941
      %4903 = vmatprep.subr.mxu0 %v2938
      %4904 = vmatpush1.msra.mxu0 %v2937
      %4905 = vmatprep.subr.mxu0 %v2934
      %4906 = vmatpush1.msra.mxu0 %v2933
      %4907 = vmatprep.subr.mxu0 %v2930
      %4908 = vmatpush1.msra.mxu0 %v2929
      %4909 = vmatprep.subr.mxu0 %v2926
      %4910 = vmatpush1.msra.mxu0 %v2925
      %4911 = vmatprep.subr.mxu0 %v2922
      %4912 = vmatpush1.msra.mxu0 %v2921
      %4913 = vmatprep.subr.mxu0 %v2918
      %4914 = vmatpush1.msra.mxu0 %v2917
      %4915 = vmatprep.subr.mxu0 %v2914
      %4916 = vmatpush1.msra.mxu0 %v2913
      %4917 = vmatprep.subr.mxu0 %v2910
      %4918 = vmatpush1.msra.mxu0 %v2909
      %4919 = vmatprep.subr.mxu0 %v2906
      %4920 = vmatpush1.msra.mxu0 %v2905
      %4921 = vmatprep.subr.mxu0 %v3030
      %4922 = vmatpush2.msra.mxu0 %v3029
      %4923 = vmatprep.subr.mxu0 %v3026
      %4924 = vmatpush2.msra.mxu0 %v3025
      %4925 = vmatprep.subr.mxu0 %v3022
      %4926 = vmatpush2.msra.mxu0 %v3021
      %4927 = vmatprep.subr.mxu0 %v3018
      %4928 = vmatpush2.msra.mxu0 %v3017
      %4929 = vmatprep.subr.mxu0 %v3014
      %4930 = vmatpush2.msra.mxu0 %v3013
      %4931 = vmatprep.subr.mxu0 %v3010
      %4932 = vmatpush2.msra.mxu0 %v3009
      %4933 = vmatprep.subr.mxu0 %v3006
      %4934 = vmatpush2.msra.mxu0 %v3005
      %4935 = vmatprep.subr.mxu0 %v3002
      %4936 = vmatpush2.msra.mxu0 %v3001
      %4937 = vmatprep.subr.mxu0 %v2998
      %4938 = vmatpush2.msra.mxu0 %v2997
      %4939 = vmatprep.subr.mxu0 %v2994
      %4940 = vmatpush2.msra.mxu0 %v2993
      %4941 = vmatprep.subr.mxu0 %v2990
      %4942 = vmatpush2.msra.mxu0 %v2989
      %4943 = vmatprep.subr.mxu0 %v2986
      %4944 = vmatpush2.msra.mxu0 %v2985
      %4945 = vmatprep.subr.mxu0 %v2982
      %4946 = vmatpush2.msra.mxu0 %v2981
      %4947 = vmatprep.subr.mxu0 %v2978
      %4948 = vmatpush2.msra.mxu0 %v2977
      %4949 = vmatprep.subr.mxu0 %v2974
      %4950 = vmatpush2.msra.mxu0 %v2973
      %4951 = vmatprep.subr.mxu0 %v2970
      %4952 = vmatpush2.msra.mxu0 %v2969
      %4953 = vmatprep.mubr.f32.mxu0 %v4026
      %4954 = vmatmul.mubr.f32.gmra.mxu0 %v4025
      %v4955 = vpop.f32.mrf.mxu0
      %v4956 = vadd.f32 0.0, %v4955
      %v4957 = vpop.f32.mrf.mxu0
      %v4958 = vadd.f32 0.0, %v4957
      %4959 = vdwg.mxu0
      %4960 = vmatprep.subr.mxu0 %v3094
      %4961 = vmatpush1.msra.mxu0 %v3093
      %4962 = vmatprep.subr.mxu0 %v3090
      %4963 = vmatpush1.msra.mxu0 %v3089
      %4964 = vmatprep.subr.mxu0 %v3086
      %4965 = vmatpush1.msra.mxu0 %v3085
      %4966 = vmatprep.subr.mxu0 %v3082
      %4967 = vmatpush1.msra.mxu0 %v3081
      %4968 = vmatprep.subr.mxu0 %v3078
      %4969 = vmatpush1.msra.mxu0 %v3077
      %4970 = vmatprep.subr.mxu0 %v3074
      %4971 = vmatpush1.msra.mxu0 %v3073
      %4972 = vmatprep.subr.mxu0 %v3070
      %4973 = vmatpush1.msra.mxu0 %v3069
      %4974 = vmatprep.subr.mxu0 %v3066
      %4975 = vmatpush1.msra.mxu0 %v3065
      %4976 = vmatprep.subr.mxu0 %v3062
      %4977 = vmatpush1.msra.mxu0 %v3061
      %4978 = vmatprep.subr.mxu0 %v3058
      %4979 = vmatpush1.msra.mxu0 %v3057
      %4980 = vmatprep.subr.mxu0 %v3054
      %4981 = vmatpush1.msra.mxu0 %v3053
      %4982 = vmatprep.subr.mxu0 %v3050
      %4983 = vmatpush1.msra.mxu0 %v3049
      %4984 = vmatprep.subr.mxu0 %v3046
      %4985 = vmatpush1.msra.mxu0 %v3045
      %4986 = vmatprep.subr.mxu0 %v3042
      %4987 = vmatpush1.msra.mxu0 %v3041
      %4988 = vmatprep.subr.mxu0 %v3038
      %4989 = vmatpush1.msra.mxu0 %v3037
      %4990 = vmatprep.subr.mxu0 %v3034
      %4991 = vmatpush1.msra.mxu0 %v3033
      %4992 = vmatprep.subr.mxu0 %v3158
      %4993 = vmatpush2.msra.mxu0 %v3157
      %4994 = vmatprep.subr.mxu0 %v3154
      %4995 = vmatpush2.msra.mxu0 %v3153
      %4996 = vmatprep.subr.mxu0 %v3150
      %4997 = vmatpush2.msra.mxu0 %v3149
      %4998 = vmatprep.subr.mxu0 %v3146
      %4999 = vmatpush2.msra.mxu0 %v3145
      %5000 = vmatprep.subr.mxu0 %v3142
      %5001 = vmatpush2.msra.mxu0 %v3141
      %5002 = vmatprep.subr.mxu0 %v3138
      %5003 = vmatpush2.msra.mxu0 %v3137
      %5004 = vmatprep.subr.mxu0 %v3134
      %5005 = vmatpush2.msra.mxu0 %v3133
      %5006 = vmatprep.subr.mxu0 %v3130
      %5007 = vmatpush2.msra.mxu0 %v3129
      %5008 = vmatprep.subr.mxu0 %v3126
      %5009 = vmatpush2.msra.mxu0 %v3125
      %5010 = vmatprep.subr.mxu0 %v3122
      %5011 = vmatpush2.msra.mxu0 %v3121
      %5012 = vmatprep.subr.mxu0 %v3118
      %5013 = vmatpush2.msra.mxu0 %v3117
      %5014 = vmatprep.subr.mxu0 %v3114
      %5015 = vmatpush2.msra.mxu0 %v3113
      %5016 = vmatprep.subr.mxu0 %v3110
      %5017 = vmatpush2.msra.mxu0 %v3109
      %5018 = vmatprep.subr.mxu0 %v3106
      %5019 = vmatpush2.msra.mxu0 %v3105
      %5020 = vmatprep.subr.mxu0 %v3102
      %5021 = vmatpush2.msra.mxu0 %v3101
      %5022 = vmatprep.subr.mxu0 %v3098
      %5023 = vmatpush2.msra.mxu0 %v3097
      %5024 = vmatprep.mubr.f32.mxu0 %v4028
      %5025 = vmatmul.mubr.f32.gmra.mxu0 %v4027
      %v5026 = vpop.f32.mrf.mxu0
      %v5027 = vadd.f32 %v4956, %v5026
      %v5028 = vpop.f32.mrf.mxu0
      %v5029 = vadd.f32 %v4958, %v5028
      %5030 = vdwg.mxu0
      %5031 = vmatprep.subr.mxu0 %v2968
      %5032 = vmatpush1.msra.mxu0 %v2967
      %5033 = vmatprep.subr.mxu0 %v2964
      %5034 = vmatpush1.msra.mxu0 %v2963
      %5035 = vmatprep.subr.mxu0 %v2960
      %5036 = vmatpush1.msra.mxu0 %v2959
      %5037 = vmatprep.subr.mxu0 %v2956
      %5038 = vmatpush1.msra.mxu0 %v2955
      %5039 = vmatprep.subr.mxu0 %v2952
      %5040 = vmatpush1.msra.mxu0 %v2951
      %5041 = vmatprep.subr.mxu0 %v2948
      %5042 = vmatpush1.msra.mxu0 %v2947
      %5043 = vmatprep.subr.mxu0 %v2944
      %5044 = vmatpush1.msra.mxu0 %v2943
      %5045 = vmatprep.subr.mxu0 %v2940
      %5046 = vmatpush1.msra.mxu0 %v2939
      %5047 = vmatprep.subr.mxu0 %v2936
      %5048 = vmatpush1.msra.mxu0 %v2935
      %5049 = vmatprep.subr.mxu0 %v2932
      %5050 = vmatpush1.msra.mxu0 %v2931
      %5051 = vmatprep.subr.mxu0 %v2928
      %5052 = vmatpush1.msra.mxu0 %v2927
      %5053 = vmatprep.subr.mxu0 %v2924
      %5054 = vmatpush1.msra.mxu0 %v2923
      %5055 = vmatprep.subr.mxu0 %v2920
      %5056 = vmatpush1.msra.mxu0 %v2919
      %5057 = vmatprep.subr.mxu0 %v2916
      %5058 = vmatpush1.msra.mxu0 %v2915
      %5059 = vmatprep.subr.mxu0 %v2912
      %5060 = vmatpush1.msra.mxu0 %v2911
      %5061 = vmatprep.subr.mxu0 %v2908
      %5062 = vmatpush1.msra.mxu0 %v2907
      %5063 = vmatprep.subr.mxu0 %v3032
      %5064 = vmatpush2.msra.mxu0 %v3031
      %5065 = vmatprep.subr.mxu0 %v3028
      %5066 = vmatpush2.msra.mxu0 %v3027
      %5067 = vmatprep.subr.mxu0 %v3024
      %5068 = vmatpush2.msra.mxu0 %v3023
      %5069 = vmatprep.subr.mxu0 %v3020
      %5070 = vmatpush2.msra.mxu0 %v3019
      %5071 = vmatprep.subr.mxu0 %v3016
      %5072 = vmatpush2.msra.mxu0 %v3015
      %5073 = vmatprep.subr.mxu0 %v3012
      %5074 = vmatpush2.msra.mxu0 %v3011
      %5075 = vmatprep.subr.mxu0 %v3008
      %5076 = vmatpush2.msra.mxu0 %v3007
      %5077 = vmatprep.subr.mxu0 %v3004
      %5078 = vmatpush2.msra.mxu0 %v3003
      %5079 = vmatprep.subr.mxu0 %v3000
      %5080 = vmatpush2.msra.mxu0 %v2999
      %5081 = vmatprep.subr.mxu0 %v2996
      %5082 = vmatpush2.msra.mxu0 %v2995
      %5083 = vmatprep.subr.mxu0 %v2992
      %5084 = vmatpush2.msra.mxu0 %v2991
      %5085 = vmatprep.subr.mxu0 %v2988
      %5086 = vmatpush2.msra.mxu0 %v2987
      %5087 = vmatprep.subr.mxu0 %v2984
      %5088 = vmatpush2.msra.mxu0 %v2983
      %5089 = vmatprep.subr.mxu0 %v2980
      %5090 = vmatpush2.msra.mxu0 %v2979
      %5091 = vmatprep.subr.mxu0 %v2976
      %5092 = vmatpush2.msra.mxu0 %v2975
      %5093 = vmatprep.subr.mxu0 %v2972
      %5094 = vmatpush2.msra.mxu0 %v2971
      %5095 = vmatprep.mubr.f32.mxu0 %v4026
      %5096 = vmatmul.mubr.f32.gmra.mxu0 %v4025
      %v5097 = vpop.f32.mrf.mxu0
      %v5098 = vadd.f32 0.0, %v5097
      %v5099 = vpop.f32.mrf.mxu0
      %v5100 = vadd.f32 0.0, %v5099
      %5101 = vdwg.mxu0
      %5102 = vmatprep.subr.mxu0 %v3096
      %5103 = vmatpush1.msra.mxu0 %v3095
      %5104 = vmatprep.subr.mxu0 %v3092
      %5105 = vmatpush1.msra.mxu0 %v3091
      %5106 = vmatprep.subr.mxu0 %v3088
      %5107 = vmatpush1.msra.mxu0 %v3087
      %5108 = vmatprep.subr.mxu0 %v3084
      %5109 = vmatpush1.msra.mxu0 %v3083
      %5110 = vmatprep.subr.mxu0 %v3080
      %5111 = vmatpush1.msra.mxu0 %v3079
      %5112 = vmatprep.subr.mxu0 %v3076
      %5113 = vmatpush1.msra.mxu0 %v3075
      %5114 = vmatprep.subr.mxu0 %v3072
      %5115 = vmatpush1.msra.mxu0 %v3071
      %5116 = vmatprep.subr.mxu0 %v3068
      %5117 = vmatpush1.msra.mxu0 %v3067
      %5118 = vmatprep.subr.mxu0 %v3064
      %5119 = vmatpush1.msra.mxu0 %v3063
      %5120 = vmatprep.subr.mxu0 %v3060
      %5121 = vmatpush1.msra.mxu0 %v3059
      %5122 = vmatprep.subr.mxu0 %v3056
      %5123 = vmatpush1.msra.mxu0 %v3055
      %5124 = vmatprep.subr.mxu0 %v3052
      %5125 = vmatpush1.msra.mxu0 %v3051
      %5126 = vmatprep.subr.mxu0 %v3048
      %5127 = vmatpush1.msra.mxu0 %v3047
      %5128 = vmatprep.subr.mxu0 %v3044
      %5129 = vmatpush1.msra.mxu0 %v3043
      %5130 = vmatprep.subr.mxu0 %v3040
      %5131 = vmatpush1.msra.mxu0 %v3039
      %5132 = vmatprep.subr.mxu0 %v3036
      %5133 = vmatpush1.msra.mxu0 %v3035
      %5134 = vmatprep.subr.mxu0 %v3160
      %5135 = vmatpush2.msra.mxu0 %v3159
      %5136 = vmatprep.subr.mxu0 %v3156
      %5137 = vmatpush2.msra.mxu0 %v3155
      %5138 = vmatprep.subr.mxu0 %v3152
      %5139 = vmatpush2.msra.mxu0 %v3151
      %5140 = vmatprep.subr.mxu0 %v3148
      %5141 = vmatpush2.msra.mxu0 %v3147
      %5142 = vmatprep.subr.mxu0 %v3144
      %5143 = vmatpush2.msra.mxu0 %v3143
      %5144 = vmatprep.subr.mxu0 %v3140
      %5145 = vmatpush2.msra.mxu0 %v3139
      %5146 = vmatprep.subr.mxu0 %v3136
      %5147 = vmatpush2.msra.mxu0 %v3135
      %5148 = vmatprep.subr.mxu0 %v3132
      %5149 = vmatpush2.msra.mxu0 %v3131
      %5150 = vmatprep.subr.mxu0 %v3128
      %5151 = vmatpush2.msra.mxu0 %v3127
      %5152 = vmatprep.subr.mxu0 %v3124
      %5153 = vmatpush2.msra.mxu0 %v3123
      %5154 = vmatprep.subr.mxu0 %v3120
      %5155 = vmatpush2.msra.mxu0 %v3119
      %5156 = vmatprep.subr.mxu0 %v3116
      %5157 = vmatpush2.msra.mxu0 %v3115
      %5158 = vmatprep.subr.mxu0 %v3112
      %5159 = vmatpush2.msra.mxu0 %v3111
      %5160 = vmatprep.subr.mxu0 %v3108
      %5161 = vmatpush2.msra.mxu0 %v3107
      %5162 = vmatprep.subr.mxu0 %v3104
      %5163 = vmatpush2.msra.mxu0 %v3103
      %5164 = vmatprep.subr.mxu0 %v3100
      %5165 = vmatpush2.msra.mxu0 %v3099
      %5166 = vmatprep.mubr.f32.mxu0 %v4028
      %5167 = vmatmul.mubr.f32.gmra.mxu0 %v4027
      %v5168 = vpop.f32.mrf.mxu0
      %v5169 = vadd.f32 %v5098, %v5168
      %v5170 = vpop.f32.mrf.mxu0
      %v5171 = vadd.f32 %v5100, %v5170
      %5172 = vdwg.mxu0
      %v5173 = vadd.f32 %v4743, %v5027
      %v5174 = vadd.f32 %v4745, %v5029
      %v5175 = vadd.f32 %v4885, %v5169
      %v5176 = vadd.f32 %v4887, %v5171
      %v5177 = vmax.f32 %v1818, %v3445
      %v5178 = vmax.f32 %v1819, %v3446
      %v5179 = vmax.f32 %v1820, %v3447
      %v5180 = vmax.f32 %v1821, %v3448
      %v5181 = vmax.f32 %v4317, %v5173
      %v5182 = vmax.f32 %v4318, %v5174
      %v5183 = vmax.f32 %v4319, %v5175
      %v5184 = vmax.f32 %v4320, %v5176
      %v5185 = vmax.f32 %v5177, %v5181
      %v5186 = vmax.f32 %v5178, %v5182
      %v5187 = vmax.f32 %v5179, %v5183
      %v5188 = vmax.f32 %v5180, %v5184
      %v5189 = vld [vmem:[%s2] sm:$0xf]
      %v5191 = vlaneseq
      %v5192 = vshrl.u32 %v5191, 7
      %v5193 = vsub.s32 0, %v5192
      %v5194 = vrot.slane %v5189, %v5193
      %v5195 = vlaneseq
      %v5196 = vshrl.u32 %v5195, 7
      %v5197 = vsub.s32 1, %v5196
      %v5198 = vrot.slane %v5189, %v5197
      %v5199 = vlaneseq
      %v5200 = vshrl.u32 %v5199, 7
      %v5201 = vsub.s32 2, %v5200
      %v5202 = vrot.slane %v5189, %v5201
      %v5203 = vlaneseq
      %v5204 = vshrl.u32 %v5203, 7
      %v5205 = vsub.s32 3, %v5204
      %v5206 = vrot.slane %v5189, %v5205
      %v5211 = vadd.f32 %v5185, %v5194
      %v5212 = vadd.f32 %v5186, %v5198
      %v5213 = vadd.f32 %v5187, %v5202
      %v5214 = vadd.f32 %v5188, %v5206
      %v5215 = vmax.f32 %v5211, 0.0
      %v5216 = vmax.f32 %v5212, 0.0
      %v5217 = vmax.f32 %v5213, 0.0
      %v5218 = vmax.f32 %v5214, 0.0
      %5219 = vst [vmem:[%s170] sm:$0x7f] %v5215
      %5220 = vst [vmem:[%s170 + $0x8] sm:$0x7f] %v5216
      %5221 = vst [vmem:[%s170 + $0x10] sm:$0x7f] %v5217
      %vm5222 = vcmask 522240
      %5223 = vst.msk [vmem:[%s170 + $0x18] sm:$0x7f] %vm5222, %v5218
      %p5224 = scmp.lt.s32.totalorder %s14, 1
      %s5225 = scalar_select %p5224, %s14, 1
      %s5226 = smul.addr %s5225, 4
      %s5227 = smul.addr %s5226, 8
      %s5228 = scalar_lea.vmem %s3, %s5227
      // Predicated region
      $region33: #{cnn_forward.4} parent=31 // pred_check
        %p5229 = pneg %p100
      $region34: #{cnn_forward.4} parent=31 // pred_check_branch
        %5231 = sbr.rel (%p5229) target = $region36
      $region35: #{cnn_forward.4} parent=31 // pred_region
        _
      $region36: #{cnn_forward.4} parent=31 // pred_fallthru
        _
    $region32: #{cnn_forward.4} parent=5 // pred_fallthru
      _
    %p5232 = scmp.le.s32.totalorder 2, %s9
    // Predicated region
    $region37: #{cnn_forward.4} parent=5 // pred_check
      %p5233 = pneg %p5232
    $region38: #{cnn_forward.4} parent=5 // pred_check_branch
      %5235 = sbr.rel (%p5233) target = $region40
    $region39: #{cnn_forward.4} parent=5 // pred_region
      %s5236 = ssub.s32 %s9, 2
      // Predicated region
      $region41: #{cnn_forward.4} parent=39 // pred_check
        %p5237 = pneg %p106
      $region42: #{cnn_forward.4} parent=39 // pred_check_branch
        %5239 = sbr.rel (%p5237) target = $region44
      $region43: #{cnn_forward.4} parent=39 // pred_region
        %p5240 = scmp.lt.s32.totalorder %s15, 1
        %s5241 = scalar_select %p5240, %s15, 1
        %s5242 = smul.addr %s5241, 4
        %s5243 = smul.addr %s5242, 8
        %s5244 = scalar_lea.vmem %s3, %s5243
      $region44: #{cnn_forward.4} parent=39 // pred_fallthru
        _
    $region40: #{cnn_forward.4} parent=5 // pred_fallthru
      _
  $region6: #{cnn_forward.4} parent=0 // loop_footer
    %s13 = sadd.s32 1, %s9
  $region7: #{cnn_forward.4} parent=0 // loop_footer_branch
    %8 = sbr.rel target = $region3
  $region8: #{cnn_forward.4} parent=0 // loop_exit
    _

</llo_original>
